<compile_context>
chip_gen: v5e
topology: v5e:2x2
jax: 0.10.0
libtpu: 0.0.40
codegen_flags: <defaults>
</compile_context>

<pallas_src>
import functools

import jax
import jax.numpy as jnp
from jax import lax
from jax.experimental import pallas as pl
from jax.experimental.pallas import tpu as pltpu


# ----------------------------- Pallas kernel ------------------------------- #

def fused_conv_bn_relu_kernel(a_ref, w_ref, b_ref, g_ref, beta_ref, o_ref,
                              *, m, eps):
    """Fused: y = A @ W + b ; BN(train batch-stats) ; ReLU.

    a:    (M, K)   bf16   im2col patches (full M, full K)
    w:    (K, TC)  bf16   weight tile (TC output channels)
    b/g/beta: (1, TC) f32 conv bias, BN gamma, BN beta
    o:    (M, TC)  f32    relu(bn(conv(x)))
    """
    y = jnp.dot(a_ref[...], w_ref[...],
                preferred_element_type=jnp.float32) + b_ref[...]
    inv_m = 1.0 / m
    mean = jnp.sum(y, axis=0, keepdims=True) * inv_m          # (1, TC)
    d = y - mean
    var = jnp.sum(d * d, axis=0, keepdims=True) * inv_m       # biased (train fwd)
    scale = g_ref[...] * lax.rsqrt(var + eps)                  # (1, TC)
    o_ref[...] = jnp.maximum(d * scale + beta_ref[...], 0.0)


def fused_conv_bn_relu(A, Wm, b, gamma, beta, eps=1e-5):
    """A:[M,K] @ Wm:[K,Cout] + b, then BatchNorm(batch stats)+ReLU. -> [M,Cout]."""
    M, K = A.shape
    Cout = Wm.shape[1]
    # Lane-dense channel tiles; Cout is 64/128/256 here so TC is 64 or 128 and
    # layer 3 gets a 2-block parallel axis (both v7x TensorCores usable).
    TC = Cout if Cout <= 128 else 128
    grid = (Cout // TC,)

    A16 = A.astype(jnp.bfloat16)
    W16 = Wm.astype(jnp.bfloat16)

    kernel = functools.partial(fused_conv_bn_relu_kernel, m=float(M), eps=eps)
    return pl.pallas_call(
        kernel,
        out_shape=jax.ShapeDtypeStruct((M, Cout), jnp.float32),
        grid=grid,
        in_specs=[
            pl.BlockSpec((M, K), lambda j: (0, 0)),    # same A for every C tile
            pl.BlockSpec((K, TC), lambda j: (0, j)),
            pl.BlockSpec((1, TC), lambda j: (0, j)),
            pl.BlockSpec((1, TC), lambda j: (0, j)),
            pl.BlockSpec((1, TC), lambda j: (0, j)),
        ],
        out_specs=pl.BlockSpec((M, TC), lambda j: (0, j)),
        compiler_params=pltpu.CompilerParams(
            dimension_semantics=("parallel",),
            vmem_limit_bytes=32 * 1024 * 1024,
        ),
    )(A16, W16, b.reshape(1, Cout), gamma.reshape(1, Cout),
      beta.reshape(1, Cout))


# ------------------------------ JAX glue ----------------------------------- #

def im2col_3d_ndhwc(x, k=3, s=2, p=1):
    """x: [N, D, H, W, C] (channels-last) -> (A[M, k^3*C], (N, Do, Ho, Wo)).

    K ordering is (kd, kh, kw, cin)."""
    N, D, H, W, C = x.shape
    xp = jnp.pad(x, ((0, 0), (p, p), (p, p), (p, p), (0, 0)))
    Do = (D + 2 * p - k) // s + 1
    Ho = (H + 2 * p - k) // s + 1
    Wo = (W + 2 * p - k) // s + 1
    patches = []
    for kd in range(k):
        for kh in range(k):
            for kw in range(k):
                patches.append(xp[:,
                                  kd:kd + s * Do:s,
                                  kh:kh + s * Ho:s,
                                  kw:kw + s * Wo:s, :])   # [N, Do, Ho, Wo, C]
    pst = jnp.stack(patches, axis=4)                       # [N, Do, Ho, Wo, 27, C]
    A = pst.reshape(N * Do * Ho * Wo, k * k * k * C)
    return A, (N, Do, Ho, Wo)


def conv3d_bn_relu_ndhwc(x, w, b, gamma, beta, eps=1e-5):
    """One encoder stage, channels-last in and out.

    x: [N, D, H, W, Cin];  w: [Cout, Cin, 3, 3, 3] (PyTorch layout)."""
    k = 3
    Cout, Cin = w.shape[0], w.shape[1]
    A, (N, Do, Ho, Wo) = im2col_3d_ndhwc(x, k=k)
    # Reorder weight to match im2col K ordering (kd, kh, kw, cin).
    Wm = jnp.transpose(w, (2, 3, 4, 1, 0)).reshape(k * k * k * Cin, Cout)
    y = fused_conv_bn_relu(A, Wm, b, gamma, beta, eps)      # [M, Cout]
    return y.reshape(N, Do, Ho, Wo, Cout)                   # stay NDHWC


def init_params(key, in_channels=1, base_channels=64):
    cs = [in_channels, base_channels, base_channels * 2, base_channels * 4]
    params = []
    for li in range(3):
        key, kw, kb = jax.random.split(key, 3)
        cin, cout = cs[li], cs[li + 1]
        w = jax.random.normal(kw, (cout, cin, 3, 3, 3), jnp.float32) * 0.05
        b = jax.random.normal(kb, (cout,), jnp.float32) * 0.01
        gamma = jnp.ones((cout,), jnp.float32)
        beta = jnp.zeros((cout,), jnp.float32)
        params.append((w, b, gamma, beta))
    return params


@functools.partial(jax.jit, static_argnames=("hierarchical",))
def simple_3dcnn_encoder(x, params, hierarchical=False):
    """x: NCDHW. Returns NCDHW output(s), matching the PyTorch module."""
    h = jnp.transpose(x, (0, 2, 3, 4, 1))                   # NCDHW -> NDHWC once
    out1 = conv3d_bn_relu_ndhwc(h, *params[0])
    out2 = conv3d_bn_relu_ndhwc(out1, *params[1])
    out3 = conv3d_bn_relu_ndhwc(out2, *params[2])
    to_ncdhw = lambda t: jnp.transpose(t, (0, 4, 1, 2, 3))
    if hierarchical:
        return [to_ncdhw(out1), to_ncdhw(out2), to_ncdhw(out3)]
    return to_ncdhw(out3)


if __name__ == "__main__":
    key = jax.random.PRNGKey(0)
    key, kx = jax.random.split(key)
    # Small input consistent with the module: N=2, in_channels=1, D=H=W=8 (NCDHW).
    x = jax.random.normal(kx, (2, 1, 8, 8, 8), jnp.float32)
    params = init_params(key, in_channels=1, base_channels=64)

    out = simple_3dcnn_encoder(x, params, hierarchical=False)
    out = jax.block_until_ready(out)
    assert out.shape == (2, 256, 1, 1, 1), out.shape
    assert out.dtype == jnp.float32

    outs = simple_3dcnn_encoder(x, params, hierarchical=True)
    outs = jax.block_until_ready(outs)
    assert outs[0].shape == (2, 64, 4, 4, 4)
    assert outs[1].shape == (2, 128, 2, 2, 2)
    assert outs[2].shape == (2, 256, 1, 1, 1)
    print("KERNEL_OK")
</pallas_src>

<mosaic_0001>
module attributes {stable_mosaic.version = 11 : i64} {
  func.func @fused_conv_bn_relu_kernel(%arg0: i32, %arg1: memref<128x27xbf16, #tpu.memory_space<vmem>>, %arg2: memref<27x64xbf16, #tpu.memory_space<vmem>>, %arg3: memref<1x64xf32, #tpu.memory_space<vmem>>, %arg4: memref<1x64xf32, #tpu.memory_space<vmem>>, %arg5: memref<1x64xf32, #tpu.memory_space<vmem>>, %arg6: memref<128x64xf32, #tpu.memory_space<vmem>>) attributes {dimension_semantics = [#tpu.dimension_semantics<parallel>], iteration_bounds = array<i64: 1>, scalar_prefetch = 0 : i64, scratch_operands = 0 : i64, tpu.core_type = #tpu.core_type<tc>, window_params = [{pipeline_mode = #tpu.pipeline_mode<synchronous>, transform_indices = @transform_0, window_bounds = array<i64: 128, 27>}, {transform_indices = @transform_1, window_bounds = array<i64: 27, 64>}, {transform_indices = @transform_2, window_bounds = array<i64: 1, 64>}, {transform_indices = @transform_3, window_bounds = array<i64: 1, 64>}, {transform_indices = @transform_4, window_bounds = array<i64: 1, 64>}, {transform_indices = @transform_5, window_bounds = array<i64: 128, 64>}]} {
    %c0 = arith.constant 0 : index
    %c0_0 = arith.constant 0 : index
    %0 = vector.load %arg1[%c0, %c0_0] : memref<128x27xbf16, #tpu.memory_space<vmem>>, vector<128x27xbf16>
    %c0_1 = arith.constant 0 : index
    %c0_2 = arith.constant 0 : index
    %1 = vector.load %arg2[%c0_1, %c0_2] : memref<27x64xbf16, #tpu.memory_space<vmem>>, vector<27x64xbf16>
    %cst = arith.constant dense<0.000000e+00> : vector<128x64xf32>
    %2 = tpu.matmul %0, %1, %cst {dimension_numbers = #tpu.dot_dimension_numbers<[1], [0], [0], [1], [0, 0, 1, 1], [], []>} : vector<128x27xbf16>, vector<27x64xbf16>, vector<128x64xf32> -> vector<128x64xf32>
    %c0_3 = arith.constant 0 : index
    %c0_4 = arith.constant 0 : index
    %3 = vector.load %arg3[%c0_3, %c0_4] : memref<1x64xf32, #tpu.memory_space<vmem>>, vector<1x64xf32>
    %4 = vector.broadcast %3 : vector<1x64xf32> to vector<128x64xf32>
    %5 = arith.addf %2, %4 : vector<128x64xf32>
    %cst_5 = arith.constant dense<0.000000e+00> : vector<64xf32>
    %6 = vector.multi_reduction <add>, %5, %cst_5 [0] : vector<128x64xf32> to vector<64xf32>
    %7 = vector.shape_cast %6 : vector<64xf32> to vector<1x64xf32>
    %cst_6 = arith.constant 7.812500e-03 : f32
    %8 = vector.broadcast %cst_6 : f32 to vector<1x64xf32>
    %9 = arith.mulf %7, %8 : vector<1x64xf32>
    %10 = vector.broadcast %9 : vector<1x64xf32> to vector<128x64xf32>
    %11 = arith.subf %5, %10 : vector<128x64xf32>
    %12 = arith.mulf %11, %11 : vector<128x64xf32>
    %cst_7 = arith.constant dense<0.000000e+00> : vector<64xf32>
    %13 = vector.multi_reduction <add>, %12, %cst_7 [0] : vector<128x64xf32> to vector<64xf32>
    %14 = vector.shape_cast %13 : vector<64xf32> to vector<1x64xf32>
    %cst_8 = arith.constant 7.812500e-03 : f32
    %15 = vector.broadcast %cst_8 : f32 to vector<1x64xf32>
    %16 = arith.mulf %14, %15 : vector<1x64xf32>
    %c0_9 = arith.constant 0 : index
    %c0_10 = arith.constant 0 : index
    %17 = vector.load %arg4[%c0_9, %c0_10] : memref<1x64xf32, #tpu.memory_space<vmem>>, vector<1x64xf32>
    %cst_11 = arith.constant 9.99999974E-6 : f32
    %18 = vector.broadcast %cst_11 : f32 to vector<1x64xf32>
    %19 = arith.addf %16, %18 : vector<1x64xf32>
    %20 = math.rsqrt %19 : vector<1x64xf32>
    %21 = arith.mulf %17, %20 : vector<1x64xf32>
    %22 = vector.broadcast %21 : vector<1x64xf32> to vector<128x64xf32>
    %23 = arith.mulf %11, %22 : vector<128x64xf32>
    %c0_12 = arith.constant 0 : index
    %c0_13 = arith.constant 0 : index
    %24 = vector.load %arg5[%c0_12, %c0_13] : memref<1x64xf32, #tpu.memory_space<vmem>>, vector<1x64xf32>
    %25 = vector.broadcast %24 : vector<1x64xf32> to vector<128x64xf32>
    %26 = arith.addf %23, %25 : vector<128x64xf32>
    %cst_14 = arith.constant 0.000000e+00 : f32
    %27 = vector.broadcast %cst_14 : f32 to vector<128x64xf32>
    %28 = arith.maximumf %26, %27 : vector<128x64xf32>
    %c0_15 = arith.constant 0 : index
    %c0_16 = arith.constant 0 : index
    %29 = vector.load %arg6[%c0_15, %c0_16] : memref<128x64xf32, #tpu.memory_space<vmem>>, vector<128x64xf32>
    tpu.vector_store %arg6[%c0_15, %c0_16], %28 {strides = array<i32>} : memref<128x64xf32, #tpu.memory_space<vmem>>, vector<128x64xf32>,
    return
  }
  func.func @transform_0(%arg0: i32) -> (i32, i32) {
    %c0_i32 = arith.constant 0 : i32
    %c0_i32_0 = arith.constant 0 : i32
    %c0_i32_1 = arith.constant 0 : i32
    return %c0_i32, %c0_i32_0 : i32, i32
  }
  func.func @transform_1(%arg0: i32) -> (i32, i32) {
    %c0_i32 = arith.constant 0 : i32
    %c0_i32_0 = arith.constant 0 : i32
    return %c0_i32, %arg0 : i32, i32
  }
  func.func @transform_2(%arg0: i32) -> (i32, i32) {
    %c0_i32 = arith.constant 0 : i32
    %c0_i32_0 = arith.constant 0 : i32
    return %c0_i32, %arg0 : i32, i32
  }
  func.func @transform_3(%arg0: i32) -> (i32, i32) {
    %c0_i32 = arith.constant 0 : i32
    %c0_i32_0 = arith.constant 0 : i32
    return %c0_i32, %arg0 : i32, i32
  }
  func.func @transform_4(%arg0: i32) -> (i32, i32) {
    %c0_i32 = arith.constant 0 : i32
    %c0_i32_0 = arith.constant 0 : i32
    return %c0_i32, %arg0 : i32, i32
  }
  func.func @transform_5(%arg0: i32) -> (i32, i32) {
    %c0_i32 = arith.constant 0 : i32
    %c0_i32_0 = arith.constant 0 : i32
    return %c0_i32, %arg0 : i32, i32
  }
}

module attributes {stable_mosaic.version = 11 : i64} {
  func.func @fused_conv_bn_relu_kernel(%arg0: i32, %arg1: memref<16x1728xbf16, #tpu.memory_space<vmem>>, %arg2: memref<1728x128xbf16, #tpu.memory_space<vmem>>, %arg3: memref<1x128xf32, #tpu.memory_space<vmem>>, %arg4: memref<1x128xf32, #tpu.memory_space<vmem>>, %arg5: memref<1x128xf32, #tpu.memory_space<vmem>>, %arg6: memref<16x128xf32, #tpu.memory_space<vmem>>) attributes {dimension_semantics = [#tpu.dimension_semantics<parallel>], iteration_bounds = array<i64: 1>, scalar_prefetch = 0 : i64, scratch_operands = 0 : i64, tpu.core_type = #tpu.core_type<tc>, window_params = [{pipeline_mode = #tpu.pipeline_mode<synchronous>, transform_indices = @transform_0, window_bounds = array<i64: 16, 1728>}, {transform_indices = @transform_1, window_bounds = array<i64: 1728, 128>}, {transform_indices = @transform_2, window_bounds = array<i64: 1, 128>}, {transform_indices = @transform_3, window_bounds = array<i64: 1, 128>}, {transform_indices = @transform_4, window_bounds = array<i64: 1, 128>}, {transform_indices = @transform_5, window_bounds = array<i64: 16, 128>}]} {
    %c0 = arith.constant 0 : index
    %c0_0 = arith.constant 0 : index
    %0 = vector.load %arg1[%c0, %c0_0] : memref<16x1728xbf16, #tpu.memory_space<vmem>>, vector<16x1728xbf16>
    %c0_1 = arith.constant 0 : index
    %c0_2 = arith.constant 0 : index
    %1 = vector.load %arg2[%c0_1, %c0_2] : memref<1728x128xbf16, #tpu.memory_space<vmem>>, vector<1728x128xbf16>
    %cst = arith.constant dense<0.000000e+00> : vector<16x128xf32>
    %2 = tpu.matmul %0, %1, %cst {dimension_numbers = #tpu.dot_dimension_numbers<[1], [0], [0], [1], [0, 0, 1, 1], [], []>} : vector<16x1728xbf16>, vector<1728x128xbf16>, vector<16x128xf32> -> vector<16x128xf32>
    %c0_3 = arith.constant 0 : index
    %c0_4 = arith.constant 0 : index
    %3 = vector.load %arg3[%c0_3, %c0_4] : memref<1x128xf32, #tpu.memory_space<vmem>>, vector<1x128xf32>
    %4 = vector.broadcast %3 : vector<1x128xf32> to vector<16x128xf32>
    %5 = arith.addf %2, %4 : vector<16x128xf32>
    %cst_5 = arith.constant dense<0.000000e+00> : vector<128xf32>
    %6 = vector.multi_reduction <add>, %5, %cst_5 [0] : vector<16x128xf32> to vector<128xf32>
    %7 = vector.shape_cast %6 : vector<128xf32> to vector<1x128xf32>
    %cst_6 = arith.constant 6.250000e-02 : f32
    %8 = vector.broadcast %cst_6 : f32 to vector<1x128xf32>
    %9 = arith.mulf %7, %8 : vector<1x128xf32>
    %10 = vector.broadcast %9 : vector<1x128xf32> to vector<16x128xf32>
    %11 = arith.subf %5, %10 : vector<16x128xf32>
    %12 = arith.mulf %11, %11 : vector<16x128xf32>
    %cst_7 = arith.constant dense<0.000000e+00> : vector<128xf32>
    %13 = vector.multi_reduction <add>, %12, %cst_7 [0] : vector<16x128xf32> to vector<128xf32>
    %14 = vector.shape_cast %13 : vector<128xf32> to vector<1x128xf32>
    %cst_8 = arith.constant 6.250000e-02 : f32
    %15 = vector.broadcast %cst_8 : f32 to vector<1x128xf32>
    %16 = arith.mulf %14, %15 : vector<1x128xf32>
    %c0_9 = arith.constant 0 : index
    %c0_10 = arith.constant 0 : index
    %17 = vector.load %arg4[%c0_9, %c0_10] : memref<1x128xf32, #tpu.memory_space<vmem>>, vector<1x128xf32>
    %cst_11 = arith.constant 9.99999974E-6 : f32
    %18 = vector.broadcast %cst_11 : f32 to vector<1x128xf32>
    %19 = arith.addf %16, %18 : vector<1x128xf32>
    %20 = math.rsqrt %19 : vector<1x128xf32>
    %21 = arith.mulf %17, %20 : vector<1x128xf32>
    %22 = vector.broadcast %21 : vector<1x128xf32> to vector<16x128xf32>
    %23 = arith.mulf %11, %22 : vector<16x128xf32>
    %c0_12 = arith.constant 0 : index
    %c0_13 = arith.constant 0 : index
    %24 = vector.load %arg5[%c0_12, %c0_13] : memref<1x128xf32, #tpu.memory_space<vmem>>, vector<1x128xf32>
    %25 = vector.broadcast %24 : vector<1x128xf32> to vector<16x128xf32>
    %26 = arith.addf %23, %25 : vector<16x128xf32>
    %cst_14 = arith.constant 0.000000e+00 : f32
    %27 = vector.broadcast %cst_14 : f32 to vector<16x128xf32>
    %28 = arith.maximumf %26, %27 : vector<16x128xf32>
    %c0_15 = arith.constant 0 : index
    %c0_16 = arith.constant 0 : index
    %29 = vector.load %arg6[%c0_15, %c0_16] : memref<16x128xf32, #tpu.memory_space<vmem>>, vector<16x128xf32>
    tpu.vector_store %arg6[%c0_15, %c0_16], %28 {strides = array<i32>} : memref<16x128xf32, #tpu.memory_space<vmem>>, vector<16x128xf32>,
    return
  }
  func.func @transform_0(%arg0: i32) -> (i32, i32) {
    %c0_i32 = arith.constant 0 : i32
    %c0_i32_0 = arith.constant 0 : i32
    %c0_i32_1 = arith.constant 0 : i32
    return %c0_i32, %c0_i32_0 : i32, i32
  }
  func.func @transform_1(%arg0: i32) -> (i32, i32) {
    %c0_i32 = arith.constant 0 : i32
    %c0_i32_0 = arith.constant 0 : i32
    return %c0_i32, %arg0 : i32, i32
  }
  func.func @transform_2(%arg0: i32) -> (i32, i32) {
    %c0_i32 = arith.constant 0 : i32
    %c0_i32_0 = arith.constant 0 : i32
    return %c0_i32, %arg0 : i32, i32
  }
  func.func @transform_3(%arg0: i32) -> (i32, i32) {
    %c0_i32 = arith.constant 0 : i32
    %c0_i32_0 = arith.constant 0 : i32
    return %c0_i32, %arg0 : i32, i32
  }
  func.func @transform_4(%arg0: i32) -> (i32, i32) {
    %c0_i32 = arith.constant 0 : i32
    %c0_i32_0 = arith.constant 0 : i32
    return %c0_i32, %arg0 : i32, i32
  }
  func.func @transform_5(%arg0: i32) -> (i32, i32) {
    %c0_i32 = arith.constant 0 : i32
    %c0_i32_0 = arith.constant 0 : i32
    return %c0_i32, %arg0 : i32, i32
  }
}

module attributes {stable_mosaic.version = 11 : i64} {
  func.func @fused_conv_bn_relu_kernel(%arg0: i32, %arg1: memref<2x3456xbf16, #tpu.memory_space<vmem>>, %arg2: memref<3456x128xbf16, #tpu.memory_space<vmem>>, %arg3: memref<1x128xf32, #tpu.memory_space<vmem>>, %arg4: memref<1x128xf32, #tpu.memory_space<vmem>>, %arg5: memref<1x128xf32, #tpu.memory_space<vmem>>, %arg6: memref<2x128xf32, #tpu.memory_space<vmem>>) attributes {dimension_semantics = [#tpu.dimension_semantics<parallel>], iteration_bounds = array<i64: 2>, scalar_prefetch = 0 : i64, scratch_operands = 0 : i64, tpu.core_type = #tpu.core_type<tc>, window_params = [{pipeline_mode = #tpu.pipeline_mode<synchronous>, transform_indices = @transform_0, window_bounds = array<i64: 2, 3456>}, {transform_indices = @transform_1, window_bounds = array<i64: 3456, 128>}, {transform_indices = @transform_2, window_bounds = array<i64: 1, 128>}, {transform_indices = @transform_3, window_bounds = array<i64: 1, 128>}, {transform_indices = @transform_4, window_bounds = array<i64: 1, 128>}, {transform_indices = @transform_5, window_bounds = array<i64: 2, 128>}]} {
    %c0 = arith.constant 0 : index
    %c0_0 = arith.constant 0 : index
    %0 = vector.load %arg1[%c0, %c0_0] : memref<2x3456xbf16, #tpu.memory_space<vmem>>, vector<2x3456xbf16>
    %c0_1 = arith.constant 0 : index
    %c0_2 = arith.constant 0 : index
    %1 = vector.load %arg2[%c0_1, %c0_2] : memref<3456x128xbf16, #tpu.memory_space<vmem>>, vector<3456x128xbf16>
    %cst = arith.constant dense<0.000000e+00> : vector<2x128xf32>
    %2 = tpu.matmul %0, %1, %cst {dimension_numbers = #tpu.dot_dimension_numbers<[1], [0], [0], [1], [0, 0, 1, 1], [], []>} : vector<2x3456xbf16>, vector<3456x128xbf16>, vector<2x128xf32> -> vector<2x128xf32>
    %c0_3 = arith.constant 0 : index
    %c0_4 = arith.constant 0 : index
    %3 = vector.load %arg3[%c0_3, %c0_4] : memref<1x128xf32, #tpu.memory_space<vmem>>, vector<1x128xf32>
    %4 = vector.broadcast %3 : vector<1x128xf32> to vector<2x128xf32>
    %5 = arith.addf %2, %4 : vector<2x128xf32>
    %cst_5 = arith.constant dense<0.000000e+00> : vector<128xf32>
    %6 = vector.multi_reduction <add>, %5, %cst_5 [0] : vector<2x128xf32> to vector<128xf32>
    %7 = vector.shape_cast %6 : vector<128xf32> to vector<1x128xf32>
    %cst_6 = arith.constant 5.000000e-01 : f32
    %8 = vector.broadcast %cst_6 : f32 to vector<1x128xf32>
    %9 = arith.mulf %7, %8 : vector<1x128xf32>
    %10 = vector.broadcast %9 : vector<1x128xf32> to vector<2x128xf32>
    %11 = arith.subf %5, %10 : vector<2x128xf32>
    %12 = arith.mulf %11, %11 : vector<2x128xf32>
    %cst_7 = arith.constant dense<0.000000e+00> : vector<128xf32>
    %13 = vector.multi_reduction <add>, %12, %cst_7 [0] : vector<2x128xf32> to vector<128xf32>
    %14 = vector.shape_cast %13 : vector<128xf32> to vector<1x128xf32>
    %cst_8 = arith.constant 5.000000e-01 : f32
    %15 = vector.broadcast %cst_8 : f32 to vector<1x128xf32>
    %16 = arith.mulf %14, %15 : vector<1x128xf32>
    %c0_9 = arith.constant 0 : index
    %c0_10 = arith.constant 0 : index
    %17 = vector.load %arg4[%c0_9, %c0_10] : memref<1x128xf32, #tpu.memory_space<vmem>>, vector<1x128xf32>
    %cst_11 = arith.constant 9.99999974E-6 : f32
    %18 = vector.broadcast %cst_11 : f32 to vector<1x128xf32>
    %19 = arith.addf %16, %18 : vector<1x128xf32>
    %20 = math.rsqrt %19 : vector<1x128xf32>
    %21 = arith.mulf %17, %20 : vector<1x128xf32>
    %22 = vector.broadcast %21 : vector<1x128xf32> to vector<2x128xf32>
    %23 = arith.mulf %11, %22 : vector<2x128xf32>
    %c0_12 = arith.constant 0 : index
    %c0_13 = arith.constant 0 : index
    %24 = vector.load %arg5[%c0_12, %c0_13] : memref<1x128xf32, #tpu.memory_space<vmem>>, vector<1x128xf32>
    %25 = vector.broadcast %24 : vector<1x128xf32> to vector<2x128xf32>
    %26 = arith.addf %23, %25 : vector<2x128xf32>
    %cst_14 = arith.constant 0.000000e+00 : f32
    %27 = vector.broadcast %cst_14 : f32 to vector<2x128xf32>
    %28 = arith.maximumf %26, %27 : vector<2x128xf32>
    %c0_15 = arith.constant 0 : index
    %c0_16 = arith.constant 0 : index
    %29 = vector.load %arg6[%c0_15, %c0_16] : memref<2x128xf32, #tpu.memory_space<vmem>>, vector<2x128xf32>
    tpu.vector_store %arg6[%c0_15, %c0_16], %28 {strides = array<i32>} : memref<2x128xf32, #tpu.memory_space<vmem>>, vector<2x128xf32>,
    return
  }
  func.func @transform_0(%arg0: i32) -> (i32, i32) {
    %c0_i32 = arith.constant 0 : i32
    %c0_i32_0 = arith.constant 0 : i32
    %c0_i32_1 = arith.constant 0 : i32
    return %c0_i32, %c0_i32_0 : i32, i32
  }
  func.func @transform_1(%arg0: i32) -> (i32, i32) {
    %c0_i32 = arith.constant 0 : i32
    %c0_i32_0 = arith.constant 0 : i32
    return %c0_i32, %arg0 : i32, i32
  }
  func.func @transform_2(%arg0: i32) -> (i32, i32) {
    %c0_i32 = arith.constant 0 : i32
    %c0_i32_0 = arith.constant 0 : i32
    return %c0_i32, %arg0 : i32, i32
  }
  func.func @transform_3(%arg0: i32) -> (i32, i32) {
    %c0_i32 = arith.constant 0 : i32
    %c0_i32_0 = arith.constant 0 : i32
    return %c0_i32, %arg0 : i32, i32
  }
  func.func @transform_4(%arg0: i32) -> (i32, i32) {
    %c0_i32 = arith.constant 0 : i32
    %c0_i32_0 = arith.constant 0 : i32
    return %c0_i32, %arg0 : i32, i32
  }
  func.func @transform_5(%arg0: i32) -> (i32, i32) {
    %c0_i32 = arith.constant 0 : i32
    %c0_i32_0 = arith.constant 0 : i32
    return %c0_i32, %arg0 : i32, i32
  }
}

</mosaic_0001>

<llo_original>
// kernel: simple_3dcnn_encoder.3
$region0: #{simple_3dcnn_encoder.3}
  #allocation0 [shape = 'u32[]', space=smem, size = 0x4, offset = 0x4, fixed_abs, tag = 'smem constant byte address 0x4 - core index']
  #allocation1 [shape = 'u32[72,128]{1,0:T(1,128)}', space=vmem, size = 0x9000, scoped, tag = 'internal scratch']
  %s0 = inlined_call_operand.vmem [shape: bf16[128,27], index: 0, kind: input, shape index: {}]
  %s1 = inlined_call_operand.vmem [shape: bf16[27,64], index: 1, kind: input, shape index: {}]
  %s2 = inlined_call_operand.hbm [shape: f32[1,64], index: 2, kind: input, shape index: {}]
  %s3 = inlined_call_operand.hbm [shape: f32[1,64], index: 3, kind: input, shape index: {}]
  %s4 = inlined_call_operand.hbm [shape: f32[1,64], index: 4, kind: input, shape index: {}]
  %s5 = inlined_call_operand.vmem [shape: f32[128,64], index: 5, kind: output, shape index: {}]
  %s6 = sld [smem:[#allocation0]]
  $region42: #{simple_3dcnn_encoder.3} parent=0
    _
  %s8 = ssub.s32 1, %s6
  %s9 = scalar_select 0, %s8, %s6
  $region1: #{simple_3dcnn_encoder.3} parent=0
    #allocation2 [shape = 'u8[512]{0}', space=vmem, size = 0x400, scoped, tag = 'input window, operand 2, single buffered']
    #allocation3 [shape = 's32[1]{0}', space=sflag, size = 0x4, scoped, tag = 'scoped memory for simple_3dcnn_encoder.3']
    #allocation4 [shape = 'u8[512]{0}', space=vmem, size = 0x400, scoped, tag = 'input window, operand 3, single buffered']
    #allocation5 [shape = 's32[1]{0}', space=sflag, size = 0x4, scoped, tag = 'scoped memory for simple_3dcnn_encoder.3']
    #allocation6 [shape = 'u8[512]{0}', space=vmem, size = 0x400, scoped, tag = 'input window, operand 4, single buffered']
    %10 = vsyncpa [#allocation3], 0
    %11 = vsyncpa [#allocation5], 0
    // Predicated region
    $region2: #{simple_3dcnn_encoder.3} parent=1 // pred_check
      _
    $region3: #{simple_3dcnn_encoder.3} parent=1 // pred_check_branch
      %13 = sbr.rel (0) target = $region5
    $region4: #{simple_3dcnn_encoder.3} parent=1 // pred_region
      _
    $region5: #{simple_3dcnn_encoder.3} parent=1 // pred_fallthru
      _
    // Predicated region
    $region6: #{simple_3dcnn_encoder.3} parent=1 // pred_check
      _
    $region7: #{simple_3dcnn_encoder.3} parent=1 // pred_check_branch
      %15 = sbr.rel (0) target = $region9
    $region8: #{simple_3dcnn_encoder.3} parent=1 // pred_region
      _
    $region9: #{simple_3dcnn_encoder.3} parent=1 // pred_fallthru
      _
    // Predicated region
    $region10: #{simple_3dcnn_encoder.3} parent=1 // pred_check
      _
    $region11: #{simple_3dcnn_encoder.3} parent=1 // pred_check_branch
      %17 = sbr.rel (0) target = $region13
    $region12: #{simple_3dcnn_encoder.3} parent=1 // pred_region
      %19 = vsyncadd [#allocation3], 0
      %s21 = sshll.u32 %s2, 4
      %s22 = int_to_ptr.hbm [resolvable:$true] %s21
      %s23 = sshll.u32 [#allocation2], 4
      %s24 = int_to_ptr.vmem [resolvable:$true] %s23
      %26 = dma.hbm_to_vmem [thread:$0]  %s22, 16, %s24, [#allocation3]
    $region13: #{simple_3dcnn_encoder.3} parent=1 // pred_fallthru
      _
    // Predicated region
    $region14: #{simple_3dcnn_encoder.3} parent=1 // pred_check
      _
    $region15: #{simple_3dcnn_encoder.3} parent=1 // pred_check_branch
      %28 = sbr.rel (0) target = $region17
    $region16: #{simple_3dcnn_encoder.3} parent=1 // pred_region
      %30 = vsyncadd [#allocation5], 0
      %s32 = sshll.u32 %s3, 4
      %s33 = int_to_ptr.hbm [resolvable:$true] %s32
      %s34 = sshll.u32 [#allocation4], 4
      %s35 = int_to_ptr.vmem [resolvable:$true] %s34
      %37 = dma.hbm_to_vmem [thread:$0]  %s33, 16, %s35, [#allocation5]
    $region17: #{simple_3dcnn_encoder.3} parent=1 // pred_fallthru
      _
    // Predicated region
    $region18: #{simple_3dcnn_encoder.3} parent=1 // pred_check
      _
    $region19: #{simple_3dcnn_encoder.3} parent=1 // pred_check_branch
      %39 = sbr.rel (0) target = $region21
    $region20: #{simple_3dcnn_encoder.3} parent=1 // pred_region
      %41 = vsyncadd [#allocation5], 0
      %s43 = sshll.u32 %s4, 4
      %s44 = int_to_ptr.hbm [resolvable:$true] %s43
      %s45 = sshll.u32 [#allocation6], 4
      %s46 = int_to_ptr.vmem [resolvable:$true] %s45
      %48 = dma.hbm_to_vmem [thread:$0]  %s44, 16, %s46, [#allocation5]
    $region21: #{simple_3dcnn_encoder.3} parent=1 // pred_fallthru
      _
    // Predicated region
    $region22: #{simple_3dcnn_encoder.3} parent=1 // pred_check
      _
    $region23: #{simple_3dcnn_encoder.3} parent=1 // pred_check_branch
      %50 = sbr.rel (0) target = $region25
    $region24: #{simple_3dcnn_encoder.3} parent=1 // pred_region
      %52 = dma.done [#allocation3], 16
    $region25: #{simple_3dcnn_encoder.3} parent=1 // pred_fallthru
      _
    // Predicated region
    $region26: #{simple_3dcnn_encoder.3} parent=1 // pred_check
      _
    $region27: #{simple_3dcnn_encoder.3} parent=1 // pred_check_branch
      %54 = sbr.rel (0) target = $region29
    $region28: #{simple_3dcnn_encoder.3} parent=1 // pred_region
      %56 = dma.done [#allocation5], 16
    $region29: #{simple_3dcnn_encoder.3} parent=1 // pred_fallthru
      _
    // Predicated region
    $region30: #{simple_3dcnn_encoder.3} parent=1 // pred_check
      _
    $region31: #{simple_3dcnn_encoder.3} parent=1 // pred_check_branch
      %58 = sbr.rel (0) target = $region33
    $region32: #{simple_3dcnn_encoder.3} parent=1 // pred_region
      %60 = dma.done [#allocation5], 16
    $region33: #{simple_3dcnn_encoder.3} parent=1 // pred_fallthru
      _
    %v62 = vld [vmem:[%s0] sm:$0xf]
    %v63 = vld [vmem:[%s0 + $0x4] sm:$0xf]
    %v64 = vld [vmem:[%s0 + $0x8] sm:$0xf]
    %v65 = vld [vmem:[%s0 + $0xc] sm:$0xf]
    %v66 = vld [vmem:[%s0 + $0x10] sm:$0xf]
    %v67 = vld [vmem:[%s0 + $0x14] sm:$0xf]
    %v68 = vld [vmem:[%s0 + $0x18] sm:$0xf]
    %v69 = vld [vmem:[%s0 + $0x1c] sm:$0xf]
    %v70 = vld [vmem:[%s0 + $0x20] sm:$0xf]
    %v71 = vld [vmem:[%s0 + $0x24] sm:$0xf]
    %v72 = vld [vmem:[%s0 + $0x28] sm:$0xf]
    %v73 = vld [vmem:[%s0 + $0x2c] sm:$0xf]
    %v74 = vld [vmem:[%s0 + $0x30] sm:$0xf]
    %v75 = vld [vmem:[%s0 + $0x34] sm:$0xf]
    %v76 = vld [vmem:[%s0 + $0x38] sm:$0xf]
    %v77 = vld [vmem:[%s0 + $0x3c] sm:$0xf]
    %v78 = vld [vmem:[%s1] sm:$0xf]
    %v79 = vld [vmem:[%s1 + $0x4] sm:$0xf]
    %v80 = vld [vmem:[%s1 + $0x8] sm:$0xf]
    %v81 = vld [vmem:[%s1 + $0xc] sm:$0x3]
    %v82 = vld [vmem:[#allocation2] sm:$0x1]
    %v84 = vperm.slane %v82, 0
    %v102 = vunpack.c.l.b16 %v62
    %v103 = vunpack.c.l.b16 %v63
    %v104 = vunpack.c.l.b16 %v64
    %v105 = vunpack.c.l.b16 %v65
    %v106 = vunpack.c.l.b16 %v66
    %v107 = vunpack.c.l.b16 %v67
    %v108 = vunpack.c.l.b16 %v68
    %v109 = vunpack.c.l.b16 %v69
    %v110 = vunpack.c.l.b16 %v70
    %v111 = vunpack.c.l.b16 %v71
    %v112 = vunpack.c.l.b16 %v72
    %v113 = vunpack.c.l.b16 %v73
    %v114 = vunpack.c.l.b16 %v74
    %v115 = vunpack.c.l.b16 %v75
    %v116 = vunpack.c.l.b16 %v76
    %v117 = vunpack.c.l.b16 %v77
    %v118 = vpack.c.b16 %v103, %v102
    %v119 = vpack.c.b16 %v105, %v104
    %v120 = vpack.c.b16 %v107, %v106
    %v121 = vpack.c.b16 %v109, %v108
    %v122 = vpack.c.b16 %v111, %v110
    %v123 = vpack.c.b16 %v113, %v112
    %v124 = vpack.c.b16 %v115, %v114
    %v125 = vpack.c.b16 %v117, %v116
    %v130 = vunpack.c.l.b16 %v78
    %v131 = vunpack.c.l.b16 %v79
    %v132 = vunpack.c.l.b16 %v80
    %v133 = vunpack.c.l.b16 %v81
    %v134 = vpack.c.b16 %v131, %v130
    %v135 = vpack.c.b16 %v133, %v132
    %vm137 = vcmask 220160
    %v139 = vsel %vm137, %v118, 0
    %v142 = vsel %vm137, %v119, 0
    %v145 = vsel %vm137, %v120, 0
    %v148 = vsel %vm137, %v121, 0
    %v151 = vsel %vm137, %v122, 0
    %v154 = vsel %vm137, %v123, 0
    %v157 = vsel %vm137, %v124, 0
    %v160 = vsel %vm137, %v125, 0
    %vm162 = vcmask 1044480
    %vm163 = vcmask 1045504
    %v164 = vsel %vm162, 4294967295, 65535
    %v165 = vsel %vm163, %v164, 0
    %v167 = vand.u32 %v135, %v165
    %169 = vmatpush.bf16.msra.mxu0 0
    %170 = vmatpush.bf16.msra.mxu0 0
    %171 = vmatpush.bf16.msra.mxu0 0
    %172 = vmatpush.bf16.msra.mxu0 0
    %173 = vmatpush.bf16.msra.mxu0 0
    %174 = vmatpush.bf16.msra.mxu0 0
    %175 = vmatpush.bf16.msra.mxu0 %v167
    %176 = vmatpush.bf16.msra.mxu0 %v134
    %177 = vmatmul.bf16.gmra.mxu0 %v139
    %v178 = vpop.f32.mrf.mxu0
    %v179 = vadd.f32 %v84, %v178
    %v180 = vpop.f32.mrf.mxu0
    %v181 = vadd.f32 %v84, %v180
    %182 = vmatmul.bf16.gmra.mxu0 %v142
    %v183 = vpop.f32.mrf.mxu0
    %v184 = vadd.f32 %v84, %v183
    %v185 = vpop.f32.mrf.mxu0
    %v186 = vadd.f32 %v84, %v185
    %187 = vmatmul.bf16.gmra.mxu0 %v145
    %v188 = vpop.f32.mrf.mxu0
    %v189 = vadd.f32 %v84, %v188
    %v190 = vpop.f32.mrf.mxu0
    %v191 = vadd.f32 %v84, %v190
    %192 = vmatmul.bf16.gmra.mxu0 %v148
    %v193 = vpop.f32.mrf.mxu0
    %v194 = vadd.f32 %v84, %v193
    %v195 = vpop.f32.mrf.mxu0
    %v196 = vadd.f32 %v84, %v195
    %197 = vmatmul.bf16.gmra.mxu0 %v151
    %v198 = vpop.f32.mrf.mxu0
    %v199 = vadd.f32 %v84, %v198
    %v200 = vpop.f32.mrf.mxu0
    %v201 = vadd.f32 %v84, %v200
    %202 = vmatmul.bf16.gmra.mxu0 %v154
    %v203 = vpop.f32.mrf.mxu0
    %v204 = vadd.f32 %v84, %v203
    %v205 = vpop.f32.mrf.mxu0
    %v206 = vadd.f32 %v84, %v205
    %207 = vmatmul.bf16.gmra.mxu0 %v157
    %v208 = vpop.f32.mrf.mxu0
    %v209 = vadd.f32 %v84, %v208
    %v210 = vpop.f32.mrf.mxu0
    %v211 = vadd.f32 %v84, %v210
    %212 = vmatmul.bf16.gmra.mxu0 %v160
    %v213 = vpop.f32.mrf.mxu0
    %v214 = vadd.f32 %v84, %v213
    %v215 = vpop.f32.mrf.mxu0
    %v216 = vadd.f32 %v84, %v215
    %217 = vdwg.mxu0
    %vm218 = vcmask 523264
    %v219 = vsel %vm218, %v179, 0.0
    %v220 = vsel %vm218, %v181, 0.0
    %v221 = vadd.f32 %v219, %v220
    %v222 = vsel %vm218, %v184, 0.0
    %v223 = vadd.f32 %v221, %v222
    %v224 = vsel %vm218, %v186, 0.0
    %v225 = vadd.f32 %v223, %v224
    %v226 = vsel %vm218, %v189, 0.0
    %v227 = vadd.f32 %v225, %v226
    %v228 = vsel %vm218, %v191, 0.0
    %v229 = vadd.f32 %v227, %v228
    %v230 = vsel %vm218, %v194, 0.0
    %v231 = vadd.f32 %v229, %v230
    %v232 = vsel %vm218, %v196, 0.0
    %v233 = vadd.f32 %v231, %v232
    %v234 = vsel %vm218, %v199, 0.0
    %v235 = vadd.f32 %v233, %v234
    %v236 = vsel %vm218, %v201, 0.0
    %v237 = vadd.f32 %v235, %v236
    %v238 = vsel %vm218, %v204, 0.0
    %v239 = vadd.f32 %v237, %v238
    %v240 = vsel %vm218, %v206, 0.0
    %v241 = vadd.f32 %v239, %v240
    %v242 = vsel %vm218, %v209, 0.0
    %v243 = vadd.f32 %v241, %v242
    %v244 = vsel %vm218, %v211, 0.0
    %v245 = vadd.f32 %v243, %v244
    %v246 = vsel %vm218, %v214, 0.0
    %v247 = vadd.f32 %v245, %v246
    %v248 = vsel %vm218, %v216, 0.0
    %v249 = vadd.f32 %v247, %v248
    %v250 = vrot.slane %v249, 4
    %v251 = vadd.f32 %v249, %v250
    %v252 = vrot.slane %v251, 2
    %v253 = vadd.f32 %v251, %v252
    %v254 = vrot.slane %v253, 1
    %v255 = vadd.f32 %v253, %v254
    %v256 = vmul.f32 %v255, 0.0078125
    %v257 = vsub.f32 %v179, %v256
    %v258 = vsub.f32 %v181, %v256
    %v259 = vsub.f32 %v184, %v256
    %v260 = vsub.f32 %v186, %v256
    %v261 = vsub.f32 %v189, %v256
    %v262 = vsub.f32 %v191, %v256
    %v263 = vsub.f32 %v194, %v256
    %v264 = vsub.f32 %v196, %v256
    %v265 = vsub.f32 %v199, %v256
    %v266 = vsub.f32 %v201, %v256
    %v267 = vsub.f32 %v204, %v256
    %v268 = vsub.f32 %v206, %v256
    %v269 = vsub.f32 %v209, %v256
    %v270 = vsub.f32 %v211, %v256
    %v271 = vsub.f32 %v214, %v256
    %v272 = vsub.f32 %v216, %v256
    %v273 = vmul.f32 %v257, %v257
    %v274 = vmul.f32 %v258, %v258
    %v275 = vmul.f32 %v259, %v259
    %v276 = vmul.f32 %v260, %v260
    %v277 = vmul.f32 %v261, %v261
    %v278 = vmul.f32 %v262, %v262
    %v279 = vmul.f32 %v263, %v263
    %v280 = vmul.f32 %v264, %v264
    %v281 = vmul.f32 %v265, %v265
    %v282 = vmul.f32 %v266, %v266
    %v283 = vmul.f32 %v267, %v267
    %v284 = vmul.f32 %v268, %v268
    %v285 = vmul.f32 %v269, %v269
    %v286 = vmul.f32 %v270, %v270
    %v287 = vmul.f32 %v271, %v271
    %v288 = vmul.f32 %v272, %v272
    %v289 = vsel %vm218, %v273, 0.0
    %v290 = vsel %vm218, %v274, 0.0
    %v291 = vadd.f32 %v289, %v290
    %v292 = vsel %vm218, %v275, 0.0
    %v293 = vadd.f32 %v291, %v292
    %v294 = vsel %vm218, %v276, 0.0
    %v295 = vadd.f32 %v293, %v294
    %v296 = vsel %vm218, %v277, 0.0
    %v297 = vadd.f32 %v295, %v296
    %v298 = vsel %vm218, %v278, 0.0
    %v299 = vadd.f32 %v297, %v298
    %v300 = vsel %vm218, %v279, 0.0
    %v301 = vadd.f32 %v299, %v300
    %v302 = vsel %vm218, %v280, 0.0
    %v303 = vadd.f32 %v301, %v302
    %v304 = vsel %vm218, %v281, 0.0
    %v305 = vadd.f32 %v303, %v304
    %v306 = vsel %vm218, %v282, 0.0
    %v307 = vadd.f32 %v305, %v306
    %v308 = vsel %vm218, %v283, 0.0
    %v309 = vadd.f32 %v307, %v308
    %v310 = vsel %vm218, %v284, 0.0
    %v311 = vadd.f32 %v309, %v310
    %v312 = vsel %vm218, %v285, 0.0
    %v313 = vadd.f32 %v311, %v312
    %v314 = vsel %vm218, %v286, 0.0
    %v315 = vadd.f32 %v313, %v314
    %v316 = vsel %vm218, %v287, 0.0
    %v317 = vadd.f32 %v315, %v316
    %v318 = vsel %vm218, %v288, 0.0
    %v319 = vadd.f32 %v317, %v318
    %v320 = vrot.slane %v319, 4
    %v321 = vadd.f32 %v319, %v320
    %v322 = vrot.slane %v321, 2
    %v323 = vadd.f32 %v321, %v322
    %v324 = vrot.slane %v323, 1
    %v325 = vadd.f32 %v323, %v324
    %v326 = vmul.f32 %v325, 0.0078125
    %v327 = vld [vmem:[#allocation4] sm:$0x1]
    %v328 = vadd.f32 %v326, 1e-05
    %v329 = vrsqrt.pop %v328
    %v330 = vmul.f32 %v329, %v328
    %v331 = vmul.f32 %v330, %v329
    %v332 = vmul.f32 0.5, %v331
    %v333 = vsub.f32 1.5, %v332
    %v334 = vmul.f32 %v329, %v333
    %vm335 = vweird.f32 %v328
    %vm336 = vweird.f32 %v329
    %vm337 = vmor %vm335, %vm336
    %v338 = vsel %vm337, %v329, %v334
    %v339 = vmul.f32 %v327, %v338
    %v341 = vperm.slane %v339, 0
    %v343 = vmul.f32 %v257, %v341
    %v344 = vmul.f32 %v258, %v341
    %v345 = vmul.f32 %v259, %v341
    %v346 = vmul.f32 %v260, %v341
    %v347 = vmul.f32 %v261, %v341
    %v348 = vmul.f32 %v262, %v341
    %v349 = vmul.f32 %v263, %v341
    %v350 = vmul.f32 %v264, %v341
    %v351 = vmul.f32 %v265, %v341
    %v352 = vmul.f32 %v266, %v341
    %v353 = vmul.f32 %v267, %v341
    %v354 = vmul.f32 %v268, %v341
    %v355 = vmul.f32 %v269, %v341
    %v356 = vmul.f32 %v270, %v341
    %v357 = vmul.f32 %v271, %v341
    %v358 = vmul.f32 %v272, %v341
    %v359 = vld [vmem:[#allocation6] sm:$0x1]
    %v361 = vperm.slane %v359, 0
    %v363 = vadd.f32 %v343, %v361
    %v364 = vadd.f32 %v344, %v361
    %v365 = vadd.f32 %v345, %v361
    %v366 = vadd.f32 %v346, %v361
    %v367 = vadd.f32 %v347, %v361
    %v368 = vadd.f32 %v348, %v361
    %v369 = vadd.f32 %v349, %v361
    %v370 = vadd.f32 %v350, %v361
    %v371 = vadd.f32 %v351, %v361
    %v372 = vadd.f32 %v352, %v361
    %v373 = vadd.f32 %v353, %v361
    %v374 = vadd.f32 %v354, %v361
    %v375 = vadd.f32 %v355, %v361
    %v376 = vadd.f32 %v356, %v361
    %v377 = vadd.f32 %v357, %v361
    %v378 = vadd.f32 %v358, %v361
    %v379 = vmax.f32 %v363, 0.0
    %v380 = vmax.f32 %v364, 0.0
    %v381 = vmax.f32 %v365, 0.0
    %v382 = vmax.f32 %v366, 0.0
    %v383 = vmax.f32 %v367, 0.0
    %v384 = vmax.f32 %v368, 0.0
    %v385 = vmax.f32 %v369, 0.0
    %v386 = vmax.f32 %v370, 0.0
    %v387 = vmax.f32 %v371, 0.0
    %v388 = vmax.f32 %v372, 0.0
    %v389 = vmax.f32 %v373, 0.0
    %v390 = vmax.f32 %v374, 0.0
    %v391 = vmax.f32 %v375, 0.0
    %v392 = vmax.f32 %v376, 0.0
    %v393 = vmax.f32 %v377, 0.0
    %v394 = vmax.f32 %v378, 0.0
    %395 = vst.msk [vmem:[%s5] sm:$0xff] %vm218, %v379
    %396 = vst.msk [vmem:[%s5 + $0x8] sm:$0xff] %vm218, %v380
    %397 = vst.msk [vmem:[%s5 + $0x10] sm:$0xff] %vm218, %v381
    %398 = vst.msk [vmem:[%s5 + $0x18] sm:$0xff] %vm218, %v382
    %399 = vst.msk [vmem:[%s5 + $0x20] sm:$0xff] %vm218, %v383
    %400 = vst.msk [vmem:[%s5 + $0x28] sm:$0xff] %vm218, %v384
    %401 = vst.msk [vmem:[%s5 + $0x30] sm:$0xff] %vm218, %v385
    %402 = vst.msk [vmem:[%s5 + $0x38] sm:$0xff] %vm218, %v386
    %403 = vst.msk [vmem:[%s5 + $0x40] sm:$0xff] %vm218, %v387
    %404 = vst.msk [vmem:[%s5 + $0x48] sm:$0xff] %vm218, %v388
    %405 = vst.msk [vmem:[%s5 + $0x50] sm:$0xff] %vm218, %v389
    %406 = vst.msk [vmem:[%s5 + $0x58] sm:$0xff] %vm218, %v390
    %407 = vst.msk [vmem:[%s5 + $0x60] sm:$0xff] %vm218, %v391
    %408 = vst.msk [vmem:[%s5 + $0x68] sm:$0xff] %vm218, %v392
    %409 = vst.msk [vmem:[%s5 + $0x70] sm:$0xff] %vm218, %v393
    %410 = vst.msk [vmem:[%s5 + $0x78] sm:$0xff] %vm218, %v394
    // Predicated region
    $region34: #{simple_3dcnn_encoder.3} parent=1 // pred_check
      _
    $region35: #{simple_3dcnn_encoder.3} parent=1 // pred_check_branch
      %412 = sbr.rel (0) target = $region37
    $region36: #{simple_3dcnn_encoder.3} parent=1 // pred_region
      _
    $region37: #{simple_3dcnn_encoder.3} parent=1 // pred_fallthru
      _
    // Predicated region
    $region38: #{simple_3dcnn_encoder.3} parent=1 // pred_check
      _
    $region39: #{simple_3dcnn_encoder.3} parent=1 // pred_check_branch
      %414 = sbr.rel (0) target = $region41
    $region40: #{simple_3dcnn_encoder.3} parent=1 // pred_region
      _
    $region41: #{simple_3dcnn_encoder.3} parent=1 // pred_fallthru
      _
    %415 = vsyncpa [#allocation3], 1
    %416 = vsyncpa [#allocation5], 1

// kernel: simple_3dcnn_encoder.4
$region0: #{simple_3dcnn_encoder.4}
  #allocation0 [shape = 'u32[]', space=smem, size = 0x4, offset = 0x4, fixed_abs, tag = 'smem constant byte address 0x4 - core index']
  #allocation1 [shape = 'u32[72,128]{1,0:T(1,128)}', space=vmem, size = 0x9000, scoped, tag = 'internal scratch']
  %s0 = inlined_call_operand.vmem [shape: bf16[16,1728], index: 0, kind: input, shape index: {}]
  %s1 = inlined_call_operand.vmem [shape: bf16[1728,128], index: 1, kind: input, shape index: {}]
  %s2 = inlined_call_operand.vmem [shape: f32[1,128], index: 2, kind: input, shape index: {}]
  %s3 = inlined_call_operand.vmem [shape: f32[1,128], index: 3, kind: input, shape index: {}]
  %s4 = inlined_call_operand.vmem [shape: f32[1,128], index: 4, kind: input, shape index: {}]
  %s5 = inlined_call_operand.vmem [shape: f32[16,128], index: 5, kind: output, shape index: {}]
  %s6 = sld [smem:[#allocation0]]
  $region30: #{simple_3dcnn_encoder.4} parent=0
    _
  %s8 = ssub.s32 1, %s6
  %s9 = scalar_select 0, %s8, %s6
  // Predicated region
  $region2: #{simple_3dcnn_encoder.4} parent=0 // pred_check
    _
  $region3: #{simple_3dcnn_encoder.4} parent=0 // pred_check_branch
    %11 = sbr.rel (0) target = $region5
  $region4: #{simple_3dcnn_encoder.4} parent=0 // pred_region
    _
  $region5: #{simple_3dcnn_encoder.4} parent=0 // pred_fallthru
    _
  // Predicated region
  $region6: #{simple_3dcnn_encoder.4} parent=0 // pred_check
    _
  $region7: #{simple_3dcnn_encoder.4} parent=0 // pred_check_branch
    %13 = sbr.rel (0) target = $region9
  $region8: #{simple_3dcnn_encoder.4} parent=0 // pred_region
    _
  $region9: #{simple_3dcnn_encoder.4} parent=0 // pred_fallthru
    _
  // Predicated region
  $region10: #{simple_3dcnn_encoder.4} parent=0 // pred_check
    _
  $region11: #{simple_3dcnn_encoder.4} parent=0 // pred_check_branch
    %15 = sbr.rel (0) target = $region13
  $region12: #{simple_3dcnn_encoder.4} parent=0 // pred_region
    _
  $region13: #{simple_3dcnn_encoder.4} parent=0 // pred_fallthru
    _
  // Predicated region
  $region14: #{simple_3dcnn_encoder.4} parent=0 // pred_check
    _
  $region15: #{simple_3dcnn_encoder.4} parent=0 // pred_check_branch
    %17 = sbr.rel (0) target = $region17
  $region16: #{simple_3dcnn_encoder.4} parent=0 // pred_region
    _
  $region17: #{simple_3dcnn_encoder.4} parent=0 // pred_fallthru
    _
  // Predicated region
  $region18: #{simple_3dcnn_encoder.4} parent=0 // pred_check
    _
  $region19: #{simple_3dcnn_encoder.4} parent=0 // pred_check_branch
    %19 = sbr.rel (0) target = $region21
  $region20: #{simple_3dcnn_encoder.4} parent=0 // pred_region
    _
  $region21: #{simple_3dcnn_encoder.4} parent=0 // pred_fallthru
    _
  %v21 = vld [vmem:[%s0] sm:$0xff]
  %v22 = vld [vmem:[%s0 + $0x8] sm:$0xff]
  %v23 = vld [vmem:[%s0 + $0x10] sm:$0xff]
  %v24 = vld [vmem:[%s0 + $0x18] sm:$0xff]
  %v25 = vld [vmem:[%s0 + $0x20] sm:$0xff]
  %v26 = vld [vmem:[%s0 + $0x28] sm:$0xff]
  %v27 = vld [vmem:[%s0 + $0x30] sm:$0xff]
  %v28 = vld [vmem:[%s0 + $0x38] sm:$0xff]
  %v29 = vld [vmem:[%s0 + $0x40] sm:$0xff]
  %v30 = vld [vmem:[%s0 + $0x48] sm:$0xff]
  %v31 = vld [vmem:[%s0 + $0x50] sm:$0xff]
  %v32 = vld [vmem:[%s0 + $0x58] sm:$0xff]
  %v33 = vld [vmem:[%s0 + $0x60] sm:$0xff]
  %v34 = vld [vmem:[%s0 + $0x68] sm:$0xff]
  %v35 = vld [vmem:[%s1] sm:$0xf]
  %v36 = vld [vmem:[%s1 + $0x4] sm:$0xf]
  %v37 = vld [vmem:[%s1 + $0x8] sm:$0xf]
  %v38 = vld [vmem:[%s1 + $0xc] sm:$0xf]
  %v39 = vld [vmem:[%s1 + $0x10] sm:$0xf]
  %v40 = vld [vmem:[%s1 + $0x14] sm:$0xf]
  %v41 = vld [vmem:[%s1 + $0x18] sm:$0xf]
  %v42 = vld [vmem:[%s1 + $0x1c] sm:$0xf]
  %v43 = vld [vmem:[%s1 + $0x20] sm:$0xf]
  %v44 = vld [vmem:[%s1 + $0x24] sm:$0xf]
  %v45 = vld [vmem:[%s1 + $0x28] sm:$0xf]
  %v46 = vld [vmem:[%s1 + $0x2c] sm:$0xf]
  %v47 = vld [vmem:[%s1 + $0x30] sm:$0xf]
  %v48 = vld [vmem:[%s1 + $0x34] sm:$0xf]
  %v49 = vld [vmem:[%s1 + $0x38] sm:$0xf]
  %v50 = vld [vmem:[%s1 + $0x3c] sm:$0xf]
  %v51 = vld [vmem:[%s1 + $0x40] sm:$0xf]
  %v52 = vld [vmem:[%s1 + $0x44] sm:$0xf]
  %v53 = vld [vmem:[%s1 + $0x48] sm:$0xf]
  %v54 = vld [vmem:[%s1 + $0x4c] sm:$0xf]
  %v55 = vld [vmem:[%s1 + $0x50] sm:$0xf]
  %v56 = vld [vmem:[%s1 + $0x54] sm:$0xf]
  %v57 = vld [vmem:[%s1 + $0x58] sm:$0xf]
  %v58 = vld [vmem:[%s1 + $0x5c] sm:$0xf]
  %v59 = vld [vmem:[%s1 + $0x60] sm:$0xf]
  %v60 = vld [vmem:[%s1 + $0x64] sm:$0xf]
  %v61 = vld [vmem:[%s1 + $0x68] sm:$0xf]
  %v62 = vld [vmem:[%s1 + $0x6c] sm:$0xf]
  %v63 = vld [vmem:[%s1 + $0x70] sm:$0xf]
  %v64 = vld [vmem:[%s1 + $0x74] sm:$0xf]
  %v65 = vld [vmem:[%s1 + $0x78] sm:$0xf]
  %v66 = vld [vmem:[%s1 + $0x7c] sm:$0xf]
  %v67 = vld [vmem:[%s1 + $0x80] sm:$0xf]
  %v68 = vld [vmem:[%s1 + $0x84] sm:$0xf]
  %v69 = vld [vmem:[%s1 + $0x88] sm:$0xf]
  %v70 = vld [vmem:[%s1 + $0x8c] sm:$0xf]
  %v71 = vld [vmem:[%s1 + $0x90] sm:$0xf]
  %v72 = vld [vmem:[%s1 + $0x94] sm:$0xf]
  %v73 = vld [vmem:[%s1 + $0x98] sm:$0xf]
  %v74 = vld [vmem:[%s1 + $0x9c] sm:$0xf]
  %v75 = vld [vmem:[%s1 + $0xa0] sm:$0xf]
  %v76 = vld [vmem:[%s1 + $0xa4] sm:$0xf]
  %v77 = vld [vmem:[%s1 + $0xa8] sm:$0xf]
  %v78 = vld [vmem:[%s1 + $0xac] sm:$0xf]
  %v79 = vld [vmem:[%s1 + $0xb0] sm:$0xf]
  %v80 = vld [vmem:[%s1 + $0xb4] sm:$0xf]
  %v81 = vld [vmem:[%s1 + $0xb8] sm:$0xf]
  %v82 = vld [vmem:[%s1 + $0xbc] sm:$0xf]
  %v83 = vld [vmem:[%s1 + $0xc0] sm:$0xf]
  %v84 = vld [vmem:[%s1 + $0xc4] sm:$0xf]
  %v85 = vld [vmem:[%s1 + $0xc8] sm:$0xf]
  %v86 = vld [vmem:[%s1 + $0xcc] sm:$0xf]
  %v87 = vld [vmem:[%s1 + $0xd0] sm:$0xf]
  %v88 = vld [vmem:[%s1 + $0xd4] sm:$0xf]
  %v89 = vld [vmem:[%s1 + $0xd8] sm:$0xf]
  %v90 = vld [vmem:[%s1 + $0xdc] sm:$0xf]
  %v91 = vld [vmem:[%s1 + $0xe0] sm:$0xf]
  %v92 = vld [vmem:[%s1 + $0xe4] sm:$0xf]
  %v93 = vld [vmem:[%s1 + $0xe8] sm:$0xf]
  %v94 = vld [vmem:[%s1 + $0xec] sm:$0xf]
  %v95 = vld [vmem:[%s1 + $0xf0] sm:$0xf]
  %v96 = vld [vmem:[%s1 + $0xf4] sm:$0xf]
  %v97 = vld [vmem:[%s1 + $0xf8] sm:$0xf]
  %v98 = vld [vmem:[%s1 + $0xfc] sm:$0xf]
  %v99 = vld [vmem:[%s1 + $0x100] sm:$0xf]
  %v100 = vld [vmem:[%s1 + $0x104] sm:$0xf]
  %v101 = vld [vmem:[%s1 + $0x108] sm:$0xf]
  %v102 = vld [vmem:[%s1 + $0x10c] sm:$0xf]
  %v103 = vld [vmem:[%s1 + $0x110] sm:$0xf]
  %v104 = vld [vmem:[%s1 + $0x114] sm:$0xf]
  %v105 = vld [vmem:[%s1 + $0x118] sm:$0xf]
  %v106 = vld [vmem:[%s1 + $0x11c] sm:$0xf]
  %v107 = vld [vmem:[%s1 + $0x120] sm:$0xf]
  %v108 = vld [vmem:[%s1 + $0x124] sm:$0xf]
  %v109 = vld [vmem:[%s1 + $0x128] sm:$0xf]
  %v110 = vld [vmem:[%s1 + $0x12c] sm:$0xf]
  %v111 = vld [vmem:[%s1 + $0x130] sm:$0xf]
  %v112 = vld [vmem:[%s1 + $0x134] sm:$0xf]
  %v113 = vld [vmem:[%s1 + $0x138] sm:$0xf]
  %v114 = vld [vmem:[%s1 + $0x13c] sm:$0xf]
  %v115 = vld [vmem:[%s1 + $0x140] sm:$0xf]
  %v116 = vld [vmem:[%s1 + $0x144] sm:$0xf]
  %v117 = vld [vmem:[%s1 + $0x148] sm:$0xf]
  %v118 = vld [vmem:[%s1 + $0x14c] sm:$0xf]
  %v119 = vld [vmem:[%s1 + $0x150] sm:$0xf]
  %v120 = vld [vmem:[%s1 + $0x154] sm:$0xf]
  %v121 = vld [vmem:[%s1 + $0x158] sm:$0xf]
  %v122 = vld [vmem:[%s1 + $0x15c] sm:$0xf]
  %v123 = vld [vmem:[%s1 + $0x160] sm:$0xf]
  %v124 = vld [vmem:[%s1 + $0x164] sm:$0xf]
  %v125 = vld [vmem:[%s1 + $0x168] sm:$0xf]
  %v126 = vld [vmem:[%s1 + $0x16c] sm:$0xf]
  %v127 = vld [vmem:[%s1 + $0x170] sm:$0xf]
  %v128 = vld [vmem:[%s1 + $0x174] sm:$0xf]
  %v129 = vld [vmem:[%s1 + $0x178] sm:$0xf]
  %v130 = vld [vmem:[%s1 + $0x17c] sm:$0xf]
  %v131 = vld [vmem:[%s1 + $0x180] sm:$0xf]
  %v132 = vld [vmem:[%s1 + $0x184] sm:$0xf]
  %v133 = vld [vmem:[%s1 + $0x188] sm:$0xf]
  %v134 = vld [vmem:[%s1 + $0x18c] sm:$0xf]
  %v135 = vld [vmem:[%s1 + $0x190] sm:$0xf]
  %v136 = vld [vmem:[%s1 + $0x194] sm:$0xf]
  %v137 = vld [vmem:[%s1 + $0x198] sm:$0xf]
  %v138 = vld [vmem:[%s1 + $0x19c] sm:$0xf]
  %v139 = vld [vmem:[%s1 + $0x1a0] sm:$0xf]
  %v140 = vld [vmem:[%s1 + $0x1a4] sm:$0xf]
  %v141 = vld [vmem:[%s1 + $0x1a8] sm:$0xf]
  %v142 = vld [vmem:[%s1 + $0x1ac] sm:$0xf]
  %v143 = vld [vmem:[%s1 + $0x1b0] sm:$0xf]
  %v144 = vld [vmem:[%s1 + $0x1b4] sm:$0xf]
  %v145 = vld [vmem:[%s1 + $0x1b8] sm:$0xf]
  %v146 = vld [vmem:[%s1 + $0x1bc] sm:$0xf]
  %v147 = vld [vmem:[%s1 + $0x1c0] sm:$0xf]
  %v148 = vld [vmem:[%s1 + $0x1c4] sm:$0xf]
  %v149 = vld [vmem:[%s1 + $0x1c8] sm:$0xf]
  %v150 = vld [vmem:[%s1 + $0x1cc] sm:$0xf]
  %v151 = vld [vmem:[%s1 + $0x1d0] sm:$0xf]
  %v152 = vld [vmem:[%s1 + $0x1d4] sm:$0xf]
  %v153 = vld [vmem:[%s1 + $0x1d8] sm:$0xf]
  %v154 = vld [vmem:[%s1 + $0x1dc] sm:$0xf]
  %v155 = vld [vmem:[%s1 + $0x1e0] sm:$0xf]
  %v156 = vld [vmem:[%s1 + $0x1e4] sm:$0xf]
  %v157 = vld [vmem:[%s1 + $0x1e8] sm:$0xf]
  %v158 = vld [vmem:[%s1 + $0x1ec] sm:$0xf]
  %v159 = vld [vmem:[%s1 + $0x1f0] sm:$0xf]
  %v160 = vld [vmem:[%s1 + $0x1f4] sm:$0xf]
  %v161 = vld [vmem:[%s1 + $0x1f8] sm:$0xf]
  %v162 = vld [vmem:[%s1 + $0x1fc] sm:$0xf]
  %v163 = vld [vmem:[%s1 + $0x200] sm:$0xf]
  %v164 = vld [vmem:[%s1 + $0x204] sm:$0xf]
  %v165 = vld [vmem:[%s1 + $0x208] sm:$0xf]
  %v166 = vld [vmem:[%s1 + $0x20c] sm:$0xf]
  %v167 = vld [vmem:[%s1 + $0x210] sm:$0xf]
  %v168 = vld [vmem:[%s1 + $0x214] sm:$0xf]
  %v169 = vld [vmem:[%s1 + $0x218] sm:$0xf]
  %v170 = vld [vmem:[%s1 + $0x21c] sm:$0xf]
  %v171 = vld [vmem:[%s1 + $0x220] sm:$0xf]
  %v172 = vld [vmem:[%s1 + $0x224] sm:$0xf]
  %v173 = vld [vmem:[%s1 + $0x228] sm:$0xf]
  %v174 = vld [vmem:[%s1 + $0x22c] sm:$0xf]
  %v175 = vld [vmem:[%s1 + $0x230] sm:$0xf]
  %v176 = vld [vmem:[%s1 + $0x234] sm:$0xf]
  %v177 = vld [vmem:[%s1 + $0x238] sm:$0xf]
  %v178 = vld [vmem:[%s1 + $0x23c] sm:$0xf]
  %v179 = vld [vmem:[%s1 + $0x240] sm:$0xf]
  %v180 = vld [vmem:[%s1 + $0x244] sm:$0xf]
  %v181 = vld [vmem:[%s1 + $0x248] sm:$0xf]
  %v182 = vld [vmem:[%s1 + $0x24c] sm:$0xf]
  %v183 = vld [vmem:[%s1 + $0x250] sm:$0xf]
  %v184 = vld [vmem:[%s1 + $0x254] sm:$0xf]
  %v185 = vld [vmem:[%s1 + $0x258] sm:$0xf]
  %v186 = vld [vmem:[%s1 + $0x25c] sm:$0xf]
  %v187 = vld [vmem:[%s1 + $0x260] sm:$0xf]
  %v188 = vld [vmem:[%s1 + $0x264] sm:$0xf]
  %v189 = vld [vmem:[%s1 + $0x268] sm:$0xf]
  %v190 = vld [vmem:[%s1 + $0x26c] sm:$0xf]
  %v191 = vld [vmem:[%s1 + $0x270] sm:$0xf]
  %v192 = vld [vmem:[%s1 + $0x274] sm:$0xf]
  %v193 = vld [vmem:[%s1 + $0x278] sm:$0xf]
  %v194 = vld [vmem:[%s1 + $0x27c] sm:$0xf]
  %v195 = vld [vmem:[%s1 + $0x280] sm:$0xf]
  %v196 = vld [vmem:[%s1 + $0x284] sm:$0xf]
  %v197 = vld [vmem:[%s1 + $0x288] sm:$0xf]
  %v198 = vld [vmem:[%s1 + $0x28c] sm:$0xf]
  %v199 = vld [vmem:[%s1 + $0x290] sm:$0xf]
  %v200 = vld [vmem:[%s1 + $0x294] sm:$0xf]
  %v201 = vld [vmem:[%s1 + $0x298] sm:$0xf]
  %v202 = vld [vmem:[%s1 + $0x29c] sm:$0xf]
  %v203 = vld [vmem:[%s1 + $0x2a0] sm:$0xf]
  %v204 = vld [vmem:[%s1 + $0x2a4] sm:$0xf]
  %v205 = vld [vmem:[%s1 + $0x2a8] sm:$0xf]
  %v206 = vld [vmem:[%s1 + $0x2ac] sm:$0xf]
  %v207 = vld [vmem:[%s1 + $0x2b0] sm:$0xf]
  %v208 = vld [vmem:[%s1 + $0x2b4] sm:$0xf]
  %v209 = vld [vmem:[%s1 + $0x2b8] sm:$0xf]
  %v210 = vld [vmem:[%s1 + $0x2bc] sm:$0xf]
  %v211 = vld [vmem:[%s1 + $0x2c0] sm:$0xf]
  %v212 = vld [vmem:[%s1 + $0x2c4] sm:$0xf]
  %v213 = vld [vmem:[%s1 + $0x2c8] sm:$0xf]
  %v214 = vld [vmem:[%s1 + $0x2cc] sm:$0xf]
  %v215 = vld [vmem:[%s1 + $0x2d0] sm:$0xf]
  %v216 = vld [vmem:[%s1 + $0x2d4] sm:$0xf]
  %v217 = vld [vmem:[%s1 + $0x2d8] sm:$0xf]
  %v218 = vld [vmem:[%s1 + $0x2dc] sm:$0xf]
  %v219 = vld [vmem:[%s1 + $0x2e0] sm:$0xf]
  %v220 = vld [vmem:[%s1 + $0x2e4] sm:$0xf]
  %v221 = vld [vmem:[%s1 + $0x2e8] sm:$0xf]
  %v222 = vld [vmem:[%s1 + $0x2ec] sm:$0xf]
  %v223 = vld [vmem:[%s1 + $0x2f0] sm:$0xf]
  %v224 = vld [vmem:[%s1 + $0x2f4] sm:$0xf]
  %v225 = vld [vmem:[%s1 + $0x2f8] sm:$0xf]
  %v226 = vld [vmem:[%s1 + $0x2fc] sm:$0xf]
  %v227 = vld [vmem:[%s1 + $0x300] sm:$0xf]
  %v228 = vld [vmem:[%s1 + $0x304] sm:$0xf]
  %v229 = vld [vmem:[%s1 + $0x308] sm:$0xf]
  %v230 = vld [vmem:[%s1 + $0x30c] sm:$0xf]
  %v231 = vld [vmem:[%s1 + $0x310] sm:$0xf]
  %v232 = vld [vmem:[%s1 + $0x314] sm:$0xf]
  %v233 = vld [vmem:[%s1 + $0x318] sm:$0xf]
  %v234 = vld [vmem:[%s1 + $0x31c] sm:$0xf]
  %v235 = vld [vmem:[%s1 + $0x320] sm:$0xf]
  %v236 = vld [vmem:[%s1 + $0x324] sm:$0xf]
  %v237 = vld [vmem:[%s1 + $0x328] sm:$0xf]
  %v238 = vld [vmem:[%s1 + $0x32c] sm:$0xf]
  %v239 = vld [vmem:[%s1 + $0x330] sm:$0xf]
  %v240 = vld [vmem:[%s1 + $0x334] sm:$0xf]
  %v241 = vld [vmem:[%s1 + $0x338] sm:$0xf]
  %v242 = vld [vmem:[%s1 + $0x33c] sm:$0xf]
  %v243 = vld [vmem:[%s1 + $0x340] sm:$0xf]
  %v244 = vld [vmem:[%s1 + $0x344] sm:$0xf]
  %v245 = vld [vmem:[%s1 + $0x348] sm:$0xf]
  %v246 = vld [vmem:[%s1 + $0x34c] sm:$0xf]
  %v247 = vld [vmem:[%s1 + $0x350] sm:$0xf]
  %v248 = vld [vmem:[%s1 + $0x354] sm:$0xf]
  %v249 = vld [vmem:[%s1 + $0x358] sm:$0xf]
  %v250 = vld [vmem:[%s1 + $0x35c] sm:$0xf]
  %v251 = vld [vmem:[%s2] sm:$0x1]
  %v253 = vperm.slane %v251, 0
  %v269 = vunpack.c.l.b16 %v21
  %v270 = vunpack.c.h.b16 %v21
  %v271 = vunpack.c.l.b16 %v22
  %v272 = vunpack.c.h.b16 %v22
  %v273 = vunpack.c.l.b16 %v23
  %v274 = vunpack.c.h.b16 %v23
  %v275 = vunpack.c.l.b16 %v24
  %v276 = vunpack.c.h.b16 %v24
  %v277 = vunpack.c.l.b16 %v25
  %v278 = vunpack.c.h.b16 %v25
  %v279 = vunpack.c.l.b16 %v26
  %v280 = vunpack.c.h.b16 %v26
  %v281 = vunpack.c.l.b16 %v27
  %v282 = vunpack.c.h.b16 %v27
  %v283 = vunpack.c.l.b16 %v28
  %v284 = vunpack.c.h.b16 %v28
  %v285 = vunpack.c.l.b16 %v29
  %v286 = vunpack.c.h.b16 %v29
  %v287 = vunpack.c.l.b16 %v30
  %v288 = vunpack.c.h.b16 %v30
  %v289 = vunpack.c.l.b16 %v31
  %v290 = vunpack.c.h.b16 %v31
  %v291 = vunpack.c.l.b16 %v32
  %v292 = vunpack.c.h.b16 %v32
  %v293 = vunpack.c.l.b16 %v33
  %v294 = vunpack.c.h.b16 %v33
  %v295 = vunpack.c.l.b16 %v34
  %v296 = vunpack.c.h.b16 %v34
  %v297 = vpack.c.b16 %v283, %v269
  %v298 = vpack.c.b16 %v284, %v270
  %v299 = vpack.c.b16 %v285, %v271
  %v300 = vpack.c.b16 %v286, %v272
  %v301 = vpack.c.b16 %v287, %v273
  %v302 = vpack.c.b16 %v288, %v274
  %v303 = vpack.c.b16 %v289, %v275
  %v304 = vpack.c.b16 %v290, %v276
  %v305 = vpack.c.b16 %v291, %v277
  %v306 = vpack.c.b16 %v292, %v278
  %v307 = vpack.c.b16 %v293, %v279
  %v308 = vpack.c.b16 %v294, %v280
  %v309 = vpack.c.b16 %v295, %v281
  %v310 = vpack.c.b16 %v296, %v282
  %v540 = vunpack.c.l.b16 %v35
  %v541 = vunpack.c.l.b16 %v36
  %v542 = vunpack.c.l.b16 %v37
  %v543 = vunpack.c.l.b16 %v38
  %v544 = vunpack.c.l.b16 %v39
  %v545 = vunpack.c.l.b16 %v40
  %v546 = vunpack.c.l.b16 %v41
  %v547 = vunpack.c.l.b16 %v42
  %v548 = vunpack.c.l.b16 %v43
  %v549 = vunpack.c.l.b16 %v44
  %v550 = vunpack.c.l.b16 %v45
  %v551 = vunpack.c.l.b16 %v46
  %v552 = vunpack.c.l.b16 %v47
  %v553 = vunpack.c.l.b16 %v48
  %v554 = vunpack.c.l.b16 %v49
  %v555 = vunpack.c.l.b16 %v50
  %v556 = vunpack.c.l.b16 %v51
  %v557 = vunpack.c.l.b16 %v52
  %v558 = vunpack.c.l.b16 %v53
  %v559 = vunpack.c.l.b16 %v54
  %v560 = vunpack.c.l.b16 %v55
  %v561 = vunpack.c.l.b16 %v56
  %v562 = vunpack.c.l.b16 %v57
  %v563 = vunpack.c.l.b16 %v58
  %v564 = vunpack.c.l.b16 %v59
  %v565 = vunpack.c.l.b16 %v60
  %v566 = vunpack.c.l.b16 %v61
  %v567 = vunpack.c.l.b16 %v62
  %v568 = vunpack.c.l.b16 %v63
  %v569 = vunpack.c.l.b16 %v64
  %v570 = vunpack.c.l.b16 %v65
  %v571 = vunpack.c.l.b16 %v66
  %v572 = vunpack.c.l.b16 %v67
  %v573 = vunpack.c.l.b16 %v68
  %v574 = vunpack.c.l.b16 %v69
  %v575 = vunpack.c.l.b16 %v70
  %v576 = vunpack.c.l.b16 %v71
  %v577 = vunpack.c.l.b16 %v72
  %v578 = vunpack.c.l.b16 %v73
  %v579 = vunpack.c.l.b16 %v74
  %v580 = vunpack.c.l.b16 %v75
  %v581 = vunpack.c.l.b16 %v76
  %v582 = vunpack.c.l.b16 %v77
  %v583 = vunpack.c.l.b16 %v78
  %v584 = vunpack.c.l.b16 %v79
  %v585 = vunpack.c.l.b16 %v80
  %v586 = vunpack.c.l.b16 %v81
  %v587 = vunpack.c.l.b16 %v82
  %v588 = vunpack.c.l.b16 %v83
  %v589 = vunpack.c.l.b16 %v84
  %v590 = vunpack.c.l.b16 %v85
  %v591 = vunpack.c.l.b16 %v86
  %v592 = vunpack.c.l.b16 %v87
  %v593 = vunpack.c.l.b16 %v88
  %v594 = vunpack.c.l.b16 %v89
  %v595 = vunpack.c.l.b16 %v90
  %v596 = vunpack.c.l.b16 %v91
  %v597 = vunpack.c.l.b16 %v92
  %v598 = vunpack.c.l.b16 %v93
  %v599 = vunpack.c.l.b16 %v94
  %v600 = vunpack.c.l.b16 %v95
  %v601 = vunpack.c.l.b16 %v96
  %v602 = vunpack.c.l.b16 %v97
  %v603 = vunpack.c.l.b16 %v98
  %v604 = vunpack.c.l.b16 %v99
  %v605 = vunpack.c.l.b16 %v100
  %v606 = vunpack.c.l.b16 %v101
  %v607 = vunpack.c.l.b16 %v102
  %v608 = vunpack.c.l.b16 %v103
  %v609 = vunpack.c.l.b16 %v104
  %v610 = vunpack.c.l.b16 %v105
  %v611 = vunpack.c.l.b16 %v106
  %v612 = vunpack.c.l.b16 %v107
  %v613 = vunpack.c.l.b16 %v108
  %v614 = vunpack.c.l.b16 %v109
  %v615 = vunpack.c.l.b16 %v110
  %v616 = vunpack.c.l.b16 %v111
  %v617 = vunpack.c.l.b16 %v112
  %v618 = vunpack.c.l.b16 %v113
  %v619 = vunpack.c.l.b16 %v114
  %v620 = vunpack.c.l.b16 %v115
  %v621 = vunpack.c.l.b16 %v116
  %v622 = vunpack.c.l.b16 %v117
  %v623 = vunpack.c.l.b16 %v118
  %v624 = vunpack.c.l.b16 %v119
  %v625 = vunpack.c.l.b16 %v120
  %v626 = vunpack.c.l.b16 %v121
  %v627 = vunpack.c.l.b16 %v122
  %v628 = vunpack.c.l.b16 %v123
  %v629 = vunpack.c.l.b16 %v124
  %v630 = vunpack.c.l.b16 %v125
  %v631 = vunpack.c.l.b16 %v126
  %v632 = vunpack.c.l.b16 %v127
  %v633 = vunpack.c.l.b16 %v128
  %v634 = vunpack.c.l.b16 %v129
  %v635 = vunpack.c.l.b16 %v130
  %v636 = vunpack.c.l.b16 %v131
  %v637 = vunpack.c.l.b16 %v132
  %v638 = vunpack.c.l.b16 %v133
  %v639 = vunpack.c.l.b16 %v134
  %v640 = vunpack.c.l.b16 %v135
  %v641 = vunpack.c.l.b16 %v136
  %v642 = vunpack.c.l.b16 %v137
  %v643 = vunpack.c.l.b16 %v138
  %v644 = vunpack.c.l.b16 %v139
  %v645 = vunpack.c.l.b16 %v140
  %v646 = vunpack.c.l.b16 %v141
  %v647 = vunpack.c.l.b16 %v142
  %v648 = vunpack.c.l.b16 %v143
  %v649 = vunpack.c.l.b16 %v144
  %v650 = vunpack.c.l.b16 %v145
  %v651 = vunpack.c.l.b16 %v146
  %v652 = vunpack.c.l.b16 %v147
  %v653 = vunpack.c.l.b16 %v148
  %v654 = vunpack.c.l.b16 %v149
  %v655 = vunpack.c.l.b16 %v150
  %v656 = vunpack.c.l.b16 %v151
  %v657 = vunpack.c.l.b16 %v152
  %v658 = vunpack.c.l.b16 %v153
  %v659 = vunpack.c.l.b16 %v154
  %v660 = vunpack.c.l.b16 %v155
  %v661 = vunpack.c.l.b16 %v156
  %v662 = vunpack.c.l.b16 %v157
  %v663 = vunpack.c.l.b16 %v158
  %v664 = vunpack.c.l.b16 %v159
  %v665 = vunpack.c.l.b16 %v160
  %v666 = vunpack.c.l.b16 %v161
  %v667 = vunpack.c.l.b16 %v162
  %v668 = vunpack.c.l.b16 %v163
  %v669 = vunpack.c.l.b16 %v164
  %v670 = vunpack.c.l.b16 %v165
  %v671 = vunpack.c.l.b16 %v166
  %v672 = vunpack.c.l.b16 %v167
  %v673 = vunpack.c.l.b16 %v168
  %v674 = vunpack.c.l.b16 %v169
  %v675 = vunpack.c.l.b16 %v170
  %v676 = vunpack.c.l.b16 %v171
  %v677 = vunpack.c.l.b16 %v172
  %v678 = vunpack.c.l.b16 %v173
  %v679 = vunpack.c.l.b16 %v174
  %v680 = vunpack.c.l.b16 %v175
  %v681 = vunpack.c.l.b16 %v176
  %v682 = vunpack.c.l.b16 %v177
  %v683 = vunpack.c.l.b16 %v178
  %v684 = vunpack.c.l.b16 %v179
  %v685 = vunpack.c.l.b16 %v180
  %v686 = vunpack.c.l.b16 %v181
  %v687 = vunpack.c.l.b16 %v182
  %v688 = vunpack.c.l.b16 %v183
  %v689 = vunpack.c.l.b16 %v184
  %v690 = vunpack.c.l.b16 %v185
  %v691 = vunpack.c.l.b16 %v186
  %v692 = vunpack.c.l.b16 %v187
  %v693 = vunpack.c.l.b16 %v188
  %v694 = vunpack.c.l.b16 %v189
  %v695 = vunpack.c.l.b16 %v190
  %v696 = vunpack.c.l.b16 %v191
  %v697 = vunpack.c.l.b16 %v192
  %v698 = vunpack.c.l.b16 %v193
  %v699 = vunpack.c.l.b16 %v194
  %v700 = vunpack.c.l.b16 %v195
  %v701 = vunpack.c.l.b16 %v196
  %v702 = vunpack.c.l.b16 %v197
  %v703 = vunpack.c.l.b16 %v198
  %v704 = vunpack.c.l.b16 %v199
  %v705 = vunpack.c.l.b16 %v200
  %v706 = vunpack.c.l.b16 %v201
  %v707 = vunpack.c.l.b16 %v202
  %v708 = vunpack.c.l.b16 %v203
  %v709 = vunpack.c.l.b16 %v204
  %v710 = vunpack.c.l.b16 %v205
  %v711 = vunpack.c.l.b16 %v206
  %v712 = vunpack.c.l.b16 %v207
  %v713 = vunpack.c.l.b16 %v208
  %v714 = vunpack.c.l.b16 %v209
  %v715 = vunpack.c.l.b16 %v210
  %v716 = vunpack.c.l.b16 %v211
  %v717 = vunpack.c.l.b16 %v212
  %v718 = vunpack.c.l.b16 %v213
  %v719 = vunpack.c.l.b16 %v214
  %v720 = vunpack.c.l.b16 %v215
  %v721 = vunpack.c.l.b16 %v216
  %v722 = vunpack.c.l.b16 %v217
  %v723 = vunpack.c.l.b16 %v218
  %v724 = vunpack.c.l.b16 %v219
  %v725 = vunpack.c.l.b16 %v220
  %v726 = vunpack.c.l.b16 %v221
  %v727 = vunpack.c.l.b16 %v222
  %v728 = vunpack.c.l.b16 %v223
  %v729 = vunpack.c.l.b16 %v224
  %v730 = vunpack.c.l.b16 %v225
  %v731 = vunpack.c.l.b16 %v226
  %v732 = vunpack.c.l.b16 %v227
  %v733 = vunpack.c.l.b16 %v228
  %v734 = vunpack.c.l.b16 %v229
  %v735 = vunpack.c.l.b16 %v230
  %v736 = vunpack.c.l.b16 %v231
  %v737 = vunpack.c.l.b16 %v232
  %v738 = vunpack.c.l.b16 %v233
  %v739 = vunpack.c.l.b16 %v234
  %v740 = vunpack.c.l.b16 %v235
  %v741 = vunpack.c.l.b16 %v236
  %v742 = vunpack.c.l.b16 %v237
  %v743 = vunpack.c.l.b16 %v238
  %v744 = vunpack.c.l.b16 %v239
  %v745 = vunpack.c.l.b16 %v240
  %v746 = vunpack.c.l.b16 %v241
  %v747 = vunpack.c.l.b16 %v242
  %v748 = vunpack.c.l.b16 %v243
  %v749 = vunpack.c.l.b16 %v244
  %v750 = vunpack.c.l.b16 %v245
  %v751 = vunpack.c.l.b16 %v246
  %v752 = vunpack.c.l.b16 %v247
  %v753 = vunpack.c.l.b16 %v248
  %v754 = vunpack.c.l.b16 %v249
  %v755 = vunpack.c.l.b16 %v250
  %v756 = vpack.c.b16 %v541, %v540
  %v757 = vpack.c.b16 %v543, %v542
  %v758 = vpack.c.b16 %v545, %v544
  %v759 = vpack.c.b16 %v547, %v546
  %v760 = vpack.c.b16 %v549, %v548
  %v761 = vpack.c.b16 %v551, %v550
  %v762 = vpack.c.b16 %v553, %v552
  %v763 = vpack.c.b16 %v555, %v554
  %v764 = vpack.c.b16 %v557, %v556
  %v765 = vpack.c.b16 %v559, %v558
  %v766 = vpack.c.b16 %v561, %v560
  %v767 = vpack.c.b16 %v563, %v562
  %v768 = vpack.c.b16 %v565, %v564
  %v769 = vpack.c.b16 %v567, %v566
  %v770 = vpack.c.b16 %v569, %v568
  %v771 = vpack.c.b16 %v571, %v570
  %v772 = vpack.c.b16 %v573, %v572
  %v773 = vpack.c.b16 %v575, %v574
  %v774 = vpack.c.b16 %v577, %v576
  %v775 = vpack.c.b16 %v579, %v578
  %v776 = vpack.c.b16 %v581, %v580
  %v777 = vpack.c.b16 %v583, %v582
  %v778 = vpack.c.b16 %v585, %v584
  %v779 = vpack.c.b16 %v587, %v586
  %v780 = vpack.c.b16 %v589, %v588
  %v781 = vpack.c.b16 %v591, %v590
  %v782 = vpack.c.b16 %v593, %v592
  %v783 = vpack.c.b16 %v595, %v594
  %v784 = vpack.c.b16 %v597, %v596
  %v785 = vpack.c.b16 %v599, %v598
  %v786 = vpack.c.b16 %v601, %v600
  %v787 = vpack.c.b16 %v603, %v602
  %v788 = vpack.c.b16 %v605, %v604
  %v789 = vpack.c.b16 %v607, %v606
  %v790 = vpack.c.b16 %v609, %v608
  %v791 = vpack.c.b16 %v611, %v610
  %v792 = vpack.c.b16 %v613, %v612
  %v793 = vpack.c.b16 %v615, %v614
  %v794 = vpack.c.b16 %v617, %v616
  %v795 = vpack.c.b16 %v619, %v618
  %v796 = vpack.c.b16 %v621, %v620
  %v797 = vpack.c.b16 %v623, %v622
  %v798 = vpack.c.b16 %v625, %v624
  %v799 = vpack.c.b16 %v627, %v626
  %v800 = vpack.c.b16 %v629, %v628
  %v801 = vpack.c.b16 %v631, %v630
  %v802 = vpack.c.b16 %v633, %v632
  %v803 = vpack.c.b16 %v635, %v634
  %v804 = vpack.c.b16 %v637, %v636
  %v805 = vpack.c.b16 %v639, %v638
  %v806 = vpack.c.b16 %v641, %v640
  %v807 = vpack.c.b16 %v643, %v642
  %v808 = vpack.c.b16 %v645, %v644
  %v809 = vpack.c.b16 %v647, %v646
  %v810 = vpack.c.b16 %v649, %v648
  %v811 = vpack.c.b16 %v651, %v650
  %v812 = vpack.c.b16 %v653, %v652
  %v813 = vpack.c.b16 %v655, %v654
  %v814 = vpack.c.b16 %v657, %v656
  %v815 = vpack.c.b16 %v659, %v658
  %v816 = vpack.c.b16 %v661, %v660
  %v817 = vpack.c.b16 %v663, %v662
  %v818 = vpack.c.b16 %v665, %v664
  %v819 = vpack.c.b16 %v667, %v666
  %v820 = vpack.c.b16 %v669, %v668
  %v821 = vpack.c.b16 %v671, %v670
  %v822 = vpack.c.b16 %v673, %v672
  %v823 = vpack.c.b16 %v675, %v674
  %v824 = vpack.c.b16 %v677, %v676
  %v825 = vpack.c.b16 %v679, %v678
  %v826 = vpack.c.b16 %v681, %v680
  %v827 = vpack.c.b16 %v683, %v682
  %v828 = vpack.c.b16 %v685, %v684
  %v829 = vpack.c.b16 %v687, %v686
  %v830 = vpack.c.b16 %v689, %v688
  %v831 = vpack.c.b16 %v691, %v690
  %v832 = vpack.c.b16 %v693, %v692
  %v833 = vpack.c.b16 %v695, %v694
  %v834 = vpack.c.b16 %v697, %v696
  %v835 = vpack.c.b16 %v699, %v698
  %v836 = vpack.c.b16 %v701, %v700
  %v837 = vpack.c.b16 %v703, %v702
  %v838 = vpack.c.b16 %v705, %v704
  %v839 = vpack.c.b16 %v707, %v706
  %v840 = vpack.c.b16 %v709, %v708
  %v841 = vpack.c.b16 %v711, %v710
  %v842 = vpack.c.b16 %v713, %v712
  %v843 = vpack.c.b16 %v715, %v714
  %v844 = vpack.c.b16 %v717, %v716
  %v845 = vpack.c.b16 %v719, %v718
  %v846 = vpack.c.b16 %v721, %v720
  %v847 = vpack.c.b16 %v723, %v722
  %v848 = vpack.c.b16 %v725, %v724
  %v849 = vpack.c.b16 %v727, %v726
  %v850 = vpack.c.b16 %v729, %v728
  %v851 = vpack.c.b16 %v731, %v730
  %v852 = vpack.c.b16 %v733, %v732
  %v853 = vpack.c.b16 %v735, %v734
  %v854 = vpack.c.b16 %v737, %v736
  %v855 = vpack.c.b16 %v739, %v738
  %v856 = vpack.c.b16 %v741, %v740
  %v857 = vpack.c.b16 %v743, %v742
  %v858 = vpack.c.b16 %v745, %v744
  %v859 = vpack.c.b16 %v747, %v746
  %v860 = vpack.c.b16 %v749, %v748
  %v861 = vpack.c.b16 %v751, %v750
  %v862 = vpack.c.b16 %v753, %v752
  %v863 = vpack.c.b16 %v755, %v754
  %vm972 = vcmask 523264
  %v974 = vsel %vm972, %v310, 0
  %976 = vmatpush.bf16.msra.mxu0 %v763
  %977 = vmatpush.bf16.msra.mxu0 %v762
  %978 = vmatpush.bf16.msra.mxu0 %v761
  %979 = vmatpush.bf16.msra.mxu0 %v760
  %980 = vmatpush.bf16.msra.mxu0 %v759
  %981 = vmatpush.bf16.msra.mxu0 %v758
  %982 = vmatpush.bf16.msra.mxu0 %v757
  %983 = vmatpush.bf16.msra.mxu0 %v756
  %984 = vmatmul.bf16.gmra.mxu0 %v297
  %v985 = vpop.f32.mrf.mxu0
  %v986 = vadd.f32 %v253, %v985
  %v987 = vpop.f32.mrf.mxu0
  %v988 = vadd.f32 %v253, %v987
  %989 = vdwg.mxu0
  %990 = vmatpush.bf16.msra.mxu0 %v771
  %991 = vmatpush.bf16.msra.mxu0 %v770
  %992 = vmatpush.bf16.msra.mxu0 %v769
  %993 = vmatpush.bf16.msra.mxu0 %v768
  %994 = vmatpush.bf16.msra.mxu0 %v767
  %995 = vmatpush.bf16.msra.mxu0 %v766
  %996 = vmatpush.bf16.msra.mxu0 %v765
  %997 = vmatpush.bf16.msra.mxu0 %v764
  %998 = vmatmul.bf16.gmra.mxu0 %v298
  %v999 = vpop.f32.mrf.mxu0
  %v1000 = vadd.f32 %v986, %v999
  %v1001 = vpop.f32.mrf.mxu0
  %v1002 = vadd.f32 %v988, %v1001
  %1003 = vdwg.mxu0
  %1004 = vmatpush.bf16.msra.mxu0 %v779
  %1005 = vmatpush.bf16.msra.mxu0 %v778
  %1006 = vmatpush.bf16.msra.mxu0 %v777
  %1007 = vmatpush.bf16.msra.mxu0 %v776
  %1008 = vmatpush.bf16.msra.mxu0 %v775
  %1009 = vmatpush.bf16.msra.mxu0 %v774
  %1010 = vmatpush.bf16.msra.mxu0 %v773
  %1011 = vmatpush.bf16.msra.mxu0 %v772
  %1012 = vmatmul.bf16.gmra.mxu0 %v299
  %v1013 = vpop.f32.mrf.mxu0
  %v1014 = vadd.f32 %v1000, %v1013
  %v1015 = vpop.f32.mrf.mxu0
  %v1016 = vadd.f32 %v1002, %v1015
  %1017 = vdwg.mxu0
  %1018 = vmatpush.bf16.msra.mxu0 %v787
  %1019 = vmatpush.bf16.msra.mxu0 %v786
  %1020 = vmatpush.bf16.msra.mxu0 %v785
  %1021 = vmatpush.bf16.msra.mxu0 %v784
  %1022 = vmatpush.bf16.msra.mxu0 %v783
  %1023 = vmatpush.bf16.msra.mxu0 %v782
  %1024 = vmatpush.bf16.msra.mxu0 %v781
  %1025 = vmatpush.bf16.msra.mxu0 %v780
  %1026 = vmatmul.bf16.gmra.mxu0 %v300
  %v1027 = vpop.f32.mrf.mxu0
  %v1028 = vadd.f32 %v1014, %v1027
  %v1029 = vpop.f32.mrf.mxu0
  %v1030 = vadd.f32 %v1016, %v1029
  %1031 = vdwg.mxu0
  %1032 = vmatpush.bf16.msra.mxu0 %v795
  %1033 = vmatpush.bf16.msra.mxu0 %v794
  %1034 = vmatpush.bf16.msra.mxu0 %v793
  %1035 = vmatpush.bf16.msra.mxu0 %v792
  %1036 = vmatpush.bf16.msra.mxu0 %v791
  %1037 = vmatpush.bf16.msra.mxu0 %v790
  %1038 = vmatpush.bf16.msra.mxu0 %v789
  %1039 = vmatpush.bf16.msra.mxu0 %v788
  %1040 = vmatmul.bf16.gmra.mxu0 %v301
  %v1041 = vpop.f32.mrf.mxu0
  %v1042 = vadd.f32 %v1028, %v1041
  %v1043 = vpop.f32.mrf.mxu0
  %v1044 = vadd.f32 %v1030, %v1043
  %1045 = vdwg.mxu0
  %1046 = vmatpush.bf16.msra.mxu0 %v803
  %1047 = vmatpush.bf16.msra.mxu0 %v802
  %1048 = vmatpush.bf16.msra.mxu0 %v801
  %1049 = vmatpush.bf16.msra.mxu0 %v800
  %1050 = vmatpush.bf16.msra.mxu0 %v799
  %1051 = vmatpush.bf16.msra.mxu0 %v798
  %1052 = vmatpush.bf16.msra.mxu0 %v797
  %1053 = vmatpush.bf16.msra.mxu0 %v796
  %1054 = vmatmul.bf16.gmra.mxu0 %v302
  %v1055 = vpop.f32.mrf.mxu0
  %v1056 = vadd.f32 %v1042, %v1055
  %v1057 = vpop.f32.mrf.mxu0
  %v1058 = vadd.f32 %v1044, %v1057
  %1059 = vdwg.mxu0
  %1060 = vmatpush.bf16.msra.mxu0 %v811
  %1061 = vmatpush.bf16.msra.mxu0 %v810
  %1062 = vmatpush.bf16.msra.mxu0 %v809
  %1063 = vmatpush.bf16.msra.mxu0 %v808
  %1064 = vmatpush.bf16.msra.mxu0 %v807
  %1065 = vmatpush.bf16.msra.mxu0 %v806
  %1066 = vmatpush.bf16.msra.mxu0 %v805
  %1067 = vmatpush.bf16.msra.mxu0 %v804
  %1068 = vmatmul.bf16.gmra.mxu0 %v303
  %v1069 = vpop.f32.mrf.mxu0
  %v1070 = vadd.f32 %v1056, %v1069
  %v1071 = vpop.f32.mrf.mxu0
  %v1072 = vadd.f32 %v1058, %v1071
  %1073 = vdwg.mxu0
  %1074 = vmatpush.bf16.msra.mxu0 %v819
  %1075 = vmatpush.bf16.msra.mxu0 %v818
  %1076 = vmatpush.bf16.msra.mxu0 %v817
  %1077 = vmatpush.bf16.msra.mxu0 %v816
  %1078 = vmatpush.bf16.msra.mxu0 %v815
  %1079 = vmatpush.bf16.msra.mxu0 %v814
  %1080 = vmatpush.bf16.msra.mxu0 %v813
  %1081 = vmatpush.bf16.msra.mxu0 %v812
  %1082 = vmatmul.bf16.gmra.mxu0 %v304
  %v1083 = vpop.f32.mrf.mxu0
  %v1084 = vadd.f32 %v1070, %v1083
  %v1085 = vpop.f32.mrf.mxu0
  %v1086 = vadd.f32 %v1072, %v1085
  %1087 = vdwg.mxu0
  %1088 = vmatpush.bf16.msra.mxu0 %v827
  %1089 = vmatpush.bf16.msra.mxu0 %v826
  %1090 = vmatpush.bf16.msra.mxu0 %v825
  %1091 = vmatpush.bf16.msra.mxu0 %v824
  %1092 = vmatpush.bf16.msra.mxu0 %v823
  %1093 = vmatpush.bf16.msra.mxu0 %v822
  %1094 = vmatpush.bf16.msra.mxu0 %v821
  %1095 = vmatpush.bf16.msra.mxu0 %v820
  %1096 = vmatmul.bf16.gmra.mxu0 %v305
  %v1097 = vpop.f32.mrf.mxu0
  %v1098 = vadd.f32 %v1084, %v1097
  %v1099 = vpop.f32.mrf.mxu0
  %v1100 = vadd.f32 %v1086, %v1099
  %1101 = vdwg.mxu0
  %1102 = vmatpush.bf16.msra.mxu0 %v835
  %1103 = vmatpush.bf16.msra.mxu0 %v834
  %1104 = vmatpush.bf16.msra.mxu0 %v833
  %1105 = vmatpush.bf16.msra.mxu0 %v832
  %1106 = vmatpush.bf16.msra.mxu0 %v831
  %1107 = vmatpush.bf16.msra.mxu0 %v830
  %1108 = vmatpush.bf16.msra.mxu0 %v829
  %1109 = vmatpush.bf16.msra.mxu0 %v828
  %1110 = vmatmul.bf16.gmra.mxu0 %v306
  %v1111 = vpop.f32.mrf.mxu0
  %v1112 = vadd.f32 %v1098, %v1111
  %v1113 = vpop.f32.mrf.mxu0
  %v1114 = vadd.f32 %v1100, %v1113
  %1115 = vdwg.mxu0
  %1116 = vmatpush.bf16.msra.mxu0 %v843
  %1117 = vmatpush.bf16.msra.mxu0 %v842
  %1118 = vmatpush.bf16.msra.mxu0 %v841
  %1119 = vmatpush.bf16.msra.mxu0 %v840
  %1120 = vmatpush.bf16.msra.mxu0 %v839
  %1121 = vmatpush.bf16.msra.mxu0 %v838
  %1122 = vmatpush.bf16.msra.mxu0 %v837
  %1123 = vmatpush.bf16.msra.mxu0 %v836
  %1124 = vmatmul.bf16.gmra.mxu0 %v307
  %v1125 = vpop.f32.mrf.mxu0
  %v1126 = vadd.f32 %v1112, %v1125
  %v1127 = vpop.f32.mrf.mxu0
  %v1128 = vadd.f32 %v1114, %v1127
  %1129 = vdwg.mxu0
  %1130 = vmatpush.bf16.msra.mxu0 %v851
  %1131 = vmatpush.bf16.msra.mxu0 %v850
  %1132 = vmatpush.bf16.msra.mxu0 %v849
  %1133 = vmatpush.bf16.msra.mxu0 %v848
  %1134 = vmatpush.bf16.msra.mxu0 %v847
  %1135 = vmatpush.bf16.msra.mxu0 %v846
  %1136 = vmatpush.bf16.msra.mxu0 %v845
  %1137 = vmatpush.bf16.msra.mxu0 %v844
  %1138 = vmatmul.bf16.gmra.mxu0 %v308
  %v1139 = vpop.f32.mrf.mxu0
  %v1140 = vadd.f32 %v1126, %v1139
  %v1141 = vpop.f32.mrf.mxu0
  %v1142 = vadd.f32 %v1128, %v1141
  %1143 = vdwg.mxu0
  %1144 = vmatpush.bf16.msra.mxu0 %v859
  %1145 = vmatpush.bf16.msra.mxu0 %v858
  %1146 = vmatpush.bf16.msra.mxu0 %v857
  %1147 = vmatpush.bf16.msra.mxu0 %v856
  %1148 = vmatpush.bf16.msra.mxu0 %v855
  %1149 = vmatpush.bf16.msra.mxu0 %v854
  %1150 = vmatpush.bf16.msra.mxu0 %v853
  %1151 = vmatpush.bf16.msra.mxu0 %v852
  %1152 = vmatmul.bf16.gmra.mxu0 %v309
  %v1153 = vpop.f32.mrf.mxu0
  %v1154 = vadd.f32 %v1140, %v1153
  %v1155 = vpop.f32.mrf.mxu0
  %v1156 = vadd.f32 %v1142, %v1155
  %1157 = vdwg.mxu0
  %1158 = vmatpush.bf16.msra.mxu0 0
  %1159 = vmatpush.bf16.msra.mxu0 0
  %1160 = vmatpush.bf16.msra.mxu0 0
  %1161 = vmatpush.bf16.msra.mxu0 0
  %1162 = vmatpush.bf16.msra.mxu0 %v863
  %1163 = vmatpush.bf16.msra.mxu0 %v862
  %1164 = vmatpush.bf16.msra.mxu0 %v861
  %1165 = vmatpush.bf16.msra.mxu0 %v860
  %1166 = vmatmul.bf16.gmra.mxu0 %v974
  %v1167 = vpop.f32.mrf.mxu0
  %v1168 = vadd.f32 %v1154, %v1167
  %v1169 = vpop.f32.mrf.mxu0
  %v1170 = vadd.f32 %v1156, %v1169
  %1171 = vdwg.mxu0
  %v1172 = vadd.f32 %v1168, %v1170
  %v1173 = vrot.slane %v1172, 4
  %v1174 = vadd.f32 %v1172, %v1173
  %v1175 = vrot.slane %v1174, 2
  %v1176 = vadd.f32 %v1174, %v1175
  %v1177 = vrot.slane %v1176, 1
  %v1178 = vadd.f32 %v1176, %v1177
  %v1179 = vmul.f32 %v1178, 0.0625
  %v1180 = vsub.f32 %v1168, %v1179
  %v1181 = vsub.f32 %v1170, %v1179
  %v1182 = vmul.f32 %v1180, %v1180
  %v1183 = vmul.f32 %v1181, %v1181
  %v1184 = vadd.f32 %v1182, %v1183
  %v1185 = vrot.slane %v1184, 4
  %v1186 = vadd.f32 %v1184, %v1185
  %v1187 = vrot.slane %v1186, 2
  %v1188 = vadd.f32 %v1186, %v1187
  %v1189 = vrot.slane %v1188, 1
  %v1190 = vadd.f32 %v1188, %v1189
  %v1191 = vmul.f32 %v1190, 0.0625
  %v1192 = vld [vmem:[%s3] sm:$0x1]
  %v1193 = vadd.f32 %v1191, 1e-05
  %v1194 = vrsqrt.pop %v1193
  %v1195 = vmul.f32 %v1194, %v1193
  %v1196 = vmul.f32 %v1195, %v1194
  %v1197 = vmul.f32 0.5, %v1196
  %v1198 = vsub.f32 1.5, %v1197
  %v1199 = vmul.f32 %v1194, %v1198
  %vm1200 = vweird.f32 %v1193
  %vm1201 = vweird.f32 %v1194
  %vm1202 = vmor %vm1200, %vm1201
  %v1203 = vsel %vm1202, %v1194, %v1199
  %v1204 = vmul.f32 %v1192, %v1203
  %v1206 = vperm.slane %v1204, 0
  %v1208 = vmul.f32 %v1180, %v1206
  %v1209 = vmul.f32 %v1181, %v1206
  %v1210 = vld [vmem:[%s4] sm:$0x1]
  %v1212 = vperm.slane %v1210, 0
  %v1214 = vadd.f32 %v1208, %v1212
  %v1215 = vadd.f32 %v1209, %v1212
  %v1216 = vmax.f32 %v1214, 0.0
  %v1217 = vmax.f32 %v1215, 0.0
  %1218 = vst [vmem:[%s5] sm:$0xff] %v1216
  %1219 = vst [vmem:[%s5 + $0x8] sm:$0xff] %v1217
  // Predicated region
  $region22: #{simple_3dcnn_encoder.4} parent=0 // pred_check
    _
  $region23: #{simple_3dcnn_encoder.4} parent=0 // pred_check_branch
    %1221 = sbr.rel (0) target = $region25
  $region24: #{simple_3dcnn_encoder.4} parent=0 // pred_region
    _
  $region25: #{simple_3dcnn_encoder.4} parent=0 // pred_fallthru
    _
  // Predicated region
  $region26: #{simple_3dcnn_encoder.4} parent=0 // pred_check
    _
  $region27: #{simple_3dcnn_encoder.4} parent=0 // pred_check_branch
    %1223 = sbr.rel (0) target = $region29
  $region28: #{simple_3dcnn_encoder.4} parent=0 // pred_region
    _
  $region29: #{simple_3dcnn_encoder.4} parent=0 // pred_fallthru
    _

// kernel: simple_3dcnn_encoder.5
$region0: #{simple_3dcnn_encoder.5}
  #allocation0 [shape = 'u32[]', space=smem, size = 0x4, offset = 0x4, fixed_abs, tag = 'smem constant byte address 0x4 - core index']
  #allocation1 [shape = 'u32[72,128]{1,0:T(1,128)}', space=vmem, size = 0x9000, scoped, tag = 'internal scratch']
  %s0 = inlined_call_operand.vmem [shape: bf16[2,3456], index: 0, kind: input, shape index: {}]
  %s1 = inlined_call_operand.vmem [shape: bf16[3456,256], index: 1, kind: input, shape index: {}]
  %s2 = inlined_call_operand.vmem [shape: f32[1,256], index: 2, kind: input, shape index: {}]
  %s3 = inlined_call_operand.vmem [shape: f32[1,256], index: 3, kind: input, shape index: {}]
  %s4 = inlined_call_operand.vmem [shape: f32[1,256], index: 4, kind: input, shape index: {}]
  %s5 = inlined_call_operand.vmem [shape: f32[2,256], index: 5, kind: output, shape index: {}]
  %s6 = sld [smem:[#allocation0]]
  $region105: #{simple_3dcnn_encoder.5} parent=0
    _
  %s8 = ssub.s32 1, %s6
  %s9 = scalar_select 0, %s8, %s6
  $region1: #{simple_3dcnn_encoder.5} parent=0
    #allocation2 [shape = 'u8[1769472]{0}', space=vmem, size = 0x1b0000, scoped, tag = 'input window, operand 1']
    loop: start=0, step=1, limit=4
    $region2: #{simple_3dcnn_encoder.5} parent=1 // loop_pre_header
      _
    $region3: #{simple_3dcnn_encoder.5} parent=1 // loop_header
      %s11 = sphi 0, %s15
      %p12 = scmp.ge.s32.totalorder %s11, 4
      %s19 = sphi 0, %s19
      %s21 = sphi 0, %s19
      %s22 = sphi 0, %s21
      %s36 = sphi 0, %s22
      %s42 = sphi 0, %s44
      %s45 = sphi 0, %s42
      %s46 = sphi 0, %s45
      %s62 = sphi 0, %s46
      %s68 = sphi 0, %s70
      %s71 = sphi 0, %s68
      %s72 = sphi 0, %s71
      %s88 = sphi 0, %s72
      %s94 = sphi 0, %s96
      %s97 = sphi 0, %s94
      %s98 = sphi 0, %s97
      %s114 = sphi 0, %s98
      %s120 = sphi 0, %s122
      %s123 = sphi 0, %s120
      %s124 = sphi 0, %s123
      %s140 = sphi 0, %s124
      %s146 = sphi 0, %s148
      %s149 = sphi 0, %s146
      %s150 = sphi 0, %s149
      %s166 = sphi 0, %s150
    $region4: #{simple_3dcnn_encoder.5} parent=1 // loop_header_branch
      %14 = sbr.rel (%p12) target = $region8
    $region5: #{simple_3dcnn_encoder.5} parent=1 // loop_body
      %s16 = ssub.s32 %s11, 1
      %s17 = ssub.s32 %s11, 2
      %s18 = sadd.s32 %s11, 1
      %s20 = sadd.s32 %s19, 1
      %p23 = scmp.eq.s32.totalorder %s11, 1
      %p24 = scmp.ne.s32.totalorder %s19, %s21
      %p25 = scmp.eq.s32.totalorder %s11, 0
      %p26 = por %p24, %p25
      %p27 = scmp.ne.s32.totalorder %s19, %s21
      %p28 = scmp.eq.s32.totalorder %s16, 1
      %p29 = por %p27, %p28
      %p30 = scmp.ne.s32.totalorder %s21, %s22
      %p31 = scmp.eq.s32.totalorder %s16, 0
      %p32 = por %p30, %p31
      %p33 = scmp.ne.s32.totalorder %s21, %s22
      %p34 = scmp.eq.s32.totalorder %s17, 1
      %p35 = por %p33, %p34
      %p37 = scmp.ne.s32.totalorder %s22, %s36
      %p38 = scmp.eq.s32.totalorder %s17, 0
      %p39 = por %p37, %p38
      %s40 = ssub.s32 %s11, %s18
      %p41 = scmp.eq.s32.totalorder %s40, 0
      %s43 = sadd.s32 %s42, 1
      %s44 = scalar_select %p41, %s42, %s43
      %p47 = pneg %p41
      %p48 = scmp.eq.s32.totalorder %s11, 1
      %p49 = por %p47, %p48
      %p50 = scmp.ne.s32.totalorder %s42, %s45
      %p51 = scmp.eq.s32.totalorder %s11, 0
      %p52 = por %p50, %p51
      %p53 = scmp.ne.s32.totalorder %s42, %s45
      %p54 = scmp.eq.s32.totalorder %s16, 1
      %p55 = por %p53, %p54
      %p56 = scmp.ne.s32.totalorder %s45, %s46
      %p57 = scmp.eq.s32.totalorder %s16, 0
      %p58 = por %p56, %p57
      %p59 = scmp.ne.s32.totalorder %s45, %s46
      %p60 = scmp.eq.s32.totalorder %s17, 1
      %p61 = por %p59, %p60
      %p63 = scmp.ne.s32.totalorder %s46, %s62
      %p64 = scmp.eq.s32.totalorder %s17, 0
      %p65 = por %p63, %p64
      %s66 = ssub.s32 %s11, %s18
      %p67 = scmp.eq.s32.totalorder %s66, 0
      %s69 = sadd.s32 %s68, 1
      %s70 = scalar_select %p67, %s68, %s69
      %p73 = pneg %p67
      %p74 = scmp.eq.s32.totalorder %s11, 1
      %p75 = por %p73, %p74
      %p76 = scmp.ne.s32.totalorder %s68, %s71
      %p77 = scmp.eq.s32.totalorder %s11, 0
      %p78 = por %p76, %p77
      %p79 = scmp.ne.s32.totalorder %s68, %s71
      %p80 = scmp.eq.s32.totalorder %s16, 1
      %p81 = por %p79, %p80
      %p82 = scmp.ne.s32.totalorder %s71, %s72
      %p83 = scmp.eq.s32.totalorder %s16, 0
      %p84 = por %p82, %p83
      %p85 = scmp.ne.s32.totalorder %s71, %s72
      %p86 = scmp.eq.s32.totalorder %s17, 1
      %p87 = por %p85, %p86
      %p89 = scmp.ne.s32.totalorder %s72, %s88
      %p90 = scmp.eq.s32.totalorder %s17, 0
      %p91 = por %p89, %p90
      %s92 = ssub.s32 %s11, %s18
      %p93 = scmp.eq.s32.totalorder %s92, 0
      %s95 = sadd.s32 %s94, 1
      %s96 = scalar_select %p93, %s94, %s95
      %p99 = pneg %p93
      %p100 = scmp.eq.s32.totalorder %s11, 1
      %p101 = por %p99, %p100
      %p102 = scmp.ne.s32.totalorder %s94, %s97
      %p103 = scmp.eq.s32.totalorder %s11, 0
      %p104 = por %p102, %p103
      %p105 = scmp.ne.s32.totalorder %s94, %s97
      %p106 = scmp.eq.s32.totalorder %s16, 1
      %p107 = por %p105, %p106
      %p108 = scmp.ne.s32.totalorder %s97, %s98
      %p109 = scmp.eq.s32.totalorder %s16, 0
      %p110 = por %p108, %p109
      %p111 = scmp.ne.s32.totalorder %s97, %s98
      %p112 = scmp.eq.s32.totalorder %s17, 1
      %p113 = por %p111, %p112
      %p115 = scmp.ne.s32.totalorder %s98, %s114
      %p116 = scmp.eq.s32.totalorder %s17, 0
      %p117 = por %p115, %p116
      %s118 = ssub.s32 %s11, %s18
      %p119 = scmp.eq.s32.totalorder %s118, 0
      %s121 = sadd.s32 %s120, 1
      %s122 = scalar_select %p119, %s120, %s121
      %p125 = pneg %p119
      %p126 = scmp.eq.s32.totalorder %s11, 1
      %p127 = por %p125, %p126
      %p128 = scmp.ne.s32.totalorder %s120, %s123
      %p129 = scmp.eq.s32.totalorder %s11, 0
      %p130 = por %p128, %p129
      %p131 = scmp.ne.s32.totalorder %s120, %s123
      %p132 = scmp.eq.s32.totalorder %s16, 1
      %p133 = por %p131, %p132
      %p134 = scmp.ne.s32.totalorder %s123, %s124
      %p135 = scmp.eq.s32.totalorder %s16, 0
      %p136 = por %p134, %p135
      %p137 = scmp.ne.s32.totalorder %s123, %s124
      %p138 = scmp.eq.s32.totalorder %s17, 1
      %p139 = por %p137, %p138
      %p141 = scmp.ne.s32.totalorder %s124, %s140
      %p142 = scmp.eq.s32.totalorder %s17, 0
      %p143 = por %p141, %p142
      %s144 = ssub.s32 %s11, %s18
      %p145 = scmp.eq.s32.totalorder %s144, 0
      %s147 = sadd.s32 %s146, 1
      %s148 = scalar_select %p145, %s146, %s147
      %p151 = pneg %p145
      %p152 = scmp.eq.s32.totalorder %s11, 1
      %p153 = por %p151, %p152
      %p154 = scmp.ne.s32.totalorder %s146, %s149
      %p155 = scmp.eq.s32.totalorder %s11, 0
      %p156 = por %p154, %p155
      %p157 = scmp.ne.s32.totalorder %s146, %s149
      %p158 = scmp.eq.s32.totalorder %s16, 1
      %p159 = por %p157, %p158
      %p160 = scmp.ne.s32.totalorder %s149, %s150
      %p161 = scmp.eq.s32.totalorder %s16, 0
      %p162 = por %p160, %p161
      %p163 = scmp.ne.s32.totalorder %s149, %s150
      %p164 = scmp.eq.s32.totalorder %s17, 1
      %p165 = por %p163, %p164
      %p167 = scmp.ne.s32.totalorder %s150, %s166
      %p168 = scmp.eq.s32.totalorder %s17, 0
      %p169 = por %p167, %p168
      %p170 = scmp.le.s32.totalorder 1, %s11
      %p171 = scmp.lt.s32.totalorder %s11, 3
      %p172 = pnand %p170, %p171
      %p173 = pneg %p172
      // Predicated region
      $region9: #{simple_3dcnn_encoder.5} parent=5 // pred_check
        _
      $region10: #{simple_3dcnn_encoder.5} parent=5 // pred_check_branch
        %175 = sbr.rel (%p172) target = $region12
      $region11: #{simple_3dcnn_encoder.5} parent=5 // pred_region
        %s176 = ssub.s32 %s11, 1
        // Predicated region
        $region13: #{simple_3dcnn_encoder.5} parent=11 // pred_check
          %p177 = pneg %p32
        $region14: #{simple_3dcnn_encoder.5} parent=11 // pred_check_branch
          %179 = sbr.rel (%p177) target = $region16
        $region15: #{simple_3dcnn_encoder.5} parent=11 // pred_region
          _
        $region16: #{simple_3dcnn_encoder.5} parent=11 // pred_fallthru
          _
      $region12: #{simple_3dcnn_encoder.5} parent=5 // pred_fallthru
        _
      %p180 = scmp.lt.s32.totalorder %s11, 2
      // Predicated region
      $region17: #{simple_3dcnn_encoder.5} parent=5 // pred_check
        %p181 = pneg %p180
      $region18: #{simple_3dcnn_encoder.5} parent=5 // pred_check_branch
        %183 = sbr.rel (%p181) target = $region20
      $region19: #{simple_3dcnn_encoder.5} parent=5 // pred_region
        // Predicated region
        $region21: #{simple_3dcnn_encoder.5} parent=19 // pred_check
          %p184 = pneg %p52
        $region22: #{simple_3dcnn_encoder.5} parent=19 // pred_check_branch
          %186 = sbr.rel (%p184) target = $region24
        $region23: #{simple_3dcnn_encoder.5} parent=19 // pred_region
          %s187 = sand.u32 %s42, 1
          %s188 = sand.u32 %s42, 1
          %s189 = smul.addr %s188, 1728
          %s190 = scalar_lea.vmem [#allocation2], %s189
          %s191 = smul.addr %s11, 4
          %s192 = scalar_lea.vmem %s1, %s191
          // Predicated region
          $region25: #{simple_3dcnn_encoder.5} parent=23 // pred_check
            _
          $region26: #{simple_3dcnn_encoder.5} parent=23 // pred_check_branch
            %194 = sbr.rel (0) target = $region28
          $region27: #{simple_3dcnn_encoder.5} parent=23 // pred_region
            // Predicated region
            $region29: #{simple_3dcnn_encoder.5} parent=27 // pred_check
              _
            $region30: #{simple_3dcnn_encoder.5} parent=27 // pred_check_branch
              %196 = sbr.rel target = $region32
            $region31: #{simple_3dcnn_encoder.5} parent=27 // pred_region
              // Predicated region
              $region44: #{simple_3dcnn_encoder.5} parent=31 // pred_check
                _
              $region45: #{simple_3dcnn_encoder.5} parent=31 // pred_check_branch
                %1074 = sbr.rel target = $region47
              $region46: #{simple_3dcnn_encoder.5} parent=31 // pred_region
                loop: start=0, step=1, limit=0
                $region48: #{simple_3dcnn_encoder.5} parent=46 // loop_pre_header
                  _
                $region49: #{simple_3dcnn_encoder.5} parent=46 // loop_header
                  %s1076 = sphi 0, %s1080
                  %p1077 = scmp.ge.s32.totalorder %s1076, 0
                  %s1081 = sphi 0, %s1950
                  %s1082 = sphi %s192, %s1953
                  %s1083 = sphi %s190, %s1954
                $region50: #{simple_3dcnn_encoder.5} parent=46 // loop_header_branch
                  %1079 = sbr.rel (%p1077) target = $region54
                $region51: #{simple_3dcnn_encoder.5} parent=46 // loop_body
                  %v1084 = vld [vmem:[%s1082] sm:$0xff]
                  %1085 = vst [vmem:[%s1083] sm:$0xff] %v1084
                  %v1086 = vld [vmem:[%s1082 + $0x8] sm:$0xff]
                  %1087 = vst [vmem:[%s1083 + $0x4] sm:$0xff] %v1086
                  %v1088 = vld [vmem:[%s1082 + $0x10] sm:$0xff]
                  %1089 = vst [vmem:[%s1083 + $0x8] sm:$0xff] %v1088
                  %v1090 = vld [vmem:[%s1082 + $0x18] sm:$0xff]
                  %1091 = vst [vmem:[%s1083 + $0xc] sm:$0xff] %v1090
                  %v1092 = vld [vmem:[%s1082 + $0x20] sm:$0xff]
                  %1093 = vst [vmem:[%s1083 + $0x10] sm:$0xff] %v1092
                  %v1094 = vld [vmem:[%s1082 + $0x28] sm:$0xff]
                  %1095 = vst [vmem:[%s1083 + $0x14] sm:$0xff] %v1094
                  %v1096 = vld [vmem:[%s1082 + $0x30] sm:$0xff]
                  %1097 = vst [vmem:[%s1083 + $0x18] sm:$0xff] %v1096
                  %v1098 = vld [vmem:[%s1082 + $0x38] sm:$0xff]
                  %1099 = vst [vmem:[%s1083 + $0x1c] sm:$0xff] %v1098
                  %v1100 = vld [vmem:[%s1082 + $0x40] sm:$0xff]
                  %1101 = vst [vmem:[%s1083 + $0x20] sm:$0xff] %v1100
                  %v1102 = vld [vmem:[%s1082 + $0x48] sm:$0xff]
                  %1103 = vst [vmem:[%s1083 + $0x24] sm:$0xff] %v1102
                  %v1104 = vld [vmem:[%s1082 + $0x50] sm:$0xff]
                  %1105 = vst [vmem:[%s1083 + $0x28] sm:$0xff] %v1104
                  %v1106 = vld [vmem:[%s1082 + $0x58] sm:$0xff]
                  %1107 = vst [vmem:[%s1083 + $0x2c] sm:$0xff] %v1106
                  %v1108 = vld [vmem:[%s1082 + $0x60] sm:$0xff]
                  %1109 = vst [vmem:[%s1083 + $0x30] sm:$0xff] %v1108
                  %v1110 = vld [vmem:[%s1082 + $0x68] sm:$0xff]
                  %1111 = vst [vmem:[%s1083 + $0x34] sm:$0xff] %v1110
                  %v1112 = vld [vmem:[%s1082 + $0x70] sm:$0xff]
                  %1113 = vst [vmem:[%s1083 + $0x38] sm:$0xff] %v1112
                  %v1114 = vld [vmem:[%s1082 + $0x78] sm:$0xff]
                  %1115 = vst [vmem:[%s1083 + $0x3c] sm:$0xff] %v1114
                  %v1116 = vld [vmem:[%s1082 + $0x80] sm:$0xff]
                  %1117 = vst [vmem:[%s1083 + $0x40] sm:$0xff] %v1116
                  %v1118 = vld [vmem:[%s1082 + $0x88] sm:$0xff]
                  %1119 = vst [vmem:[%s1083 + $0x44] sm:$0xff] %v1118
                  %v1120 = vld [vmem:[%s1082 + $0x90] sm:$0xff]
                  %1121 = vst [vmem:[%s1083 + $0x48] sm:$0xff] %v1120
                  %v1122 = vld [vmem:[%s1082 + $0x98] sm:$0xff]
                  %1123 = vst [vmem:[%s1083 + $0x4c] sm:$0xff] %v1122
                  %v1124 = vld [vmem:[%s1082 + $0xa0] sm:$0xff]
                  %1125 = vst [vmem:[%s1083 + $0x50] sm:$0xff] %v1124
                  %v1126 = vld [vmem:[%s1082 + $0xa8] sm:$0xff]
                  %1127 = vst [vmem:[%s1083 + $0x54] sm:$0xff] %v1126
                  %v1128 = vld [vmem:[%s1082 + $0xb0] sm:$0xff]
                  %1129 = vst [vmem:[%s1083 + $0x58] sm:$0xff] %v1128
                  %v1130 = vld [vmem:[%s1082 + $0xb8] sm:$0xff]
                  %1131 = vst [vmem:[%s1083 + $0x5c] sm:$0xff] %v1130
                  %v1132 = vld [vmem:[%s1082 + $0xc0] sm:$0xff]
                  %1133 = vst [vmem:[%s1083 + $0x60] sm:$0xff] %v1132
                  %v1134 = vld [vmem:[%s1082 + $0xc8] sm:$0xff]
                  %1135 = vst [vmem:[%s1083 + $0x64] sm:$0xff] %v1134
                  %v1136 = vld [vmem:[%s1082 + $0xd0] sm:$0xff]
                  %1137 = vst [vmem:[%s1083 + $0x68] sm:$0xff] %v1136
                  %v1138 = vld [vmem:[%s1082 + $0xd8] sm:$0xff]
                  %1139 = vst [vmem:[%s1083 + $0x6c] sm:$0xff] %v1138
                  %v1140 = vld [vmem:[%s1082 + $0xe0] sm:$0xff]
                  %1141 = vst [vmem:[%s1083 + $0x70] sm:$0xff] %v1140
                  %v1142 = vld [vmem:[%s1082 + $0xe8] sm:$0xff]
                  %1143 = vst [vmem:[%s1083 + $0x74] sm:$0xff] %v1142
                  %v1144 = vld [vmem:[%s1082 + $0xf0] sm:$0xff]
                  %1145 = vst [vmem:[%s1083 + $0x78] sm:$0xff] %v1144
                  %v1146 = vld [vmem:[%s1082 + $0xf8] sm:$0xff]
                  %1147 = vst [vmem:[%s1083 + $0x7c] sm:$0xff] %v1146
                  %v1148 = vld [vmem:[%s1082 + $0x100] sm:$0xff]
                  %1149 = vst [vmem:[%s1083 + $0x80] sm:$0xff] %v1148
                  %v1150 = vld [vmem:[%s1082 + $0x108] sm:$0xff]
                  %1151 = vst [vmem:[%s1083 + $0x84] sm:$0xff] %v1150
                  %v1152 = vld [vmem:[%s1082 + $0x110] sm:$0xff]
                  %1153 = vst [vmem:[%s1083 + $0x88] sm:$0xff] %v1152
                  %v1154 = vld [vmem:[%s1082 + $0x118] sm:$0xff]
                  %1155 = vst [vmem:[%s1083 + $0x8c] sm:$0xff] %v1154
                  %v1156 = vld [vmem:[%s1082 + $0x120] sm:$0xff]
                  %1157 = vst [vmem:[%s1083 + $0x90] sm:$0xff] %v1156
                  %v1158 = vld [vmem:[%s1082 + $0x128] sm:$0xff]
                  %1159 = vst [vmem:[%s1083 + $0x94] sm:$0xff] %v1158
                  %v1160 = vld [vmem:[%s1082 + $0x130] sm:$0xff]
                  %1161 = vst [vmem:[%s1083 + $0x98] sm:$0xff] %v1160
                  %v1162 = vld [vmem:[%s1082 + $0x138] sm:$0xff]
                  %1163 = vst [vmem:[%s1083 + $0x9c] sm:$0xff] %v1162
                  %v1164 = vld [vmem:[%s1082 + $0x140] sm:$0xff]
                  %1165 = vst [vmem:[%s1083 + $0xa0] sm:$0xff] %v1164
                  %v1166 = vld [vmem:[%s1082 + $0x148] sm:$0xff]
                  %1167 = vst [vmem:[%s1083 + $0xa4] sm:$0xff] %v1166
                  %v1168 = vld [vmem:[%s1082 + $0x150] sm:$0xff]
                  %1169 = vst [vmem:[%s1083 + $0xa8] sm:$0xff] %v1168
                  %v1170 = vld [vmem:[%s1082 + $0x158] sm:$0xff]
                  %1171 = vst [vmem:[%s1083 + $0xac] sm:$0xff] %v1170
                  %v1172 = vld [vmem:[%s1082 + $0x160] sm:$0xff]
                  %1173 = vst [vmem:[%s1083 + $0xb0] sm:$0xff] %v1172
                  %v1174 = vld [vmem:[%s1082 + $0x168] sm:$0xff]
                  %1175 = vst [vmem:[%s1083 + $0xb4] sm:$0xff] %v1174
                  %v1176 = vld [vmem:[%s1082 + $0x170] sm:$0xff]
                  %1177 = vst [vmem:[%s1083 + $0xb8] sm:$0xff] %v1176
                  %v1178 = vld [vmem:[%s1082 + $0x178] sm:$0xff]
                  %1179 = vst [vmem:[%s1083 + $0xbc] sm:$0xff] %v1178
                  %v1180 = vld [vmem:[%s1082 + $0x180] sm:$0xff]
                  %1181 = vst [vmem:[%s1083 + $0xc0] sm:$0xff] %v1180
                  %v1182 = vld [vmem:[%s1082 + $0x188] sm:$0xff]
                  %1183 = vst [vmem:[%s1083 + $0xc4] sm:$0xff] %v1182
                  %v1184 = vld [vmem:[%s1082 + $0x190] sm:$0xff]
                  %1185 = vst [vmem:[%s1083 + $0xc8] sm:$0xff] %v1184
                  %v1186 = vld [vmem:[%s1082 + $0x198] sm:$0xff]
                  %1187 = vst [vmem:[%s1083 + $0xcc] sm:$0xff] %v1186
                  %v1188 = vld [vmem:[%s1082 + $0x1a0] sm:$0xff]
                  %1189 = vst [vmem:[%s1083 + $0xd0] sm:$0xff] %v1188
                  %v1190 = vld [vmem:[%s1082 + $0x1a8] sm:$0xff]
                  %1191 = vst [vmem:[%s1083 + $0xd4] sm:$0xff] %v1190
                  %v1192 = vld [vmem:[%s1082 + $0x1b0] sm:$0xff]
                  %1193 = vst [vmem:[%s1083 + $0xd8] sm:$0xff] %v1192
                  %v1194 = vld [vmem:[%s1082 + $0x1b8] sm:$0xff]
                  %1195 = vst [vmem:[%s1083 + $0xdc] sm:$0xff] %v1194
                  %v1196 = vld [vmem:[%s1082 + $0x1c0] sm:$0xff]
                  %1197 = vst [vmem:[%s1083 + $0xe0] sm:$0xff] %v1196
                  %v1198 = vld [vmem:[%s1082 + $0x1c8] sm:$0xff]
                  %1199 = vst [vmem:[%s1083 + $0xe4] sm:$0xff] %v1198
                  %v1200 = vld [vmem:[%s1082 + $0x1d0] sm:$0xff]
                  %1201 = vst [vmem:[%s1083 + $0xe8] sm:$0xff] %v1200
                  %v1202 = vld [vmem:[%s1082 + $0x1d8] sm:$0xff]
                  %1203 = vst [vmem:[%s1083 + $0xec] sm:$0xff] %v1202
                  %v1204 = vld [vmem:[%s1082 + $0x1e0] sm:$0xff]
                  %1205 = vst [vmem:[%s1083 + $0xf0] sm:$0xff] %v1204
                  %v1206 = vld [vmem:[%s1082 + $0x1e8] sm:$0xff]
                  %1207 = vst [vmem:[%s1083 + $0xf4] sm:$0xff] %v1206
                  %v1208 = vld [vmem:[%s1082 + $0x1f0] sm:$0xff]
                  %1209 = vst [vmem:[%s1083 + $0xf8] sm:$0xff] %v1208
                  %v1210 = vld [vmem:[%s1082 + $0x1f8] sm:$0xff]
                  %1211 = vst [vmem:[%s1083 + $0xfc] sm:$0xff] %v1210
                  %v1212 = vld [vmem:[%s1082 + $0x200] sm:$0xff]
                  %1213 = vst [vmem:[%s1083 + $0x100] sm:$0xff] %v1212
                  %v1214 = vld [vmem:[%s1082 + $0x208] sm:$0xff]
                  %1215 = vst [vmem:[%s1083 + $0x104] sm:$0xff] %v1214
                  %v1216 = vld [vmem:[%s1082 + $0x210] sm:$0xff]
                  %1217 = vst [vmem:[%s1083 + $0x108] sm:$0xff] %v1216
                  %v1218 = vld [vmem:[%s1082 + $0x218] sm:$0xff]
                  %1219 = vst [vmem:[%s1083 + $0x10c] sm:$0xff] %v1218
                  %v1220 = vld [vmem:[%s1082 + $0x220] sm:$0xff]
                  %1221 = vst [vmem:[%s1083 + $0x110] sm:$0xff] %v1220
                  %v1222 = vld [vmem:[%s1082 + $0x228] sm:$0xff]
                  %1223 = vst [vmem:[%s1083 + $0x114] sm:$0xff] %v1222
                  %v1224 = vld [vmem:[%s1082 + $0x230] sm:$0xff]
                  %1225 = vst [vmem:[%s1083 + $0x118] sm:$0xff] %v1224
                  %v1226 = vld [vmem:[%s1082 + $0x238] sm:$0xff]
                  %1227 = vst [vmem:[%s1083 + $0x11c] sm:$0xff] %v1226
                  %v1228 = vld [vmem:[%s1082 + $0x240] sm:$0xff]
                  %1229 = vst [vmem:[%s1083 + $0x120] sm:$0xff] %v1228
                  %v1230 = vld [vmem:[%s1082 + $0x248] sm:$0xff]
                  %1231 = vst [vmem:[%s1083 + $0x124] sm:$0xff] %v1230
                  %v1232 = vld [vmem:[%s1082 + $0x250] sm:$0xff]
                  %1233 = vst [vmem:[%s1083 + $0x128] sm:$0xff] %v1232
                  %v1234 = vld [vmem:[%s1082 + $0x258] sm:$0xff]
                  %1235 = vst [vmem:[%s1083 + $0x12c] sm:$0xff] %v1234
                  %v1236 = vld [vmem:[%s1082 + $0x260] sm:$0xff]
                  %1237 = vst [vmem:[%s1083 + $0x130] sm:$0xff] %v1236
                  %v1238 = vld [vmem:[%s1082 + $0x268] sm:$0xff]
                  %1239 = vst [vmem:[%s1083 + $0x134] sm:$0xff] %v1238
                  %v1240 = vld [vmem:[%s1082 + $0x270] sm:$0xff]
                  %1241 = vst [vmem:[%s1083 + $0x138] sm:$0xff] %v1240
                  %v1242 = vld [vmem:[%s1082 + $0x278] sm:$0xff]
                  %1243 = vst [vmem:[%s1083 + $0x13c] sm:$0xff] %v1242
                  %v1244 = vld [vmem:[%s1082 + $0x280] sm:$0xff]
                  %1245 = vst [vmem:[%s1083 + $0x140] sm:$0xff] %v1244
                  %v1246 = vld [vmem:[%s1082 + $0x288] sm:$0xff]
                  %1247 = vst [vmem:[%s1083 + $0x144] sm:$0xff] %v1246
                  %v1248 = vld [vmem:[%s1082 + $0x290] sm:$0xff]
                  %1249 = vst [vmem:[%s1083 + $0x148] sm:$0xff] %v1248
                  %v1250 = vld [vmem:[%s1082 + $0x298] sm:$0xff]
                  %1251 = vst [vmem:[%s1083 + $0x14c] sm:$0xff] %v1250
                  %v1252 = vld [vmem:[%s1082 + $0x2a0] sm:$0xff]
                  %1253 = vst [vmem:[%s1083 + $0x150] sm:$0xff] %v1252
                  %v1254 = vld [vmem:[%s1082 + $0x2a8] sm:$0xff]
                  %1255 = vst [vmem:[%s1083 + $0x154] sm:$0xff] %v1254
                  %v1256 = vld [vmem:[%s1082 + $0x2b0] sm:$0xff]
                  %1257 = vst [vmem:[%s1083 + $0x158] sm:$0xff] %v1256
                  %v1258 = vld [vmem:[%s1082 + $0x2b8] sm:$0xff]
                  %1259 = vst [vmem:[%s1083 + $0x15c] sm:$0xff] %v1258
                  %v1260 = vld [vmem:[%s1082 + $0x2c0] sm:$0xff]
                  %1261 = vst [vmem:[%s1083 + $0x160] sm:$0xff] %v1260
                  %v1262 = vld [vmem:[%s1082 + $0x2c8] sm:$0xff]
                  %1263 = vst [vmem:[%s1083 + $0x164] sm:$0xff] %v1262
                  %v1264 = vld [vmem:[%s1082 + $0x2d0] sm:$0xff]
                  %1265 = vst [vmem:[%s1083 + $0x168] sm:$0xff] %v1264
                  %v1266 = vld [vmem:[%s1082 + $0x2d8] sm:$0xff]
                  %1267 = vst [vmem:[%s1083 + $0x16c] sm:$0xff] %v1266
                  %v1268 = vld [vmem:[%s1082 + $0x2e0] sm:$0xff]
                  %1269 = vst [vmem:[%s1083 + $0x170] sm:$0xff] %v1268
                  %v1270 = vld [vmem:[%s1082 + $0x2e8] sm:$0xff]
                  %1271 = vst [vmem:[%s1083 + $0x174] sm:$0xff] %v1270
                  %v1272 = vld [vmem:[%s1082 + $0x2f0] sm:$0xff]
                  %1273 = vst [vmem:[%s1083 + $0x178] sm:$0xff] %v1272
                  %v1274 = vld [vmem:[%s1082 + $0x2f8] sm:$0xff]
                  %1275 = vst [vmem:[%s1083 + $0x17c] sm:$0xff] %v1274
                  %v1276 = vld [vmem:[%s1082 + $0x300] sm:$0xff]
                  %1277 = vst [vmem:[%s1083 + $0x180] sm:$0xff] %v1276
                  %v1278 = vld [vmem:[%s1082 + $0x308] sm:$0xff]
                  %1279 = vst [vmem:[%s1083 + $0x184] sm:$0xff] %v1278
                  %v1280 = vld [vmem:[%s1082 + $0x310] sm:$0xff]
                  %1281 = vst [vmem:[%s1083 + $0x188] sm:$0xff] %v1280
                  %v1282 = vld [vmem:[%s1082 + $0x318] sm:$0xff]
                  %1283 = vst [vmem:[%s1083 + $0x18c] sm:$0xff] %v1282
                  %v1284 = vld [vmem:[%s1082 + $0x320] sm:$0xff]
                  %1285 = vst [vmem:[%s1083 + $0x190] sm:$0xff] %v1284
                  %v1286 = vld [vmem:[%s1082 + $0x328] sm:$0xff]
                  %1287 = vst [vmem:[%s1083 + $0x194] sm:$0xff] %v1286
                  %v1288 = vld [vmem:[%s1082 + $0x330] sm:$0xff]
                  %1289 = vst [vmem:[%s1083 + $0x198] sm:$0xff] %v1288
                  %v1290 = vld [vmem:[%s1082 + $0x338] sm:$0xff]
                  %1291 = vst [vmem:[%s1083 + $0x19c] sm:$0xff] %v1290
                  %v1292 = vld [vmem:[%s1082 + $0x340] sm:$0xff]
                  %1293 = vst [vmem:[%s1083 + $0x1a0] sm:$0xff] %v1292
                  %v1294 = vld [vmem:[%s1082 + $0x348] sm:$0xff]
                  %1295 = vst [vmem:[%s1083 + $0x1a4] sm:$0xff] %v1294
                  %v1296 = vld [vmem:[%s1082 + $0x350] sm:$0xff]
                  %1297 = vst [vmem:[%s1083 + $0x1a8] sm:$0xff] %v1296
                  %v1298 = vld [vmem:[%s1082 + $0x358] sm:$0xff]
                  %1299 = vst [vmem:[%s1083 + $0x1ac] sm:$0xff] %v1298
                  %v1300 = vld [vmem:[%s1082 + $0x360] sm:$0xff]
                  %1301 = vst [vmem:[%s1083 + $0x1b0] sm:$0xff] %v1300
                  %v1302 = vld [vmem:[%s1082 + $0x368] sm:$0xff]
                  %1303 = vst [vmem:[%s1083 + $0x1b4] sm:$0xff] %v1302
                  %v1304 = vld [vmem:[%s1082 + $0x370] sm:$0xff]
                  %1305 = vst [vmem:[%s1083 + $0x1b8] sm:$0xff] %v1304
                  %v1306 = vld [vmem:[%s1082 + $0x378] sm:$0xff]
                  %1307 = vst [vmem:[%s1083 + $0x1bc] sm:$0xff] %v1306
                  %v1308 = vld [vmem:[%s1082 + $0x380] sm:$0xff]
                  %1309 = vst [vmem:[%s1083 + $0x1c0] sm:$0xff] %v1308
                  %v1310 = vld [vmem:[%s1082 + $0x388] sm:$0xff]
                  %1311 = vst [vmem:[%s1083 + $0x1c4] sm:$0xff] %v1310
                  %v1312 = vld [vmem:[%s1082 + $0x390] sm:$0xff]
                  %1313 = vst [vmem:[%s1083 + $0x1c8] sm:$0xff] %v1312
                  %v1314 = vld [vmem:[%s1082 + $0x398] sm:$0xff]
                  %1315 = vst [vmem:[%s1083 + $0x1cc] sm:$0xff] %v1314
                  %v1316 = vld [vmem:[%s1082 + $0x3a0] sm:$0xff]
                  %1317 = vst [vmem:[%s1083 + $0x1d0] sm:$0xff] %v1316
                  %v1318 = vld [vmem:[%s1082 + $0x3a8] sm:$0xff]
                  %1319 = vst [vmem:[%s1083 + $0x1d4] sm:$0xff] %v1318
                  %v1320 = vld [vmem:[%s1082 + $0x3b0] sm:$0xff]
                  %1321 = vst [vmem:[%s1083 + $0x1d8] sm:$0xff] %v1320
                  %v1322 = vld [vmem:[%s1082 + $0x3b8] sm:$0xff]
                  %1323 = vst [vmem:[%s1083 + $0x1dc] sm:$0xff] %v1322
                  %v1324 = vld [vmem:[%s1082 + $0x3c0] sm:$0xff]
                  %1325 = vst [vmem:[%s1083 + $0x1e0] sm:$0xff] %v1324
                  %v1326 = vld [vmem:[%s1082 + $0x3c8] sm:$0xff]
                  %1327 = vst [vmem:[%s1083 + $0x1e4] sm:$0xff] %v1326
                  %v1328 = vld [vmem:[%s1082 + $0x3d0] sm:$0xff]
                  %1329 = vst [vmem:[%s1083 + $0x1e8] sm:$0xff] %v1328
                  %v1330 = vld [vmem:[%s1082 + $0x3d8] sm:$0xff]
                  %1331 = vst [vmem:[%s1083 + $0x1ec] sm:$0xff] %v1330
                  %v1332 = vld [vmem:[%s1082 + $0x3e0] sm:$0xff]
                  %1333 = vst [vmem:[%s1083 + $0x1f0] sm:$0xff] %v1332
                  %v1334 = vld [vmem:[%s1082 + $0x3e8] sm:$0xff]
                  %1335 = vst [vmem:[%s1083 + $0x1f4] sm:$0xff] %v1334
                  %v1336 = vld [vmem:[%s1082 + $0x3f0] sm:$0xff]
                  %1337 = vst [vmem:[%s1083 + $0x1f8] sm:$0xff] %v1336
                  %v1338 = vld [vmem:[%s1082 + $0x3f8] sm:$0xff]
                  %1339 = vst [vmem:[%s1083 + $0x1fc] sm:$0xff] %v1338
                  %v1340 = vld [vmem:[%s1082 + $0x400] sm:$0xff]
                  %1341 = vst [vmem:[%s1083 + $0x200] sm:$0xff] %v1340
                  %v1342 = vld [vmem:[%s1082 + $0x408] sm:$0xff]
                  %1343 = vst [vmem:[%s1083 + $0x204] sm:$0xff] %v1342
                  %v1344 = vld [vmem:[%s1082 + $0x410] sm:$0xff]
                  %1345 = vst [vmem:[%s1083 + $0x208] sm:$0xff] %v1344
                  %v1346 = vld [vmem:[%s1082 + $0x418] sm:$0xff]
                  %1347 = vst [vmem:[%s1083 + $0x20c] sm:$0xff] %v1346
                  %v1348 = vld [vmem:[%s1082 + $0x420] sm:$0xff]
                  %1349 = vst [vmem:[%s1083 + $0x210] sm:$0xff] %v1348
                  %v1350 = vld [vmem:[%s1082 + $0x428] sm:$0xff]
                  %1351 = vst [vmem:[%s1083 + $0x214] sm:$0xff] %v1350
                  %v1352 = vld [vmem:[%s1082 + $0x430] sm:$0xff]
                  %1353 = vst [vmem:[%s1083 + $0x218] sm:$0xff] %v1352
                  %v1354 = vld [vmem:[%s1082 + $0x438] sm:$0xff]
                  %1355 = vst [vmem:[%s1083 + $0x21c] sm:$0xff] %v1354
                  %v1356 = vld [vmem:[%s1082 + $0x440] sm:$0xff]
                  %1357 = vst [vmem:[%s1083 + $0x220] sm:$0xff] %v1356
                  %v1358 = vld [vmem:[%s1082 + $0x448] sm:$0xff]
                  %1359 = vst [vmem:[%s1083 + $0x224] sm:$0xff] %v1358
                  %v1360 = vld [vmem:[%s1082 + $0x450] sm:$0xff]
                  %1361 = vst [vmem:[%s1083 + $0x228] sm:$0xff] %v1360
                  %v1362 = vld [vmem:[%s1082 + $0x458] sm:$0xff]
                  %1363 = vst [vmem:[%s1083 + $0x22c] sm:$0xff] %v1362
                  %v1364 = vld [vmem:[%s1082 + $0x460] sm:$0xff]
                  %1365 = vst [vmem:[%s1083 + $0x230] sm:$0xff] %v1364
                  %v1366 = vld [vmem:[%s1082 + $0x468] sm:$0xff]
                  %1367 = vst [vmem:[%s1083 + $0x234] sm:$0xff] %v1366
                  %v1368 = vld [vmem:[%s1082 + $0x470] sm:$0xff]
                  %1369 = vst [vmem:[%s1083 + $0x238] sm:$0xff] %v1368
                  %v1370 = vld [vmem:[%s1082 + $0x478] sm:$0xff]
                  %1371 = vst [vmem:[%s1083 + $0x23c] sm:$0xff] %v1370
                  %v1372 = vld [vmem:[%s1082 + $0x480] sm:$0xff]
                  %1373 = vst [vmem:[%s1083 + $0x240] sm:$0xff] %v1372
                  %v1374 = vld [vmem:[%s1082 + $0x488] sm:$0xff]
                  %1375 = vst [vmem:[%s1083 + $0x244] sm:$0xff] %v1374
                  %v1376 = vld [vmem:[%s1082 + $0x490] sm:$0xff]
                  %1377 = vst [vmem:[%s1083 + $0x248] sm:$0xff] %v1376
                  %v1378 = vld [vmem:[%s1082 + $0x498] sm:$0xff]
                  %1379 = vst [vmem:[%s1083 + $0x24c] sm:$0xff] %v1378
                  %v1380 = vld [vmem:[%s1082 + $0x4a0] sm:$0xff]
                  %1381 = vst [vmem:[%s1083 + $0x250] sm:$0xff] %v1380
                  %v1382 = vld [vmem:[%s1082 + $0x4a8] sm:$0xff]
                  %1383 = vst [vmem:[%s1083 + $0x254] sm:$0xff] %v1382
                  %v1384 = vld [vmem:[%s1082 + $0x4b0] sm:$0xff]
                  %1385 = vst [vmem:[%s1083 + $0x258] sm:$0xff] %v1384
                  %v1386 = vld [vmem:[%s1082 + $0x4b8] sm:$0xff]
                  %1387 = vst [vmem:[%s1083 + $0x25c] sm:$0xff] %v1386
                  %v1388 = vld [vmem:[%s1082 + $0x4c0] sm:$0xff]
                  %1389 = vst [vmem:[%s1083 + $0x260] sm:$0xff] %v1388
                  %v1390 = vld [vmem:[%s1082 + $0x4c8] sm:$0xff]
                  %1391 = vst [vmem:[%s1083 + $0x264] sm:$0xff] %v1390
                  %v1392 = vld [vmem:[%s1082 + $0x4d0] sm:$0xff]
                  %1393 = vst [vmem:[%s1083 + $0x268] sm:$0xff] %v1392
                  %v1394 = vld [vmem:[%s1082 + $0x4d8] sm:$0xff]
                  %1395 = vst [vmem:[%s1083 + $0x26c] sm:$0xff] %v1394
                  %v1396 = vld [vmem:[%s1082 + $0x4e0] sm:$0xff]
                  %1397 = vst [vmem:[%s1083 + $0x270] sm:$0xff] %v1396
                  %v1398 = vld [vmem:[%s1082 + $0x4e8] sm:$0xff]
                  %1399 = vst [vmem:[%s1083 + $0x274] sm:$0xff] %v1398
                  %v1400 = vld [vmem:[%s1082 + $0x4f0] sm:$0xff]
                  %1401 = vst [vmem:[%s1083 + $0x278] sm:$0xff] %v1400
                  %v1402 = vld [vmem:[%s1082 + $0x4f8] sm:$0xff]
                  %1403 = vst [vmem:[%s1083 + $0x27c] sm:$0xff] %v1402
                  %v1404 = vld [vmem:[%s1082 + $0x500] sm:$0xff]
                  %1405 = vst [vmem:[%s1083 + $0x280] sm:$0xff] %v1404
                  %v1406 = vld [vmem:[%s1082 + $0x508] sm:$0xff]
                  %1407 = vst [vmem:[%s1083 + $0x284] sm:$0xff] %v1406
                  %v1408 = vld [vmem:[%s1082 + $0x510] sm:$0xff]
                  %1409 = vst [vmem:[%s1083 + $0x288] sm:$0xff] %v1408
                  %v1410 = vld [vmem:[%s1082 + $0x518] sm:$0xff]
                  %1411 = vst [vmem:[%s1083 + $0x28c] sm:$0xff] %v1410
                  %v1412 = vld [vmem:[%s1082 + $0x520] sm:$0xff]
                  %1413 = vst [vmem:[%s1083 + $0x290] sm:$0xff] %v1412
                  %v1414 = vld [vmem:[%s1082 + $0x528] sm:$0xff]
                  %1415 = vst [vmem:[%s1083 + $0x294] sm:$0xff] %v1414
                  %v1416 = vld [vmem:[%s1082 + $0x530] sm:$0xff]
                  %1417 = vst [vmem:[%s1083 + $0x298] sm:$0xff] %v1416
                  %v1418 = vld [vmem:[%s1082 + $0x538] sm:$0xff]
                  %1419 = vst [vmem:[%s1083 + $0x29c] sm:$0xff] %v1418
                  %v1420 = vld [vmem:[%s1082 + $0x540] sm:$0xff]
                  %1421 = vst [vmem:[%s1083 + $0x2a0] sm:$0xff] %v1420
                  %v1422 = vld [vmem:[%s1082 + $0x548] sm:$0xff]
                  %1423 = vst [vmem:[%s1083 + $0x2a4] sm:$0xff] %v1422
                  %v1424 = vld [vmem:[%s1082 + $0x550] sm:$0xff]
                  %1425 = vst [vmem:[%s1083 + $0x2a8] sm:$0xff] %v1424
                  %v1426 = vld [vmem:[%s1082 + $0x558] sm:$0xff]
                  %1427 = vst [vmem:[%s1083 + $0x2ac] sm:$0xff] %v1426
                  %v1428 = vld [vmem:[%s1082 + $0x560] sm:$0xff]
                  %1429 = vst [vmem:[%s1083 + $0x2b0] sm:$0xff] %v1428
                  %v1430 = vld [vmem:[%s1082 + $0x568] sm:$0xff]
                  %1431 = vst [vmem:[%s1083 + $0x2b4] sm:$0xff] %v1430
                  %v1432 = vld [vmem:[%s1082 + $0x570] sm:$0xff]
                  %1433 = vst [vmem:[%s1083 + $0x2b8] sm:$0xff] %v1432
                  %v1434 = vld [vmem:[%s1082 + $0x578] sm:$0xff]
                  %1435 = vst [vmem:[%s1083 + $0x2bc] sm:$0xff] %v1434
                  %v1436 = vld [vmem:[%s1082 + $0x580] sm:$0xff]
                  %1437 = vst [vmem:[%s1083 + $0x2c0] sm:$0xff] %v1436
                  %v1438 = vld [vmem:[%s1082 + $0x588] sm:$0xff]
                  %1439 = vst [vmem:[%s1083 + $0x2c4] sm:$0xff] %v1438
                  %v1440 = vld [vmem:[%s1082 + $0x590] sm:$0xff]
                  %1441 = vst [vmem:[%s1083 + $0x2c8] sm:$0xff] %v1440
                  %v1442 = vld [vmem:[%s1082 + $0x598] sm:$0xff]
                  %1443 = vst [vmem:[%s1083 + $0x2cc] sm:$0xff] %v1442
                  %v1444 = vld [vmem:[%s1082 + $0x5a0] sm:$0xff]
                  %1445 = vst [vmem:[%s1083 + $0x2d0] sm:$0xff] %v1444
                  %v1446 = vld [vmem:[%s1082 + $0x5a8] sm:$0xff]
                  %1447 = vst [vmem:[%s1083 + $0x2d4] sm:$0xff] %v1446
                  %v1448 = vld [vmem:[%s1082 + $0x5b0] sm:$0xff]
                  %1449 = vst [vmem:[%s1083 + $0x2d8] sm:$0xff] %v1448
                  %v1450 = vld [vmem:[%s1082 + $0x5b8] sm:$0xff]
                  %1451 = vst [vmem:[%s1083 + $0x2dc] sm:$0xff] %v1450
                  %v1452 = vld [vmem:[%s1082 + $0x5c0] sm:$0xff]
                  %1453 = vst [vmem:[%s1083 + $0x2e0] sm:$0xff] %v1452
                  %v1454 = vld [vmem:[%s1082 + $0x5c8] sm:$0xff]
                  %1455 = vst [vmem:[%s1083 + $0x2e4] sm:$0xff] %v1454
                  %v1456 = vld [vmem:[%s1082 + $0x5d0] sm:$0xff]
                  %1457 = vst [vmem:[%s1083 + $0x2e8] sm:$0xff] %v1456
                  %v1458 = vld [vmem:[%s1082 + $0x5d8] sm:$0xff]
                  %1459 = vst [vmem:[%s1083 + $0x2ec] sm:$0xff] %v1458
                  %v1460 = vld [vmem:[%s1082 + $0x5e0] sm:$0xff]
                  %1461 = vst [vmem:[%s1083 + $0x2f0] sm:$0xff] %v1460
                  %v1462 = vld [vmem:[%s1082 + $0x5e8] sm:$0xff]
                  %1463 = vst [vmem:[%s1083 + $0x2f4] sm:$0xff] %v1462
                  %v1464 = vld [vmem:[%s1082 + $0x5f0] sm:$0xff]
                  %1465 = vst [vmem:[%s1083 + $0x2f8] sm:$0xff] %v1464
                  %v1466 = vld [vmem:[%s1082 + $0x5f8] sm:$0xff]
                  %1467 = vst [vmem:[%s1083 + $0x2fc] sm:$0xff] %v1466
                  %v1468 = vld [vmem:[%s1082 + $0x600] sm:$0xff]
                  %1469 = vst [vmem:[%s1083 + $0x300] sm:$0xff] %v1468
                  %v1470 = vld [vmem:[%s1082 + $0x608] sm:$0xff]
                  %1471 = vst [vmem:[%s1083 + $0x304] sm:$0xff] %v1470
                  %v1472 = vld [vmem:[%s1082 + $0x610] sm:$0xff]
                  %1473 = vst [vmem:[%s1083 + $0x308] sm:$0xff] %v1472
                  %v1474 = vld [vmem:[%s1082 + $0x618] sm:$0xff]
                  %1475 = vst [vmem:[%s1083 + $0x30c] sm:$0xff] %v1474
                  %v1476 = vld [vmem:[%s1082 + $0x620] sm:$0xff]
                  %1477 = vst [vmem:[%s1083 + $0x310] sm:$0xff] %v1476
                  %v1478 = vld [vmem:[%s1082 + $0x628] sm:$0xff]
                  %1479 = vst [vmem:[%s1083 + $0x314] sm:$0xff] %v1478
                  %v1480 = vld [vmem:[%s1082 + $0x630] sm:$0xff]
                  %1481 = vst [vmem:[%s1083 + $0x318] sm:$0xff] %v1480
                  %v1482 = vld [vmem:[%s1082 + $0x638] sm:$0xff]
                  %1483 = vst [vmem:[%s1083 + $0x31c] sm:$0xff] %v1482
                  %v1484 = vld [vmem:[%s1082 + $0x640] sm:$0xff]
                  %1485 = vst [vmem:[%s1083 + $0x320] sm:$0xff] %v1484
                  %v1486 = vld [vmem:[%s1082 + $0x648] sm:$0xff]
                  %1487 = vst [vmem:[%s1083 + $0x324] sm:$0xff] %v1486
                  %v1488 = vld [vmem:[%s1082 + $0x650] sm:$0xff]
                  %1489 = vst [vmem:[%s1083 + $0x328] sm:$0xff] %v1488
                  %v1490 = vld [vmem:[%s1082 + $0x658] sm:$0xff]
                  %1491 = vst [vmem:[%s1083 + $0x32c] sm:$0xff] %v1490
                  %v1492 = vld [vmem:[%s1082 + $0x660] sm:$0xff]
                  %1493 = vst [vmem:[%s1083 + $0x330] sm:$0xff] %v1492
                  %v1494 = vld [vmem:[%s1082 + $0x668] sm:$0xff]
                  %1495 = vst [vmem:[%s1083 + $0x334] sm:$0xff] %v1494
                  %v1496 = vld [vmem:[%s1082 + $0x670] sm:$0xff]
                  %1497 = vst [vmem:[%s1083 + $0x338] sm:$0xff] %v1496
                  %v1498 = vld [vmem:[%s1082 + $0x678] sm:$0xff]
                  %1499 = vst [vmem:[%s1083 + $0x33c] sm:$0xff] %v1498
                  %v1500 = vld [vmem:[%s1082 + $0x680] sm:$0xff]
                  %1501 = vst [vmem:[%s1083 + $0x340] sm:$0xff] %v1500
                  %v1502 = vld [vmem:[%s1082 + $0x688] sm:$0xff]
                  %1503 = vst [vmem:[%s1083 + $0x344] sm:$0xff] %v1502
                  %v1504 = vld [vmem:[%s1082 + $0x690] sm:$0xff]
                  %1505 = vst [vmem:[%s1083 + $0x348] sm:$0xff] %v1504
                  %v1506 = vld [vmem:[%s1082 + $0x698] sm:$0xff]
                  %1507 = vst [vmem:[%s1083 + $0x34c] sm:$0xff] %v1506
                  %v1508 = vld [vmem:[%s1082 + $0x6a0] sm:$0xff]
                  %1509 = vst [vmem:[%s1083 + $0x350] sm:$0xff] %v1508
                  %v1510 = vld [vmem:[%s1082 + $0x6a8] sm:$0xff]
                  %1511 = vst [vmem:[%s1083 + $0x354] sm:$0xff] %v1510
                  %v1512 = vld [vmem:[%s1082 + $0x6b0] sm:$0xff]
                  %1513 = vst [vmem:[%s1083 + $0x358] sm:$0xff] %v1512
                  %v1514 = vld [vmem:[%s1082 + $0x6b8] sm:$0xff]
                  %1515 = vst [vmem:[%s1083 + $0x35c] sm:$0xff] %v1514
                  %v1516 = vld [vmem:[%s1082 + $0x6c0] sm:$0xff]
                  %1517 = vst [vmem:[%s1083 + $0x360] sm:$0xff] %v1516
                  %v1518 = vld [vmem:[%s1082 + $0x6c8] sm:$0xff]
                  %1519 = vst [vmem:[%s1083 + $0x364] sm:$0xff] %v1518
                  %v1520 = vld [vmem:[%s1082 + $0x6d0] sm:$0xff]
                  %1521 = vst [vmem:[%s1083 + $0x368] sm:$0xff] %v1520
                  %v1522 = vld [vmem:[%s1082 + $0x6d8] sm:$0xff]
                  %1523 = vst [vmem:[%s1083 + $0x36c] sm:$0xff] %v1522
                  %v1524 = vld [vmem:[%s1082 + $0x6e0] sm:$0xff]
                  %1525 = vst [vmem:[%s1083 + $0x370] sm:$0xff] %v1524
                  %v1526 = vld [vmem:[%s1082 + $0x6e8] sm:$0xff]
                  %1527 = vst [vmem:[%s1083 + $0x374] sm:$0xff] %v1526
                  %v1528 = vld [vmem:[%s1082 + $0x6f0] sm:$0xff]
                  %1529 = vst [vmem:[%s1083 + $0x378] sm:$0xff] %v1528
                  %v1530 = vld [vmem:[%s1082 + $0x6f8] sm:$0xff]
                  %1531 = vst [vmem:[%s1083 + $0x37c] sm:$0xff] %v1530
                  %v1532 = vld [vmem:[%s1082 + $0x700] sm:$0xff]
                  %1533 = vst [vmem:[%s1083 + $0x380] sm:$0xff] %v1532
                  %v1534 = vld [vmem:[%s1082 + $0x708] sm:$0xff]
                  %1535 = vst [vmem:[%s1083 + $0x384] sm:$0xff] %v1534
                  %v1536 = vld [vmem:[%s1082 + $0x710] sm:$0xff]
                  %1537 = vst [vmem:[%s1083 + $0x388] sm:$0xff] %v1536
                  %v1538 = vld [vmem:[%s1082 + $0x718] sm:$0xff]
                  %1539 = vst [vmem:[%s1083 + $0x38c] sm:$0xff] %v1538
                  %v1540 = vld [vmem:[%s1082 + $0x720] sm:$0xff]
                  %1541 = vst [vmem:[%s1083 + $0x390] sm:$0xff] %v1540
                  %v1542 = vld [vmem:[%s1082 + $0x728] sm:$0xff]
                  %1543 = vst [vmem:[%s1083 + $0x394] sm:$0xff] %v1542
                  %v1544 = vld [vmem:[%s1082 + $0x730] sm:$0xff]
                  %1545 = vst [vmem:[%s1083 + $0x398] sm:$0xff] %v1544
                  %v1546 = vld [vmem:[%s1082 + $0x738] sm:$0xff]
                  %1547 = vst [vmem:[%s1083 + $0x39c] sm:$0xff] %v1546
                  %v1548 = vld [vmem:[%s1082 + $0x740] sm:$0xff]
                  %1549 = vst [vmem:[%s1083 + $0x3a0] sm:$0xff] %v1548
                  %v1550 = vld [vmem:[%s1082 + $0x748] sm:$0xff]
                  %1551 = vst [vmem:[%s1083 + $0x3a4] sm:$0xff] %v1550
                  %v1552 = vld [vmem:[%s1082 + $0x750] sm:$0xff]
                  %1553 = vst [vmem:[%s1083 + $0x3a8] sm:$0xff] %v1552
                  %v1554 = vld [vmem:[%s1082 + $0x758] sm:$0xff]
                  %1555 = vst [vmem:[%s1083 + $0x3ac] sm:$0xff] %v1554
                  %v1556 = vld [vmem:[%s1082 + $0x760] sm:$0xff]
                  %1557 = vst [vmem:[%s1083 + $0x3b0] sm:$0xff] %v1556
                  %v1558 = vld [vmem:[%s1082 + $0x768] sm:$0xff]
                  %1559 = vst [vmem:[%s1083 + $0x3b4] sm:$0xff] %v1558
                  %v1560 = vld [vmem:[%s1082 + $0x770] sm:$0xff]
                  %1561 = vst [vmem:[%s1083 + $0x3b8] sm:$0xff] %v1560
                  %v1562 = vld [vmem:[%s1082 + $0x778] sm:$0xff]
                  %1563 = vst [vmem:[%s1083 + $0x3bc] sm:$0xff] %v1562
                  %v1564 = vld [vmem:[%s1082 + $0x780] sm:$0xff]
                  %1565 = vst [vmem:[%s1083 + $0x3c0] sm:$0xff] %v1564
                  %v1566 = vld [vmem:[%s1082 + $0x788] sm:$0xff]
                  %1567 = vst [vmem:[%s1083 + $0x3c4] sm:$0xff] %v1566
                  %v1568 = vld [vmem:[%s1082 + $0x790] sm:$0xff]
                  %1569 = vst [vmem:[%s1083 + $0x3c8] sm:$0xff] %v1568
                  %v1570 = vld [vmem:[%s1082 + $0x798] sm:$0xff]
                  %1571 = vst [vmem:[%s1083 + $0x3cc] sm:$0xff] %v1570
                  %v1572 = vld [vmem:[%s1082 + $0x7a0] sm:$0xff]
                  %1573 = vst [vmem:[%s1083 + $0x3d0] sm:$0xff] %v1572
                  %v1574 = vld [vmem:[%s1082 + $0x7a8] sm:$0xff]
                  %1575 = vst [vmem:[%s1083 + $0x3d4] sm:$0xff] %v1574
                  %v1576 = vld [vmem:[%s1082 + $0x7b0] sm:$0xff]
                  %1577 = vst [vmem:[%s1083 + $0x3d8] sm:$0xff] %v1576
                  %v1578 = vld [vmem:[%s1082 + $0x7b8] sm:$0xff]
                  %1579 = vst [vmem:[%s1083 + $0x3dc] sm:$0xff] %v1578
                  %v1580 = vld [vmem:[%s1082 + $0x7c0] sm:$0xff]
                  %1581 = vst [vmem:[%s1083 + $0x3e0] sm:$0xff] %v1580
                  %v1582 = vld [vmem:[%s1082 + $0x7c8] sm:$0xff]
                  %1583 = vst [vmem:[%s1083 + $0x3e4] sm:$0xff] %v1582
                  %v1584 = vld [vmem:[%s1082 + $0x7d0] sm:$0xff]
                  %1585 = vst [vmem:[%s1083 + $0x3e8] sm:$0xff] %v1584
                  %v1586 = vld [vmem:[%s1082 + $0x7d8] sm:$0xff]
                  %1587 = vst [vmem:[%s1083 + $0x3ec] sm:$0xff] %v1586
                  %v1588 = vld [vmem:[%s1082 + $0x7e0] sm:$0xff]
                  %1589 = vst [vmem:[%s1083 + $0x3f0] sm:$0xff] %v1588
                  %v1590 = vld [vmem:[%s1082 + $0x7e8] sm:$0xff]
                  %1591 = vst [vmem:[%s1083 + $0x3f4] sm:$0xff] %v1590
                  %v1592 = vld [vmem:[%s1082 + $0x7f0] sm:$0xff]
                  %1593 = vst [vmem:[%s1083 + $0x3f8] sm:$0xff] %v1592
                  %v1594 = vld [vmem:[%s1082 + $0x7f8] sm:$0xff]
                  %1595 = vst [vmem:[%s1083 + $0x3fc] sm:$0xff] %v1594
                  %v1596 = vld [vmem:[%s1082 + $0x800] sm:$0xff]
                  %1597 = vst [vmem:[%s1083 + $0x400] sm:$0xff] %v1596
                  %v1598 = vld [vmem:[%s1082 + $0x808] sm:$0xff]
                  %1599 = vst [vmem:[%s1083 + $0x404] sm:$0xff] %v1598
                  %v1600 = vld [vmem:[%s1082 + $0x810] sm:$0xff]
                  %1601 = vst [vmem:[%s1083 + $0x408] sm:$0xff] %v1600
                  %v1602 = vld [vmem:[%s1082 + $0x818] sm:$0xff]
                  %1603 = vst [vmem:[%s1083 + $0x40c] sm:$0xff] %v1602
                  %v1604 = vld [vmem:[%s1082 + $0x820] sm:$0xff]
                  %1605 = vst [vmem:[%s1083 + $0x410] sm:$0xff] %v1604
                  %v1606 = vld [vmem:[%s1082 + $0x828] sm:$0xff]
                  %1607 = vst [vmem:[%s1083 + $0x414] sm:$0xff] %v1606
                  %v1608 = vld [vmem:[%s1082 + $0x830] sm:$0xff]
                  %1609 = vst [vmem:[%s1083 + $0x418] sm:$0xff] %v1608
                  %v1610 = vld [vmem:[%s1082 + $0x838] sm:$0xff]
                  %1611 = vst [vmem:[%s1083 + $0x41c] sm:$0xff] %v1610
                  %v1612 = vld [vmem:[%s1082 + $0x840] sm:$0xff]
                  %1613 = vst [vmem:[%s1083 + $0x420] sm:$0xff] %v1612
                  %v1614 = vld [vmem:[%s1082 + $0x848] sm:$0xff]
                  %1615 = vst [vmem:[%s1083 + $0x424] sm:$0xff] %v1614
                  %v1616 = vld [vmem:[%s1082 + $0x850] sm:$0xff]
                  %1617 = vst [vmem:[%s1083 + $0x428] sm:$0xff] %v1616
                  %v1618 = vld [vmem:[%s1082 + $0x858] sm:$0xff]
                  %1619 = vst [vmem:[%s1083 + $0x42c] sm:$0xff] %v1618
                  %v1620 = vld [vmem:[%s1082 + $0x860] sm:$0xff]
                  %1621 = vst [vmem:[%s1083 + $0x430] sm:$0xff] %v1620
                  %v1622 = vld [vmem:[%s1082 + $0x868] sm:$0xff]
                  %1623 = vst [vmem:[%s1083 + $0x434] sm:$0xff] %v1622
                  %v1624 = vld [vmem:[%s1082 + $0x870] sm:$0xff]
                  %1625 = vst [vmem:[%s1083 + $0x438] sm:$0xff] %v1624
                  %v1626 = vld [vmem:[%s1082 + $0x878] sm:$0xff]
                  %1627 = vst [vmem:[%s1083 + $0x43c] sm:$0xff] %v1626
                  %v1628 = vld [vmem:[%s1082 + $0x880] sm:$0xff]
                  %1629 = vst [vmem:[%s1083 + $0x440] sm:$0xff] %v1628
                  %v1630 = vld [vmem:[%s1082 + $0x888] sm:$0xff]
                  %1631 = vst [vmem:[%s1083 + $0x444] sm:$0xff] %v1630
                  %v1632 = vld [vmem:[%s1082 + $0x890] sm:$0xff]
                  %1633 = vst [vmem:[%s1083 + $0x448] sm:$0xff] %v1632
                  %v1634 = vld [vmem:[%s1082 + $0x898] sm:$0xff]
                  %1635 = vst [vmem:[%s1083 + $0x44c] sm:$0xff] %v1634
                  %v1636 = vld [vmem:[%s1082 + $0x8a0] sm:$0xff]
                  %1637 = vst [vmem:[%s1083 + $0x450] sm:$0xff] %v1636
                  %v1638 = vld [vmem:[%s1082 + $0x8a8] sm:$0xff]
                  %1639 = vst [vmem:[%s1083 + $0x454] sm:$0xff] %v1638
                  %v1640 = vld [vmem:[%s1082 + $0x8b0] sm:$0xff]
                  %1641 = vst [vmem:[%s1083 + $0x458] sm:$0xff] %v1640
                  %v1642 = vld [vmem:[%s1082 + $0x8b8] sm:$0xff]
                  %1643 = vst [vmem:[%s1083 + $0x45c] sm:$0xff] %v1642
                  %v1644 = vld [vmem:[%s1082 + $0x8c0] sm:$0xff]
                  %1645 = vst [vmem:[%s1083 + $0x460] sm:$0xff] %v1644
                  %v1646 = vld [vmem:[%s1082 + $0x8c8] sm:$0xff]
                  %1647 = vst [vmem:[%s1083 + $0x464] sm:$0xff] %v1646
                  %v1648 = vld [vmem:[%s1082 + $0x8d0] sm:$0xff]
                  %1649 = vst [vmem:[%s1083 + $0x468] sm:$0xff] %v1648
                  %v1650 = vld [vmem:[%s1082 + $0x8d8] sm:$0xff]
                  %1651 = vst [vmem:[%s1083 + $0x46c] sm:$0xff] %v1650
                  %v1652 = vld [vmem:[%s1082 + $0x8e0] sm:$0xff]
                  %1653 = vst [vmem:[%s1083 + $0x470] sm:$0xff] %v1652
                  %v1654 = vld [vmem:[%s1082 + $0x8e8] sm:$0xff]
                  %1655 = vst [vmem:[%s1083 + $0x474] sm:$0xff] %v1654
                  %v1656 = vld [vmem:[%s1082 + $0x8f0] sm:$0xff]
                  %1657 = vst [vmem:[%s1083 + $0x478] sm:$0xff] %v1656
                  %v1658 = vld [vmem:[%s1082 + $0x8f8] sm:$0xff]
                  %1659 = vst [vmem:[%s1083 + $0x47c] sm:$0xff] %v1658
                  %v1660 = vld [vmem:[%s1082 + $0x900] sm:$0xff]
                  %1661 = vst [vmem:[%s1083 + $0x480] sm:$0xff] %v1660
                  %v1662 = vld [vmem:[%s1082 + $0x908] sm:$0xff]
                  %1663 = vst [vmem:[%s1083 + $0x484] sm:$0xff] %v1662
                  %v1664 = vld [vmem:[%s1082 + $0x910] sm:$0xff]
                  %1665 = vst [vmem:[%s1083 + $0x488] sm:$0xff] %v1664
                  %v1666 = vld [vmem:[%s1082 + $0x918] sm:$0xff]
                  %1667 = vst [vmem:[%s1083 + $0x48c] sm:$0xff] %v1666
                  %v1668 = vld [vmem:[%s1082 + $0x920] sm:$0xff]
                  %1669 = vst [vmem:[%s1083 + $0x490] sm:$0xff] %v1668
                  %v1670 = vld [vmem:[%s1082 + $0x928] sm:$0xff]
                  %1671 = vst [vmem:[%s1083 + $0x494] sm:$0xff] %v1670
                  %v1672 = vld [vmem:[%s1082 + $0x930] sm:$0xff]
                  %1673 = vst [vmem:[%s1083 + $0x498] sm:$0xff] %v1672
                  %v1674 = vld [vmem:[%s1082 + $0x938] sm:$0xff]
                  %1675 = vst [vmem:[%s1083 + $0x49c] sm:$0xff] %v1674
                  %v1676 = vld [vmem:[%s1082 + $0x940] sm:$0xff]
                  %1677 = vst [vmem:[%s1083 + $0x4a0] sm:$0xff] %v1676
                  %v1678 = vld [vmem:[%s1082 + $0x948] sm:$0xff]
                  %1679 = vst [vmem:[%s1083 + $0x4a4] sm:$0xff] %v1678
                  %v1680 = vld [vmem:[%s1082 + $0x950] sm:$0xff]
                  %1681 = vst [vmem:[%s1083 + $0x4a8] sm:$0xff] %v1680
                  %v1682 = vld [vmem:[%s1082 + $0x958] sm:$0xff]
                  %1683 = vst [vmem:[%s1083 + $0x4ac] sm:$0xff] %v1682
                  %v1684 = vld [vmem:[%s1082 + $0x960] sm:$0xff]
                  %1685 = vst [vmem:[%s1083 + $0x4b0] sm:$0xff] %v1684
                  %v1686 = vld [vmem:[%s1082 + $0x968] sm:$0xff]
                  %1687 = vst [vmem:[%s1083 + $0x4b4] sm:$0xff] %v1686
                  %v1688 = vld [vmem:[%s1082 + $0x970] sm:$0xff]
                  %1689 = vst [vmem:[%s1083 + $0x4b8] sm:$0xff] %v1688
                  %v1690 = vld [vmem:[%s1082 + $0x978] sm:$0xff]
                  %1691 = vst [vmem:[%s1083 + $0x4bc] sm:$0xff] %v1690
                  %v1692 = vld [vmem:[%s1082 + $0x980] sm:$0xff]
                  %1693 = vst [vmem:[%s1083 + $0x4c0] sm:$0xff] %v1692
                  %v1694 = vld [vmem:[%s1082 + $0x988] sm:$0xff]
                  %1695 = vst [vmem:[%s1083 + $0x4c4] sm:$0xff] %v1694
                  %v1696 = vld [vmem:[%s1082 + $0x990] sm:$0xff]
                  %1697 = vst [vmem:[%s1083 + $0x4c8] sm:$0xff] %v1696
                  %v1698 = vld [vmem:[%s1082 + $0x998] sm:$0xff]
                  %1699 = vst [vmem:[%s1083 + $0x4cc] sm:$0xff] %v1698
                  %v1700 = vld [vmem:[%s1082 + $0x9a0] sm:$0xff]
                  %1701 = vst [vmem:[%s1083 + $0x4d0] sm:$0xff] %v1700
                  %v1702 = vld [vmem:[%s1082 + $0x9a8] sm:$0xff]
                  %1703 = vst [vmem:[%s1083 + $0x4d4] sm:$0xff] %v1702
                  %v1704 = vld [vmem:[%s1082 + $0x9b0] sm:$0xff]
                  %1705 = vst [vmem:[%s1083 + $0x4d8] sm:$0xff] %v1704
                  %v1706 = vld [vmem:[%s1082 + $0x9b8] sm:$0xff]
                  %1707 = vst [vmem:[%s1083 + $0x4dc] sm:$0xff] %v1706
                  %v1708 = vld [vmem:[%s1082 + $0x9c0] sm:$0xff]
                  %1709 = vst [vmem:[%s1083 + $0x4e0] sm:$0xff] %v1708
                  %v1710 = vld [vmem:[%s1082 + $0x9c8] sm:$0xff]
                  %1711 = vst [vmem:[%s1083 + $0x4e4] sm:$0xff] %v1710
                  %v1712 = vld [vmem:[%s1082 + $0x9d0] sm:$0xff]
                  %1713 = vst [vmem:[%s1083 + $0x4e8] sm:$0xff] %v1712
                  %v1714 = vld [vmem:[%s1082 + $0x9d8] sm:$0xff]
                  %1715 = vst [vmem:[%s1083 + $0x4ec] sm:$0xff] %v1714
                  %v1716 = vld [vmem:[%s1082 + $0x9e0] sm:$0xff]
                  %1717 = vst [vmem:[%s1083 + $0x4f0] sm:$0xff] %v1716
                  %v1718 = vld [vmem:[%s1082 + $0x9e8] sm:$0xff]
                  %1719 = vst [vmem:[%s1083 + $0x4f4] sm:$0xff] %v1718
                  %v1720 = vld [vmem:[%s1082 + $0x9f0] sm:$0xff]
                  %1721 = vst [vmem:[%s1083 + $0x4f8] sm:$0xff] %v1720
                  %v1722 = vld [vmem:[%s1082 + $0x9f8] sm:$0xff]
                  %1723 = vst [vmem:[%s1083 + $0x4fc] sm:$0xff] %v1722
                  %v1724 = vld [vmem:[%s1082 + $0xa00] sm:$0xff]
                  %1725 = vst [vmem:[%s1083 + $0x500] sm:$0xff] %v1724
                  %v1726 = vld [vmem:[%s1082 + $0xa08] sm:$0xff]
                  %1727 = vst [vmem:[%s1083 + $0x504] sm:$0xff] %v1726
                  %v1728 = vld [vmem:[%s1082 + $0xa10] sm:$0xff]
                  %1729 = vst [vmem:[%s1083 + $0x508] sm:$0xff] %v1728
                  %v1730 = vld [vmem:[%s1082 + $0xa18] sm:$0xff]
                  %1731 = vst [vmem:[%s1083 + $0x50c] sm:$0xff] %v1730
                  %v1732 = vld [vmem:[%s1082 + $0xa20] sm:$0xff]
                  %1733 = vst [vmem:[%s1083 + $0x510] sm:$0xff] %v1732
                  %v1734 = vld [vmem:[%s1082 + $0xa28] sm:$0xff]
                  %1735 = vst [vmem:[%s1083 + $0x514] sm:$0xff] %v1734
                  %v1736 = vld [vmem:[%s1082 + $0xa30] sm:$0xff]
                  %1737 = vst [vmem:[%s1083 + $0x518] sm:$0xff] %v1736
                  %v1738 = vld [vmem:[%s1082 + $0xa38] sm:$0xff]
                  %1739 = vst [vmem:[%s1083 + $0x51c] sm:$0xff] %v1738
                  %v1740 = vld [vmem:[%s1082 + $0xa40] sm:$0xff]
                  %1741 = vst [vmem:[%s1083 + $0x520] sm:$0xff] %v1740
                  %v1742 = vld [vmem:[%s1082 + $0xa48] sm:$0xff]
                  %1743 = vst [vmem:[%s1083 + $0x524] sm:$0xff] %v1742
                  %v1744 = vld [vmem:[%s1082 + $0xa50] sm:$0xff]
                  %1745 = vst [vmem:[%s1083 + $0x528] sm:$0xff] %v1744
                  %v1746 = vld [vmem:[%s1082 + $0xa58] sm:$0xff]
                  %1747 = vst [vmem:[%s1083 + $0x52c] sm:$0xff] %v1746
                  %v1748 = vld [vmem:[%s1082 + $0xa60] sm:$0xff]
                  %1749 = vst [vmem:[%s1083 + $0x530] sm:$0xff] %v1748
                  %v1750 = vld [vmem:[%s1082 + $0xa68] sm:$0xff]
                  %1751 = vst [vmem:[%s1083 + $0x534] sm:$0xff] %v1750
                  %v1752 = vld [vmem:[%s1082 + $0xa70] sm:$0xff]
                  %1753 = vst [vmem:[%s1083 + $0x538] sm:$0xff] %v1752
                  %v1754 = vld [vmem:[%s1082 + $0xa78] sm:$0xff]
                  %1755 = vst [vmem:[%s1083 + $0x53c] sm:$0xff] %v1754
                  %v1756 = vld [vmem:[%s1082 + $0xa80] sm:$0xff]
                  %1757 = vst [vmem:[%s1083 + $0x540] sm:$0xff] %v1756
                  %v1758 = vld [vmem:[%s1082 + $0xa88] sm:$0xff]
                  %1759 = vst [vmem:[%s1083 + $0x544] sm:$0xff] %v1758
                  %v1760 = vld [vmem:[%s1082 + $0xa90] sm:$0xff]
                  %1761 = vst [vmem:[%s1083 + $0x548] sm:$0xff] %v1760
                  %v1762 = vld [vmem:[%s1082 + $0xa98] sm:$0xff]
                  %1763 = vst [vmem:[%s1083 + $0x54c] sm:$0xff] %v1762
                  %v1764 = vld [vmem:[%s1082 + $0xaa0] sm:$0xff]
                  %1765 = vst [vmem:[%s1083 + $0x550] sm:$0xff] %v1764
                  %v1766 = vld [vmem:[%s1082 + $0xaa8] sm:$0xff]
                  %1767 = vst [vmem:[%s1083 + $0x554] sm:$0xff] %v1766
                  %v1768 = vld [vmem:[%s1082 + $0xab0] sm:$0xff]
                  %1769 = vst [vmem:[%s1083 + $0x558] sm:$0xff] %v1768
                  %v1770 = vld [vmem:[%s1082 + $0xab8] sm:$0xff]
                  %1771 = vst [vmem:[%s1083 + $0x55c] sm:$0xff] %v1770
                  %v1772 = vld [vmem:[%s1082 + $0xac0] sm:$0xff]
                  %1773 = vst [vmem:[%s1083 + $0x560] sm:$0xff] %v1772
                  %v1774 = vld [vmem:[%s1082 + $0xac8] sm:$0xff]
                  %1775 = vst [vmem:[%s1083 + $0x564] sm:$0xff] %v1774
                  %v1776 = vld [vmem:[%s1082 + $0xad0] sm:$0xff]
                  %1777 = vst [vmem:[%s1083 + $0x568] sm:$0xff] %v1776
                  %v1778 = vld [vmem:[%s1082 + $0xad8] sm:$0xff]
                  %1779 = vst [vmem:[%s1083 + $0x56c] sm:$0xff] %v1778
                  %v1780 = vld [vmem:[%s1082 + $0xae0] sm:$0xff]
                  %1781 = vst [vmem:[%s1083 + $0x570] sm:$0xff] %v1780
                  %v1782 = vld [vmem:[%s1082 + $0xae8] sm:$0xff]
                  %1783 = vst [vmem:[%s1083 + $0x574] sm:$0xff] %v1782
                  %v1784 = vld [vmem:[%s1082 + $0xaf0] sm:$0xff]
                  %1785 = vst [vmem:[%s1083 + $0x578] sm:$0xff] %v1784
                  %v1786 = vld [vmem:[%s1082 + $0xaf8] sm:$0xff]
                  %1787 = vst [vmem:[%s1083 + $0x57c] sm:$0xff] %v1786
                  %v1788 = vld [vmem:[%s1082 + $0xb00] sm:$0xff]
                  %1789 = vst [vmem:[%s1083 + $0x580] sm:$0xff] %v1788
                  %v1790 = vld [vmem:[%s1082 + $0xb08] sm:$0xff]
                  %1791 = vst [vmem:[%s1083 + $0x584] sm:$0xff] %v1790
                  %v1792 = vld [vmem:[%s1082 + $0xb10] sm:$0xff]
                  %1793 = vst [vmem:[%s1083 + $0x588] sm:$0xff] %v1792
                  %v1794 = vld [vmem:[%s1082 + $0xb18] sm:$0xff]
                  %1795 = vst [vmem:[%s1083 + $0x58c] sm:$0xff] %v1794
                  %v1796 = vld [vmem:[%s1082 + $0xb20] sm:$0xff]
                  %1797 = vst [vmem:[%s1083 + $0x590] sm:$0xff] %v1796
                  %v1798 = vld [vmem:[%s1082 + $0xb28] sm:$0xff]
                  %1799 = vst [vmem:[%s1083 + $0x594] sm:$0xff] %v1798
                  %v1800 = vld [vmem:[%s1082 + $0xb30] sm:$0xff]
                  %1801 = vst [vmem:[%s1083 + $0x598] sm:$0xff] %v1800
                  %v1802 = vld [vmem:[%s1082 + $0xb38] sm:$0xff]
                  %1803 = vst [vmem:[%s1083 + $0x59c] sm:$0xff] %v1802
                  %v1804 = vld [vmem:[%s1082 + $0xb40] sm:$0xff]
                  %1805 = vst [vmem:[%s1083 + $0x5a0] sm:$0xff] %v1804
                  %v1806 = vld [vmem:[%s1082 + $0xb48] sm:$0xff]
                  %1807 = vst [vmem:[%s1083 + $0x5a4] sm:$0xff] %v1806
                  %v1808 = vld [vmem:[%s1082 + $0xb50] sm:$0xff]
                  %1809 = vst [vmem:[%s1083 + $0x5a8] sm:$0xff] %v1808
                  %v1810 = vld [vmem:[%s1082 + $0xb58] sm:$0xff]
                  %1811 = vst [vmem:[%s1083 + $0x5ac] sm:$0xff] %v1810
                  %v1812 = vld [vmem:[%s1082 + $0xb60] sm:$0xff]
                  %1813 = vst [vmem:[%s1083 + $0x5b0] sm:$0xff] %v1812
                  %v1814 = vld [vmem:[%s1082 + $0xb68] sm:$0xff]
                  %1815 = vst [vmem:[%s1083 + $0x5b4] sm:$0xff] %v1814
                  %v1816 = vld [vmem:[%s1082 + $0xb70] sm:$0xff]
                  %1817 = vst [vmem:[%s1083 + $0x5b8] sm:$0xff] %v1816
                  %v1818 = vld [vmem:[%s1082 + $0xb78] sm:$0xff]
                  %1819 = vst [vmem:[%s1083 + $0x5bc] sm:$0xff] %v1818
                  %v1820 = vld [vmem:[%s1082 + $0xb80] sm:$0xff]
                  %1821 = vst [vmem:[%s1083 + $0x5c0] sm:$0xff] %v1820
                  %v1822 = vld [vmem:[%s1082 + $0xb88] sm:$0xff]
                  %1823 = vst [vmem:[%s1083 + $0x5c4] sm:$0xff] %v1822
                  %v1824 = vld [vmem:[%s1082 + $0xb90] sm:$0xff]
                  %1825 = vst [vmem:[%s1083 + $0x5c8] sm:$0xff] %v1824
                  %v1826 = vld [vmem:[%s1082 + $0xb98] sm:$0xff]
                  %1827 = vst [vmem:[%s1083 + $0x5cc] sm:$0xff] %v1826
                  %v1828 = vld [vmem:[%s1082 + $0xba0] sm:$0xff]
                  %1829 = vst [vmem:[%s1083 + $0x5d0] sm:$0xff] %v1828
                  %v1830 = vld [vmem:[%s1082 + $0xba8] sm:$0xff]
                  %1831 = vst [vmem:[%s1083 + $0x5d4] sm:$0xff] %v1830
                  %v1832 = vld [vmem:[%s1082 + $0xbb0] sm:$0xff]
                  %1833 = vst [vmem:[%s1083 + $0x5d8] sm:$0xff] %v1832
                  %v1834 = vld [vmem:[%s1082 + $0xbb8] sm:$0xff]
                  %1835 = vst [vmem:[%s1083 + $0x5dc] sm:$0xff] %v1834
                  %v1836 = vld [vmem:[%s1082 + $0xbc0] sm:$0xff]
                  %1837 = vst [vmem:[%s1083 + $0x5e0] sm:$0xff] %v1836
                  %v1838 = vld [vmem:[%s1082 + $0xbc8] sm:$0xff]
                  %1839 = vst [vmem:[%s1083 + $0x5e4] sm:$0xff] %v1838
                  %v1840 = vld [vmem:[%s1082 + $0xbd0] sm:$0xff]
                  %1841 = vst [vmem:[%s1083 + $0x5e8] sm:$0xff] %v1840
                  %v1842 = vld [vmem:[%s1082 + $0xbd8] sm:$0xff]
                  %1843 = vst [vmem:[%s1083 + $0x5ec] sm:$0xff] %v1842
                  %v1844 = vld [vmem:[%s1082 + $0xbe0] sm:$0xff]
                  %1845 = vst [vmem:[%s1083 + $0x5f0] sm:$0xff] %v1844
                  %v1846 = vld [vmem:[%s1082 + $0xbe8] sm:$0xff]
                  %1847 = vst [vmem:[%s1083 + $0x5f4] sm:$0xff] %v1846
                  %v1848 = vld [vmem:[%s1082 + $0xbf0] sm:$0xff]
                  %1849 = vst [vmem:[%s1083 + $0x5f8] sm:$0xff] %v1848
                  %v1850 = vld [vmem:[%s1082 + $0xbf8] sm:$0xff]
                  %1851 = vst [vmem:[%s1083 + $0x5fc] sm:$0xff] %v1850
                  %v1852 = vld [vmem:[%s1082 + $0xc00] sm:$0xff]
                  %1853 = vst [vmem:[%s1083 + $0x600] sm:$0xff] %v1852
                  %v1854 = vld [vmem:[%s1082 + $0xc08] sm:$0xff]
                  %1855 = vst [vmem:[%s1083 + $0x604] sm:$0xff] %v1854
                  %v1856 = vld [vmem:[%s1082 + $0xc10] sm:$0xff]
                  %1857 = vst [vmem:[%s1083 + $0x608] sm:$0xff] %v1856
                  %v1858 = vld [vmem:[%s1082 + $0xc18] sm:$0xff]
                  %1859 = vst [vmem:[%s1083 + $0x60c] sm:$0xff] %v1858
                  %v1860 = vld [vmem:[%s1082 + $0xc20] sm:$0xff]
                  %1861 = vst [vmem:[%s1083 + $0x610] sm:$0xff] %v1860
                  %v1862 = vld [vmem:[%s1082 + $0xc28] sm:$0xff]
                  %1863 = vst [vmem:[%s1083 + $0x614] sm:$0xff] %v1862
                  %v1864 = vld [vmem:[%s1082 + $0xc30] sm:$0xff]
                  %1865 = vst [vmem:[%s1083 + $0x618] sm:$0xff] %v1864
                  %v1866 = vld [vmem:[%s1082 + $0xc38] sm:$0xff]
                  %1867 = vst [vmem:[%s1083 + $0x61c] sm:$0xff] %v1866
                  %v1868 = vld [vmem:[%s1082 + $0xc40] sm:$0xff]
                  %1869 = vst [vmem:[%s1083 + $0x620] sm:$0xff] %v1868
                  %v1870 = vld [vmem:[%s1082 + $0xc48] sm:$0xff]
                  %1871 = vst [vmem:[%s1083 + $0x624] sm:$0xff] %v1870
                  %v1872 = vld [vmem:[%s1082 + $0xc50] sm:$0xff]
                  %1873 = vst [vmem:[%s1083 + $0x628] sm:$0xff] %v1872
                  %v1874 = vld [vmem:[%s1082 + $0xc58] sm:$0xff]
                  %1875 = vst [vmem:[%s1083 + $0x62c] sm:$0xff] %v1874
                  %v1876 = vld [vmem:[%s1082 + $0xc60] sm:$0xff]
                  %1877 = vst [vmem:[%s1083 + $0x630] sm:$0xff] %v1876
                  %v1878 = vld [vmem:[%s1082 + $0xc68] sm:$0xff]
                  %1879 = vst [vmem:[%s1083 + $0x634] sm:$0xff] %v1878
                  %v1880 = vld [vmem:[%s1082 + $0xc70] sm:$0xff]
                  %1881 = vst [vmem:[%s1083 + $0x638] sm:$0xff] %v1880
                  %v1882 = vld [vmem:[%s1082 + $0xc78] sm:$0xff]
                  %1883 = vst [vmem:[%s1083 + $0x63c] sm:$0xff] %v1882
                  %v1884 = vld [vmem:[%s1082 + $0xc80] sm:$0xff]
                  %1885 = vst [vmem:[%s1083 + $0x640] sm:$0xff] %v1884
                  %v1886 = vld [vmem:[%s1082 + $0xc88] sm:$0xff]
                  %1887 = vst [vmem:[%s1083 + $0x644] sm:$0xff] %v1886
                  %v1888 = vld [vmem:[%s1082 + $0xc90] sm:$0xff]
                  %1889 = vst [vmem:[%s1083 + $0x648] sm:$0xff] %v1888
                  %v1890 = vld [vmem:[%s1082 + $0xc98] sm:$0xff]
                  %1891 = vst [vmem:[%s1083 + $0x64c] sm:$0xff] %v1890
                  %v1892 = vld [vmem:[%s1082 + $0xca0] sm:$0xff]
                  %1893 = vst [vmem:[%s1083 + $0x650] sm:$0xff] %v1892
                  %v1894 = vld [vmem:[%s1082 + $0xca8] sm:$0xff]
                  %1895 = vst [vmem:[%s1083 + $0x654] sm:$0xff] %v1894
                  %v1896 = vld [vmem:[%s1082 + $0xcb0] sm:$0xff]
                  %1897 = vst [vmem:[%s1083 + $0x658] sm:$0xff] %v1896
                  %v1898 = vld [vmem:[%s1082 + $0xcb8] sm:$0xff]
                  %1899 = vst [vmem:[%s1083 + $0x65c] sm:$0xff] %v1898
                  %v1900 = vld [vmem:[%s1082 + $0xcc0] sm:$0xff]
                  %1901 = vst [vmem:[%s1083 + $0x660] sm:$0xff] %v1900
                  %v1902 = vld [vmem:[%s1082 + $0xcc8] sm:$0xff]
                  %1903 = vst [vmem:[%s1083 + $0x664] sm:$0xff] %v1902
                  %v1904 = vld [vmem:[%s1082 + $0xcd0] sm:$0xff]
                  %1905 = vst [vmem:[%s1083 + $0x668] sm:$0xff] %v1904
                  %v1906 = vld [vmem:[%s1082 + $0xcd8] sm:$0xff]
                  %1907 = vst [vmem:[%s1083 + $0x66c] sm:$0xff] %v1906
                  %v1908 = vld [vmem:[%s1082 + $0xce0] sm:$0xff]
                  %1909 = vst [vmem:[%s1083 + $0x670] sm:$0xff] %v1908
                  %v1910 = vld [vmem:[%s1082 + $0xce8] sm:$0xff]
                  %1911 = vst [vmem:[%s1083 + $0x674] sm:$0xff] %v1910
                  %v1912 = vld [vmem:[%s1082 + $0xcf0] sm:$0xff]
                  %1913 = vst [vmem:[%s1083 + $0x678] sm:$0xff] %v1912
                  %v1914 = vld [vmem:[%s1082 + $0xcf8] sm:$0xff]
                  %1915 = vst [vmem:[%s1083 + $0x67c] sm:$0xff] %v1914
                  %v1916 = vld [vmem:[%s1082 + $0xd00] sm:$0xff]
                  %1917 = vst [vmem:[%s1083 + $0x680] sm:$0xff] %v1916
                  %v1918 = vld [vmem:[%s1082 + $0xd08] sm:$0xff]
                  %1919 = vst [vmem:[%s1083 + $0x684] sm:$0xff] %v1918
                  %v1920 = vld [vmem:[%s1082 + $0xd10] sm:$0xff]
                  %1921 = vst [vmem:[%s1083 + $0x688] sm:$0xff] %v1920
                  %v1922 = vld [vmem:[%s1082 + $0xd18] sm:$0xff]
                  %1923 = vst [vmem:[%s1083 + $0x68c] sm:$0xff] %v1922
                  %v1924 = vld [vmem:[%s1082 + $0xd20] sm:$0xff]
                  %1925 = vst [vmem:[%s1083 + $0x690] sm:$0xff] %v1924
                  %v1926 = vld [vmem:[%s1082 + $0xd28] sm:$0xff]
                  %1927 = vst [vmem:[%s1083 + $0x694] sm:$0xff] %v1926
                  %v1928 = vld [vmem:[%s1082 + $0xd30] sm:$0xff]
                  %1929 = vst [vmem:[%s1083 + $0x698] sm:$0xff] %v1928
                  %v1930 = vld [vmem:[%s1082 + $0xd38] sm:$0xff]
                  %1931 = vst [vmem:[%s1083 + $0x69c] sm:$0xff] %v1930
                  %v1932 = vld [vmem:[%s1082 + $0xd40] sm:$0xff]
                  %1933 = vst [vmem:[%s1083 + $0x6a0] sm:$0xff] %v1932
                  %v1934 = vld [vmem:[%s1082 + $0xd48] sm:$0xff]
                  %1935 = vst [vmem:[%s1083 + $0x6a4] sm:$0xff] %v1934
                  %v1936 = vld [vmem:[%s1082 + $0xd50] sm:$0xff]
                  %1937 = vst [vmem:[%s1083 + $0x6a8] sm:$0xff] %v1936
                  %v1938 = vld [vmem:[%s1082 + $0xd58] sm:$0xff]
                  %1939 = vst [vmem:[%s1083 + $0x6ac] sm:$0xff] %v1938
                  %v1940 = vld [vmem:[%s1082 + $0xd60] sm:$0xff]
                  %1941 = vst [vmem:[%s1083 + $0x6b0] sm:$0xff] %v1940
                  %v1942 = vld [vmem:[%s1082 + $0xd68] sm:$0xff]
                  %1943 = vst [vmem:[%s1083 + $0x6b4] sm:$0xff] %v1942
                  %v1944 = vld [vmem:[%s1082 + $0xd70] sm:$0xff]
                  %1945 = vst [vmem:[%s1083 + $0x6b8] sm:$0xff] %v1944
                  %v1946 = vld [vmem:[%s1082 + $0xd78] sm:$0xff]
                  %1947 = vst [vmem:[%s1083 + $0x6bc] sm:$0xff] %v1946
                  %s1948 = sadd.s32 1, %s1081
                  %p1949 = scmp.ge.s32.totalorder %s1948, 0
                  %s1950 = scalar_select %p1949, 0, %s1948
                  %s1951 = smul.u32 %s1950, 8
                  %s1952 = smul.u32 %s1950, 8
                  %s1953 = scalar_lea.vmem %s192, %s1951
                  %s1954 = scalar_lea.vmem %s190, %s1952 [#allocation2]
                $region52: #{simple_3dcnn_encoder.5} parent=46 // loop_footer
                  %s1080 = sadd.s32 1, %s1076
                $region53: #{simple_3dcnn_encoder.5} parent=46 // loop_footer_branch
                  %1075 = sbr.rel target = $region49
                $region54: #{simple_3dcnn_encoder.5} parent=46 // loop_exit
                  _
              $region47: #{simple_3dcnn_encoder.5} parent=31 // pred_fallthru
                _
              // Predicated region
              $region55: #{simple_3dcnn_encoder.5} parent=31 // pred_check
                _
              $region56: #{simple_3dcnn_encoder.5} parent=31 // pred_check_branch
                %1956 = sbr.rel (0) target = $region58
              $region57: #{simple_3dcnn_encoder.5} parent=31 // pred_region
                loop: start=0, step=1, limit=0
                $region59: #{simple_3dcnn_encoder.5} parent=57 // loop_pre_header
                  _
                $region60: #{simple_3dcnn_encoder.5} parent=57 // loop_header
                  %s1958 = sphi 0, %s1962
                  %p1959 = scmp.ge.s32.totalorder %s1958, 0
                  %s1963 = sphi 0, %s2832
                  %s1964 = sphi %s192, %s2835
                  %s1965 = sphi %s190, %s2836
                $region61: #{simple_3dcnn_encoder.5} parent=57 // loop_header_branch
                  %1961 = sbr.rel (%p1959) target = $region65
                $region62: #{simple_3dcnn_encoder.5} parent=57 // loop_body
                  %v1966 = vld [vmem:[%s1964] sm:$0xff]
                  %1967 = vst [vmem:[%s1965] sm:$0xff] %v1966
                  %v1968 = vld [vmem:[%s1964 + $0x8] sm:$0xff]
                  %1969 = vst [vmem:[%s1965 + $0x4] sm:$0xff] %v1968
                  %v1970 = vld [vmem:[%s1964 + $0x10] sm:$0xff]
                  %1971 = vst [vmem:[%s1965 + $0x8] sm:$0xff] %v1970
                  %v1972 = vld [vmem:[%s1964 + $0x18] sm:$0xff]
                  %1973 = vst [vmem:[%s1965 + $0xc] sm:$0xff] %v1972
                  %v1974 = vld [vmem:[%s1964 + $0x20] sm:$0xff]
                  %1975 = vst [vmem:[%s1965 + $0x10] sm:$0xff] %v1974
                  %v1976 = vld [vmem:[%s1964 + $0x28] sm:$0xff]
                  %1977 = vst [vmem:[%s1965 + $0x14] sm:$0xff] %v1976
                  %v1978 = vld [vmem:[%s1964 + $0x30] sm:$0xff]
                  %1979 = vst [vmem:[%s1965 + $0x18] sm:$0xff] %v1978
                  %v1980 = vld [vmem:[%s1964 + $0x38] sm:$0xff]
                  %1981 = vst [vmem:[%s1965 + $0x1c] sm:$0xff] %v1980
                  %v1982 = vld [vmem:[%s1964 + $0x40] sm:$0xff]
                  %1983 = vst [vmem:[%s1965 + $0x20] sm:$0xff] %v1982
                  %v1984 = vld [vmem:[%s1964 + $0x48] sm:$0xff]
                  %1985 = vst [vmem:[%s1965 + $0x24] sm:$0xff] %v1984
                  %v1986 = vld [vmem:[%s1964 + $0x50] sm:$0xff]
                  %1987 = vst [vmem:[%s1965 + $0x28] sm:$0xff] %v1986
                  %v1988 = vld [vmem:[%s1964 + $0x58] sm:$0xff]
                  %1989 = vst [vmem:[%s1965 + $0x2c] sm:$0xff] %v1988
                  %v1990 = vld [vmem:[%s1964 + $0x60] sm:$0xff]
                  %1991 = vst [vmem:[%s1965 + $0x30] sm:$0xff] %v1990
                  %v1992 = vld [vmem:[%s1964 + $0x68] sm:$0xff]
                  %1993 = vst [vmem:[%s1965 + $0x34] sm:$0xff] %v1992
                  %v1994 = vld [vmem:[%s1964 + $0x70] sm:$0xff]
                  %1995 = vst [vmem:[%s1965 + $0x38] sm:$0xff] %v1994
                  %v1996 = vld [vmem:[%s1964 + $0x78] sm:$0xff]
                  %1997 = vst [vmem:[%s1965 + $0x3c] sm:$0xff] %v1996
                  %v1998 = vld [vmem:[%s1964 + $0x80] sm:$0xff]
                  %1999 = vst [vmem:[%s1965 + $0x40] sm:$0xff] %v1998
                  %v2000 = vld [vmem:[%s1964 + $0x88] sm:$0xff]
                  %2001 = vst [vmem:[%s1965 + $0x44] sm:$0xff] %v2000
                  %v2002 = vld [vmem:[%s1964 + $0x90] sm:$0xff]
                  %2003 = vst [vmem:[%s1965 + $0x48] sm:$0xff] %v2002
                  %v2004 = vld [vmem:[%s1964 + $0x98] sm:$0xff]
                  %2005 = vst [vmem:[%s1965 + $0x4c] sm:$0xff] %v2004
                  %v2006 = vld [vmem:[%s1964 + $0xa0] sm:$0xff]
                  %2007 = vst [vmem:[%s1965 + $0x50] sm:$0xff] %v2006
                  %v2008 = vld [vmem:[%s1964 + $0xa8] sm:$0xff]
                  %2009 = vst [vmem:[%s1965 + $0x54] sm:$0xff] %v2008
                  %v2010 = vld [vmem:[%s1964 + $0xb0] sm:$0xff]
                  %2011 = vst [vmem:[%s1965 + $0x58] sm:$0xff] %v2010
                  %v2012 = vld [vmem:[%s1964 + $0xb8] sm:$0xff]
                  %2013 = vst [vmem:[%s1965 + $0x5c] sm:$0xff] %v2012
                  %v2014 = vld [vmem:[%s1964 + $0xc0] sm:$0xff]
                  %2015 = vst [vmem:[%s1965 + $0x60] sm:$0xff] %v2014
                  %v2016 = vld [vmem:[%s1964 + $0xc8] sm:$0xff]
                  %2017 = vst [vmem:[%s1965 + $0x64] sm:$0xff] %v2016
                  %v2018 = vld [vmem:[%s1964 + $0xd0] sm:$0xff]
                  %2019 = vst [vmem:[%s1965 + $0x68] sm:$0xff] %v2018
                  %v2020 = vld [vmem:[%s1964 + $0xd8] sm:$0xff]
                  %2021 = vst [vmem:[%s1965 + $0x6c] sm:$0xff] %v2020
                  %v2022 = vld [vmem:[%s1964 + $0xe0] sm:$0xff]
                  %2023 = vst [vmem:[%s1965 + $0x70] sm:$0xff] %v2022
                  %v2024 = vld [vmem:[%s1964 + $0xe8] sm:$0xff]
                  %2025 = vst [vmem:[%s1965 + $0x74] sm:$0xff] %v2024
                  %v2026 = vld [vmem:[%s1964 + $0xf0] sm:$0xff]
                  %2027 = vst [vmem:[%s1965 + $0x78] sm:$0xff] %v2026
                  %v2028 = vld [vmem:[%s1964 + $0xf8] sm:$0xff]
                  %2029 = vst [vmem:[%s1965 + $0x7c] sm:$0xff] %v2028
                  %v2030 = vld [vmem:[%s1964 + $0x100] sm:$0xff]
                  %2031 = vst [vmem:[%s1965 + $0x80] sm:$0xff] %v2030
                  %v2032 = vld [vmem:[%s1964 + $0x108] sm:$0xff]
                  %2033 = vst [vmem:[%s1965 + $0x84] sm:$0xff] %v2032
                  %v2034 = vld [vmem:[%s1964 + $0x110] sm:$0xff]
                  %2035 = vst [vmem:[%s1965 + $0x88] sm:$0xff] %v2034
                  %v2036 = vld [vmem:[%s1964 + $0x118] sm:$0xff]
                  %2037 = vst [vmem:[%s1965 + $0x8c] sm:$0xff] %v2036
                  %v2038 = vld [vmem:[%s1964 + $0x120] sm:$0xff]
                  %2039 = vst [vmem:[%s1965 + $0x90] sm:$0xff] %v2038
                  %v2040 = vld [vmem:[%s1964 + $0x128] sm:$0xff]
                  %2041 = vst [vmem:[%s1965 + $0x94] sm:$0xff] %v2040
                  %v2042 = vld [vmem:[%s1964 + $0x130] sm:$0xff]
                  %2043 = vst [vmem:[%s1965 + $0x98] sm:$0xff] %v2042
                  %v2044 = vld [vmem:[%s1964 + $0x138] sm:$0xff]
                  %2045 = vst [vmem:[%s1965 + $0x9c] sm:$0xff] %v2044
                  %v2046 = vld [vmem:[%s1964 + $0x140] sm:$0xff]
                  %2047 = vst [vmem:[%s1965 + $0xa0] sm:$0xff] %v2046
                  %v2048 = vld [vmem:[%s1964 + $0x148] sm:$0xff]
                  %2049 = vst [vmem:[%s1965 + $0xa4] sm:$0xff] %v2048
                  %v2050 = vld [vmem:[%s1964 + $0x150] sm:$0xff]
                  %2051 = vst [vmem:[%s1965 + $0xa8] sm:$0xff] %v2050
                  %v2052 = vld [vmem:[%s1964 + $0x158] sm:$0xff]
                  %2053 = vst [vmem:[%s1965 + $0xac] sm:$0xff] %v2052
                  %v2054 = vld [vmem:[%s1964 + $0x160] sm:$0xff]
                  %2055 = vst [vmem:[%s1965 + $0xb0] sm:$0xff] %v2054
                  %v2056 = vld [vmem:[%s1964 + $0x168] sm:$0xff]
                  %2057 = vst [vmem:[%s1965 + $0xb4] sm:$0xff] %v2056
                  %v2058 = vld [vmem:[%s1964 + $0x170] sm:$0xff]
                  %2059 = vst [vmem:[%s1965 + $0xb8] sm:$0xff] %v2058
                  %v2060 = vld [vmem:[%s1964 + $0x178] sm:$0xff]
                  %2061 = vst [vmem:[%s1965 + $0xbc] sm:$0xff] %v2060
                  %v2062 = vld [vmem:[%s1964 + $0x180] sm:$0xff]
                  %2063 = vst [vmem:[%s1965 + $0xc0] sm:$0xff] %v2062
                  %v2064 = vld [vmem:[%s1964 + $0x188] sm:$0xff]
                  %2065 = vst [vmem:[%s1965 + $0xc4] sm:$0xff] %v2064
                  %v2066 = vld [vmem:[%s1964 + $0x190] sm:$0xff]
                  %2067 = vst [vmem:[%s1965 + $0xc8] sm:$0xff] %v2066
                  %v2068 = vld [vmem:[%s1964 + $0x198] sm:$0xff]
                  %2069 = vst [vmem:[%s1965 + $0xcc] sm:$0xff] %v2068
                  %v2070 = vld [vmem:[%s1964 + $0x1a0] sm:$0xff]
                  %2071 = vst [vmem:[%s1965 + $0xd0] sm:$0xff] %v2070
                  %v2072 = vld [vmem:[%s1964 + $0x1a8] sm:$0xff]
                  %2073 = vst [vmem:[%s1965 + $0xd4] sm:$0xff] %v2072
                  %v2074 = vld [vmem:[%s1964 + $0x1b0] sm:$0xff]
                  %2075 = vst [vmem:[%s1965 + $0xd8] sm:$0xff] %v2074
                  %v2076 = vld [vmem:[%s1964 + $0x1b8] sm:$0xff]
                  %2077 = vst [vmem:[%s1965 + $0xdc] sm:$0xff] %v2076
                  %v2078 = vld [vmem:[%s1964 + $0x1c0] sm:$0xff]
                  %2079 = vst [vmem:[%s1965 + $0xe0] sm:$0xff] %v2078
                  %v2080 = vld [vmem:[%s1964 + $0x1c8] sm:$0xff]
                  %2081 = vst [vmem:[%s1965 + $0xe4] sm:$0xff] %v2080
                  %v2082 = vld [vmem:[%s1964 + $0x1d0] sm:$0xff]
                  %2083 = vst [vmem:[%s1965 + $0xe8] sm:$0xff] %v2082
                  %v2084 = vld [vmem:[%s1964 + $0x1d8] sm:$0xff]
                  %2085 = vst [vmem:[%s1965 + $0xec] sm:$0xff] %v2084
                  %v2086 = vld [vmem:[%s1964 + $0x1e0] sm:$0xff]
                  %2087 = vst [vmem:[%s1965 + $0xf0] sm:$0xff] %v2086
                  %v2088 = vld [vmem:[%s1964 + $0x1e8] sm:$0xff]
                  %2089 = vst [vmem:[%s1965 + $0xf4] sm:$0xff] %v2088
                  %v2090 = vld [vmem:[%s1964 + $0x1f0] sm:$0xff]
                  %2091 = vst [vmem:[%s1965 + $0xf8] sm:$0xff] %v2090
                  %v2092 = vld [vmem:[%s1964 + $0x1f8] sm:$0xff]
                  %2093 = vst [vmem:[%s1965 + $0xfc] sm:$0xff] %v2092
                  %v2094 = vld [vmem:[%s1964 + $0x200] sm:$0xff]
                  %2095 = vst [vmem:[%s1965 + $0x100] sm:$0xff] %v2094
                  %v2096 = vld [vmem:[%s1964 + $0x208] sm:$0xff]
                  %2097 = vst [vmem:[%s1965 + $0x104] sm:$0xff] %v2096
                  %v2098 = vld [vmem:[%s1964 + $0x210] sm:$0xff]
                  %2099 = vst [vmem:[%s1965 + $0x108] sm:$0xff] %v2098
                  %v2100 = vld [vmem:[%s1964 + $0x218] sm:$0xff]
                  %2101 = vst [vmem:[%s1965 + $0x10c] sm:$0xff] %v2100
                  %v2102 = vld [vmem:[%s1964 + $0x220] sm:$0xff]
                  %2103 = vst [vmem:[%s1965 + $0x110] sm:$0xff] %v2102
                  %v2104 = vld [vmem:[%s1964 + $0x228] sm:$0xff]
                  %2105 = vst [vmem:[%s1965 + $0x114] sm:$0xff] %v2104
                  %v2106 = vld [vmem:[%s1964 + $0x230] sm:$0xff]
                  %2107 = vst [vmem:[%s1965 + $0x118] sm:$0xff] %v2106
                  %v2108 = vld [vmem:[%s1964 + $0x238] sm:$0xff]
                  %2109 = vst [vmem:[%s1965 + $0x11c] sm:$0xff] %v2108
                  %v2110 = vld [vmem:[%s1964 + $0x240] sm:$0xff]
                  %2111 = vst [vmem:[%s1965 + $0x120] sm:$0xff] %v2110
                  %v2112 = vld [vmem:[%s1964 + $0x248] sm:$0xff]
                  %2113 = vst [vmem:[%s1965 + $0x124] sm:$0xff] %v2112
                  %v2114 = vld [vmem:[%s1964 + $0x250] sm:$0xff]
                  %2115 = vst [vmem:[%s1965 + $0x128] sm:$0xff] %v2114
                  %v2116 = vld [vmem:[%s1964 + $0x258] sm:$0xff]
                  %2117 = vst [vmem:[%s1965 + $0x12c] sm:$0xff] %v2116
                  %v2118 = vld [vmem:[%s1964 + $0x260] sm:$0xff]
                  %2119 = vst [vmem:[%s1965 + $0x130] sm:$0xff] %v2118
                  %v2120 = vld [vmem:[%s1964 + $0x268] sm:$0xff]
                  %2121 = vst [vmem:[%s1965 + $0x134] sm:$0xff] %v2120
                  %v2122 = vld [vmem:[%s1964 + $0x270] sm:$0xff]
                  %2123 = vst [vmem:[%s1965 + $0x138] sm:$0xff] %v2122
                  %v2124 = vld [vmem:[%s1964 + $0x278] sm:$0xff]
                  %2125 = vst [vmem:[%s1965 + $0x13c] sm:$0xff] %v2124
                  %v2126 = vld [vmem:[%s1964 + $0x280] sm:$0xff]
                  %2127 = vst [vmem:[%s1965 + $0x140] sm:$0xff] %v2126
                  %v2128 = vld [vmem:[%s1964 + $0x288] sm:$0xff]
                  %2129 = vst [vmem:[%s1965 + $0x144] sm:$0xff] %v2128
                  %v2130 = vld [vmem:[%s1964 + $0x290] sm:$0xff]
                  %2131 = vst [vmem:[%s1965 + $0x148] sm:$0xff] %v2130
                  %v2132 = vld [vmem:[%s1964 + $0x298] sm:$0xff]
                  %2133 = vst [vmem:[%s1965 + $0x14c] sm:$0xff] %v2132
                  %v2134 = vld [vmem:[%s1964 + $0x2a0] sm:$0xff]
                  %2135 = vst [vmem:[%s1965 + $0x150] sm:$0xff] %v2134
                  %v2136 = vld [vmem:[%s1964 + $0x2a8] sm:$0xff]
                  %2137 = vst [vmem:[%s1965 + $0x154] sm:$0xff] %v2136
                  %v2138 = vld [vmem:[%s1964 + $0x2b0] sm:$0xff]
                  %2139 = vst [vmem:[%s1965 + $0x158] sm:$0xff] %v2138
                  %v2140 = vld [vmem:[%s1964 + $0x2b8] sm:$0xff]
                  %2141 = vst [vmem:[%s1965 + $0x15c] sm:$0xff] %v2140
                  %v2142 = vld [vmem:[%s1964 + $0x2c0] sm:$0xff]
                  %2143 = vst [vmem:[%s1965 + $0x160] sm:$0xff] %v2142
                  %v2144 = vld [vmem:[%s1964 + $0x2c8] sm:$0xff]
                  %2145 = vst [vmem:[%s1965 + $0x164] sm:$0xff] %v2144
                  %v2146 = vld [vmem:[%s1964 + $0x2d0] sm:$0xff]
                  %2147 = vst [vmem:[%s1965 + $0x168] sm:$0xff] %v2146
                  %v2148 = vld [vmem:[%s1964 + $0x2d8] sm:$0xff]
                  %2149 = vst [vmem:[%s1965 + $0x16c] sm:$0xff] %v2148
                  %v2150 = vld [vmem:[%s1964 + $0x2e0] sm:$0xff]
                  %2151 = vst [vmem:[%s1965 + $0x170] sm:$0xff] %v2150
                  %v2152 = vld [vmem:[%s1964 + $0x2e8] sm:$0xff]
                  %2153 = vst [vmem:[%s1965 + $0x174] sm:$0xff] %v2152
                  %v2154 = vld [vmem:[%s1964 + $0x2f0] sm:$0xff]
                  %2155 = vst [vmem:[%s1965 + $0x178] sm:$0xff] %v2154
                  %v2156 = vld [vmem:[%s1964 + $0x2f8] sm:$0xff]
                  %2157 = vst [vmem:[%s1965 + $0x17c] sm:$0xff] %v2156
                  %v2158 = vld [vmem:[%s1964 + $0x300] sm:$0xff]
                  %2159 = vst [vmem:[%s1965 + $0x180] sm:$0xff] %v2158
                  %v2160 = vld [vmem:[%s1964 + $0x308] sm:$0xff]
                  %2161 = vst [vmem:[%s1965 + $0x184] sm:$0xff] %v2160
                  %v2162 = vld [vmem:[%s1964 + $0x310] sm:$0xff]
                  %2163 = vst [vmem:[%s1965 + $0x188] sm:$0xff] %v2162
                  %v2164 = vld [vmem:[%s1964 + $0x318] sm:$0xff]
                  %2165 = vst [vmem:[%s1965 + $0x18c] sm:$0xff] %v2164
                  %v2166 = vld [vmem:[%s1964 + $0x320] sm:$0xff]
                  %2167 = vst [vmem:[%s1965 + $0x190] sm:$0xff] %v2166
                  %v2168 = vld [vmem:[%s1964 + $0x328] sm:$0xff]
                  %2169 = vst [vmem:[%s1965 + $0x194] sm:$0xff] %v2168
                  %v2170 = vld [vmem:[%s1964 + $0x330] sm:$0xff]
                  %2171 = vst [vmem:[%s1965 + $0x198] sm:$0xff] %v2170
                  %v2172 = vld [vmem:[%s1964 + $0x338] sm:$0xff]
                  %2173 = vst [vmem:[%s1965 + $0x19c] sm:$0xff] %v2172
                  %v2174 = vld [vmem:[%s1964 + $0x340] sm:$0xff]
                  %2175 = vst [vmem:[%s1965 + $0x1a0] sm:$0xff] %v2174
                  %v2176 = vld [vmem:[%s1964 + $0x348] sm:$0xff]
                  %2177 = vst [vmem:[%s1965 + $0x1a4] sm:$0xff] %v2176
                  %v2178 = vld [vmem:[%s1964 + $0x350] sm:$0xff]
                  %2179 = vst [vmem:[%s1965 + $0x1a8] sm:$0xff] %v2178
                  %v2180 = vld [vmem:[%s1964 + $0x358] sm:$0xff]
                  %2181 = vst [vmem:[%s1965 + $0x1ac] sm:$0xff] %v2180
                  %v2182 = vld [vmem:[%s1964 + $0x360] sm:$0xff]
                  %2183 = vst [vmem:[%s1965 + $0x1b0] sm:$0xff] %v2182
                  %v2184 = vld [vmem:[%s1964 + $0x368] sm:$0xff]
                  %2185 = vst [vmem:[%s1965 + $0x1b4] sm:$0xff] %v2184
                  %v2186 = vld [vmem:[%s1964 + $0x370] sm:$0xff]
                  %2187 = vst [vmem:[%s1965 + $0x1b8] sm:$0xff] %v2186
                  %v2188 = vld [vmem:[%s1964 + $0x378] sm:$0xff]
                  %2189 = vst [vmem:[%s1965 + $0x1bc] sm:$0xff] %v2188
                  %v2190 = vld [vmem:[%s1964 + $0x380] sm:$0xff]
                  %2191 = vst [vmem:[%s1965 + $0x1c0] sm:$0xff] %v2190
                  %v2192 = vld [vmem:[%s1964 + $0x388] sm:$0xff]
                  %2193 = vst [vmem:[%s1965 + $0x1c4] sm:$0xff] %v2192
                  %v2194 = vld [vmem:[%s1964 + $0x390] sm:$0xff]
                  %2195 = vst [vmem:[%s1965 + $0x1c8] sm:$0xff] %v2194
                  %v2196 = vld [vmem:[%s1964 + $0x398] sm:$0xff]
                  %2197 = vst [vmem:[%s1965 + $0x1cc] sm:$0xff] %v2196
                  %v2198 = vld [vmem:[%s1964 + $0x3a0] sm:$0xff]
                  %2199 = vst [vmem:[%s1965 + $0x1d0] sm:$0xff] %v2198
                  %v2200 = vld [vmem:[%s1964 + $0x3a8] sm:$0xff]
                  %2201 = vst [vmem:[%s1965 + $0x1d4] sm:$0xff] %v2200
                  %v2202 = vld [vmem:[%s1964 + $0x3b0] sm:$0xff]
                  %2203 = vst [vmem:[%s1965 + $0x1d8] sm:$0xff] %v2202
                  %v2204 = vld [vmem:[%s1964 + $0x3b8] sm:$0xff]
                  %2205 = vst [vmem:[%s1965 + $0x1dc] sm:$0xff] %v2204
                  %v2206 = vld [vmem:[%s1964 + $0x3c0] sm:$0xff]
                  %2207 = vst [vmem:[%s1965 + $0x1e0] sm:$0xff] %v2206
                  %v2208 = vld [vmem:[%s1964 + $0x3c8] sm:$0xff]
                  %2209 = vst [vmem:[%s1965 + $0x1e4] sm:$0xff] %v2208
                  %v2210 = vld [vmem:[%s1964 + $0x3d0] sm:$0xff]
                  %2211 = vst [vmem:[%s1965 + $0x1e8] sm:$0xff] %v2210
                  %v2212 = vld [vmem:[%s1964 + $0x3d8] sm:$0xff]
                  %2213 = vst [vmem:[%s1965 + $0x1ec] sm:$0xff] %v2212
                  %v2214 = vld [vmem:[%s1964 + $0x3e0] sm:$0xff]
                  %2215 = vst [vmem:[%s1965 + $0x1f0] sm:$0xff] %v2214
                  %v2216 = vld [vmem:[%s1964 + $0x3e8] sm:$0xff]
                  %2217 = vst [vmem:[%s1965 + $0x1f4] sm:$0xff] %v2216
                  %v2218 = vld [vmem:[%s1964 + $0x3f0] sm:$0xff]
                  %2219 = vst [vmem:[%s1965 + $0x1f8] sm:$0xff] %v2218
                  %v2220 = vld [vmem:[%s1964 + $0x3f8] sm:$0xff]
                  %2221 = vst [vmem:[%s1965 + $0x1fc] sm:$0xff] %v2220
                  %v2222 = vld [vmem:[%s1964 + $0x400] sm:$0xff]
                  %2223 = vst [vmem:[%s1965 + $0x200] sm:$0xff] %v2222
                  %v2224 = vld [vmem:[%s1964 + $0x408] sm:$0xff]
                  %2225 = vst [vmem:[%s1965 + $0x204] sm:$0xff] %v2224
                  %v2226 = vld [vmem:[%s1964 + $0x410] sm:$0xff]
                  %2227 = vst [vmem:[%s1965 + $0x208] sm:$0xff] %v2226
                  %v2228 = vld [vmem:[%s1964 + $0x418] sm:$0xff]
                  %2229 = vst [vmem:[%s1965 + $0x20c] sm:$0xff] %v2228
                  %v2230 = vld [vmem:[%s1964 + $0x420] sm:$0xff]
                  %2231 = vst [vmem:[%s1965 + $0x210] sm:$0xff] %v2230
                  %v2232 = vld [vmem:[%s1964 + $0x428] sm:$0xff]
                  %2233 = vst [vmem:[%s1965 + $0x214] sm:$0xff] %v2232
                  %v2234 = vld [vmem:[%s1964 + $0x430] sm:$0xff]
                  %2235 = vst [vmem:[%s1965 + $0x218] sm:$0xff] %v2234
                  %v2236 = vld [vmem:[%s1964 + $0x438] sm:$0xff]
                  %2237 = vst [vmem:[%s1965 + $0x21c] sm:$0xff] %v2236
                  %v2238 = vld [vmem:[%s1964 + $0x440] sm:$0xff]
                  %2239 = vst [vmem:[%s1965 + $0x220] sm:$0xff] %v2238
                  %v2240 = vld [vmem:[%s1964 + $0x448] sm:$0xff]
                  %2241 = vst [vmem:[%s1965 + $0x224] sm:$0xff] %v2240
                  %v2242 = vld [vmem:[%s1964 + $0x450] sm:$0xff]
                  %2243 = vst [vmem:[%s1965 + $0x228] sm:$0xff] %v2242
                  %v2244 = vld [vmem:[%s1964 + $0x458] sm:$0xff]
                  %2245 = vst [vmem:[%s1965 + $0x22c] sm:$0xff] %v2244
                  %v2246 = vld [vmem:[%s1964 + $0x460] sm:$0xff]
                  %2247 = vst [vmem:[%s1965 + $0x230] sm:$0xff] %v2246
                  %v2248 = vld [vmem:[%s1964 + $0x468] sm:$0xff]
                  %2249 = vst [vmem:[%s1965 + $0x234] sm:$0xff] %v2248
                  %v2250 = vld [vmem:[%s1964 + $0x470] sm:$0xff]
                  %2251 = vst [vmem:[%s1965 + $0x238] sm:$0xff] %v2250
                  %v2252 = vld [vmem:[%s1964 + $0x478] sm:$0xff]
                  %2253 = vst [vmem:[%s1965 + $0x23c] sm:$0xff] %v2252
                  %v2254 = vld [vmem:[%s1964 + $0x480] sm:$0xff]
                  %2255 = vst [vmem:[%s1965 + $0x240] sm:$0xff] %v2254
                  %v2256 = vld [vmem:[%s1964 + $0x488] sm:$0xff]
                  %2257 = vst [vmem:[%s1965 + $0x244] sm:$0xff] %v2256
                  %v2258 = vld [vmem:[%s1964 + $0x490] sm:$0xff]
                  %2259 = vst [vmem:[%s1965 + $0x248] sm:$0xff] %v2258
                  %v2260 = vld [vmem:[%s1964 + $0x498] sm:$0xff]
                  %2261 = vst [vmem:[%s1965 + $0x24c] sm:$0xff] %v2260
                  %v2262 = vld [vmem:[%s1964 + $0x4a0] sm:$0xff]
                  %2263 = vst [vmem:[%s1965 + $0x250] sm:$0xff] %v2262
                  %v2264 = vld [vmem:[%s1964 + $0x4a8] sm:$0xff]
                  %2265 = vst [vmem:[%s1965 + $0x254] sm:$0xff] %v2264
                  %v2266 = vld [vmem:[%s1964 + $0x4b0] sm:$0xff]
                  %2267 = vst [vmem:[%s1965 + $0x258] sm:$0xff] %v2266
                  %v2268 = vld [vmem:[%s1964 + $0x4b8] sm:$0xff]
                  %2269 = vst [vmem:[%s1965 + $0x25c] sm:$0xff] %v2268
                  %v2270 = vld [vmem:[%s1964 + $0x4c0] sm:$0xff]
                  %2271 = vst [vmem:[%s1965 + $0x260] sm:$0xff] %v2270
                  %v2272 = vld [vmem:[%s1964 + $0x4c8] sm:$0xff]
                  %2273 = vst [vmem:[%s1965 + $0x264] sm:$0xff] %v2272
                  %v2274 = vld [vmem:[%s1964 + $0x4d0] sm:$0xff]
                  %2275 = vst [vmem:[%s1965 + $0x268] sm:$0xff] %v2274
                  %v2276 = vld [vmem:[%s1964 + $0x4d8] sm:$0xff]
                  %2277 = vst [vmem:[%s1965 + $0x26c] sm:$0xff] %v2276
                  %v2278 = vld [vmem:[%s1964 + $0x4e0] sm:$0xff]
                  %2279 = vst [vmem:[%s1965 + $0x270] sm:$0xff] %v2278
                  %v2280 = vld [vmem:[%s1964 + $0x4e8] sm:$0xff]
                  %2281 = vst [vmem:[%s1965 + $0x274] sm:$0xff] %v2280
                  %v2282 = vld [vmem:[%s1964 + $0x4f0] sm:$0xff]
                  %2283 = vst [vmem:[%s1965 + $0x278] sm:$0xff] %v2282
                  %v2284 = vld [vmem:[%s1964 + $0x4f8] sm:$0xff]
                  %2285 = vst [vmem:[%s1965 + $0x27c] sm:$0xff] %v2284
                  %v2286 = vld [vmem:[%s1964 + $0x500] sm:$0xff]
                  %2287 = vst [vmem:[%s1965 + $0x280] sm:$0xff] %v2286
                  %v2288 = vld [vmem:[%s1964 + $0x508] sm:$0xff]
                  %2289 = vst [vmem:[%s1965 + $0x284] sm:$0xff] %v2288
                  %v2290 = vld [vmem:[%s1964 + $0x510] sm:$0xff]
                  %2291 = vst [vmem:[%s1965 + $0x288] sm:$0xff] %v2290
                  %v2292 = vld [vmem:[%s1964 + $0x518] sm:$0xff]
                  %2293 = vst [vmem:[%s1965 + $0x28c] sm:$0xff] %v2292
                  %v2294 = vld [vmem:[%s1964 + $0x520] sm:$0xff]
                  %2295 = vst [vmem:[%s1965 + $0x290] sm:$0xff] %v2294
                  %v2296 = vld [vmem:[%s1964 + $0x528] sm:$0xff]
                  %2297 = vst [vmem:[%s1965 + $0x294] sm:$0xff] %v2296
                  %v2298 = vld [vmem:[%s1964 + $0x530] sm:$0xff]
                  %2299 = vst [vmem:[%s1965 + $0x298] sm:$0xff] %v2298
                  %v2300 = vld [vmem:[%s1964 + $0x538] sm:$0xff]
                  %2301 = vst [vmem:[%s1965 + $0x29c] sm:$0xff] %v2300
                  %v2302 = vld [vmem:[%s1964 + $0x540] sm:$0xff]
                  %2303 = vst [vmem:[%s1965 + $0x2a0] sm:$0xff] %v2302
                  %v2304 = vld [vmem:[%s1964 + $0x548] sm:$0xff]
                  %2305 = vst [vmem:[%s1965 + $0x2a4] sm:$0xff] %v2304
                  %v2306 = vld [vmem:[%s1964 + $0x550] sm:$0xff]
                  %2307 = vst [vmem:[%s1965 + $0x2a8] sm:$0xff] %v2306
                  %v2308 = vld [vmem:[%s1964 + $0x558] sm:$0xff]
                  %2309 = vst [vmem:[%s1965 + $0x2ac] sm:$0xff] %v2308
                  %v2310 = vld [vmem:[%s1964 + $0x560] sm:$0xff]
                  %2311 = vst [vmem:[%s1965 + $0x2b0] sm:$0xff] %v2310
                  %v2312 = vld [vmem:[%s1964 + $0x568] sm:$0xff]
                  %2313 = vst [vmem:[%s1965 + $0x2b4] sm:$0xff] %v2312
                  %v2314 = vld [vmem:[%s1964 + $0x570] sm:$0xff]
                  %2315 = vst [vmem:[%s1965 + $0x2b8] sm:$0xff] %v2314
                  %v2316 = vld [vmem:[%s1964 + $0x578] sm:$0xff]
                  %2317 = vst [vmem:[%s1965 + $0x2bc] sm:$0xff] %v2316
                  %v2318 = vld [vmem:[%s1964 + $0x580] sm:$0xff]
                  %2319 = vst [vmem:[%s1965 + $0x2c0] sm:$0xff] %v2318
                  %v2320 = vld [vmem:[%s1964 + $0x588] sm:$0xff]
                  %2321 = vst [vmem:[%s1965 + $0x2c4] sm:$0xff] %v2320
                  %v2322 = vld [vmem:[%s1964 + $0x590] sm:$0xff]
                  %2323 = vst [vmem:[%s1965 + $0x2c8] sm:$0xff] %v2322
                  %v2324 = vld [vmem:[%s1964 + $0x598] sm:$0xff]
                  %2325 = vst [vmem:[%s1965 + $0x2cc] sm:$0xff] %v2324
                  %v2326 = vld [vmem:[%s1964 + $0x5a0] sm:$0xff]
                  %2327 = vst [vmem:[%s1965 + $0x2d0] sm:$0xff] %v2326
                  %v2328 = vld [vmem:[%s1964 + $0x5a8] sm:$0xff]
                  %2329 = vst [vmem:[%s1965 + $0x2d4] sm:$0xff] %v2328
                  %v2330 = vld [vmem:[%s1964 + $0x5b0] sm:$0xff]
                  %2331 = vst [vmem:[%s1965 + $0x2d8] sm:$0xff] %v2330
                  %v2332 = vld [vmem:[%s1964 + $0x5b8] sm:$0xff]
                  %2333 = vst [vmem:[%s1965 + $0x2dc] sm:$0xff] %v2332
                  %v2334 = vld [vmem:[%s1964 + $0x5c0] sm:$0xff]
                  %2335 = vst [vmem:[%s1965 + $0x2e0] sm:$0xff] %v2334
                  %v2336 = vld [vmem:[%s1964 + $0x5c8] sm:$0xff]
                  %2337 = vst [vmem:[%s1965 + $0x2e4] sm:$0xff] %v2336
                  %v2338 = vld [vmem:[%s1964 + $0x5d0] sm:$0xff]
                  %2339 = vst [vmem:[%s1965 + $0x2e8] sm:$0xff] %v2338
                  %v2340 = vld [vmem:[%s1964 + $0x5d8] sm:$0xff]
                  %2341 = vst [vmem:[%s1965 + $0x2ec] sm:$0xff] %v2340
                  %v2342 = vld [vmem:[%s1964 + $0x5e0] sm:$0xff]
                  %2343 = vst [vmem:[%s1965 + $0x2f0] sm:$0xff] %v2342
                  %v2344 = vld [vmem:[%s1964 + $0x5e8] sm:$0xff]
                  %2345 = vst [vmem:[%s1965 + $0x2f4] sm:$0xff] %v2344
                  %v2346 = vld [vmem:[%s1964 + $0x5f0] sm:$0xff]
                  %2347 = vst [vmem:[%s1965 + $0x2f8] sm:$0xff] %v2346
                  %v2348 = vld [vmem:[%s1964 + $0x5f8] sm:$0xff]
                  %2349 = vst [vmem:[%s1965 + $0x2fc] sm:$0xff] %v2348
                  %v2350 = vld [vmem:[%s1964 + $0x600] sm:$0xff]
                  %2351 = vst [vmem:[%s1965 + $0x300] sm:$0xff] %v2350
                  %v2352 = vld [vmem:[%s1964 + $0x608] sm:$0xff]
                  %2353 = vst [vmem:[%s1965 + $0x304] sm:$0xff] %v2352
                  %v2354 = vld [vmem:[%s1964 + $0x610] sm:$0xff]
                  %2355 = vst [vmem:[%s1965 + $0x308] sm:$0xff] %v2354
                  %v2356 = vld [vmem:[%s1964 + $0x618] sm:$0xff]
                  %2357 = vst [vmem:[%s1965 + $0x30c] sm:$0xff] %v2356
                  %v2358 = vld [vmem:[%s1964 + $0x620] sm:$0xff]
                  %2359 = vst [vmem:[%s1965 + $0x310] sm:$0xff] %v2358
                  %v2360 = vld [vmem:[%s1964 + $0x628] sm:$0xff]
                  %2361 = vst [vmem:[%s1965 + $0x314] sm:$0xff] %v2360
                  %v2362 = vld [vmem:[%s1964 + $0x630] sm:$0xff]
                  %2363 = vst [vmem:[%s1965 + $0x318] sm:$0xff] %v2362
                  %v2364 = vld [vmem:[%s1964 + $0x638] sm:$0xff]
                  %2365 = vst [vmem:[%s1965 + $0x31c] sm:$0xff] %v2364
                  %v2366 = vld [vmem:[%s1964 + $0x640] sm:$0xff]
                  %2367 = vst [vmem:[%s1965 + $0x320] sm:$0xff] %v2366
                  %v2368 = vld [vmem:[%s1964 + $0x648] sm:$0xff]
                  %2369 = vst [vmem:[%s1965 + $0x324] sm:$0xff] %v2368
                  %v2370 = vld [vmem:[%s1964 + $0x650] sm:$0xff]
                  %2371 = vst [vmem:[%s1965 + $0x328] sm:$0xff] %v2370
                  %v2372 = vld [vmem:[%s1964 + $0x658] sm:$0xff]
                  %2373 = vst [vmem:[%s1965 + $0x32c] sm:$0xff] %v2372
                  %v2374 = vld [vmem:[%s1964 + $0x660] sm:$0xff]
                  %2375 = vst [vmem:[%s1965 + $0x330] sm:$0xff] %v2374
                  %v2376 = vld [vmem:[%s1964 + $0x668] sm:$0xff]
                  %2377 = vst [vmem:[%s1965 + $0x334] sm:$0xff] %v2376
                  %v2378 = vld [vmem:[%s1964 + $0x670] sm:$0xff]
                  %2379 = vst [vmem:[%s1965 + $0x338] sm:$0xff] %v2378
                  %v2380 = vld [vmem:[%s1964 + $0x678] sm:$0xff]
                  %2381 = vst [vmem:[%s1965 + $0x33c] sm:$0xff] %v2380
                  %v2382 = vld [vmem:[%s1964 + $0x680] sm:$0xff]
                  %2383 = vst [vmem:[%s1965 + $0x340] sm:$0xff] %v2382
                  %v2384 = vld [vmem:[%s1964 + $0x688] sm:$0xff]
                  %2385 = vst [vmem:[%s1965 + $0x344] sm:$0xff] %v2384
                  %v2386 = vld [vmem:[%s1964 + $0x690] sm:$0xff]
                  %2387 = vst [vmem:[%s1965 + $0x348] sm:$0xff] %v2386
                  %v2388 = vld [vmem:[%s1964 + $0x698] sm:$0xff]
                  %2389 = vst [vmem:[%s1965 + $0x34c] sm:$0xff] %v2388
                  %v2390 = vld [vmem:[%s1964 + $0x6a0] sm:$0xff]
                  %2391 = vst [vmem:[%s1965 + $0x350] sm:$0xff] %v2390
                  %v2392 = vld [vmem:[%s1964 + $0x6a8] sm:$0xff]
                  %2393 = vst [vmem:[%s1965 + $0x354] sm:$0xff] %v2392
                  %v2394 = vld [vmem:[%s1964 + $0x6b0] sm:$0xff]
                  %2395 = vst [vmem:[%s1965 + $0x358] sm:$0xff] %v2394
                  %v2396 = vld [vmem:[%s1964 + $0x6b8] sm:$0xff]
                  %2397 = vst [vmem:[%s1965 + $0x35c] sm:$0xff] %v2396
                  %v2398 = vld [vmem:[%s1964 + $0x6c0] sm:$0xff]
                  %2399 = vst [vmem:[%s1965 + $0x360] sm:$0xff] %v2398
                  %v2400 = vld [vmem:[%s1964 + $0x6c8] sm:$0xff]
                  %2401 = vst [vmem:[%s1965 + $0x364] sm:$0xff] %v2400
                  %v2402 = vld [vmem:[%s1964 + $0x6d0] sm:$0xff]
                  %2403 = vst [vmem:[%s1965 + $0x368] sm:$0xff] %v2402
                  %v2404 = vld [vmem:[%s1964 + $0x6d8] sm:$0xff]
                  %2405 = vst [vmem:[%s1965 + $0x36c] sm:$0xff] %v2404
                  %v2406 = vld [vmem:[%s1964 + $0x6e0] sm:$0xff]
                  %2407 = vst [vmem:[%s1965 + $0x370] sm:$0xff] %v2406
                  %v2408 = vld [vmem:[%s1964 + $0x6e8] sm:$0xff]
                  %2409 = vst [vmem:[%s1965 + $0x374] sm:$0xff] %v2408
                  %v2410 = vld [vmem:[%s1964 + $0x6f0] sm:$0xff]
                  %2411 = vst [vmem:[%s1965 + $0x378] sm:$0xff] %v2410
                  %v2412 = vld [vmem:[%s1964 + $0x6f8] sm:$0xff]
                  %2413 = vst [vmem:[%s1965 + $0x37c] sm:$0xff] %v2412
                  %v2414 = vld [vmem:[%s1964 + $0x700] sm:$0xff]
                  %2415 = vst [vmem:[%s1965 + $0x380] sm:$0xff] %v2414
                  %v2416 = vld [vmem:[%s1964 + $0x708] sm:$0xff]
                  %2417 = vst [vmem:[%s1965 + $0x384] sm:$0xff] %v2416
                  %v2418 = vld [vmem:[%s1964 + $0x710] sm:$0xff]
                  %2419 = vst [vmem:[%s1965 + $0x388] sm:$0xff] %v2418
                  %v2420 = vld [vmem:[%s1964 + $0x718] sm:$0xff]
                  %2421 = vst [vmem:[%s1965 + $0x38c] sm:$0xff] %v2420
                  %v2422 = vld [vmem:[%s1964 + $0x720] sm:$0xff]
                  %2423 = vst [vmem:[%s1965 + $0x390] sm:$0xff] %v2422
                  %v2424 = vld [vmem:[%s1964 + $0x728] sm:$0xff]
                  %2425 = vst [vmem:[%s1965 + $0x394] sm:$0xff] %v2424
                  %v2426 = vld [vmem:[%s1964 + $0x730] sm:$0xff]
                  %2427 = vst [vmem:[%s1965 + $0x398] sm:$0xff] %v2426
                  %v2428 = vld [vmem:[%s1964 + $0x738] sm:$0xff]
                  %2429 = vst [vmem:[%s1965 + $0x39c] sm:$0xff] %v2428
                  %v2430 = vld [vmem:[%s1964 + $0x740] sm:$0xff]
                  %2431 = vst [vmem:[%s1965 + $0x3a0] sm:$0xff] %v2430
                  %v2432 = vld [vmem:[%s1964 + $0x748] sm:$0xff]
                  %2433 = vst [vmem:[%s1965 + $0x3a4] sm:$0xff] %v2432
                  %v2434 = vld [vmem:[%s1964 + $0x750] sm:$0xff]
                  %2435 = vst [vmem:[%s1965 + $0x3a8] sm:$0xff] %v2434
                  %v2436 = vld [vmem:[%s1964 + $0x758] sm:$0xff]
                  %2437 = vst [vmem:[%s1965 + $0x3ac] sm:$0xff] %v2436
                  %v2438 = vld [vmem:[%s1964 + $0x760] sm:$0xff]
                  %2439 = vst [vmem:[%s1965 + $0x3b0] sm:$0xff] %v2438
                  %v2440 = vld [vmem:[%s1964 + $0x768] sm:$0xff]
                  %2441 = vst [vmem:[%s1965 + $0x3b4] sm:$0xff] %v2440
                  %v2442 = vld [vmem:[%s1964 + $0x770] sm:$0xff]
                  %2443 = vst [vmem:[%s1965 + $0x3b8] sm:$0xff] %v2442
                  %v2444 = vld [vmem:[%s1964 + $0x778] sm:$0xff]
                  %2445 = vst [vmem:[%s1965 + $0x3bc] sm:$0xff] %v2444
                  %v2446 = vld [vmem:[%s1964 + $0x780] sm:$0xff]
                  %2447 = vst [vmem:[%s1965 + $0x3c0] sm:$0xff] %v2446
                  %v2448 = vld [vmem:[%s1964 + $0x788] sm:$0xff]
                  %2449 = vst [vmem:[%s1965 + $0x3c4] sm:$0xff] %v2448
                  %v2450 = vld [vmem:[%s1964 + $0x790] sm:$0xff]
                  %2451 = vst [vmem:[%s1965 + $0x3c8] sm:$0xff] %v2450
                  %v2452 = vld [vmem:[%s1964 + $0x798] sm:$0xff]
                  %2453 = vst [vmem:[%s1965 + $0x3cc] sm:$0xff] %v2452
                  %v2454 = vld [vmem:[%s1964 + $0x7a0] sm:$0xff]
                  %2455 = vst [vmem:[%s1965 + $0x3d0] sm:$0xff] %v2454
                  %v2456 = vld [vmem:[%s1964 + $0x7a8] sm:$0xff]
                  %2457 = vst [vmem:[%s1965 + $0x3d4] sm:$0xff] %v2456
                  %v2458 = vld [vmem:[%s1964 + $0x7b0] sm:$0xff]
                  %2459 = vst [vmem:[%s1965 + $0x3d8] sm:$0xff] %v2458
                  %v2460 = vld [vmem:[%s1964 + $0x7b8] sm:$0xff]
                  %2461 = vst [vmem:[%s1965 + $0x3dc] sm:$0xff] %v2460
                  %v2462 = vld [vmem:[%s1964 + $0x7c0] sm:$0xff]
                  %2463 = vst [vmem:[%s1965 + $0x3e0] sm:$0xff] %v2462
                  %v2464 = vld [vmem:[%s1964 + $0x7c8] sm:$0xff]
                  %2465 = vst [vmem:[%s1965 + $0x3e4] sm:$0xff] %v2464
                  %v2466 = vld [vmem:[%s1964 + $0x7d0] sm:$0xff]
                  %2467 = vst [vmem:[%s1965 + $0x3e8] sm:$0xff] %v2466
                  %v2468 = vld [vmem:[%s1964 + $0x7d8] sm:$0xff]
                  %2469 = vst [vmem:[%s1965 + $0x3ec] sm:$0xff] %v2468
                  %v2470 = vld [vmem:[%s1964 + $0x7e0] sm:$0xff]
                  %2471 = vst [vmem:[%s1965 + $0x3f0] sm:$0xff] %v2470
                  %v2472 = vld [vmem:[%s1964 + $0x7e8] sm:$0xff]
                  %2473 = vst [vmem:[%s1965 + $0x3f4] sm:$0xff] %v2472
                  %v2474 = vld [vmem:[%s1964 + $0x7f0] sm:$0xff]
                  %2475 = vst [vmem:[%s1965 + $0x3f8] sm:$0xff] %v2474
                  %v2476 = vld [vmem:[%s1964 + $0x7f8] sm:$0xff]
                  %2477 = vst [vmem:[%s1965 + $0x3fc] sm:$0xff] %v2476
                  %v2478 = vld [vmem:[%s1964 + $0x800] sm:$0xff]
                  %2479 = vst [vmem:[%s1965 + $0x400] sm:$0xff] %v2478
                  %v2480 = vld [vmem:[%s1964 + $0x808] sm:$0xff]
                  %2481 = vst [vmem:[%s1965 + $0x404] sm:$0xff] %v2480
                  %v2482 = vld [vmem:[%s1964 + $0x810] sm:$0xff]
                  %2483 = vst [vmem:[%s1965 + $0x408] sm:$0xff] %v2482
                  %v2484 = vld [vmem:[%s1964 + $0x818] sm:$0xff]
                  %2485 = vst [vmem:[%s1965 + $0x40c] sm:$0xff] %v2484
                  %v2486 = vld [vmem:[%s1964 + $0x820] sm:$0xff]
                  %2487 = vst [vmem:[%s1965 + $0x410] sm:$0xff] %v2486
                  %v2488 = vld [vmem:[%s1964 + $0x828] sm:$0xff]
                  %2489 = vst [vmem:[%s1965 + $0x414] sm:$0xff] %v2488
                  %v2490 = vld [vmem:[%s1964 + $0x830] sm:$0xff]
                  %2491 = vst [vmem:[%s1965 + $0x418] sm:$0xff] %v2490
                  %v2492 = vld [vmem:[%s1964 + $0x838] sm:$0xff]
                  %2493 = vst [vmem:[%s1965 + $0x41c] sm:$0xff] %v2492
                  %v2494 = vld [vmem:[%s1964 + $0x840] sm:$0xff]
                  %2495 = vst [vmem:[%s1965 + $0x420] sm:$0xff] %v2494
                  %v2496 = vld [vmem:[%s1964 + $0x848] sm:$0xff]
                  %2497 = vst [vmem:[%s1965 + $0x424] sm:$0xff] %v2496
                  %v2498 = vld [vmem:[%s1964 + $0x850] sm:$0xff]
                  %2499 = vst [vmem:[%s1965 + $0x428] sm:$0xff] %v2498
                  %v2500 = vld [vmem:[%s1964 + $0x858] sm:$0xff]
                  %2501 = vst [vmem:[%s1965 + $0x42c] sm:$0xff] %v2500
                  %v2502 = vld [vmem:[%s1964 + $0x860] sm:$0xff]
                  %2503 = vst [vmem:[%s1965 + $0x430] sm:$0xff] %v2502
                  %v2504 = vld [vmem:[%s1964 + $0x868] sm:$0xff]
                  %2505 = vst [vmem:[%s1965 + $0x434] sm:$0xff] %v2504
                  %v2506 = vld [vmem:[%s1964 + $0x870] sm:$0xff]
                  %2507 = vst [vmem:[%s1965 + $0x438] sm:$0xff] %v2506
                  %v2508 = vld [vmem:[%s1964 + $0x878] sm:$0xff]
                  %2509 = vst [vmem:[%s1965 + $0x43c] sm:$0xff] %v2508
                  %v2510 = vld [vmem:[%s1964 + $0x880] sm:$0xff]
                  %2511 = vst [vmem:[%s1965 + $0x440] sm:$0xff] %v2510
                  %v2512 = vld [vmem:[%s1964 + $0x888] sm:$0xff]
                  %2513 = vst [vmem:[%s1965 + $0x444] sm:$0xff] %v2512
                  %v2514 = vld [vmem:[%s1964 + $0x890] sm:$0xff]
                  %2515 = vst [vmem:[%s1965 + $0x448] sm:$0xff] %v2514
                  %v2516 = vld [vmem:[%s1964 + $0x898] sm:$0xff]
                  %2517 = vst [vmem:[%s1965 + $0x44c] sm:$0xff] %v2516
                  %v2518 = vld [vmem:[%s1964 + $0x8a0] sm:$0xff]
                  %2519 = vst [vmem:[%s1965 + $0x450] sm:$0xff] %v2518
                  %v2520 = vld [vmem:[%s1964 + $0x8a8] sm:$0xff]
                  %2521 = vst [vmem:[%s1965 + $0x454] sm:$0xff] %v2520
                  %v2522 = vld [vmem:[%s1964 + $0x8b0] sm:$0xff]
                  %2523 = vst [vmem:[%s1965 + $0x458] sm:$0xff] %v2522
                  %v2524 = vld [vmem:[%s1964 + $0x8b8] sm:$0xff]
                  %2525 = vst [vmem:[%s1965 + $0x45c] sm:$0xff] %v2524
                  %v2526 = vld [vmem:[%s1964 + $0x8c0] sm:$0xff]
                  %2527 = vst [vmem:[%s1965 + $0x460] sm:$0xff] %v2526
                  %v2528 = vld [vmem:[%s1964 + $0x8c8] sm:$0xff]
                  %2529 = vst [vmem:[%s1965 + $0x464] sm:$0xff] %v2528
                  %v2530 = vld [vmem:[%s1964 + $0x8d0] sm:$0xff]
                  %2531 = vst [vmem:[%s1965 + $0x468] sm:$0xff] %v2530
                  %v2532 = vld [vmem:[%s1964 + $0x8d8] sm:$0xff]
                  %2533 = vst [vmem:[%s1965 + $0x46c] sm:$0xff] %v2532
                  %v2534 = vld [vmem:[%s1964 + $0x8e0] sm:$0xff]
                  %2535 = vst [vmem:[%s1965 + $0x470] sm:$0xff] %v2534
                  %v2536 = vld [vmem:[%s1964 + $0x8e8] sm:$0xff]
                  %2537 = vst [vmem:[%s1965 + $0x474] sm:$0xff] %v2536
                  %v2538 = vld [vmem:[%s1964 + $0x8f0] sm:$0xff]
                  %2539 = vst [vmem:[%s1965 + $0x478] sm:$0xff] %v2538
                  %v2540 = vld [vmem:[%s1964 + $0x8f8] sm:$0xff]
                  %2541 = vst [vmem:[%s1965 + $0x47c] sm:$0xff] %v2540
                  %v2542 = vld [vmem:[%s1964 + $0x900] sm:$0xff]
                  %2543 = vst [vmem:[%s1965 + $0x480] sm:$0xff] %v2542
                  %v2544 = vld [vmem:[%s1964 + $0x908] sm:$0xff]
                  %2545 = vst [vmem:[%s1965 + $0x484] sm:$0xff] %v2544
                  %v2546 = vld [vmem:[%s1964 + $0x910] sm:$0xff]
                  %2547 = vst [vmem:[%s1965 + $0x488] sm:$0xff] %v2546
                  %v2548 = vld [vmem:[%s1964 + $0x918] sm:$0xff]
                  %2549 = vst [vmem:[%s1965 + $0x48c] sm:$0xff] %v2548
                  %v2550 = vld [vmem:[%s1964 + $0x920] sm:$0xff]
                  %2551 = vst [vmem:[%s1965 + $0x490] sm:$0xff] %v2550
                  %v2552 = vld [vmem:[%s1964 + $0x928] sm:$0xff]
                  %2553 = vst [vmem:[%s1965 + $0x494] sm:$0xff] %v2552
                  %v2554 = vld [vmem:[%s1964 + $0x930] sm:$0xff]
                  %2555 = vst [vmem:[%s1965 + $0x498] sm:$0xff] %v2554
                  %v2556 = vld [vmem:[%s1964 + $0x938] sm:$0xff]
                  %2557 = vst [vmem:[%s1965 + $0x49c] sm:$0xff] %v2556
                  %v2558 = vld [vmem:[%s1964 + $0x940] sm:$0xff]
                  %2559 = vst [vmem:[%s1965 + $0x4a0] sm:$0xff] %v2558
                  %v2560 = vld [vmem:[%s1964 + $0x948] sm:$0xff]
                  %2561 = vst [vmem:[%s1965 + $0x4a4] sm:$0xff] %v2560
                  %v2562 = vld [vmem:[%s1964 + $0x950] sm:$0xff]
                  %2563 = vst [vmem:[%s1965 + $0x4a8] sm:$0xff] %v2562
                  %v2564 = vld [vmem:[%s1964 + $0x958] sm:$0xff]
                  %2565 = vst [vmem:[%s1965 + $0x4ac] sm:$0xff] %v2564
                  %v2566 = vld [vmem:[%s1964 + $0x960] sm:$0xff]
                  %2567 = vst [vmem:[%s1965 + $0x4b0] sm:$0xff] %v2566
                  %v2568 = vld [vmem:[%s1964 + $0x968] sm:$0xff]
                  %2569 = vst [vmem:[%s1965 + $0x4b4] sm:$0xff] %v2568
                  %v2570 = vld [vmem:[%s1964 + $0x970] sm:$0xff]
                  %2571 = vst [vmem:[%s1965 + $0x4b8] sm:$0xff] %v2570
                  %v2572 = vld [vmem:[%s1964 + $0x978] sm:$0xff]
                  %2573 = vst [vmem:[%s1965 + $0x4bc] sm:$0xff] %v2572
                  %v2574 = vld [vmem:[%s1964 + $0x980] sm:$0xff]
                  %2575 = vst [vmem:[%s1965 + $0x4c0] sm:$0xff] %v2574
                  %v2576 = vld [vmem:[%s1964 + $0x988] sm:$0xff]
                  %2577 = vst [vmem:[%s1965 + $0x4c4] sm:$0xff] %v2576
                  %v2578 = vld [vmem:[%s1964 + $0x990] sm:$0xff]
                  %2579 = vst [vmem:[%s1965 + $0x4c8] sm:$0xff] %v2578
                  %v2580 = vld [vmem:[%s1964 + $0x998] sm:$0xff]
                  %2581 = vst [vmem:[%s1965 + $0x4cc] sm:$0xff] %v2580
                  %v2582 = vld [vmem:[%s1964 + $0x9a0] sm:$0xff]
                  %2583 = vst [vmem:[%s1965 + $0x4d0] sm:$0xff] %v2582
                  %v2584 = vld [vmem:[%s1964 + $0x9a8] sm:$0xff]
                  %2585 = vst [vmem:[%s1965 + $0x4d4] sm:$0xff] %v2584
                  %v2586 = vld [vmem:[%s1964 + $0x9b0] sm:$0xff]
                  %2587 = vst [vmem:[%s1965 + $0x4d8] sm:$0xff] %v2586
                  %v2588 = vld [vmem:[%s1964 + $0x9b8] sm:$0xff]
                  %2589 = vst [vmem:[%s1965 + $0x4dc] sm:$0xff] %v2588
                  %v2590 = vld [vmem:[%s1964 + $0x9c0] sm:$0xff]
                  %2591 = vst [vmem:[%s1965 + $0x4e0] sm:$0xff] %v2590
                  %v2592 = vld [vmem:[%s1964 + $0x9c8] sm:$0xff]
                  %2593 = vst [vmem:[%s1965 + $0x4e4] sm:$0xff] %v2592
                  %v2594 = vld [vmem:[%s1964 + $0x9d0] sm:$0xff]
                  %2595 = vst [vmem:[%s1965 + $0x4e8] sm:$0xff] %v2594
                  %v2596 = vld [vmem:[%s1964 + $0x9d8] sm:$0xff]
                  %2597 = vst [vmem:[%s1965 + $0x4ec] sm:$0xff] %v2596
                  %v2598 = vld [vmem:[%s1964 + $0x9e0] sm:$0xff]
                  %2599 = vst [vmem:[%s1965 + $0x4f0] sm:$0xff] %v2598
                  %v2600 = vld [vmem:[%s1964 + $0x9e8] sm:$0xff]
                  %2601 = vst [vmem:[%s1965 + $0x4f4] sm:$0xff] %v2600
                  %v2602 = vld [vmem:[%s1964 + $0x9f0] sm:$0xff]
                  %2603 = vst [vmem:[%s1965 + $0x4f8] sm:$0xff] %v2602
                  %v2604 = vld [vmem:[%s1964 + $0x9f8] sm:$0xff]
                  %2605 = vst [vmem:[%s1965 + $0x4fc] sm:$0xff] %v2604
                  %v2606 = vld [vmem:[%s1964 + $0xa00] sm:$0xff]
                  %2607 = vst [vmem:[%s1965 + $0x500] sm:$0xff] %v2606
                  %v2608 = vld [vmem:[%s1964 + $0xa08] sm:$0xff]
                  %2609 = vst [vmem:[%s1965 + $0x504] sm:$0xff] %v2608
                  %v2610 = vld [vmem:[%s1964 + $0xa10] sm:$0xff]
                  %2611 = vst [vmem:[%s1965 + $0x508] sm:$0xff] %v2610
                  %v2612 = vld [vmem:[%s1964 + $0xa18] sm:$0xff]
                  %2613 = vst [vmem:[%s1965 + $0x50c] sm:$0xff] %v2612
                  %v2614 = vld [vmem:[%s1964 + $0xa20] sm:$0xff]
                  %2615 = vst [vmem:[%s1965 + $0x510] sm:$0xff] %v2614
                  %v2616 = vld [vmem:[%s1964 + $0xa28] sm:$0xff]
                  %2617 = vst [vmem:[%s1965 + $0x514] sm:$0xff] %v2616
                  %v2618 = vld [vmem:[%s1964 + $0xa30] sm:$0xff]
                  %2619 = vst [vmem:[%s1965 + $0x518] sm:$0xff] %v2618
                  %v2620 = vld [vmem:[%s1964 + $0xa38] sm:$0xff]
                  %2621 = vst [vmem:[%s1965 + $0x51c] sm:$0xff] %v2620
                  %v2622 = vld [vmem:[%s1964 + $0xa40] sm:$0xff]
                  %2623 = vst [vmem:[%s1965 + $0x520] sm:$0xff] %v2622
                  %v2624 = vld [vmem:[%s1964 + $0xa48] sm:$0xff]
                  %2625 = vst [vmem:[%s1965 + $0x524] sm:$0xff] %v2624
                  %v2626 = vld [vmem:[%s1964 + $0xa50] sm:$0xff]
                  %2627 = vst [vmem:[%s1965 + $0x528] sm:$0xff] %v2626
                  %v2628 = vld [vmem:[%s1964 + $0xa58] sm:$0xff]
                  %2629 = vst [vmem:[%s1965 + $0x52c] sm:$0xff] %v2628
                  %v2630 = vld [vmem:[%s1964 + $0xa60] sm:$0xff]
                  %2631 = vst [vmem:[%s1965 + $0x530] sm:$0xff] %v2630
                  %v2632 = vld [vmem:[%s1964 + $0xa68] sm:$0xff]
                  %2633 = vst [vmem:[%s1965 + $0x534] sm:$0xff] %v2632
                  %v2634 = vld [vmem:[%s1964 + $0xa70] sm:$0xff]
                  %2635 = vst [vmem:[%s1965 + $0x538] sm:$0xff] %v2634
                  %v2636 = vld [vmem:[%s1964 + $0xa78] sm:$0xff]
                  %2637 = vst [vmem:[%s1965 + $0x53c] sm:$0xff] %v2636
                  %v2638 = vld [vmem:[%s1964 + $0xa80] sm:$0xff]
                  %2639 = vst [vmem:[%s1965 + $0x540] sm:$0xff] %v2638
                  %v2640 = vld [vmem:[%s1964 + $0xa88] sm:$0xff]
                  %2641 = vst [vmem:[%s1965 + $0x544] sm:$0xff] %v2640
                  %v2642 = vld [vmem:[%s1964 + $0xa90] sm:$0xff]
                  %2643 = vst [vmem:[%s1965 + $0x548] sm:$0xff] %v2642
                  %v2644 = vld [vmem:[%s1964 + $0xa98] sm:$0xff]
                  %2645 = vst [vmem:[%s1965 + $0x54c] sm:$0xff] %v2644
                  %v2646 = vld [vmem:[%s1964 + $0xaa0] sm:$0xff]
                  %2647 = vst [vmem:[%s1965 + $0x550] sm:$0xff] %v2646
                  %v2648 = vld [vmem:[%s1964 + $0xaa8] sm:$0xff]
                  %2649 = vst [vmem:[%s1965 + $0x554] sm:$0xff] %v2648
                  %v2650 = vld [vmem:[%s1964 + $0xab0] sm:$0xff]
                  %2651 = vst [vmem:[%s1965 + $0x558] sm:$0xff] %v2650
                  %v2652 = vld [vmem:[%s1964 + $0xab8] sm:$0xff]
                  %2653 = vst [vmem:[%s1965 + $0x55c] sm:$0xff] %v2652
                  %v2654 = vld [vmem:[%s1964 + $0xac0] sm:$0xff]
                  %2655 = vst [vmem:[%s1965 + $0x560] sm:$0xff] %v2654
                  %v2656 = vld [vmem:[%s1964 + $0xac8] sm:$0xff]
                  %2657 = vst [vmem:[%s1965 + $0x564] sm:$0xff] %v2656
                  %v2658 = vld [vmem:[%s1964 + $0xad0] sm:$0xff]
                  %2659 = vst [vmem:[%s1965 + $0x568] sm:$0xff] %v2658
                  %v2660 = vld [vmem:[%s1964 + $0xad8] sm:$0xff]
                  %2661 = vst [vmem:[%s1965 + $0x56c] sm:$0xff] %v2660
                  %v2662 = vld [vmem:[%s1964 + $0xae0] sm:$0xff]
                  %2663 = vst [vmem:[%s1965 + $0x570] sm:$0xff] %v2662
                  %v2664 = vld [vmem:[%s1964 + $0xae8] sm:$0xff]
                  %2665 = vst [vmem:[%s1965 + $0x574] sm:$0xff] %v2664
                  %v2666 = vld [vmem:[%s1964 + $0xaf0] sm:$0xff]
                  %2667 = vst [vmem:[%s1965 + $0x578] sm:$0xff] %v2666
                  %v2668 = vld [vmem:[%s1964 + $0xaf8] sm:$0xff]
                  %2669 = vst [vmem:[%s1965 + $0x57c] sm:$0xff] %v2668
                  %v2670 = vld [vmem:[%s1964 + $0xb00] sm:$0xff]
                  %2671 = vst [vmem:[%s1965 + $0x580] sm:$0xff] %v2670
                  %v2672 = vld [vmem:[%s1964 + $0xb08] sm:$0xff]
                  %2673 = vst [vmem:[%s1965 + $0x584] sm:$0xff] %v2672
                  %v2674 = vld [vmem:[%s1964 + $0xb10] sm:$0xff]
                  %2675 = vst [vmem:[%s1965 + $0x588] sm:$0xff] %v2674
                  %v2676 = vld [vmem:[%s1964 + $0xb18] sm:$0xff]
                  %2677 = vst [vmem:[%s1965 + $0x58c] sm:$0xff] %v2676
                  %v2678 = vld [vmem:[%s1964 + $0xb20] sm:$0xff]
                  %2679 = vst [vmem:[%s1965 + $0x590] sm:$0xff] %v2678
                  %v2680 = vld [vmem:[%s1964 + $0xb28] sm:$0xff]
                  %2681 = vst [vmem:[%s1965 + $0x594] sm:$0xff] %v2680
                  %v2682 = vld [vmem:[%s1964 + $0xb30] sm:$0xff]
                  %2683 = vst [vmem:[%s1965 + $0x598] sm:$0xff] %v2682
                  %v2684 = vld [vmem:[%s1964 + $0xb38] sm:$0xff]
                  %2685 = vst [vmem:[%s1965 + $0x59c] sm:$0xff] %v2684
                  %v2686 = vld [vmem:[%s1964 + $0xb40] sm:$0xff]
                  %2687 = vst [vmem:[%s1965 + $0x5a0] sm:$0xff] %v2686
                  %v2688 = vld [vmem:[%s1964 + $0xb48] sm:$0xff]
                  %2689 = vst [vmem:[%s1965 + $0x5a4] sm:$0xff] %v2688
                  %v2690 = vld [vmem:[%s1964 + $0xb50] sm:$0xff]
                  %2691 = vst [vmem:[%s1965 + $0x5a8] sm:$0xff] %v2690
                  %v2692 = vld [vmem:[%s1964 + $0xb58] sm:$0xff]
                  %2693 = vst [vmem:[%s1965 + $0x5ac] sm:$0xff] %v2692
                  %v2694 = vld [vmem:[%s1964 + $0xb60] sm:$0xff]
                  %2695 = vst [vmem:[%s1965 + $0x5b0] sm:$0xff] %v2694
                  %v2696 = vld [vmem:[%s1964 + $0xb68] sm:$0xff]
                  %2697 = vst [vmem:[%s1965 + $0x5b4] sm:$0xff] %v2696
                  %v2698 = vld [vmem:[%s1964 + $0xb70] sm:$0xff]
                  %2699 = vst [vmem:[%s1965 + $0x5b8] sm:$0xff] %v2698
                  %v2700 = vld [vmem:[%s1964 + $0xb78] sm:$0xff]
                  %2701 = vst [vmem:[%s1965 + $0x5bc] sm:$0xff] %v2700
                  %v2702 = vld [vmem:[%s1964 + $0xb80] sm:$0xff]
                  %2703 = vst [vmem:[%s1965 + $0x5c0] sm:$0xff] %v2702
                  %v2704 = vld [vmem:[%s1964 + $0xb88] sm:$0xff]
                  %2705 = vst [vmem:[%s1965 + $0x5c4] sm:$0xff] %v2704
                  %v2706 = vld [vmem:[%s1964 + $0xb90] sm:$0xff]
                  %2707 = vst [vmem:[%s1965 + $0x5c8] sm:$0xff] %v2706
                  %v2708 = vld [vmem:[%s1964 + $0xb98] sm:$0xff]
                  %2709 = vst [vmem:[%s1965 + $0x5cc] sm:$0xff] %v2708
                  %v2710 = vld [vmem:[%s1964 + $0xba0] sm:$0xff]
                  %2711 = vst [vmem:[%s1965 + $0x5d0] sm:$0xff] %v2710
                  %v2712 = vld [vmem:[%s1964 + $0xba8] sm:$0xff]
                  %2713 = vst [vmem:[%s1965 + $0x5d4] sm:$0xff] %v2712
                  %v2714 = vld [vmem:[%s1964 + $0xbb0] sm:$0xff]
                  %2715 = vst [vmem:[%s1965 + $0x5d8] sm:$0xff] %v2714
                  %v2716 = vld [vmem:[%s1964 + $0xbb8] sm:$0xff]
                  %2717 = vst [vmem:[%s1965 + $0x5dc] sm:$0xff] %v2716
                  %v2718 = vld [vmem:[%s1964 + $0xbc0] sm:$0xff]
                  %2719 = vst [vmem:[%s1965 + $0x5e0] sm:$0xff] %v2718
                  %v2720 = vld [vmem:[%s1964 + $0xbc8] sm:$0xff]
                  %2721 = vst [vmem:[%s1965 + $0x5e4] sm:$0xff] %v2720
                  %v2722 = vld [vmem:[%s1964 + $0xbd0] sm:$0xff]
                  %2723 = vst [vmem:[%s1965 + $0x5e8] sm:$0xff] %v2722
                  %v2724 = vld [vmem:[%s1964 + $0xbd8] sm:$0xff]
                  %2725 = vst [vmem:[%s1965 + $0x5ec] sm:$0xff] %v2724
                  %v2726 = vld [vmem:[%s1964 + $0xbe0] sm:$0xff]
                  %2727 = vst [vmem:[%s1965 + $0x5f0] sm:$0xff] %v2726
                  %v2728 = vld [vmem:[%s1964 + $0xbe8] sm:$0xff]
                  %2729 = vst [vmem:[%s1965 + $0x5f4] sm:$0xff] %v2728
                  %v2730 = vld [vmem:[%s1964 + $0xbf0] sm:$0xff]
                  %2731 = vst [vmem:[%s1965 + $0x5f8] sm:$0xff] %v2730
                  %v2732 = vld [vmem:[%s1964 + $0xbf8] sm:$0xff]
                  %2733 = vst [vmem:[%s1965 + $0x5fc] sm:$0xff] %v2732
                  %v2734 = vld [vmem:[%s1964 + $0xc00] sm:$0xff]
                  %2735 = vst [vmem:[%s1965 + $0x600] sm:$0xff] %v2734
                  %v2736 = vld [vmem:[%s1964 + $0xc08] sm:$0xff]
                  %2737 = vst [vmem:[%s1965 + $0x604] sm:$0xff] %v2736
                  %v2738 = vld [vmem:[%s1964 + $0xc10] sm:$0xff]
                  %2739 = vst [vmem:[%s1965 + $0x608] sm:$0xff] %v2738
                  %v2740 = vld [vmem:[%s1964 + $0xc18] sm:$0xff]
                  %2741 = vst [vmem:[%s1965 + $0x60c] sm:$0xff] %v2740
                  %v2742 = vld [vmem:[%s1964 + $0xc20] sm:$0xff]
                  %2743 = vst [vmem:[%s1965 + $0x610] sm:$0xff] %v2742
                  %v2744 = vld [vmem:[%s1964 + $0xc28] sm:$0xff]
                  %2745 = vst [vmem:[%s1965 + $0x614] sm:$0xff] %v2744
                  %v2746 = vld [vmem:[%s1964 + $0xc30] sm:$0xff]
                  %2747 = vst [vmem:[%s1965 + $0x618] sm:$0xff] %v2746
                  %v2748 = vld [vmem:[%s1964 + $0xc38] sm:$0xff]
                  %2749 = vst [vmem:[%s1965 + $0x61c] sm:$0xff] %v2748
                  %v2750 = vld [vmem:[%s1964 + $0xc40] sm:$0xff]
                  %2751 = vst [vmem:[%s1965 + $0x620] sm:$0xff] %v2750
                  %v2752 = vld [vmem:[%s1964 + $0xc48] sm:$0xff]
                  %2753 = vst [vmem:[%s1965 + $0x624] sm:$0xff] %v2752
                  %v2754 = vld [vmem:[%s1964 + $0xc50] sm:$0xff]
                  %2755 = vst [vmem:[%s1965 + $0x628] sm:$0xff] %v2754
                  %v2756 = vld [vmem:[%s1964 + $0xc58] sm:$0xff]
                  %2757 = vst [vmem:[%s1965 + $0x62c] sm:$0xff] %v2756
                  %v2758 = vld [vmem:[%s1964 + $0xc60] sm:$0xff]
                  %2759 = vst [vmem:[%s1965 + $0x630] sm:$0xff] %v2758
                  %v2760 = vld [vmem:[%s1964 + $0xc68] sm:$0xff]
                  %2761 = vst [vmem:[%s1965 + $0x634] sm:$0xff] %v2760
                  %v2762 = vld [vmem:[%s1964 + $0xc70] sm:$0xff]
                  %2763 = vst [vmem:[%s1965 + $0x638] sm:$0xff] %v2762
                  %v2764 = vld [vmem:[%s1964 + $0xc78] sm:$0xff]
                  %2765 = vst [vmem:[%s1965 + $0x63c] sm:$0xff] %v2764
                  %v2766 = vld [vmem:[%s1964 + $0xc80] sm:$0xff]
                  %2767 = vst [vmem:[%s1965 + $0x640] sm:$0xff] %v2766
                  %v2768 = vld [vmem:[%s1964 + $0xc88] sm:$0xff]
                  %2769 = vst [vmem:[%s1965 + $0x644] sm:$0xff] %v2768
                  %v2770 = vld [vmem:[%s1964 + $0xc90] sm:$0xff]
                  %2771 = vst [vmem:[%s1965 + $0x648] sm:$0xff] %v2770
                  %v2772 = vld [vmem:[%s1964 + $0xc98] sm:$0xff]
                  %2773 = vst [vmem:[%s1965 + $0x64c] sm:$0xff] %v2772
                  %v2774 = vld [vmem:[%s1964 + $0xca0] sm:$0xff]
                  %2775 = vst [vmem:[%s1965 + $0x650] sm:$0xff] %v2774
                  %v2776 = vld [vmem:[%s1964 + $0xca8] sm:$0xff]
                  %2777 = vst [vmem:[%s1965 + $0x654] sm:$0xff] %v2776
                  %v2778 = vld [vmem:[%s1964 + $0xcb0] sm:$0xff]
                  %2779 = vst [vmem:[%s1965 + $0x658] sm:$0xff] %v2778
                  %v2780 = vld [vmem:[%s1964 + $0xcb8] sm:$0xff]
                  %2781 = vst [vmem:[%s1965 + $0x65c] sm:$0xff] %v2780
                  %v2782 = vld [vmem:[%s1964 + $0xcc0] sm:$0xff]
                  %2783 = vst [vmem:[%s1965 + $0x660] sm:$0xff] %v2782
                  %v2784 = vld [vmem:[%s1964 + $0xcc8] sm:$0xff]
                  %2785 = vst [vmem:[%s1965 + $0x664] sm:$0xff] %v2784
                  %v2786 = vld [vmem:[%s1964 + $0xcd0] sm:$0xff]
                  %2787 = vst [vmem:[%s1965 + $0x668] sm:$0xff] %v2786
                  %v2788 = vld [vmem:[%s1964 + $0xcd8] sm:$0xff]
                  %2789 = vst [vmem:[%s1965 + $0x66c] sm:$0xff] %v2788
                  %v2790 = vld [vmem:[%s1964 + $0xce0] sm:$0xff]
                  %2791 = vst [vmem:[%s1965 + $0x670] sm:$0xff] %v2790
                  %v2792 = vld [vmem:[%s1964 + $0xce8] sm:$0xff]
                  %2793 = vst [vmem:[%s1965 + $0x674] sm:$0xff] %v2792
                  %v2794 = vld [vmem:[%s1964 + $0xcf0] sm:$0xff]
                  %2795 = vst [vmem:[%s1965 + $0x678] sm:$0xff] %v2794
                  %v2796 = vld [vmem:[%s1964 + $0xcf8] sm:$0xff]
                  %2797 = vst [vmem:[%s1965 + $0x67c] sm:$0xff] %v2796
                  %v2798 = vld [vmem:[%s1964 + $0xd00] sm:$0xff]
                  %2799 = vst [vmem:[%s1965 + $0x680] sm:$0xff] %v2798
                  %v2800 = vld [vmem:[%s1964 + $0xd08] sm:$0xff]
                  %2801 = vst [vmem:[%s1965 + $0x684] sm:$0xff] %v2800
                  %v2802 = vld [vmem:[%s1964 + $0xd10] sm:$0xff]
                  %2803 = vst [vmem:[%s1965 + $0x688] sm:$0xff] %v2802
                  %v2804 = vld [vmem:[%s1964 + $0xd18] sm:$0xff]
                  %2805 = vst [vmem:[%s1965 + $0x68c] sm:$0xff] %v2804
                  %v2806 = vld [vmem:[%s1964 + $0xd20] sm:$0xff]
                  %2807 = vst [vmem:[%s1965 + $0x690] sm:$0xff] %v2806
                  %v2808 = vld [vmem:[%s1964 + $0xd28] sm:$0xff]
                  %2809 = vst [vmem:[%s1965 + $0x694] sm:$0xff] %v2808
                  %v2810 = vld [vmem:[%s1964 + $0xd30] sm:$0xff]
                  %2811 = vst [vmem:[%s1965 + $0x698] sm:$0xff] %v2810
                  %v2812 = vld [vmem:[%s1964 + $0xd38] sm:$0xff]
                  %2813 = vst [vmem:[%s1965 + $0x69c] sm:$0xff] %v2812
                  %v2814 = vld [vmem:[%s1964 + $0xd40] sm:$0xff]
                  %2815 = vst [vmem:[%s1965 + $0x6a0] sm:$0xff] %v2814
                  %v2816 = vld [vmem:[%s1964 + $0xd48] sm:$0xff]
                  %2817 = vst [vmem:[%s1965 + $0x6a4] sm:$0xff] %v2816
                  %v2818 = vld [vmem:[%s1964 + $0xd50] sm:$0xff]
                  %2819 = vst [vmem:[%s1965 + $0x6a8] sm:$0xff] %v2818
                  %v2820 = vld [vmem:[%s1964 + $0xd58] sm:$0xff]
                  %2821 = vst [vmem:[%s1965 + $0x6ac] sm:$0xff] %v2820
                  %v2822 = vld [vmem:[%s1964 + $0xd60] sm:$0xff]
                  %2823 = vst [vmem:[%s1965 + $0x6b0] sm:$0xff] %v2822
                  %v2824 = vld [vmem:[%s1964 + $0xd68] sm:$0xff]
                  %2825 = vst [vmem:[%s1965 + $0x6b4] sm:$0xff] %v2824
                  %v2826 = vld [vmem:[%s1964 + $0xd70] sm:$0xff]
                  %2827 = vst [vmem:[%s1965 + $0x6b8] sm:$0xff] %v2826
                  %v2828 = vld [vmem:[%s1964 + $0xd78] sm:$0xff]
                  %2829 = vst [vmem:[%s1965 + $0x6bc] sm:$0xff] %v2828
                  %s2830 = sadd.s32 1, %s1963
                  %p2831 = scmp.ge.s32.totalorder %s2830, 0
                  %s2832 = scalar_select %p2831, 0, %s2830
                  %s2833 = smul.u32 %s2832, 8
                  %s2834 = smul.u32 %s2832, 8
                  %s2835 = scalar_lea.vmem %s192, %s2833
                  %s2836 = scalar_lea.vmem %s190, %s2834 [#allocation2]
                $region63: #{simple_3dcnn_encoder.5} parent=57 // loop_footer
                  %s1962 = sadd.s32 1, %s1958
                $region64: #{simple_3dcnn_encoder.5} parent=57 // loop_footer_branch
                  %1957 = sbr.rel target = $region60
                $region65: #{simple_3dcnn_encoder.5} parent=57 // loop_exit
                  _
                %s2838 = ssub.s32 16, 1
                loop: start=0, step=1, limit=1
                $region66: #{simple_3dcnn_encoder.5} parent=57 // loop_pre_header
                  _
                $region67: #{simple_3dcnn_encoder.5} parent=57 // loop_header
                  %s2840 = sphi 0, %s2844
                  %p2841 = scmp.ge.s32.totalorder %s2840, 1
                  %s2845 = sphi %s192, %s192
                  %s2846 = sphi %s190, %s190
                $region68: #{simple_3dcnn_encoder.5} parent=57 // loop_header_branch
                  %2843 = sbr.rel (%p2841) target = $region72
                $region69: #{simple_3dcnn_encoder.5} parent=57 // loop_body
                  %v2847 = vld [vmem:[%s2845] sm:%s2838]
                  %2848 = vst [vmem:[%s2846] sm:%s2838] %v2847
                  %v2849 = vld [vmem:[%s2845 + $0x8] sm:%s2838]
                  %2850 = vst [vmem:[%s2846 + $0x4] sm:%s2838] %v2849
                  %v2851 = vld [vmem:[%s2845 + $0x10] sm:%s2838]
                  %2852 = vst [vmem:[%s2846 + $0x8] sm:%s2838] %v2851
                  %v2853 = vld [vmem:[%s2845 + $0x18] sm:%s2838]
                  %2854 = vst [vmem:[%s2846 + $0xc] sm:%s2838] %v2853
                  %v2855 = vld [vmem:[%s2845 + $0x20] sm:%s2838]
                  %2856 = vst [vmem:[%s2846 + $0x10] sm:%s2838] %v2855
                  %v2857 = vld [vmem:[%s2845 + $0x28] sm:%s2838]
                  %2858 = vst [vmem:[%s2846 + $0x14] sm:%s2838] %v2857
                  %v2859 = vld [vmem:[%s2845 + $0x30] sm:%s2838]
                  %2860 = vst [vmem:[%s2846 + $0x18] sm:%s2838] %v2859
                  %v2861 = vld [vmem:[%s2845 + $0x38] sm:%s2838]
                  %2862 = vst [vmem:[%s2846 + $0x1c] sm:%s2838] %v2861
                  %v2863 = vld [vmem:[%s2845 + $0x40] sm:%s2838]
                  %2864 = vst [vmem:[%s2846 + $0x20] sm:%s2838] %v2863
                  %v2865 = vld [vmem:[%s2845 + $0x48] sm:%s2838]
                  %2866 = vst [vmem:[%s2846 + $0x24] sm:%s2838] %v2865
                  %v2867 = vld [vmem:[%s2845 + $0x50] sm:%s2838]
                  %2868 = vst [vmem:[%s2846 + $0x28] sm:%s2838] %v2867
                  %v2869 = vld [vmem:[%s2845 + $0x58] sm:%s2838]
                  %2870 = vst [vmem:[%s2846 + $0x2c] sm:%s2838] %v2869
                  %v2871 = vld [vmem:[%s2845 + $0x60] sm:%s2838]
                  %2872 = vst [vmem:[%s2846 + $0x30] sm:%s2838] %v2871
                  %v2873 = vld [vmem:[%s2845 + $0x68] sm:%s2838]
                  %2874 = vst [vmem:[%s2846 + $0x34] sm:%s2838] %v2873
                  %v2875 = vld [vmem:[%s2845 + $0x70] sm:%s2838]
                  %2876 = vst [vmem:[%s2846 + $0x38] sm:%s2838] %v2875
                  %v2877 = vld [vmem:[%s2845 + $0x78] sm:%s2838]
                  %2878 = vst [vmem:[%s2846 + $0x3c] sm:%s2838] %v2877
                  %v2879 = vld [vmem:[%s2845 + $0x80] sm:%s2838]
                  %2880 = vst [vmem:[%s2846 + $0x40] sm:%s2838] %v2879
                  %v2881 = vld [vmem:[%s2845 + $0x88] sm:%s2838]
                  %2882 = vst [vmem:[%s2846 + $0x44] sm:%s2838] %v2881
                  %v2883 = vld [vmem:[%s2845 + $0x90] sm:%s2838]
                  %2884 = vst [vmem:[%s2846 + $0x48] sm:%s2838] %v2883
                  %v2885 = vld [vmem:[%s2845 + $0x98] sm:%s2838]
                  %2886 = vst [vmem:[%s2846 + $0x4c] sm:%s2838] %v2885
                  %v2887 = vld [vmem:[%s2845 + $0xa0] sm:%s2838]
                  %2888 = vst [vmem:[%s2846 + $0x50] sm:%s2838] %v2887
                  %v2889 = vld [vmem:[%s2845 + $0xa8] sm:%s2838]
                  %2890 = vst [vmem:[%s2846 + $0x54] sm:%s2838] %v2889
                  %v2891 = vld [vmem:[%s2845 + $0xb0] sm:%s2838]
                  %2892 = vst [vmem:[%s2846 + $0x58] sm:%s2838] %v2891
                  %v2893 = vld [vmem:[%s2845 + $0xb8] sm:%s2838]
                  %2894 = vst [vmem:[%s2846 + $0x5c] sm:%s2838] %v2893
                  %v2895 = vld [vmem:[%s2845 + $0xc0] sm:%s2838]
                  %2896 = vst [vmem:[%s2846 + $0x60] sm:%s2838] %v2895
                  %v2897 = vld [vmem:[%s2845 + $0xc8] sm:%s2838]
                  %2898 = vst [vmem:[%s2846 + $0x64] sm:%s2838] %v2897
                  %v2899 = vld [vmem:[%s2845 + $0xd0] sm:%s2838]
                  %2900 = vst [vmem:[%s2846 + $0x68] sm:%s2838] %v2899
                  %v2901 = vld [vmem:[%s2845 + $0xd8] sm:%s2838]
                  %2902 = vst [vmem:[%s2846 + $0x6c] sm:%s2838] %v2901
                  %v2903 = vld [vmem:[%s2845 + $0xe0] sm:%s2838]
                  %2904 = vst [vmem:[%s2846 + $0x70] sm:%s2838] %v2903
                  %v2905 = vld [vmem:[%s2845 + $0xe8] sm:%s2838]
                  %2906 = vst [vmem:[%s2846 + $0x74] sm:%s2838] %v2905
                  %v2907 = vld [vmem:[%s2845 + $0xf0] sm:%s2838]
                  %2908 = vst [vmem:[%s2846 + $0x78] sm:%s2838] %v2907
                  %v2909 = vld [vmem:[%s2845 + $0xf8] sm:%s2838]
                  %2910 = vst [vmem:[%s2846 + $0x7c] sm:%s2838] %v2909
                  %v2911 = vld [vmem:[%s2845 + $0x100] sm:%s2838]
                  %2912 = vst [vmem:[%s2846 + $0x80] sm:%s2838] %v2911
                  %v2913 = vld [vmem:[%s2845 + $0x108] sm:%s2838]
                  %2914 = vst [vmem:[%s2846 + $0x84] sm:%s2838] %v2913
                  %v2915 = vld [vmem:[%s2845 + $0x110] sm:%s2838]
                  %2916 = vst [vmem:[%s2846 + $0x88] sm:%s2838] %v2915
                  %v2917 = vld [vmem:[%s2845 + $0x118] sm:%s2838]
                  %2918 = vst [vmem:[%s2846 + $0x8c] sm:%s2838] %v2917
                  %v2919 = vld [vmem:[%s2845 + $0x120] sm:%s2838]
                  %2920 = vst [vmem:[%s2846 + $0x90] sm:%s2838] %v2919
                  %v2921 = vld [vmem:[%s2845 + $0x128] sm:%s2838]
                  %2922 = vst [vmem:[%s2846 + $0x94] sm:%s2838] %v2921
                  %v2923 = vld [vmem:[%s2845 + $0x130] sm:%s2838]
                  %2924 = vst [vmem:[%s2846 + $0x98] sm:%s2838] %v2923
                  %v2925 = vld [vmem:[%s2845 + $0x138] sm:%s2838]
                  %2926 = vst [vmem:[%s2846 + $0x9c] sm:%s2838] %v2925
                  %v2927 = vld [vmem:[%s2845 + $0x140] sm:%s2838]
                  %2928 = vst [vmem:[%s2846 + $0xa0] sm:%s2838] %v2927
                  %v2929 = vld [vmem:[%s2845 + $0x148] sm:%s2838]
                  %2930 = vst [vmem:[%s2846 + $0xa4] sm:%s2838] %v2929
                  %v2931 = vld [vmem:[%s2845 + $0x150] sm:%s2838]
                  %2932 = vst [vmem:[%s2846 + $0xa8] sm:%s2838] %v2931
                  %v2933 = vld [vmem:[%s2845 + $0x158] sm:%s2838]
                  %2934 = vst [vmem:[%s2846 + $0xac] sm:%s2838] %v2933
                  %v2935 = vld [vmem:[%s2845 + $0x160] sm:%s2838]
                  %2936 = vst [vmem:[%s2846 + $0xb0] sm:%s2838] %v2935
                  %v2937 = vld [vmem:[%s2845 + $0x168] sm:%s2838]
                  %2938 = vst [vmem:[%s2846 + $0xb4] sm:%s2838] %v2937
                  %v2939 = vld [vmem:[%s2845 + $0x170] sm:%s2838]
                  %2940 = vst [vmem:[%s2846 + $0xb8] sm:%s2838] %v2939
                  %v2941 = vld [vmem:[%s2845 + $0x178] sm:%s2838]
                  %2942 = vst [vmem:[%s2846 + $0xbc] sm:%s2838] %v2941
                  %v2943 = vld [vmem:[%s2845 + $0x180] sm:%s2838]
                  %2944 = vst [vmem:[%s2846 + $0xc0] sm:%s2838] %v2943
                  %v2945 = vld [vmem:[%s2845 + $0x188] sm:%s2838]
                  %2946 = vst [vmem:[%s2846 + $0xc4] sm:%s2838] %v2945
                  %v2947 = vld [vmem:[%s2845 + $0x190] sm:%s2838]
                  %2948 = vst [vmem:[%s2846 + $0xc8] sm:%s2838] %v2947
                  %v2949 = vld [vmem:[%s2845 + $0x198] sm:%s2838]
                  %2950 = vst [vmem:[%s2846 + $0xcc] sm:%s2838] %v2949
                  %v2951 = vld [vmem:[%s2845 + $0x1a0] sm:%s2838]
                  %2952 = vst [vmem:[%s2846 + $0xd0] sm:%s2838] %v2951
                  %v2953 = vld [vmem:[%s2845 + $0x1a8] sm:%s2838]
                  %2954 = vst [vmem:[%s2846 + $0xd4] sm:%s2838] %v2953
                  %v2955 = vld [vmem:[%s2845 + $0x1b0] sm:%s2838]
                  %2956 = vst [vmem:[%s2846 + $0xd8] sm:%s2838] %v2955
                  %v2957 = vld [vmem:[%s2845 + $0x1b8] sm:%s2838]
                  %2958 = vst [vmem:[%s2846 + $0xdc] sm:%s2838] %v2957
                  %v2959 = vld [vmem:[%s2845 + $0x1c0] sm:%s2838]
                  %2960 = vst [vmem:[%s2846 + $0xe0] sm:%s2838] %v2959
                  %v2961 = vld [vmem:[%s2845 + $0x1c8] sm:%s2838]
                  %2962 = vst [vmem:[%s2846 + $0xe4] sm:%s2838] %v2961
                  %v2963 = vld [vmem:[%s2845 + $0x1d0] sm:%s2838]
                  %2964 = vst [vmem:[%s2846 + $0xe8] sm:%s2838] %v2963
                  %v2965 = vld [vmem:[%s2845 + $0x1d8] sm:%s2838]
                  %2966 = vst [vmem:[%s2846 + $0xec] sm:%s2838] %v2965
                  %v2967 = vld [vmem:[%s2845 + $0x1e0] sm:%s2838]
                  %2968 = vst [vmem:[%s2846 + $0xf0] sm:%s2838] %v2967
                  %v2969 = vld [vmem:[%s2845 + $0x1e8] sm:%s2838]
                  %2970 = vst [vmem:[%s2846 + $0xf4] sm:%s2838] %v2969
                  %v2971 = vld [vmem:[%s2845 + $0x1f0] sm:%s2838]
                  %2972 = vst [vmem:[%s2846 + $0xf8] sm:%s2838] %v2971
                  %v2973 = vld [vmem:[%s2845 + $0x1f8] sm:%s2838]
                  %2974 = vst [vmem:[%s2846 + $0xfc] sm:%s2838] %v2973
                  %v2975 = vld [vmem:[%s2845 + $0x200] sm:%s2838]
                  %2976 = vst [vmem:[%s2846 + $0x100] sm:%s2838] %v2975
                  %v2977 = vld [vmem:[%s2845 + $0x208] sm:%s2838]
                  %2978 = vst [vmem:[%s2846 + $0x104] sm:%s2838] %v2977
                  %v2979 = vld [vmem:[%s2845 + $0x210] sm:%s2838]
                  %2980 = vst [vmem:[%s2846 + $0x108] sm:%s2838] %v2979
                  %v2981 = vld [vmem:[%s2845 + $0x218] sm:%s2838]
                  %2982 = vst [vmem:[%s2846 + $0x10c] sm:%s2838] %v2981
                  %v2983 = vld [vmem:[%s2845 + $0x220] sm:%s2838]
                  %2984 = vst [vmem:[%s2846 + $0x110] sm:%s2838] %v2983
                  %v2985 = vld [vmem:[%s2845 + $0x228] sm:%s2838]
                  %2986 = vst [vmem:[%s2846 + $0x114] sm:%s2838] %v2985
                  %v2987 = vld [vmem:[%s2845 + $0x230] sm:%s2838]
                  %2988 = vst [vmem:[%s2846 + $0x118] sm:%s2838] %v2987
                  %v2989 = vld [vmem:[%s2845 + $0x238] sm:%s2838]
                  %2990 = vst [vmem:[%s2846 + $0x11c] sm:%s2838] %v2989
                  %v2991 = vld [vmem:[%s2845 + $0x240] sm:%s2838]
                  %2992 = vst [vmem:[%s2846 + $0x120] sm:%s2838] %v2991
                  %v2993 = vld [vmem:[%s2845 + $0x248] sm:%s2838]
                  %2994 = vst [vmem:[%s2846 + $0x124] sm:%s2838] %v2993
                  %v2995 = vld [vmem:[%s2845 + $0x250] sm:%s2838]
                  %2996 = vst [vmem:[%s2846 + $0x128] sm:%s2838] %v2995
                  %v2997 = vld [vmem:[%s2845 + $0x258] sm:%s2838]
                  %2998 = vst [vmem:[%s2846 + $0x12c] sm:%s2838] %v2997
                  %v2999 = vld [vmem:[%s2845 + $0x260] sm:%s2838]
                  %3000 = vst [vmem:[%s2846 + $0x130] sm:%s2838] %v2999
                  %v3001 = vld [vmem:[%s2845 + $0x268] sm:%s2838]
                  %3002 = vst [vmem:[%s2846 + $0x134] sm:%s2838] %v3001
                  %v3003 = vld [vmem:[%s2845 + $0x270] sm:%s2838]
                  %3004 = vst [vmem:[%s2846 + $0x138] sm:%s2838] %v3003
                  %v3005 = vld [vmem:[%s2845 + $0x278] sm:%s2838]
                  %3006 = vst [vmem:[%s2846 + $0x13c] sm:%s2838] %v3005
                  %v3007 = vld [vmem:[%s2845 + $0x280] sm:%s2838]
                  %3008 = vst [vmem:[%s2846 + $0x140] sm:%s2838] %v3007
                  %v3009 = vld [vmem:[%s2845 + $0x288] sm:%s2838]
                  %3010 = vst [vmem:[%s2846 + $0x144] sm:%s2838] %v3009
                  %v3011 = vld [vmem:[%s2845 + $0x290] sm:%s2838]
                  %3012 = vst [vmem:[%s2846 + $0x148] sm:%s2838] %v3011
                  %v3013 = vld [vmem:[%s2845 + $0x298] sm:%s2838]
                  %3014 = vst [vmem:[%s2846 + $0x14c] sm:%s2838] %v3013
                  %v3015 = vld [vmem:[%s2845 + $0x2a0] sm:%s2838]
                  %3016 = vst [vmem:[%s2846 + $0x150] sm:%s2838] %v3015
                  %v3017 = vld [vmem:[%s2845 + $0x2a8] sm:%s2838]
                  %3018 = vst [vmem:[%s2846 + $0x154] sm:%s2838] %v3017
                  %v3019 = vld [vmem:[%s2845 + $0x2b0] sm:%s2838]
                  %3020 = vst [vmem:[%s2846 + $0x158] sm:%s2838] %v3019
                  %v3021 = vld [vmem:[%s2845 + $0x2b8] sm:%s2838]
                  %3022 = vst [vmem:[%s2846 + $0x15c] sm:%s2838] %v3021
                  %v3023 = vld [vmem:[%s2845 + $0x2c0] sm:%s2838]
                  %3024 = vst [vmem:[%s2846 + $0x160] sm:%s2838] %v3023
                  %v3025 = vld [vmem:[%s2845 + $0x2c8] sm:%s2838]
                  %3026 = vst [vmem:[%s2846 + $0x164] sm:%s2838] %v3025
                  %v3027 = vld [vmem:[%s2845 + $0x2d0] sm:%s2838]
                  %3028 = vst [vmem:[%s2846 + $0x168] sm:%s2838] %v3027
                  %v3029 = vld [vmem:[%s2845 + $0x2d8] sm:%s2838]
                  %3030 = vst [vmem:[%s2846 + $0x16c] sm:%s2838] %v3029
                  %v3031 = vld [vmem:[%s2845 + $0x2e0] sm:%s2838]
                  %3032 = vst [vmem:[%s2846 + $0x170] sm:%s2838] %v3031
                  %v3033 = vld [vmem:[%s2845 + $0x2e8] sm:%s2838]
                  %3034 = vst [vmem:[%s2846 + $0x174] sm:%s2838] %v3033
                  %v3035 = vld [vmem:[%s2845 + $0x2f0] sm:%s2838]
                  %3036 = vst [vmem:[%s2846 + $0x178] sm:%s2838] %v3035
                  %v3037 = vld [vmem:[%s2845 + $0x2f8] sm:%s2838]
                  %3038 = vst [vmem:[%s2846 + $0x17c] sm:%s2838] %v3037
                  %v3039 = vld [vmem:[%s2845 + $0x300] sm:%s2838]
                  %3040 = vst [vmem:[%s2846 + $0x180] sm:%s2838] %v3039
                  %v3041 = vld [vmem:[%s2845 + $0x308] sm:%s2838]
                  %3042 = vst [vmem:[%s2846 + $0x184] sm:%s2838] %v3041
                  %v3043 = vld [vmem:[%s2845 + $0x310] sm:%s2838]
                  %3044 = vst [vmem:[%s2846 + $0x188] sm:%s2838] %v3043
                  %v3045 = vld [vmem:[%s2845 + $0x318] sm:%s2838]
                  %3046 = vst [vmem:[%s2846 + $0x18c] sm:%s2838] %v3045
                  %v3047 = vld [vmem:[%s2845 + $0x320] sm:%s2838]
                  %3048 = vst [vmem:[%s2846 + $0x190] sm:%s2838] %v3047
                  %v3049 = vld [vmem:[%s2845 + $0x328] sm:%s2838]
                  %3050 = vst [vmem:[%s2846 + $0x194] sm:%s2838] %v3049
                  %v3051 = vld [vmem:[%s2845 + $0x330] sm:%s2838]
                  %3052 = vst [vmem:[%s2846 + $0x198] sm:%s2838] %v3051
                  %v3053 = vld [vmem:[%s2845 + $0x338] sm:%s2838]
                  %3054 = vst [vmem:[%s2846 + $0x19c] sm:%s2838] %v3053
                  %v3055 = vld [vmem:[%s2845 + $0x340] sm:%s2838]
                  %3056 = vst [vmem:[%s2846 + $0x1a0] sm:%s2838] %v3055
                  %v3057 = vld [vmem:[%s2845 + $0x348] sm:%s2838]
                  %3058 = vst [vmem:[%s2846 + $0x1a4] sm:%s2838] %v3057
                  %v3059 = vld [vmem:[%s2845 + $0x350] sm:%s2838]
                  %3060 = vst [vmem:[%s2846 + $0x1a8] sm:%s2838] %v3059
                  %v3061 = vld [vmem:[%s2845 + $0x358] sm:%s2838]
                  %3062 = vst [vmem:[%s2846 + $0x1ac] sm:%s2838] %v3061
                  %v3063 = vld [vmem:[%s2845 + $0x360] sm:%s2838]
                  %3064 = vst [vmem:[%s2846 + $0x1b0] sm:%s2838] %v3063
                  %v3065 = vld [vmem:[%s2845 + $0x368] sm:%s2838]
                  %3066 = vst [vmem:[%s2846 + $0x1b4] sm:%s2838] %v3065
                  %v3067 = vld [vmem:[%s2845 + $0x370] sm:%s2838]
                  %3068 = vst [vmem:[%s2846 + $0x1b8] sm:%s2838] %v3067
                  %v3069 = vld [vmem:[%s2845 + $0x378] sm:%s2838]
                  %3070 = vst [vmem:[%s2846 + $0x1bc] sm:%s2838] %v3069
                  %v3071 = vld [vmem:[%s2845 + $0x380] sm:%s2838]
                  %3072 = vst [vmem:[%s2846 + $0x1c0] sm:%s2838] %v3071
                  %v3073 = vld [vmem:[%s2845 + $0x388] sm:%s2838]
                  %3074 = vst [vmem:[%s2846 + $0x1c4] sm:%s2838] %v3073
                  %v3075 = vld [vmem:[%s2845 + $0x390] sm:%s2838]
                  %3076 = vst [vmem:[%s2846 + $0x1c8] sm:%s2838] %v3075
                  %v3077 = vld [vmem:[%s2845 + $0x398] sm:%s2838]
                  %3078 = vst [vmem:[%s2846 + $0x1cc] sm:%s2838] %v3077
                  %v3079 = vld [vmem:[%s2845 + $0x3a0] sm:%s2838]
                  %3080 = vst [vmem:[%s2846 + $0x1d0] sm:%s2838] %v3079
                  %v3081 = vld [vmem:[%s2845 + $0x3a8] sm:%s2838]
                  %3082 = vst [vmem:[%s2846 + $0x1d4] sm:%s2838] %v3081
                  %v3083 = vld [vmem:[%s2845 + $0x3b0] sm:%s2838]
                  %3084 = vst [vmem:[%s2846 + $0x1d8] sm:%s2838] %v3083
                  %v3085 = vld [vmem:[%s2845 + $0x3b8] sm:%s2838]
                  %3086 = vst [vmem:[%s2846 + $0x1dc] sm:%s2838] %v3085
                  %v3087 = vld [vmem:[%s2845 + $0x3c0] sm:%s2838]
                  %3088 = vst [vmem:[%s2846 + $0x1e0] sm:%s2838] %v3087
                  %v3089 = vld [vmem:[%s2845 + $0x3c8] sm:%s2838]
                  %3090 = vst [vmem:[%s2846 + $0x1e4] sm:%s2838] %v3089
                  %v3091 = vld [vmem:[%s2845 + $0x3d0] sm:%s2838]
                  %3092 = vst [vmem:[%s2846 + $0x1e8] sm:%s2838] %v3091
                  %v3093 = vld [vmem:[%s2845 + $0x3d8] sm:%s2838]
                  %3094 = vst [vmem:[%s2846 + $0x1ec] sm:%s2838] %v3093
                  %v3095 = vld [vmem:[%s2845 + $0x3e0] sm:%s2838]
                  %3096 = vst [vmem:[%s2846 + $0x1f0] sm:%s2838] %v3095
                  %v3097 = vld [vmem:[%s2845 + $0x3e8] sm:%s2838]
                  %3098 = vst [vmem:[%s2846 + $0x1f4] sm:%s2838] %v3097
                  %v3099 = vld [vmem:[%s2845 + $0x3f0] sm:%s2838]
                  %3100 = vst [vmem:[%s2846 + $0x1f8] sm:%s2838] %v3099
                  %v3101 = vld [vmem:[%s2845 + $0x3f8] sm:%s2838]
                  %3102 = vst [vmem:[%s2846 + $0x1fc] sm:%s2838] %v3101
                  %v3103 = vld [vmem:[%s2845 + $0x400] sm:%s2838]
                  %3104 = vst [vmem:[%s2846 + $0x200] sm:%s2838] %v3103
                  %v3105 = vld [vmem:[%s2845 + $0x408] sm:%s2838]
                  %3106 = vst [vmem:[%s2846 + $0x204] sm:%s2838] %v3105
                  %v3107 = vld [vmem:[%s2845 + $0x410] sm:%s2838]
                  %3108 = vst [vmem:[%s2846 + $0x208] sm:%s2838] %v3107
                  %v3109 = vld [vmem:[%s2845 + $0x418] sm:%s2838]
                  %3110 = vst [vmem:[%s2846 + $0x20c] sm:%s2838] %v3109
                  %v3111 = vld [vmem:[%s2845 + $0x420] sm:%s2838]
                  %3112 = vst [vmem:[%s2846 + $0x210] sm:%s2838] %v3111
                  %v3113 = vld [vmem:[%s2845 + $0x428] sm:%s2838]
                  %3114 = vst [vmem:[%s2846 + $0x214] sm:%s2838] %v3113
                  %v3115 = vld [vmem:[%s2845 + $0x430] sm:%s2838]
                  %3116 = vst [vmem:[%s2846 + $0x218] sm:%s2838] %v3115
                  %v3117 = vld [vmem:[%s2845 + $0x438] sm:%s2838]
                  %3118 = vst [vmem:[%s2846 + $0x21c] sm:%s2838] %v3117
                  %v3119 = vld [vmem:[%s2845 + $0x440] sm:%s2838]
                  %3120 = vst [vmem:[%s2846 + $0x220] sm:%s2838] %v3119
                  %v3121 = vld [vmem:[%s2845 + $0x448] sm:%s2838]
                  %3122 = vst [vmem:[%s2846 + $0x224] sm:%s2838] %v3121
                  %v3123 = vld [vmem:[%s2845 + $0x450] sm:%s2838]
                  %3124 = vst [vmem:[%s2846 + $0x228] sm:%s2838] %v3123
                  %v3125 = vld [vmem:[%s2845 + $0x458] sm:%s2838]
                  %3126 = vst [vmem:[%s2846 + $0x22c] sm:%s2838] %v3125
                  %v3127 = vld [vmem:[%s2845 + $0x460] sm:%s2838]
                  %3128 = vst [vmem:[%s2846 + $0x230] sm:%s2838] %v3127
                  %v3129 = vld [vmem:[%s2845 + $0x468] sm:%s2838]
                  %3130 = vst [vmem:[%s2846 + $0x234] sm:%s2838] %v3129
                  %v3131 = vld [vmem:[%s2845 + $0x470] sm:%s2838]
                  %3132 = vst [vmem:[%s2846 + $0x238] sm:%s2838] %v3131
                  %v3133 = vld [vmem:[%s2845 + $0x478] sm:%s2838]
                  %3134 = vst [vmem:[%s2846 + $0x23c] sm:%s2838] %v3133
                  %v3135 = vld [vmem:[%s2845 + $0x480] sm:%s2838]
                  %3136 = vst [vmem:[%s2846 + $0x240] sm:%s2838] %v3135
                  %v3137 = vld [vmem:[%s2845 + $0x488] sm:%s2838]
                  %3138 = vst [vmem:[%s2846 + $0x244] sm:%s2838] %v3137
                  %v3139 = vld [vmem:[%s2845 + $0x490] sm:%s2838]
                  %3140 = vst [vmem:[%s2846 + $0x248] sm:%s2838] %v3139
                  %v3141 = vld [vmem:[%s2845 + $0x498] sm:%s2838]
                  %3142 = vst [vmem:[%s2846 + $0x24c] sm:%s2838] %v3141
                  %v3143 = vld [vmem:[%s2845 + $0x4a0] sm:%s2838]
                  %3144 = vst [vmem:[%s2846 + $0x250] sm:%s2838] %v3143
                  %v3145 = vld [vmem:[%s2845 + $0x4a8] sm:%s2838]
                  %3146 = vst [vmem:[%s2846 + $0x254] sm:%s2838] %v3145
                  %v3147 = vld [vmem:[%s2845 + $0x4b0] sm:%s2838]
                  %3148 = vst [vmem:[%s2846 + $0x258] sm:%s2838] %v3147
                  %v3149 = vld [vmem:[%s2845 + $0x4b8] sm:%s2838]
                  %3150 = vst [vmem:[%s2846 + $0x25c] sm:%s2838] %v3149
                  %v3151 = vld [vmem:[%s2845 + $0x4c0] sm:%s2838]
                  %3152 = vst [vmem:[%s2846 + $0x260] sm:%s2838] %v3151
                  %v3153 = vld [vmem:[%s2845 + $0x4c8] sm:%s2838]
                  %3154 = vst [vmem:[%s2846 + $0x264] sm:%s2838] %v3153
                  %v3155 = vld [vmem:[%s2845 + $0x4d0] sm:%s2838]
                  %3156 = vst [vmem:[%s2846 + $0x268] sm:%s2838] %v3155
                  %v3157 = vld [vmem:[%s2845 + $0x4d8] sm:%s2838]
                  %3158 = vst [vmem:[%s2846 + $0x26c] sm:%s2838] %v3157
                  %v3159 = vld [vmem:[%s2845 + $0x4e0] sm:%s2838]
                  %3160 = vst [vmem:[%s2846 + $0x270] sm:%s2838] %v3159
                  %v3161 = vld [vmem:[%s2845 + $0x4e8] sm:%s2838]
                  %3162 = vst [vmem:[%s2846 + $0x274] sm:%s2838] %v3161
                  %v3163 = vld [vmem:[%s2845 + $0x4f0] sm:%s2838]
                  %3164 = vst [vmem:[%s2846 + $0x278] sm:%s2838] %v3163
                  %v3165 = vld [vmem:[%s2845 + $0x4f8] sm:%s2838]
                  %3166 = vst [vmem:[%s2846 + $0x27c] sm:%s2838] %v3165
                  %v3167 = vld [vmem:[%s2845 + $0x500] sm:%s2838]
                  %3168 = vst [vmem:[%s2846 + $0x280] sm:%s2838] %v3167
                  %v3169 = vld [vmem:[%s2845 + $0x508] sm:%s2838]
                  %3170 = vst [vmem:[%s2846 + $0x284] sm:%s2838] %v3169
                  %v3171 = vld [vmem:[%s2845 + $0x510] sm:%s2838]
                  %3172 = vst [vmem:[%s2846 + $0x288] sm:%s2838] %v3171
                  %v3173 = vld [vmem:[%s2845 + $0x518] sm:%s2838]
                  %3174 = vst [vmem:[%s2846 + $0x28c] sm:%s2838] %v3173
                  %v3175 = vld [vmem:[%s2845 + $0x520] sm:%s2838]
                  %3176 = vst [vmem:[%s2846 + $0x290] sm:%s2838] %v3175
                  %v3177 = vld [vmem:[%s2845 + $0x528] sm:%s2838]
                  %3178 = vst [vmem:[%s2846 + $0x294] sm:%s2838] %v3177
                  %v3179 = vld [vmem:[%s2845 + $0x530] sm:%s2838]
                  %3180 = vst [vmem:[%s2846 + $0x298] sm:%s2838] %v3179
                  %v3181 = vld [vmem:[%s2845 + $0x538] sm:%s2838]
                  %3182 = vst [vmem:[%s2846 + $0x29c] sm:%s2838] %v3181
                  %v3183 = vld [vmem:[%s2845 + $0x540] sm:%s2838]
                  %3184 = vst [vmem:[%s2846 + $0x2a0] sm:%s2838] %v3183
                  %v3185 = vld [vmem:[%s2845 + $0x548] sm:%s2838]
                  %3186 = vst [vmem:[%s2846 + $0x2a4] sm:%s2838] %v3185
                  %v3187 = vld [vmem:[%s2845 + $0x550] sm:%s2838]
                  %3188 = vst [vmem:[%s2846 + $0x2a8] sm:%s2838] %v3187
                  %v3189 = vld [vmem:[%s2845 + $0x558] sm:%s2838]
                  %3190 = vst [vmem:[%s2846 + $0x2ac] sm:%s2838] %v3189
                  %v3191 = vld [vmem:[%s2845 + $0x560] sm:%s2838]
                  %3192 = vst [vmem:[%s2846 + $0x2b0] sm:%s2838] %v3191
                  %v3193 = vld [vmem:[%s2845 + $0x568] sm:%s2838]
                  %3194 = vst [vmem:[%s2846 + $0x2b4] sm:%s2838] %v3193
                  %v3195 = vld [vmem:[%s2845 + $0x570] sm:%s2838]
                  %3196 = vst [vmem:[%s2846 + $0x2b8] sm:%s2838] %v3195
                  %v3197 = vld [vmem:[%s2845 + $0x578] sm:%s2838]
                  %3198 = vst [vmem:[%s2846 + $0x2bc] sm:%s2838] %v3197
                  %v3199 = vld [vmem:[%s2845 + $0x580] sm:%s2838]
                  %3200 = vst [vmem:[%s2846 + $0x2c0] sm:%s2838] %v3199
                  %v3201 = vld [vmem:[%s2845 + $0x588] sm:%s2838]
                  %3202 = vst [vmem:[%s2846 + $0x2c4] sm:%s2838] %v3201
                  %v3203 = vld [vmem:[%s2845 + $0x590] sm:%s2838]
                  %3204 = vst [vmem:[%s2846 + $0x2c8] sm:%s2838] %v3203
                  %v3205 = vld [vmem:[%s2845 + $0x598] sm:%s2838]
                  %3206 = vst [vmem:[%s2846 + $0x2cc] sm:%s2838] %v3205
                  %v3207 = vld [vmem:[%s2845 + $0x5a0] sm:%s2838]
                  %3208 = vst [vmem:[%s2846 + $0x2d0] sm:%s2838] %v3207
                  %v3209 = vld [vmem:[%s2845 + $0x5a8] sm:%s2838]
                  %3210 = vst [vmem:[%s2846 + $0x2d4] sm:%s2838] %v3209
                  %v3211 = vld [vmem:[%s2845 + $0x5b0] sm:%s2838]
                  %3212 = vst [vmem:[%s2846 + $0x2d8] sm:%s2838] %v3211
                  %v3213 = vld [vmem:[%s2845 + $0x5b8] sm:%s2838]
                  %3214 = vst [vmem:[%s2846 + $0x2dc] sm:%s2838] %v3213
                  %v3215 = vld [vmem:[%s2845 + $0x5c0] sm:%s2838]
                  %3216 = vst [vmem:[%s2846 + $0x2e0] sm:%s2838] %v3215
                  %v3217 = vld [vmem:[%s2845 + $0x5c8] sm:%s2838]
                  %3218 = vst [vmem:[%s2846 + $0x2e4] sm:%s2838] %v3217
                  %v3219 = vld [vmem:[%s2845 + $0x5d0] sm:%s2838]
                  %3220 = vst [vmem:[%s2846 + $0x2e8] sm:%s2838] %v3219
                  %v3221 = vld [vmem:[%s2845 + $0x5d8] sm:%s2838]
                  %3222 = vst [vmem:[%s2846 + $0x2ec] sm:%s2838] %v3221
                  %v3223 = vld [vmem:[%s2845 + $0x5e0] sm:%s2838]
                  %3224 = vst [vmem:[%s2846 + $0x2f0] sm:%s2838] %v3223
                  %v3225 = vld [vmem:[%s2845 + $0x5e8] sm:%s2838]
                  %3226 = vst [vmem:[%s2846 + $0x2f4] sm:%s2838] %v3225
                  %v3227 = vld [vmem:[%s2845 + $0x5f0] sm:%s2838]
                  %3228 = vst [vmem:[%s2846 + $0x2f8] sm:%s2838] %v3227
                  %v3229 = vld [vmem:[%s2845 + $0x5f8] sm:%s2838]
                  %3230 = vst [vmem:[%s2846 + $0x2fc] sm:%s2838] %v3229
                  %v3231 = vld [vmem:[%s2845 + $0x600] sm:%s2838]
                  %3232 = vst [vmem:[%s2846 + $0x300] sm:%s2838] %v3231
                  %v3233 = vld [vmem:[%s2845 + $0x608] sm:%s2838]
                  %3234 = vst [vmem:[%s2846 + $0x304] sm:%s2838] %v3233
                  %v3235 = vld [vmem:[%s2845 + $0x610] sm:%s2838]
                  %3236 = vst [vmem:[%s2846 + $0x308] sm:%s2838] %v3235
                  %v3237 = vld [vmem:[%s2845 + $0x618] sm:%s2838]
                  %3238 = vst [vmem:[%s2846 + $0x30c] sm:%s2838] %v3237
                  %v3239 = vld [vmem:[%s2845 + $0x620] sm:%s2838]
                  %3240 = vst [vmem:[%s2846 + $0x310] sm:%s2838] %v3239
                  %v3241 = vld [vmem:[%s2845 + $0x628] sm:%s2838]
                  %3242 = vst [vmem:[%s2846 + $0x314] sm:%s2838] %v3241
                  %v3243 = vld [vmem:[%s2845 + $0x630] sm:%s2838]
                  %3244 = vst [vmem:[%s2846 + $0x318] sm:%s2838] %v3243
                  %v3245 = vld [vmem:[%s2845 + $0x638] sm:%s2838]
                  %3246 = vst [vmem:[%s2846 + $0x31c] sm:%s2838] %v3245
                  %v3247 = vld [vmem:[%s2845 + $0x640] sm:%s2838]
                  %3248 = vst [vmem:[%s2846 + $0x320] sm:%s2838] %v3247
                  %v3249 = vld [vmem:[%s2845 + $0x648] sm:%s2838]
                  %3250 = vst [vmem:[%s2846 + $0x324] sm:%s2838] %v3249
                  %v3251 = vld [vmem:[%s2845 + $0x650] sm:%s2838]
                  %3252 = vst [vmem:[%s2846 + $0x328] sm:%s2838] %v3251
                  %v3253 = vld [vmem:[%s2845 + $0x658] sm:%s2838]
                  %3254 = vst [vmem:[%s2846 + $0x32c] sm:%s2838] %v3253
                  %v3255 = vld [vmem:[%s2845 + $0x660] sm:%s2838]
                  %3256 = vst [vmem:[%s2846 + $0x330] sm:%s2838] %v3255
                  %v3257 = vld [vmem:[%s2845 + $0x668] sm:%s2838]
                  %3258 = vst [vmem:[%s2846 + $0x334] sm:%s2838] %v3257
                  %v3259 = vld [vmem:[%s2845 + $0x670] sm:%s2838]
                  %3260 = vst [vmem:[%s2846 + $0x338] sm:%s2838] %v3259
                  %v3261 = vld [vmem:[%s2845 + $0x678] sm:%s2838]
                  %3262 = vst [vmem:[%s2846 + $0x33c] sm:%s2838] %v3261
                  %v3263 = vld [vmem:[%s2845 + $0x680] sm:%s2838]
                  %3264 = vst [vmem:[%s2846 + $0x340] sm:%s2838] %v3263
                  %v3265 = vld [vmem:[%s2845 + $0x688] sm:%s2838]
                  %3266 = vst [vmem:[%s2846 + $0x344] sm:%s2838] %v3265
                  %v3267 = vld [vmem:[%s2845 + $0x690] sm:%s2838]
                  %3268 = vst [vmem:[%s2846 + $0x348] sm:%s2838] %v3267
                  %v3269 = vld [vmem:[%s2845 + $0x698] sm:%s2838]
                  %3270 = vst [vmem:[%s2846 + $0x34c] sm:%s2838] %v3269
                  %v3271 = vld [vmem:[%s2845 + $0x6a0] sm:%s2838]
                  %3272 = vst [vmem:[%s2846 + $0x350] sm:%s2838] %v3271
                  %v3273 = vld [vmem:[%s2845 + $0x6a8] sm:%s2838]
                  %3274 = vst [vmem:[%s2846 + $0x354] sm:%s2838] %v3273
                  %v3275 = vld [vmem:[%s2845 + $0x6b0] sm:%s2838]
                  %3276 = vst [vmem:[%s2846 + $0x358] sm:%s2838] %v3275
                  %v3277 = vld [vmem:[%s2845 + $0x6b8] sm:%s2838]
                  %3278 = vst [vmem:[%s2846 + $0x35c] sm:%s2838] %v3277
                  %v3279 = vld [vmem:[%s2845 + $0x6c0] sm:%s2838]
                  %3280 = vst [vmem:[%s2846 + $0x360] sm:%s2838] %v3279
                  %v3281 = vld [vmem:[%s2845 + $0x6c8] sm:%s2838]
                  %3282 = vst [vmem:[%s2846 + $0x364] sm:%s2838] %v3281
                  %v3283 = vld [vmem:[%s2845 + $0x6d0] sm:%s2838]
                  %3284 = vst [vmem:[%s2846 + $0x368] sm:%s2838] %v3283
                  %v3285 = vld [vmem:[%s2845 + $0x6d8] sm:%s2838]
                  %3286 = vst [vmem:[%s2846 + $0x36c] sm:%s2838] %v3285
                  %v3287 = vld [vmem:[%s2845 + $0x6e0] sm:%s2838]
                  %3288 = vst [vmem:[%s2846 + $0x370] sm:%s2838] %v3287
                  %v3289 = vld [vmem:[%s2845 + $0x6e8] sm:%s2838]
                  %3290 = vst [vmem:[%s2846 + $0x374] sm:%s2838] %v3289
                  %v3291 = vld [vmem:[%s2845 + $0x6f0] sm:%s2838]
                  %3292 = vst [vmem:[%s2846 + $0x378] sm:%s2838] %v3291
                  %v3293 = vld [vmem:[%s2845 + $0x6f8] sm:%s2838]
                  %3294 = vst [vmem:[%s2846 + $0x37c] sm:%s2838] %v3293
                  %v3295 = vld [vmem:[%s2845 + $0x700] sm:%s2838]
                  %3296 = vst [vmem:[%s2846 + $0x380] sm:%s2838] %v3295
                  %v3297 = vld [vmem:[%s2845 + $0x708] sm:%s2838]
                  %3298 = vst [vmem:[%s2846 + $0x384] sm:%s2838] %v3297
                  %v3299 = vld [vmem:[%s2845 + $0x710] sm:%s2838]
                  %3300 = vst [vmem:[%s2846 + $0x388] sm:%s2838] %v3299
                  %v3301 = vld [vmem:[%s2845 + $0x718] sm:%s2838]
                  %3302 = vst [vmem:[%s2846 + $0x38c] sm:%s2838] %v3301
                  %v3303 = vld [vmem:[%s2845 + $0x720] sm:%s2838]
                  %3304 = vst [vmem:[%s2846 + $0x390] sm:%s2838] %v3303
                  %v3305 = vld [vmem:[%s2845 + $0x728] sm:%s2838]
                  %3306 = vst [vmem:[%s2846 + $0x394] sm:%s2838] %v3305
                  %v3307 = vld [vmem:[%s2845 + $0x730] sm:%s2838]
                  %3308 = vst [vmem:[%s2846 + $0x398] sm:%s2838] %v3307
                  %v3309 = vld [vmem:[%s2845 + $0x738] sm:%s2838]
                  %3310 = vst [vmem:[%s2846 + $0x39c] sm:%s2838] %v3309
                  %v3311 = vld [vmem:[%s2845 + $0x740] sm:%s2838]
                  %3312 = vst [vmem:[%s2846 + $0x3a0] sm:%s2838] %v3311
                  %v3313 = vld [vmem:[%s2845 + $0x748] sm:%s2838]
                  %3314 = vst [vmem:[%s2846 + $0x3a4] sm:%s2838] %v3313
                  %v3315 = vld [vmem:[%s2845 + $0x750] sm:%s2838]
                  %3316 = vst [vmem:[%s2846 + $0x3a8] sm:%s2838] %v3315
                  %v3317 = vld [vmem:[%s2845 + $0x758] sm:%s2838]
                  %3318 = vst [vmem:[%s2846 + $0x3ac] sm:%s2838] %v3317
                  %v3319 = vld [vmem:[%s2845 + $0x760] sm:%s2838]
                  %3320 = vst [vmem:[%s2846 + $0x3b0] sm:%s2838] %v3319
                  %v3321 = vld [vmem:[%s2845 + $0x768] sm:%s2838]
                  %3322 = vst [vmem:[%s2846 + $0x3b4] sm:%s2838] %v3321
                  %v3323 = vld [vmem:[%s2845 + $0x770] sm:%s2838]
                  %3324 = vst [vmem:[%s2846 + $0x3b8] sm:%s2838] %v3323
                  %v3325 = vld [vmem:[%s2845 + $0x778] sm:%s2838]
                  %3326 = vst [vmem:[%s2846 + $0x3bc] sm:%s2838] %v3325
                  %v3327 = vld [vmem:[%s2845 + $0x780] sm:%s2838]
                  %3328 = vst [vmem:[%s2846 + $0x3c0] sm:%s2838] %v3327
                  %v3329 = vld [vmem:[%s2845 + $0x788] sm:%s2838]
                  %3330 = vst [vmem:[%s2846 + $0x3c4] sm:%s2838] %v3329
                  %v3331 = vld [vmem:[%s2845 + $0x790] sm:%s2838]
                  %3332 = vst [vmem:[%s2846 + $0x3c8] sm:%s2838] %v3331
                  %v3333 = vld [vmem:[%s2845 + $0x798] sm:%s2838]
                  %3334 = vst [vmem:[%s2846 + $0x3cc] sm:%s2838] %v3333
                  %v3335 = vld [vmem:[%s2845 + $0x7a0] sm:%s2838]
                  %3336 = vst [vmem:[%s2846 + $0x3d0] sm:%s2838] %v3335
                  %v3337 = vld [vmem:[%s2845 + $0x7a8] sm:%s2838]
                  %3338 = vst [vmem:[%s2846 + $0x3d4] sm:%s2838] %v3337
                  %v3339 = vld [vmem:[%s2845 + $0x7b0] sm:%s2838]
                  %3340 = vst [vmem:[%s2846 + $0x3d8] sm:%s2838] %v3339
                  %v3341 = vld [vmem:[%s2845 + $0x7b8] sm:%s2838]
                  %3342 = vst [vmem:[%s2846 + $0x3dc] sm:%s2838] %v3341
                  %v3343 = vld [vmem:[%s2845 + $0x7c0] sm:%s2838]
                  %3344 = vst [vmem:[%s2846 + $0x3e0] sm:%s2838] %v3343
                  %v3345 = vld [vmem:[%s2845 + $0x7c8] sm:%s2838]
                  %3346 = vst [vmem:[%s2846 + $0x3e4] sm:%s2838] %v3345
                  %v3347 = vld [vmem:[%s2845 + $0x7d0] sm:%s2838]
                  %3348 = vst [vmem:[%s2846 + $0x3e8] sm:%s2838] %v3347
                  %v3349 = vld [vmem:[%s2845 + $0x7d8] sm:%s2838]
                  %3350 = vst [vmem:[%s2846 + $0x3ec] sm:%s2838] %v3349
                  %v3351 = vld [vmem:[%s2845 + $0x7e0] sm:%s2838]
                  %3352 = vst [vmem:[%s2846 + $0x3f0] sm:%s2838] %v3351
                  %v3353 = vld [vmem:[%s2845 + $0x7e8] sm:%s2838]
                  %3354 = vst [vmem:[%s2846 + $0x3f4] sm:%s2838] %v3353
                  %v3355 = vld [vmem:[%s2845 + $0x7f0] sm:%s2838]
                  %3356 = vst [vmem:[%s2846 + $0x3f8] sm:%s2838] %v3355
                  %v3357 = vld [vmem:[%s2845 + $0x7f8] sm:%s2838]
                  %3358 = vst [vmem:[%s2846 + $0x3fc] sm:%s2838] %v3357
                  %v3359 = vld [vmem:[%s2845 + $0x800] sm:%s2838]
                  %3360 = vst [vmem:[%s2846 + $0x400] sm:%s2838] %v3359
                  %v3361 = vld [vmem:[%s2845 + $0x808] sm:%s2838]
                  %3362 = vst [vmem:[%s2846 + $0x404] sm:%s2838] %v3361
                  %v3363 = vld [vmem:[%s2845 + $0x810] sm:%s2838]
                  %3364 = vst [vmem:[%s2846 + $0x408] sm:%s2838] %v3363
                  %v3365 = vld [vmem:[%s2845 + $0x818] sm:%s2838]
                  %3366 = vst [vmem:[%s2846 + $0x40c] sm:%s2838] %v3365
                  %v3367 = vld [vmem:[%s2845 + $0x820] sm:%s2838]
                  %3368 = vst [vmem:[%s2846 + $0x410] sm:%s2838] %v3367
                  %v3369 = vld [vmem:[%s2845 + $0x828] sm:%s2838]
                  %3370 = vst [vmem:[%s2846 + $0x414] sm:%s2838] %v3369
                  %v3371 = vld [vmem:[%s2845 + $0x830] sm:%s2838]
                  %3372 = vst [vmem:[%s2846 + $0x418] sm:%s2838] %v3371
                  %v3373 = vld [vmem:[%s2845 + $0x838] sm:%s2838]
                  %3374 = vst [vmem:[%s2846 + $0x41c] sm:%s2838] %v3373
                  %v3375 = vld [vmem:[%s2845 + $0x840] sm:%s2838]
                  %3376 = vst [vmem:[%s2846 + $0x420] sm:%s2838] %v3375
                  %v3377 = vld [vmem:[%s2845 + $0x848] sm:%s2838]
                  %3378 = vst [vmem:[%s2846 + $0x424] sm:%s2838] %v3377
                  %v3379 = vld [vmem:[%s2845 + $0x850] sm:%s2838]
                  %3380 = vst [vmem:[%s2846 + $0x428] sm:%s2838] %v3379
                  %v3381 = vld [vmem:[%s2845 + $0x858] sm:%s2838]
                  %3382 = vst [vmem:[%s2846 + $0x42c] sm:%s2838] %v3381
                  %v3383 = vld [vmem:[%s2845 + $0x860] sm:%s2838]
                  %3384 = vst [vmem:[%s2846 + $0x430] sm:%s2838] %v3383
                  %v3385 = vld [vmem:[%s2845 + $0x868] sm:%s2838]
                  %3386 = vst [vmem:[%s2846 + $0x434] sm:%s2838] %v3385
                  %v3387 = vld [vmem:[%s2845 + $0x870] sm:%s2838]
                  %3388 = vst [vmem:[%s2846 + $0x438] sm:%s2838] %v3387
                  %v3389 = vld [vmem:[%s2845 + $0x878] sm:%s2838]
                  %3390 = vst [vmem:[%s2846 + $0x43c] sm:%s2838] %v3389
                  %v3391 = vld [vmem:[%s2845 + $0x880] sm:%s2838]
                  %3392 = vst [vmem:[%s2846 + $0x440] sm:%s2838] %v3391
                  %v3393 = vld [vmem:[%s2845 + $0x888] sm:%s2838]
                  %3394 = vst [vmem:[%s2846 + $0x444] sm:%s2838] %v3393
                  %v3395 = vld [vmem:[%s2845 + $0x890] sm:%s2838]
                  %3396 = vst [vmem:[%s2846 + $0x448] sm:%s2838] %v3395
                  %v3397 = vld [vmem:[%s2845 + $0x898] sm:%s2838]
                  %3398 = vst [vmem:[%s2846 + $0x44c] sm:%s2838] %v3397
                  %v3399 = vld [vmem:[%s2845 + $0x8a0] sm:%s2838]
                  %3400 = vst [vmem:[%s2846 + $0x450] sm:%s2838] %v3399
                  %v3401 = vld [vmem:[%s2845 + $0x8a8] sm:%s2838]
                  %3402 = vst [vmem:[%s2846 + $0x454] sm:%s2838] %v3401
                  %v3403 = vld [vmem:[%s2845 + $0x8b0] sm:%s2838]
                  %3404 = vst [vmem:[%s2846 + $0x458] sm:%s2838] %v3403
                  %v3405 = vld [vmem:[%s2845 + $0x8b8] sm:%s2838]
                  %3406 = vst [vmem:[%s2846 + $0x45c] sm:%s2838] %v3405
                  %v3407 = vld [vmem:[%s2845 + $0x8c0] sm:%s2838]
                  %3408 = vst [vmem:[%s2846 + $0x460] sm:%s2838] %v3407
                  %v3409 = vld [vmem:[%s2845 + $0x8c8] sm:%s2838]
                  %3410 = vst [vmem:[%s2846 + $0x464] sm:%s2838] %v3409
                  %v3411 = vld [vmem:[%s2845 + $0x8d0] sm:%s2838]
                  %3412 = vst [vmem:[%s2846 + $0x468] sm:%s2838] %v3411
                  %v3413 = vld [vmem:[%s2845 + $0x8d8] sm:%s2838]
                  %3414 = vst [vmem:[%s2846 + $0x46c] sm:%s2838] %v3413
                  %v3415 = vld [vmem:[%s2845 + $0x8e0] sm:%s2838]
                  %3416 = vst [vmem:[%s2846 + $0x470] sm:%s2838] %v3415
                  %v3417 = vld [vmem:[%s2845 + $0x8e8] sm:%s2838]
                  %3418 = vst [vmem:[%s2846 + $0x474] sm:%s2838] %v3417
                  %v3419 = vld [vmem:[%s2845 + $0x8f0] sm:%s2838]
                  %3420 = vst [vmem:[%s2846 + $0x478] sm:%s2838] %v3419
                  %v3421 = vld [vmem:[%s2845 + $0x8f8] sm:%s2838]
                  %3422 = vst [vmem:[%s2846 + $0x47c] sm:%s2838] %v3421
                  %v3423 = vld [vmem:[%s2845 + $0x900] sm:%s2838]
                  %3424 = vst [vmem:[%s2846 + $0x480] sm:%s2838] %v3423
                  %v3425 = vld [vmem:[%s2845 + $0x908] sm:%s2838]
                  %3426 = vst [vmem:[%s2846 + $0x484] sm:%s2838] %v3425
                  %v3427 = vld [vmem:[%s2845 + $0x910] sm:%s2838]
                  %3428 = vst [vmem:[%s2846 + $0x488] sm:%s2838] %v3427
                  %v3429 = vld [vmem:[%s2845 + $0x918] sm:%s2838]
                  %3430 = vst [vmem:[%s2846 + $0x48c] sm:%s2838] %v3429
                  %v3431 = vld [vmem:[%s2845 + $0x920] sm:%s2838]
                  %3432 = vst [vmem:[%s2846 + $0x490] sm:%s2838] %v3431
                  %v3433 = vld [vmem:[%s2845 + $0x928] sm:%s2838]
                  %3434 = vst [vmem:[%s2846 + $0x494] sm:%s2838] %v3433
                  %v3435 = vld [vmem:[%s2845 + $0x930] sm:%s2838]
                  %3436 = vst [vmem:[%s2846 + $0x498] sm:%s2838] %v3435
                  %v3437 = vld [vmem:[%s2845 + $0x938] sm:%s2838]
                  %3438 = vst [vmem:[%s2846 + $0x49c] sm:%s2838] %v3437
                  %v3439 = vld [vmem:[%s2845 + $0x940] sm:%s2838]
                  %3440 = vst [vmem:[%s2846 + $0x4a0] sm:%s2838] %v3439
                  %v3441 = vld [vmem:[%s2845 + $0x948] sm:%s2838]
                  %3442 = vst [vmem:[%s2846 + $0x4a4] sm:%s2838] %v3441
                  %v3443 = vld [vmem:[%s2845 + $0x950] sm:%s2838]
                  %3444 = vst [vmem:[%s2846 + $0x4a8] sm:%s2838] %v3443
                  %v3445 = vld [vmem:[%s2845 + $0x958] sm:%s2838]
                  %3446 = vst [vmem:[%s2846 + $0x4ac] sm:%s2838] %v3445
                  %v3447 = vld [vmem:[%s2845 + $0x960] sm:%s2838]
                  %3448 = vst [vmem:[%s2846 + $0x4b0] sm:%s2838] %v3447
                  %v3449 = vld [vmem:[%s2845 + $0x968] sm:%s2838]
                  %3450 = vst [vmem:[%s2846 + $0x4b4] sm:%s2838] %v3449
                  %v3451 = vld [vmem:[%s2845 + $0x970] sm:%s2838]
                  %3452 = vst [vmem:[%s2846 + $0x4b8] sm:%s2838] %v3451
                  %v3453 = vld [vmem:[%s2845 + $0x978] sm:%s2838]
                  %3454 = vst [vmem:[%s2846 + $0x4bc] sm:%s2838] %v3453
                  %v3455 = vld [vmem:[%s2845 + $0x980] sm:%s2838]
                  %3456 = vst [vmem:[%s2846 + $0x4c0] sm:%s2838] %v3455
                  %v3457 = vld [vmem:[%s2845 + $0x988] sm:%s2838]
                  %3458 = vst [vmem:[%s2846 + $0x4c4] sm:%s2838] %v3457
                  %v3459 = vld [vmem:[%s2845 + $0x990] sm:%s2838]
                  %3460 = vst [vmem:[%s2846 + $0x4c8] sm:%s2838] %v3459
                  %v3461 = vld [vmem:[%s2845 + $0x998] sm:%s2838]
                  %3462 = vst [vmem:[%s2846 + $0x4cc] sm:%s2838] %v3461
                  %v3463 = vld [vmem:[%s2845 + $0x9a0] sm:%s2838]
                  %3464 = vst [vmem:[%s2846 + $0x4d0] sm:%s2838] %v3463
                  %v3465 = vld [vmem:[%s2845 + $0x9a8] sm:%s2838]
                  %3466 = vst [vmem:[%s2846 + $0x4d4] sm:%s2838] %v3465
                  %v3467 = vld [vmem:[%s2845 + $0x9b0] sm:%s2838]
                  %3468 = vst [vmem:[%s2846 + $0x4d8] sm:%s2838] %v3467
                  %v3469 = vld [vmem:[%s2845 + $0x9b8] sm:%s2838]
                  %3470 = vst [vmem:[%s2846 + $0x4dc] sm:%s2838] %v3469
                  %v3471 = vld [vmem:[%s2845 + $0x9c0] sm:%s2838]
                  %3472 = vst [vmem:[%s2846 + $0x4e0] sm:%s2838] %v3471
                  %v3473 = vld [vmem:[%s2845 + $0x9c8] sm:%s2838]
                  %3474 = vst [vmem:[%s2846 + $0x4e4] sm:%s2838] %v3473
                  %v3475 = vld [vmem:[%s2845 + $0x9d0] sm:%s2838]
                  %3476 = vst [vmem:[%s2846 + $0x4e8] sm:%s2838] %v3475
                  %v3477 = vld [vmem:[%s2845 + $0x9d8] sm:%s2838]
                  %3478 = vst [vmem:[%s2846 + $0x4ec] sm:%s2838] %v3477
                  %v3479 = vld [vmem:[%s2845 + $0x9e0] sm:%s2838]
                  %3480 = vst [vmem:[%s2846 + $0x4f0] sm:%s2838] %v3479
                  %v3481 = vld [vmem:[%s2845 + $0x9e8] sm:%s2838]
                  %3482 = vst [vmem:[%s2846 + $0x4f4] sm:%s2838] %v3481
                  %v3483 = vld [vmem:[%s2845 + $0x9f0] sm:%s2838]
                  %3484 = vst [vmem:[%s2846 + $0x4f8] sm:%s2838] %v3483
                  %v3485 = vld [vmem:[%s2845 + $0x9f8] sm:%s2838]
                  %3486 = vst [vmem:[%s2846 + $0x4fc] sm:%s2838] %v3485
                  %v3487 = vld [vmem:[%s2845 + $0xa00] sm:%s2838]
                  %3488 = vst [vmem:[%s2846 + $0x500] sm:%s2838] %v3487
                  %v3489 = vld [vmem:[%s2845 + $0xa08] sm:%s2838]
                  %3490 = vst [vmem:[%s2846 + $0x504] sm:%s2838] %v3489
                  %v3491 = vld [vmem:[%s2845 + $0xa10] sm:%s2838]
                  %3492 = vst [vmem:[%s2846 + $0x508] sm:%s2838] %v3491
                  %v3493 = vld [vmem:[%s2845 + $0xa18] sm:%s2838]
                  %3494 = vst [vmem:[%s2846 + $0x50c] sm:%s2838] %v3493
                  %v3495 = vld [vmem:[%s2845 + $0xa20] sm:%s2838]
                  %3496 = vst [vmem:[%s2846 + $0x510] sm:%s2838] %v3495
                  %v3497 = vld [vmem:[%s2845 + $0xa28] sm:%s2838]
                  %3498 = vst [vmem:[%s2846 + $0x514] sm:%s2838] %v3497
                  %v3499 = vld [vmem:[%s2845 + $0xa30] sm:%s2838]
                  %3500 = vst [vmem:[%s2846 + $0x518] sm:%s2838] %v3499
                  %v3501 = vld [vmem:[%s2845 + $0xa38] sm:%s2838]
                  %3502 = vst [vmem:[%s2846 + $0x51c] sm:%s2838] %v3501
                  %v3503 = vld [vmem:[%s2845 + $0xa40] sm:%s2838]
                  %3504 = vst [vmem:[%s2846 + $0x520] sm:%s2838] %v3503
                  %v3505 = vld [vmem:[%s2845 + $0xa48] sm:%s2838]
                  %3506 = vst [vmem:[%s2846 + $0x524] sm:%s2838] %v3505
                  %v3507 = vld [vmem:[%s2845 + $0xa50] sm:%s2838]
                  %3508 = vst [vmem:[%s2846 + $0x528] sm:%s2838] %v3507
                  %v3509 = vld [vmem:[%s2845 + $0xa58] sm:%s2838]
                  %3510 = vst [vmem:[%s2846 + $0x52c] sm:%s2838] %v3509
                  %v3511 = vld [vmem:[%s2845 + $0xa60] sm:%s2838]
                  %3512 = vst [vmem:[%s2846 + $0x530] sm:%s2838] %v3511
                  %v3513 = vld [vmem:[%s2845 + $0xa68] sm:%s2838]
                  %3514 = vst [vmem:[%s2846 + $0x534] sm:%s2838] %v3513
                  %v3515 = vld [vmem:[%s2845 + $0xa70] sm:%s2838]
                  %3516 = vst [vmem:[%s2846 + $0x538] sm:%s2838] %v3515
                  %v3517 = vld [vmem:[%s2845 + $0xa78] sm:%s2838]
                  %3518 = vst [vmem:[%s2846 + $0x53c] sm:%s2838] %v3517
                  %v3519 = vld [vmem:[%s2845 + $0xa80] sm:%s2838]
                  %3520 = vst [vmem:[%s2846 + $0x540] sm:%s2838] %v3519
                  %v3521 = vld [vmem:[%s2845 + $0xa88] sm:%s2838]
                  %3522 = vst [vmem:[%s2846 + $0x544] sm:%s2838] %v3521
                  %v3523 = vld [vmem:[%s2845 + $0xa90] sm:%s2838]
                  %3524 = vst [vmem:[%s2846 + $0x548] sm:%s2838] %v3523
                  %v3525 = vld [vmem:[%s2845 + $0xa98] sm:%s2838]
                  %3526 = vst [vmem:[%s2846 + $0x54c] sm:%s2838] %v3525
                  %v3527 = vld [vmem:[%s2845 + $0xaa0] sm:%s2838]
                  %3528 = vst [vmem:[%s2846 + $0x550] sm:%s2838] %v3527
                  %v3529 = vld [vmem:[%s2845 + $0xaa8] sm:%s2838]
                  %3530 = vst [vmem:[%s2846 + $0x554] sm:%s2838] %v3529
                  %v3531 = vld [vmem:[%s2845 + $0xab0] sm:%s2838]
                  %3532 = vst [vmem:[%s2846 + $0x558] sm:%s2838] %v3531
                  %v3533 = vld [vmem:[%s2845 + $0xab8] sm:%s2838]
                  %3534 = vst [vmem:[%s2846 + $0x55c] sm:%s2838] %v3533
                  %v3535 = vld [vmem:[%s2845 + $0xac0] sm:%s2838]
                  %3536 = vst [vmem:[%s2846 + $0x560] sm:%s2838] %v3535
                  %v3537 = vld [vmem:[%s2845 + $0xac8] sm:%s2838]
                  %3538 = vst [vmem:[%s2846 + $0x564] sm:%s2838] %v3537
                  %v3539 = vld [vmem:[%s2845 + $0xad0] sm:%s2838]
                  %3540 = vst [vmem:[%s2846 + $0x568] sm:%s2838] %v3539
                  %v3541 = vld [vmem:[%s2845 + $0xad8] sm:%s2838]
                  %3542 = vst [vmem:[%s2846 + $0x56c] sm:%s2838] %v3541
                  %v3543 = vld [vmem:[%s2845 + $0xae0] sm:%s2838]
                  %3544 = vst [vmem:[%s2846 + $0x570] sm:%s2838] %v3543
                  %v3545 = vld [vmem:[%s2845 + $0xae8] sm:%s2838]
                  %3546 = vst [vmem:[%s2846 + $0x574] sm:%s2838] %v3545
                  %v3547 = vld [vmem:[%s2845 + $0xaf0] sm:%s2838]
                  %3548 = vst [vmem:[%s2846 + $0x578] sm:%s2838] %v3547
                  %v3549 = vld [vmem:[%s2845 + $0xaf8] sm:%s2838]
                  %3550 = vst [vmem:[%s2846 + $0x57c] sm:%s2838] %v3549
                  %v3551 = vld [vmem:[%s2845 + $0xb00] sm:%s2838]
                  %3552 = vst [vmem:[%s2846 + $0x580] sm:%s2838] %v3551
                  %v3553 = vld [vmem:[%s2845 + $0xb08] sm:%s2838]
                  %3554 = vst [vmem:[%s2846 + $0x584] sm:%s2838] %v3553
                  %v3555 = vld [vmem:[%s2845 + $0xb10] sm:%s2838]
                  %3556 = vst [vmem:[%s2846 + $0x588] sm:%s2838] %v3555
                  %v3557 = vld [vmem:[%s2845 + $0xb18] sm:%s2838]
                  %3558 = vst [vmem:[%s2846 + $0x58c] sm:%s2838] %v3557
                  %v3559 = vld [vmem:[%s2845 + $0xb20] sm:%s2838]
                  %3560 = vst [vmem:[%s2846 + $0x590] sm:%s2838] %v3559
                  %v3561 = vld [vmem:[%s2845 + $0xb28] sm:%s2838]
                  %3562 = vst [vmem:[%s2846 + $0x594] sm:%s2838] %v3561
                  %v3563 = vld [vmem:[%s2845 + $0xb30] sm:%s2838]
                  %3564 = vst [vmem:[%s2846 + $0x598] sm:%s2838] %v3563
                  %v3565 = vld [vmem:[%s2845 + $0xb38] sm:%s2838]
                  %3566 = vst [vmem:[%s2846 + $0x59c] sm:%s2838] %v3565
                  %v3567 = vld [vmem:[%s2845 + $0xb40] sm:%s2838]
                  %3568 = vst [vmem:[%s2846 + $0x5a0] sm:%s2838] %v3567
                  %v3569 = vld [vmem:[%s2845 + $0xb48] sm:%s2838]
                  %3570 = vst [vmem:[%s2846 + $0x5a4] sm:%s2838] %v3569
                  %v3571 = vld [vmem:[%s2845 + $0xb50] sm:%s2838]
                  %3572 = vst [vmem:[%s2846 + $0x5a8] sm:%s2838] %v3571
                  %v3573 = vld [vmem:[%s2845 + $0xb58] sm:%s2838]
                  %3574 = vst [vmem:[%s2846 + $0x5ac] sm:%s2838] %v3573
                  %v3575 = vld [vmem:[%s2845 + $0xb60] sm:%s2838]
                  %3576 = vst [vmem:[%s2846 + $0x5b0] sm:%s2838] %v3575
                  %v3577 = vld [vmem:[%s2845 + $0xb68] sm:%s2838]
                  %3578 = vst [vmem:[%s2846 + $0x5b4] sm:%s2838] %v3577
                  %v3579 = vld [vmem:[%s2845 + $0xb70] sm:%s2838]
                  %3580 = vst [vmem:[%s2846 + $0x5b8] sm:%s2838] %v3579
                  %v3581 = vld [vmem:[%s2845 + $0xb78] sm:%s2838]
                  %3582 = vst [vmem:[%s2846 + $0x5bc] sm:%s2838] %v3581
                  %v3583 = vld [vmem:[%s2845 + $0xb80] sm:%s2838]
                  %3584 = vst [vmem:[%s2846 + $0x5c0] sm:%s2838] %v3583
                  %v3585 = vld [vmem:[%s2845 + $0xb88] sm:%s2838]
                  %3586 = vst [vmem:[%s2846 + $0x5c4] sm:%s2838] %v3585
                  %v3587 = vld [vmem:[%s2845 + $0xb90] sm:%s2838]
                  %3588 = vst [vmem:[%s2846 + $0x5c8] sm:%s2838] %v3587
                  %v3589 = vld [vmem:[%s2845 + $0xb98] sm:%s2838]
                  %3590 = vst [vmem:[%s2846 + $0x5cc] sm:%s2838] %v3589
                  %v3591 = vld [vmem:[%s2845 + $0xba0] sm:%s2838]
                  %3592 = vst [vmem:[%s2846 + $0x5d0] sm:%s2838] %v3591
                  %v3593 = vld [vmem:[%s2845 + $0xba8] sm:%s2838]
                  %3594 = vst [vmem:[%s2846 + $0x5d4] sm:%s2838] %v3593
                  %v3595 = vld [vmem:[%s2845 + $0xbb0] sm:%s2838]
                  %3596 = vst [vmem:[%s2846 + $0x5d8] sm:%s2838] %v3595
                  %v3597 = vld [vmem:[%s2845 + $0xbb8] sm:%s2838]
                  %3598 = vst [vmem:[%s2846 + $0x5dc] sm:%s2838] %v3597
                  %v3599 = vld [vmem:[%s2845 + $0xbc0] sm:%s2838]
                  %3600 = vst [vmem:[%s2846 + $0x5e0] sm:%s2838] %v3599
                  %v3601 = vld [vmem:[%s2845 + $0xbc8] sm:%s2838]
                  %3602 = vst [vmem:[%s2846 + $0x5e4] sm:%s2838] %v3601
                  %v3603 = vld [vmem:[%s2845 + $0xbd0] sm:%s2838]
                  %3604 = vst [vmem:[%s2846 + $0x5e8] sm:%s2838] %v3603
                  %v3605 = vld [vmem:[%s2845 + $0xbd8] sm:%s2838]
                  %3606 = vst [vmem:[%s2846 + $0x5ec] sm:%s2838] %v3605
                  %v3607 = vld [vmem:[%s2845 + $0xbe0] sm:%s2838]
                  %3608 = vst [vmem:[%s2846 + $0x5f0] sm:%s2838] %v3607
                  %v3609 = vld [vmem:[%s2845 + $0xbe8] sm:%s2838]
                  %3610 = vst [vmem:[%s2846 + $0x5f4] sm:%s2838] %v3609
                  %v3611 = vld [vmem:[%s2845 + $0xbf0] sm:%s2838]
                  %3612 = vst [vmem:[%s2846 + $0x5f8] sm:%s2838] %v3611
                  %v3613 = vld [vmem:[%s2845 + $0xbf8] sm:%s2838]
                  %3614 = vst [vmem:[%s2846 + $0x5fc] sm:%s2838] %v3613
                  %v3615 = vld [vmem:[%s2845 + $0xc00] sm:%s2838]
                  %3616 = vst [vmem:[%s2846 + $0x600] sm:%s2838] %v3615
                  %v3617 = vld [vmem:[%s2845 + $0xc08] sm:%s2838]
                  %3618 = vst [vmem:[%s2846 + $0x604] sm:%s2838] %v3617
                  %v3619 = vld [vmem:[%s2845 + $0xc10] sm:%s2838]
                  %3620 = vst [vmem:[%s2846 + $0x608] sm:%s2838] %v3619
                  %v3621 = vld [vmem:[%s2845 + $0xc18] sm:%s2838]
                  %3622 = vst [vmem:[%s2846 + $0x60c] sm:%s2838] %v3621
                  %v3623 = vld [vmem:[%s2845 + $0xc20] sm:%s2838]
                  %3624 = vst [vmem:[%s2846 + $0x610] sm:%s2838] %v3623
                  %v3625 = vld [vmem:[%s2845 + $0xc28] sm:%s2838]
                  %3626 = vst [vmem:[%s2846 + $0x614] sm:%s2838] %v3625
                  %v3627 = vld [vmem:[%s2845 + $0xc30] sm:%s2838]
                  %3628 = vst [vmem:[%s2846 + $0x618] sm:%s2838] %v3627
                  %v3629 = vld [vmem:[%s2845 + $0xc38] sm:%s2838]
                  %3630 = vst [vmem:[%s2846 + $0x61c] sm:%s2838] %v3629
                  %v3631 = vld [vmem:[%s2845 + $0xc40] sm:%s2838]
                  %3632 = vst [vmem:[%s2846 + $0x620] sm:%s2838] %v3631
                  %v3633 = vld [vmem:[%s2845 + $0xc48] sm:%s2838]
                  %3634 = vst [vmem:[%s2846 + $0x624] sm:%s2838] %v3633
                  %v3635 = vld [vmem:[%s2845 + $0xc50] sm:%s2838]
                  %3636 = vst [vmem:[%s2846 + $0x628] sm:%s2838] %v3635
                  %v3637 = vld [vmem:[%s2845 + $0xc58] sm:%s2838]
                  %3638 = vst [vmem:[%s2846 + $0x62c] sm:%s2838] %v3637
                  %v3639 = vld [vmem:[%s2845 + $0xc60] sm:%s2838]
                  %3640 = vst [vmem:[%s2846 + $0x630] sm:%s2838] %v3639
                  %v3641 = vld [vmem:[%s2845 + $0xc68] sm:%s2838]
                  %3642 = vst [vmem:[%s2846 + $0x634] sm:%s2838] %v3641
                  %v3643 = vld [vmem:[%s2845 + $0xc70] sm:%s2838]
                  %3644 = vst [vmem:[%s2846 + $0x638] sm:%s2838] %v3643
                  %v3645 = vld [vmem:[%s2845 + $0xc78] sm:%s2838]
                  %3646 = vst [vmem:[%s2846 + $0x63c] sm:%s2838] %v3645
                  %v3647 = vld [vmem:[%s2845 + $0xc80] sm:%s2838]
                  %3648 = vst [vmem:[%s2846 + $0x640] sm:%s2838] %v3647
                  %v3649 = vld [vmem:[%s2845 + $0xc88] sm:%s2838]
                  %3650 = vst [vmem:[%s2846 + $0x644] sm:%s2838] %v3649
                  %v3651 = vld [vmem:[%s2845 + $0xc90] sm:%s2838]
                  %3652 = vst [vmem:[%s2846 + $0x648] sm:%s2838] %v3651
                  %v3653 = vld [vmem:[%s2845 + $0xc98] sm:%s2838]
                  %3654 = vst [vmem:[%s2846 + $0x64c] sm:%s2838] %v3653
                  %v3655 = vld [vmem:[%s2845 + $0xca0] sm:%s2838]
                  %3656 = vst [vmem:[%s2846 + $0x650] sm:%s2838] %v3655
                  %v3657 = vld [vmem:[%s2845 + $0xca8] sm:%s2838]
                  %3658 = vst [vmem:[%s2846 + $0x654] sm:%s2838] %v3657
                  %v3659 = vld [vmem:[%s2845 + $0xcb0] sm:%s2838]
                  %3660 = vst [vmem:[%s2846 + $0x658] sm:%s2838] %v3659
                  %v3661 = vld [vmem:[%s2845 + $0xcb8] sm:%s2838]
                  %3662 = vst [vmem:[%s2846 + $0x65c] sm:%s2838] %v3661
                  %v3663 = vld [vmem:[%s2845 + $0xcc0] sm:%s2838]
                  %3664 = vst [vmem:[%s2846 + $0x660] sm:%s2838] %v3663
                  %v3665 = vld [vmem:[%s2845 + $0xcc8] sm:%s2838]
                  %3666 = vst [vmem:[%s2846 + $0x664] sm:%s2838] %v3665
                  %v3667 = vld [vmem:[%s2845 + $0xcd0] sm:%s2838]
                  %3668 = vst [vmem:[%s2846 + $0x668] sm:%s2838] %v3667
                  %v3669 = vld [vmem:[%s2845 + $0xcd8] sm:%s2838]
                  %3670 = vst [vmem:[%s2846 + $0x66c] sm:%s2838] %v3669
                  %v3671 = vld [vmem:[%s2845 + $0xce0] sm:%s2838]
                  %3672 = vst [vmem:[%s2846 + $0x670] sm:%s2838] %v3671
                  %v3673 = vld [vmem:[%s2845 + $0xce8] sm:%s2838]
                  %3674 = vst [vmem:[%s2846 + $0x674] sm:%s2838] %v3673
                  %v3675 = vld [vmem:[%s2845 + $0xcf0] sm:%s2838]
                  %3676 = vst [vmem:[%s2846 + $0x678] sm:%s2838] %v3675
                  %v3677 = vld [vmem:[%s2845 + $0xcf8] sm:%s2838]
                  %3678 = vst [vmem:[%s2846 + $0x67c] sm:%s2838] %v3677
                  %v3679 = vld [vmem:[%s2845 + $0xd00] sm:%s2838]
                  %3680 = vst [vmem:[%s2846 + $0x680] sm:%s2838] %v3679
                  %v3681 = vld [vmem:[%s2845 + $0xd08] sm:%s2838]
                  %3682 = vst [vmem:[%s2846 + $0x684] sm:%s2838] %v3681
                  %v3683 = vld [vmem:[%s2845 + $0xd10] sm:%s2838]
                  %3684 = vst [vmem:[%s2846 + $0x688] sm:%s2838] %v3683
                  %v3685 = vld [vmem:[%s2845 + $0xd18] sm:%s2838]
                  %3686 = vst [vmem:[%s2846 + $0x68c] sm:%s2838] %v3685
                  %v3687 = vld [vmem:[%s2845 + $0xd20] sm:%s2838]
                  %3688 = vst [vmem:[%s2846 + $0x690] sm:%s2838] %v3687
                  %v3689 = vld [vmem:[%s2845 + $0xd28] sm:%s2838]
                  %3690 = vst [vmem:[%s2846 + $0x694] sm:%s2838] %v3689
                  %v3691 = vld [vmem:[%s2845 + $0xd30] sm:%s2838]
                  %3692 = vst [vmem:[%s2846 + $0x698] sm:%s2838] %v3691
                  %v3693 = vld [vmem:[%s2845 + $0xd38] sm:%s2838]
                  %3694 = vst [vmem:[%s2846 + $0x69c] sm:%s2838] %v3693
                  %v3695 = vld [vmem:[%s2845 + $0xd40] sm:%s2838]
                  %3696 = vst [vmem:[%s2846 + $0x6a0] sm:%s2838] %v3695
                  %v3697 = vld [vmem:[%s2845 + $0xd48] sm:%s2838]
                  %3698 = vst [vmem:[%s2846 + $0x6a4] sm:%s2838] %v3697
                  %v3699 = vld [vmem:[%s2845 + $0xd50] sm:%s2838]
                  %3700 = vst [vmem:[%s2846 + $0x6a8] sm:%s2838] %v3699
                  %v3701 = vld [vmem:[%s2845 + $0xd58] sm:%s2838]
                  %3702 = vst [vmem:[%s2846 + $0x6ac] sm:%s2838] %v3701
                  %v3703 = vld [vmem:[%s2845 + $0xd60] sm:%s2838]
                  %3704 = vst [vmem:[%s2846 + $0x6b0] sm:%s2838] %v3703
                  %v3705 = vld [vmem:[%s2845 + $0xd68] sm:%s2838]
                  %3706 = vst [vmem:[%s2846 + $0x6b4] sm:%s2838] %v3705
                  %v3707 = vld [vmem:[%s2845 + $0xd70] sm:%s2838]
                  %3708 = vst [vmem:[%s2846 + $0x6b8] sm:%s2838] %v3707
                  %v3709 = vld [vmem:[%s2845 + $0xd78] sm:%s2838]
                  %3710 = vst [vmem:[%s2846 + $0x6bc] sm:%s2838] %v3709
                $region70: #{simple_3dcnn_encoder.5} parent=57 // loop_footer
                  %s2844 = sadd.s32 1, %s2840
                $region71: #{simple_3dcnn_encoder.5} parent=57 // loop_footer_branch
                  %2839 = sbr.rel target = $region67
                $region72: #{simple_3dcnn_encoder.5} parent=57 // loop_exit
                  _
              $region58: #{simple_3dcnn_encoder.5} parent=31 // pred_fallthru
                _
            $region32: #{simple_3dcnn_encoder.5} parent=27 // pred_fallthru
              _
            // Predicated region
            $region33: #{simple_3dcnn_encoder.5} parent=27 // pred_check
              _
            $region34: #{simple_3dcnn_encoder.5} parent=27 // pred_check_branch
              %198 = sbr.rel (0) target = $region36
            $region35: #{simple_3dcnn_encoder.5} parent=27 // pred_region
              %s200 = ssub.s32 16, 1
              loop: start=0, step=1, limit=1
              $region37: #{simple_3dcnn_encoder.5} parent=35 // loop_pre_header
                _
              $region38: #{simple_3dcnn_encoder.5} parent=35 // loop_header
                %s202 = sphi 0, %s206
                %p203 = scmp.ge.s32.totalorder %s202, 1
                %s207 = sphi %s192, %s192
                %s208 = sphi %s190, %s190
              $region39: #{simple_3dcnn_encoder.5} parent=35 // loop_header_branch
                %205 = sbr.rel (%p203) target = $region43
              $region40: #{simple_3dcnn_encoder.5} parent=35 // loop_body
                %v209 = vld [vmem:[%s207] sm:%s200]
                %210 = vst [vmem:[%s208] sm:%s200] %v209
                %v211 = vld [vmem:[%s207 + $0x8] sm:%s200]
                %212 = vst [vmem:[%s208 + $0x4] sm:%s200] %v211
                %v213 = vld [vmem:[%s207 + $0x10] sm:%s200]
                %214 = vst [vmem:[%s208 + $0x8] sm:%s200] %v213
                %v215 = vld [vmem:[%s207 + $0x18] sm:%s200]
                %216 = vst [vmem:[%s208 + $0xc] sm:%s200] %v215
                %v217 = vld [vmem:[%s207 + $0x20] sm:%s200]
                %218 = vst [vmem:[%s208 + $0x10] sm:%s200] %v217
                %v219 = vld [vmem:[%s207 + $0x28] sm:%s200]
                %220 = vst [vmem:[%s208 + $0x14] sm:%s200] %v219
                %v221 = vld [vmem:[%s207 + $0x30] sm:%s200]
                %222 = vst [vmem:[%s208 + $0x18] sm:%s200] %v221
                %v223 = vld [vmem:[%s207 + $0x38] sm:%s200]
                %224 = vst [vmem:[%s208 + $0x1c] sm:%s200] %v223
                %v225 = vld [vmem:[%s207 + $0x40] sm:%s200]
                %226 = vst [vmem:[%s208 + $0x20] sm:%s200] %v225
                %v227 = vld [vmem:[%s207 + $0x48] sm:%s200]
                %228 = vst [vmem:[%s208 + $0x24] sm:%s200] %v227
                %v229 = vld [vmem:[%s207 + $0x50] sm:%s200]
                %230 = vst [vmem:[%s208 + $0x28] sm:%s200] %v229
                %v231 = vld [vmem:[%s207 + $0x58] sm:%s200]
                %232 = vst [vmem:[%s208 + $0x2c] sm:%s200] %v231
                %v233 = vld [vmem:[%s207 + $0x60] sm:%s200]
                %234 = vst [vmem:[%s208 + $0x30] sm:%s200] %v233
                %v235 = vld [vmem:[%s207 + $0x68] sm:%s200]
                %236 = vst [vmem:[%s208 + $0x34] sm:%s200] %v235
                %v237 = vld [vmem:[%s207 + $0x70] sm:%s200]
                %238 = vst [vmem:[%s208 + $0x38] sm:%s200] %v237
                %v239 = vld [vmem:[%s207 + $0x78] sm:%s200]
                %240 = vst [vmem:[%s208 + $0x3c] sm:%s200] %v239
                %v241 = vld [vmem:[%s207 + $0x80] sm:%s200]
                %242 = vst [vmem:[%s208 + $0x40] sm:%s200] %v241
                %v243 = vld [vmem:[%s207 + $0x88] sm:%s200]
                %244 = vst [vmem:[%s208 + $0x44] sm:%s200] %v243
                %v245 = vld [vmem:[%s207 + $0x90] sm:%s200]
                %246 = vst [vmem:[%s208 + $0x48] sm:%s200] %v245
                %v247 = vld [vmem:[%s207 + $0x98] sm:%s200]
                %248 = vst [vmem:[%s208 + $0x4c] sm:%s200] %v247
                %v249 = vld [vmem:[%s207 + $0xa0] sm:%s200]
                %250 = vst [vmem:[%s208 + $0x50] sm:%s200] %v249
                %v251 = vld [vmem:[%s207 + $0xa8] sm:%s200]
                %252 = vst [vmem:[%s208 + $0x54] sm:%s200] %v251
                %v253 = vld [vmem:[%s207 + $0xb0] sm:%s200]
                %254 = vst [vmem:[%s208 + $0x58] sm:%s200] %v253
                %v255 = vld [vmem:[%s207 + $0xb8] sm:%s200]
                %256 = vst [vmem:[%s208 + $0x5c] sm:%s200] %v255
                %v257 = vld [vmem:[%s207 + $0xc0] sm:%s200]
                %258 = vst [vmem:[%s208 + $0x60] sm:%s200] %v257
                %v259 = vld [vmem:[%s207 + $0xc8] sm:%s200]
                %260 = vst [vmem:[%s208 + $0x64] sm:%s200] %v259
                %v261 = vld [vmem:[%s207 + $0xd0] sm:%s200]
                %262 = vst [vmem:[%s208 + $0x68] sm:%s200] %v261
                %v263 = vld [vmem:[%s207 + $0xd8] sm:%s200]
                %264 = vst [vmem:[%s208 + $0x6c] sm:%s200] %v263
                %v265 = vld [vmem:[%s207 + $0xe0] sm:%s200]
                %266 = vst [vmem:[%s208 + $0x70] sm:%s200] %v265
                %v267 = vld [vmem:[%s207 + $0xe8] sm:%s200]
                %268 = vst [vmem:[%s208 + $0x74] sm:%s200] %v267
                %v269 = vld [vmem:[%s207 + $0xf0] sm:%s200]
                %270 = vst [vmem:[%s208 + $0x78] sm:%s200] %v269
                %v271 = vld [vmem:[%s207 + $0xf8] sm:%s200]
                %272 = vst [vmem:[%s208 + $0x7c] sm:%s200] %v271
                %v273 = vld [vmem:[%s207 + $0x100] sm:%s200]
                %274 = vst [vmem:[%s208 + $0x80] sm:%s200] %v273
                %v275 = vld [vmem:[%s207 + $0x108] sm:%s200]
                %276 = vst [vmem:[%s208 + $0x84] sm:%s200] %v275
                %v277 = vld [vmem:[%s207 + $0x110] sm:%s200]
                %278 = vst [vmem:[%s208 + $0x88] sm:%s200] %v277
                %v279 = vld [vmem:[%s207 + $0x118] sm:%s200]
                %280 = vst [vmem:[%s208 + $0x8c] sm:%s200] %v279
                %v281 = vld [vmem:[%s207 + $0x120] sm:%s200]
                %282 = vst [vmem:[%s208 + $0x90] sm:%s200] %v281
                %v283 = vld [vmem:[%s207 + $0x128] sm:%s200]
                %284 = vst [vmem:[%s208 + $0x94] sm:%s200] %v283
                %v285 = vld [vmem:[%s207 + $0x130] sm:%s200]
                %286 = vst [vmem:[%s208 + $0x98] sm:%s200] %v285
                %v287 = vld [vmem:[%s207 + $0x138] sm:%s200]
                %288 = vst [vmem:[%s208 + $0x9c] sm:%s200] %v287
                %v289 = vld [vmem:[%s207 + $0x140] sm:%s200]
                %290 = vst [vmem:[%s208 + $0xa0] sm:%s200] %v289
                %v291 = vld [vmem:[%s207 + $0x148] sm:%s200]
                %292 = vst [vmem:[%s208 + $0xa4] sm:%s200] %v291
                %v293 = vld [vmem:[%s207 + $0x150] sm:%s200]
                %294 = vst [vmem:[%s208 + $0xa8] sm:%s200] %v293
                %v295 = vld [vmem:[%s207 + $0x158] sm:%s200]
                %296 = vst [vmem:[%s208 + $0xac] sm:%s200] %v295
                %v297 = vld [vmem:[%s207 + $0x160] sm:%s200]
                %298 = vst [vmem:[%s208 + $0xb0] sm:%s200] %v297
                %v299 = vld [vmem:[%s207 + $0x168] sm:%s200]
                %300 = vst [vmem:[%s208 + $0xb4] sm:%s200] %v299
                %v301 = vld [vmem:[%s207 + $0x170] sm:%s200]
                %302 = vst [vmem:[%s208 + $0xb8] sm:%s200] %v301
                %v303 = vld [vmem:[%s207 + $0x178] sm:%s200]
                %304 = vst [vmem:[%s208 + $0xbc] sm:%s200] %v303
                %v305 = vld [vmem:[%s207 + $0x180] sm:%s200]
                %306 = vst [vmem:[%s208 + $0xc0] sm:%s200] %v305
                %v307 = vld [vmem:[%s207 + $0x188] sm:%s200]
                %308 = vst [vmem:[%s208 + $0xc4] sm:%s200] %v307
                %v309 = vld [vmem:[%s207 + $0x190] sm:%s200]
                %310 = vst [vmem:[%s208 + $0xc8] sm:%s200] %v309
                %v311 = vld [vmem:[%s207 + $0x198] sm:%s200]
                %312 = vst [vmem:[%s208 + $0xcc] sm:%s200] %v311
                %v313 = vld [vmem:[%s207 + $0x1a0] sm:%s200]
                %314 = vst [vmem:[%s208 + $0xd0] sm:%s200] %v313
                %v315 = vld [vmem:[%s207 + $0x1a8] sm:%s200]
                %316 = vst [vmem:[%s208 + $0xd4] sm:%s200] %v315
                %v317 = vld [vmem:[%s207 + $0x1b0] sm:%s200]
                %318 = vst [vmem:[%s208 + $0xd8] sm:%s200] %v317
                %v319 = vld [vmem:[%s207 + $0x1b8] sm:%s200]
                %320 = vst [vmem:[%s208 + $0xdc] sm:%s200] %v319
                %v321 = vld [vmem:[%s207 + $0x1c0] sm:%s200]
                %322 = vst [vmem:[%s208 + $0xe0] sm:%s200] %v321
                %v323 = vld [vmem:[%s207 + $0x1c8] sm:%s200]
                %324 = vst [vmem:[%s208 + $0xe4] sm:%s200] %v323
                %v325 = vld [vmem:[%s207 + $0x1d0] sm:%s200]
                %326 = vst [vmem:[%s208 + $0xe8] sm:%s200] %v325
                %v327 = vld [vmem:[%s207 + $0x1d8] sm:%s200]
                %328 = vst [vmem:[%s208 + $0xec] sm:%s200] %v327
                %v329 = vld [vmem:[%s207 + $0x1e0] sm:%s200]
                %330 = vst [vmem:[%s208 + $0xf0] sm:%s200] %v329
                %v331 = vld [vmem:[%s207 + $0x1e8] sm:%s200]
                %332 = vst [vmem:[%s208 + $0xf4] sm:%s200] %v331
                %v333 = vld [vmem:[%s207 + $0x1f0] sm:%s200]
                %334 = vst [vmem:[%s208 + $0xf8] sm:%s200] %v333
                %v335 = vld [vmem:[%s207 + $0x1f8] sm:%s200]
                %336 = vst [vmem:[%s208 + $0xfc] sm:%s200] %v335
                %v337 = vld [vmem:[%s207 + $0x200] sm:%s200]
                %338 = vst [vmem:[%s208 + $0x100] sm:%s200] %v337
                %v339 = vld [vmem:[%s207 + $0x208] sm:%s200]
                %340 = vst [vmem:[%s208 + $0x104] sm:%s200] %v339
                %v341 = vld [vmem:[%s207 + $0x210] sm:%s200]
                %342 = vst [vmem:[%s208 + $0x108] sm:%s200] %v341
                %v343 = vld [vmem:[%s207 + $0x218] sm:%s200]
                %344 = vst [vmem:[%s208 + $0x10c] sm:%s200] %v343
                %v345 = vld [vmem:[%s207 + $0x220] sm:%s200]
                %346 = vst [vmem:[%s208 + $0x110] sm:%s200] %v345
                %v347 = vld [vmem:[%s207 + $0x228] sm:%s200]
                %348 = vst [vmem:[%s208 + $0x114] sm:%s200] %v347
                %v349 = vld [vmem:[%s207 + $0x230] sm:%s200]
                %350 = vst [vmem:[%s208 + $0x118] sm:%s200] %v349
                %v351 = vld [vmem:[%s207 + $0x238] sm:%s200]
                %352 = vst [vmem:[%s208 + $0x11c] sm:%s200] %v351
                %v353 = vld [vmem:[%s207 + $0x240] sm:%s200]
                %354 = vst [vmem:[%s208 + $0x120] sm:%s200] %v353
                %v355 = vld [vmem:[%s207 + $0x248] sm:%s200]
                %356 = vst [vmem:[%s208 + $0x124] sm:%s200] %v355
                %v357 = vld [vmem:[%s207 + $0x250] sm:%s200]
                %358 = vst [vmem:[%s208 + $0x128] sm:%s200] %v357
                %v359 = vld [vmem:[%s207 + $0x258] sm:%s200]
                %360 = vst [vmem:[%s208 + $0x12c] sm:%s200] %v359
                %v361 = vld [vmem:[%s207 + $0x260] sm:%s200]
                %362 = vst [vmem:[%s208 + $0x130] sm:%s200] %v361
                %v363 = vld [vmem:[%s207 + $0x268] sm:%s200]
                %364 = vst [vmem:[%s208 + $0x134] sm:%s200] %v363
                %v365 = vld [vmem:[%s207 + $0x270] sm:%s200]
                %366 = vst [vmem:[%s208 + $0x138] sm:%s200] %v365
                %v367 = vld [vmem:[%s207 + $0x278] sm:%s200]
                %368 = vst [vmem:[%s208 + $0x13c] sm:%s200] %v367
                %v369 = vld [vmem:[%s207 + $0x280] sm:%s200]
                %370 = vst [vmem:[%s208 + $0x140] sm:%s200] %v369
                %v371 = vld [vmem:[%s207 + $0x288] sm:%s200]
                %372 = vst [vmem:[%s208 + $0x144] sm:%s200] %v371
                %v373 = vld [vmem:[%s207 + $0x290] sm:%s200]
                %374 = vst [vmem:[%s208 + $0x148] sm:%s200] %v373
                %v375 = vld [vmem:[%s207 + $0x298] sm:%s200]
                %376 = vst [vmem:[%s208 + $0x14c] sm:%s200] %v375
                %v377 = vld [vmem:[%s207 + $0x2a0] sm:%s200]
                %378 = vst [vmem:[%s208 + $0x150] sm:%s200] %v377
                %v379 = vld [vmem:[%s207 + $0x2a8] sm:%s200]
                %380 = vst [vmem:[%s208 + $0x154] sm:%s200] %v379
                %v381 = vld [vmem:[%s207 + $0x2b0] sm:%s200]
                %382 = vst [vmem:[%s208 + $0x158] sm:%s200] %v381
                %v383 = vld [vmem:[%s207 + $0x2b8] sm:%s200]
                %384 = vst [vmem:[%s208 + $0x15c] sm:%s200] %v383
                %v385 = vld [vmem:[%s207 + $0x2c0] sm:%s200]
                %386 = vst [vmem:[%s208 + $0x160] sm:%s200] %v385
                %v387 = vld [vmem:[%s207 + $0x2c8] sm:%s200]
                %388 = vst [vmem:[%s208 + $0x164] sm:%s200] %v387
                %v389 = vld [vmem:[%s207 + $0x2d0] sm:%s200]
                %390 = vst [vmem:[%s208 + $0x168] sm:%s200] %v389
                %v391 = vld [vmem:[%s207 + $0x2d8] sm:%s200]
                %392 = vst [vmem:[%s208 + $0x16c] sm:%s200] %v391
                %v393 = vld [vmem:[%s207 + $0x2e0] sm:%s200]
                %394 = vst [vmem:[%s208 + $0x170] sm:%s200] %v393
                %v395 = vld [vmem:[%s207 + $0x2e8] sm:%s200]
                %396 = vst [vmem:[%s208 + $0x174] sm:%s200] %v395
                %v397 = vld [vmem:[%s207 + $0x2f0] sm:%s200]
                %398 = vst [vmem:[%s208 + $0x178] sm:%s200] %v397
                %v399 = vld [vmem:[%s207 + $0x2f8] sm:%s200]
                %400 = vst [vmem:[%s208 + $0x17c] sm:%s200] %v399
                %v401 = vld [vmem:[%s207 + $0x300] sm:%s200]
                %402 = vst [vmem:[%s208 + $0x180] sm:%s200] %v401
                %v403 = vld [vmem:[%s207 + $0x308] sm:%s200]
                %404 = vst [vmem:[%s208 + $0x184] sm:%s200] %v403
                %v405 = vld [vmem:[%s207 + $0x310] sm:%s200]
                %406 = vst [vmem:[%s208 + $0x188] sm:%s200] %v405
                %v407 = vld [vmem:[%s207 + $0x318] sm:%s200]
                %408 = vst [vmem:[%s208 + $0x18c] sm:%s200] %v407
                %v409 = vld [vmem:[%s207 + $0x320] sm:%s200]
                %410 = vst [vmem:[%s208 + $0x190] sm:%s200] %v409
                %v411 = vld [vmem:[%s207 + $0x328] sm:%s200]
                %412 = vst [vmem:[%s208 + $0x194] sm:%s200] %v411
                %v413 = vld [vmem:[%s207 + $0x330] sm:%s200]
                %414 = vst [vmem:[%s208 + $0x198] sm:%s200] %v413
                %v415 = vld [vmem:[%s207 + $0x338] sm:%s200]
                %416 = vst [vmem:[%s208 + $0x19c] sm:%s200] %v415
                %v417 = vld [vmem:[%s207 + $0x340] sm:%s200]
                %418 = vst [vmem:[%s208 + $0x1a0] sm:%s200] %v417
                %v419 = vld [vmem:[%s207 + $0x348] sm:%s200]
                %420 = vst [vmem:[%s208 + $0x1a4] sm:%s200] %v419
                %v421 = vld [vmem:[%s207 + $0x350] sm:%s200]
                %422 = vst [vmem:[%s208 + $0x1a8] sm:%s200] %v421
                %v423 = vld [vmem:[%s207 + $0x358] sm:%s200]
                %424 = vst [vmem:[%s208 + $0x1ac] sm:%s200] %v423
                %v425 = vld [vmem:[%s207 + $0x360] sm:%s200]
                %426 = vst [vmem:[%s208 + $0x1b0] sm:%s200] %v425
                %v427 = vld [vmem:[%s207 + $0x368] sm:%s200]
                %428 = vst [vmem:[%s208 + $0x1b4] sm:%s200] %v427
                %v429 = vld [vmem:[%s207 + $0x370] sm:%s200]
                %430 = vst [vmem:[%s208 + $0x1b8] sm:%s200] %v429
                %v431 = vld [vmem:[%s207 + $0x378] sm:%s200]
                %432 = vst [vmem:[%s208 + $0x1bc] sm:%s200] %v431
                %v433 = vld [vmem:[%s207 + $0x380] sm:%s200]
                %434 = vst [vmem:[%s208 + $0x1c0] sm:%s200] %v433
                %v435 = vld [vmem:[%s207 + $0x388] sm:%s200]
                %436 = vst [vmem:[%s208 + $0x1c4] sm:%s200] %v435
                %v437 = vld [vmem:[%s207 + $0x390] sm:%s200]
                %438 = vst [vmem:[%s208 + $0x1c8] sm:%s200] %v437
                %v439 = vld [vmem:[%s207 + $0x398] sm:%s200]
                %440 = vst [vmem:[%s208 + $0x1cc] sm:%s200] %v439
                %v441 = vld [vmem:[%s207 + $0x3a0] sm:%s200]
                %442 = vst [vmem:[%s208 + $0x1d0] sm:%s200] %v441
                %v443 = vld [vmem:[%s207 + $0x3a8] sm:%s200]
                %444 = vst [vmem:[%s208 + $0x1d4] sm:%s200] %v443
                %v445 = vld [vmem:[%s207 + $0x3b0] sm:%s200]
                %446 = vst [vmem:[%s208 + $0x1d8] sm:%s200] %v445
                %v447 = vld [vmem:[%s207 + $0x3b8] sm:%s200]
                %448 = vst [vmem:[%s208 + $0x1dc] sm:%s200] %v447
                %v449 = vld [vmem:[%s207 + $0x3c0] sm:%s200]
                %450 = vst [vmem:[%s208 + $0x1e0] sm:%s200] %v449
                %v451 = vld [vmem:[%s207 + $0x3c8] sm:%s200]
                %452 = vst [vmem:[%s208 + $0x1e4] sm:%s200] %v451
                %v453 = vld [vmem:[%s207 + $0x3d0] sm:%s200]
                %454 = vst [vmem:[%s208 + $0x1e8] sm:%s200] %v453
                %v455 = vld [vmem:[%s207 + $0x3d8] sm:%s200]
                %456 = vst [vmem:[%s208 + $0x1ec] sm:%s200] %v455
                %v457 = vld [vmem:[%s207 + $0x3e0] sm:%s200]
                %458 = vst [vmem:[%s208 + $0x1f0] sm:%s200] %v457
                %v459 = vld [vmem:[%s207 + $0x3e8] sm:%s200]
                %460 = vst [vmem:[%s208 + $0x1f4] sm:%s200] %v459
                %v461 = vld [vmem:[%s207 + $0x3f0] sm:%s200]
                %462 = vst [vmem:[%s208 + $0x1f8] sm:%s200] %v461
                %v463 = vld [vmem:[%s207 + $0x3f8] sm:%s200]
                %464 = vst [vmem:[%s208 + $0x1fc] sm:%s200] %v463
                %v465 = vld [vmem:[%s207 + $0x400] sm:%s200]
                %466 = vst [vmem:[%s208 + $0x200] sm:%s200] %v465
                %v467 = vld [vmem:[%s207 + $0x408] sm:%s200]
                %468 = vst [vmem:[%s208 + $0x204] sm:%s200] %v467
                %v469 = vld [vmem:[%s207 + $0x410] sm:%s200]
                %470 = vst [vmem:[%s208 + $0x208] sm:%s200] %v469
                %v471 = vld [vmem:[%s207 + $0x418] sm:%s200]
                %472 = vst [vmem:[%s208 + $0x20c] sm:%s200] %v471
                %v473 = vld [vmem:[%s207 + $0x420] sm:%s200]
                %474 = vst [vmem:[%s208 + $0x210] sm:%s200] %v473
                %v475 = vld [vmem:[%s207 + $0x428] sm:%s200]
                %476 = vst [vmem:[%s208 + $0x214] sm:%s200] %v475
                %v477 = vld [vmem:[%s207 + $0x430] sm:%s200]
                %478 = vst [vmem:[%s208 + $0x218] sm:%s200] %v477
                %v479 = vld [vmem:[%s207 + $0x438] sm:%s200]
                %480 = vst [vmem:[%s208 + $0x21c] sm:%s200] %v479
                %v481 = vld [vmem:[%s207 + $0x440] sm:%s200]
                %482 = vst [vmem:[%s208 + $0x220] sm:%s200] %v481
                %v483 = vld [vmem:[%s207 + $0x448] sm:%s200]
                %484 = vst [vmem:[%s208 + $0x224] sm:%s200] %v483
                %v485 = vld [vmem:[%s207 + $0x450] sm:%s200]
                %486 = vst [vmem:[%s208 + $0x228] sm:%s200] %v485
                %v487 = vld [vmem:[%s207 + $0x458] sm:%s200]
                %488 = vst [vmem:[%s208 + $0x22c] sm:%s200] %v487
                %v489 = vld [vmem:[%s207 + $0x460] sm:%s200]
                %490 = vst [vmem:[%s208 + $0x230] sm:%s200] %v489
                %v491 = vld [vmem:[%s207 + $0x468] sm:%s200]
                %492 = vst [vmem:[%s208 + $0x234] sm:%s200] %v491
                %v493 = vld [vmem:[%s207 + $0x470] sm:%s200]
                %494 = vst [vmem:[%s208 + $0x238] sm:%s200] %v493
                %v495 = vld [vmem:[%s207 + $0x478] sm:%s200]
                %496 = vst [vmem:[%s208 + $0x23c] sm:%s200] %v495
                %v497 = vld [vmem:[%s207 + $0x480] sm:%s200]
                %498 = vst [vmem:[%s208 + $0x240] sm:%s200] %v497
                %v499 = vld [vmem:[%s207 + $0x488] sm:%s200]
                %500 = vst [vmem:[%s208 + $0x244] sm:%s200] %v499
                %v501 = vld [vmem:[%s207 + $0x490] sm:%s200]
                %502 = vst [vmem:[%s208 + $0x248] sm:%s200] %v501
                %v503 = vld [vmem:[%s207 + $0x498] sm:%s200]
                %504 = vst [vmem:[%s208 + $0x24c] sm:%s200] %v503
                %v505 = vld [vmem:[%s207 + $0x4a0] sm:%s200]
                %506 = vst [vmem:[%s208 + $0x250] sm:%s200] %v505
                %v507 = vld [vmem:[%s207 + $0x4a8] sm:%s200]
                %508 = vst [vmem:[%s208 + $0x254] sm:%s200] %v507
                %v509 = vld [vmem:[%s207 + $0x4b0] sm:%s200]
                %510 = vst [vmem:[%s208 + $0x258] sm:%s200] %v509
                %v511 = vld [vmem:[%s207 + $0x4b8] sm:%s200]
                %512 = vst [vmem:[%s208 + $0x25c] sm:%s200] %v511
                %v513 = vld [vmem:[%s207 + $0x4c0] sm:%s200]
                %514 = vst [vmem:[%s208 + $0x260] sm:%s200] %v513
                %v515 = vld [vmem:[%s207 + $0x4c8] sm:%s200]
                %516 = vst [vmem:[%s208 + $0x264] sm:%s200] %v515
                %v517 = vld [vmem:[%s207 + $0x4d0] sm:%s200]
                %518 = vst [vmem:[%s208 + $0x268] sm:%s200] %v517
                %v519 = vld [vmem:[%s207 + $0x4d8] sm:%s200]
                %520 = vst [vmem:[%s208 + $0x26c] sm:%s200] %v519
                %v521 = vld [vmem:[%s207 + $0x4e0] sm:%s200]
                %522 = vst [vmem:[%s208 + $0x270] sm:%s200] %v521
                %v523 = vld [vmem:[%s207 + $0x4e8] sm:%s200]
                %524 = vst [vmem:[%s208 + $0x274] sm:%s200] %v523
                %v525 = vld [vmem:[%s207 + $0x4f0] sm:%s200]
                %526 = vst [vmem:[%s208 + $0x278] sm:%s200] %v525
                %v527 = vld [vmem:[%s207 + $0x4f8] sm:%s200]
                %528 = vst [vmem:[%s208 + $0x27c] sm:%s200] %v527
                %v529 = vld [vmem:[%s207 + $0x500] sm:%s200]
                %530 = vst [vmem:[%s208 + $0x280] sm:%s200] %v529
                %v531 = vld [vmem:[%s207 + $0x508] sm:%s200]
                %532 = vst [vmem:[%s208 + $0x284] sm:%s200] %v531
                %v533 = vld [vmem:[%s207 + $0x510] sm:%s200]
                %534 = vst [vmem:[%s208 + $0x288] sm:%s200] %v533
                %v535 = vld [vmem:[%s207 + $0x518] sm:%s200]
                %536 = vst [vmem:[%s208 + $0x28c] sm:%s200] %v535
                %v537 = vld [vmem:[%s207 + $0x520] sm:%s200]
                %538 = vst [vmem:[%s208 + $0x290] sm:%s200] %v537
                %v539 = vld [vmem:[%s207 + $0x528] sm:%s200]
                %540 = vst [vmem:[%s208 + $0x294] sm:%s200] %v539
                %v541 = vld [vmem:[%s207 + $0x530] sm:%s200]
                %542 = vst [vmem:[%s208 + $0x298] sm:%s200] %v541
                %v543 = vld [vmem:[%s207 + $0x538] sm:%s200]
                %544 = vst [vmem:[%s208 + $0x29c] sm:%s200] %v543
                %v545 = vld [vmem:[%s207 + $0x540] sm:%s200]
                %546 = vst [vmem:[%s208 + $0x2a0] sm:%s200] %v545
                %v547 = vld [vmem:[%s207 + $0x548] sm:%s200]
                %548 = vst [vmem:[%s208 + $0x2a4] sm:%s200] %v547
                %v549 = vld [vmem:[%s207 + $0x550] sm:%s200]
                %550 = vst [vmem:[%s208 + $0x2a8] sm:%s200] %v549
                %v551 = vld [vmem:[%s207 + $0x558] sm:%s200]
                %552 = vst [vmem:[%s208 + $0x2ac] sm:%s200] %v551
                %v553 = vld [vmem:[%s207 + $0x560] sm:%s200]
                %554 = vst [vmem:[%s208 + $0x2b0] sm:%s200] %v553
                %v555 = vld [vmem:[%s207 + $0x568] sm:%s200]
                %556 = vst [vmem:[%s208 + $0x2b4] sm:%s200] %v555
                %v557 = vld [vmem:[%s207 + $0x570] sm:%s200]
                %558 = vst [vmem:[%s208 + $0x2b8] sm:%s200] %v557
                %v559 = vld [vmem:[%s207 + $0x578] sm:%s200]
                %560 = vst [vmem:[%s208 + $0x2bc] sm:%s200] %v559
                %v561 = vld [vmem:[%s207 + $0x580] sm:%s200]
                %562 = vst [vmem:[%s208 + $0x2c0] sm:%s200] %v561
                %v563 = vld [vmem:[%s207 + $0x588] sm:%s200]
                %564 = vst [vmem:[%s208 + $0x2c4] sm:%s200] %v563
                %v565 = vld [vmem:[%s207 + $0x590] sm:%s200]
                %566 = vst [vmem:[%s208 + $0x2c8] sm:%s200] %v565
                %v567 = vld [vmem:[%s207 + $0x598] sm:%s200]
                %568 = vst [vmem:[%s208 + $0x2cc] sm:%s200] %v567
                %v569 = vld [vmem:[%s207 + $0x5a0] sm:%s200]
                %570 = vst [vmem:[%s208 + $0x2d0] sm:%s200] %v569
                %v571 = vld [vmem:[%s207 + $0x5a8] sm:%s200]
                %572 = vst [vmem:[%s208 + $0x2d4] sm:%s200] %v571
                %v573 = vld [vmem:[%s207 + $0x5b0] sm:%s200]
                %574 = vst [vmem:[%s208 + $0x2d8] sm:%s200] %v573
                %v575 = vld [vmem:[%s207 + $0x5b8] sm:%s200]
                %576 = vst [vmem:[%s208 + $0x2dc] sm:%s200] %v575
                %v577 = vld [vmem:[%s207 + $0x5c0] sm:%s200]
                %578 = vst [vmem:[%s208 + $0x2e0] sm:%s200] %v577
                %v579 = vld [vmem:[%s207 + $0x5c8] sm:%s200]
                %580 = vst [vmem:[%s208 + $0x2e4] sm:%s200] %v579
                %v581 = vld [vmem:[%s207 + $0x5d0] sm:%s200]
                %582 = vst [vmem:[%s208 + $0x2e8] sm:%s200] %v581
                %v583 = vld [vmem:[%s207 + $0x5d8] sm:%s200]
                %584 = vst [vmem:[%s208 + $0x2ec] sm:%s200] %v583
                %v585 = vld [vmem:[%s207 + $0x5e0] sm:%s200]
                %586 = vst [vmem:[%s208 + $0x2f0] sm:%s200] %v585
                %v587 = vld [vmem:[%s207 + $0x5e8] sm:%s200]
                %588 = vst [vmem:[%s208 + $0x2f4] sm:%s200] %v587
                %v589 = vld [vmem:[%s207 + $0x5f0] sm:%s200]
                %590 = vst [vmem:[%s208 + $0x2f8] sm:%s200] %v589
                %v591 = vld [vmem:[%s207 + $0x5f8] sm:%s200]
                %592 = vst [vmem:[%s208 + $0x2fc] sm:%s200] %v591
                %v593 = vld [vmem:[%s207 + $0x600] sm:%s200]
                %594 = vst [vmem:[%s208 + $0x300] sm:%s200] %v593
                %v595 = vld [vmem:[%s207 + $0x608] sm:%s200]
                %596 = vst [vmem:[%s208 + $0x304] sm:%s200] %v595
                %v597 = vld [vmem:[%s207 + $0x610] sm:%s200]
                %598 = vst [vmem:[%s208 + $0x308] sm:%s200] %v597
                %v599 = vld [vmem:[%s207 + $0x618] sm:%s200]
                %600 = vst [vmem:[%s208 + $0x30c] sm:%s200] %v599
                %v601 = vld [vmem:[%s207 + $0x620] sm:%s200]
                %602 = vst [vmem:[%s208 + $0x310] sm:%s200] %v601
                %v603 = vld [vmem:[%s207 + $0x628] sm:%s200]
                %604 = vst [vmem:[%s208 + $0x314] sm:%s200] %v603
                %v605 = vld [vmem:[%s207 + $0x630] sm:%s200]
                %606 = vst [vmem:[%s208 + $0x318] sm:%s200] %v605
                %v607 = vld [vmem:[%s207 + $0x638] sm:%s200]
                %608 = vst [vmem:[%s208 + $0x31c] sm:%s200] %v607
                %v609 = vld [vmem:[%s207 + $0x640] sm:%s200]
                %610 = vst [vmem:[%s208 + $0x320] sm:%s200] %v609
                %v611 = vld [vmem:[%s207 + $0x648] sm:%s200]
                %612 = vst [vmem:[%s208 + $0x324] sm:%s200] %v611
                %v613 = vld [vmem:[%s207 + $0x650] sm:%s200]
                %614 = vst [vmem:[%s208 + $0x328] sm:%s200] %v613
                %v615 = vld [vmem:[%s207 + $0x658] sm:%s200]
                %616 = vst [vmem:[%s208 + $0x32c] sm:%s200] %v615
                %v617 = vld [vmem:[%s207 + $0x660] sm:%s200]
                %618 = vst [vmem:[%s208 + $0x330] sm:%s200] %v617
                %v619 = vld [vmem:[%s207 + $0x668] sm:%s200]
                %620 = vst [vmem:[%s208 + $0x334] sm:%s200] %v619
                %v621 = vld [vmem:[%s207 + $0x670] sm:%s200]
                %622 = vst [vmem:[%s208 + $0x338] sm:%s200] %v621
                %v623 = vld [vmem:[%s207 + $0x678] sm:%s200]
                %624 = vst [vmem:[%s208 + $0x33c] sm:%s200] %v623
                %v625 = vld [vmem:[%s207 + $0x680] sm:%s200]
                %626 = vst [vmem:[%s208 + $0x340] sm:%s200] %v625
                %v627 = vld [vmem:[%s207 + $0x688] sm:%s200]
                %628 = vst [vmem:[%s208 + $0x344] sm:%s200] %v627
                %v629 = vld [vmem:[%s207 + $0x690] sm:%s200]
                %630 = vst [vmem:[%s208 + $0x348] sm:%s200] %v629
                %v631 = vld [vmem:[%s207 + $0x698] sm:%s200]
                %632 = vst [vmem:[%s208 + $0x34c] sm:%s200] %v631
                %v633 = vld [vmem:[%s207 + $0x6a0] sm:%s200]
                %634 = vst [vmem:[%s208 + $0x350] sm:%s200] %v633
                %v635 = vld [vmem:[%s207 + $0x6a8] sm:%s200]
                %636 = vst [vmem:[%s208 + $0x354] sm:%s200] %v635
                %v637 = vld [vmem:[%s207 + $0x6b0] sm:%s200]
                %638 = vst [vmem:[%s208 + $0x358] sm:%s200] %v637
                %v639 = vld [vmem:[%s207 + $0x6b8] sm:%s200]
                %640 = vst [vmem:[%s208 + $0x35c] sm:%s200] %v639
                %v641 = vld [vmem:[%s207 + $0x6c0] sm:%s200]
                %642 = vst [vmem:[%s208 + $0x360] sm:%s200] %v641
                %v643 = vld [vmem:[%s207 + $0x6c8] sm:%s200]
                %644 = vst [vmem:[%s208 + $0x364] sm:%s200] %v643
                %v645 = vld [vmem:[%s207 + $0x6d0] sm:%s200]
                %646 = vst [vmem:[%s208 + $0x368] sm:%s200] %v645
                %v647 = vld [vmem:[%s207 + $0x6d8] sm:%s200]
                %648 = vst [vmem:[%s208 + $0x36c] sm:%s200] %v647
                %v649 = vld [vmem:[%s207 + $0x6e0] sm:%s200]
                %650 = vst [vmem:[%s208 + $0x370] sm:%s200] %v649
                %v651 = vld [vmem:[%s207 + $0x6e8] sm:%s200]
                %652 = vst [vmem:[%s208 + $0x374] sm:%s200] %v651
                %v653 = vld [vmem:[%s207 + $0x6f0] sm:%s200]
                %654 = vst [vmem:[%s208 + $0x378] sm:%s200] %v653
                %v655 = vld [vmem:[%s207 + $0x6f8] sm:%s200]
                %656 = vst [vmem:[%s208 + $0x37c] sm:%s200] %v655
                %v657 = vld [vmem:[%s207 + $0x700] sm:%s200]
                %658 = vst [vmem:[%s208 + $0x380] sm:%s200] %v657
                %v659 = vld [vmem:[%s207 + $0x708] sm:%s200]
                %660 = vst [vmem:[%s208 + $0x384] sm:%s200] %v659
                %v661 = vld [vmem:[%s207 + $0x710] sm:%s200]
                %662 = vst [vmem:[%s208 + $0x388] sm:%s200] %v661
                %v663 = vld [vmem:[%s207 + $0x718] sm:%s200]
                %664 = vst [vmem:[%s208 + $0x38c] sm:%s200] %v663
                %v665 = vld [vmem:[%s207 + $0x720] sm:%s200]
                %666 = vst [vmem:[%s208 + $0x390] sm:%s200] %v665
                %v667 = vld [vmem:[%s207 + $0x728] sm:%s200]
                %668 = vst [vmem:[%s208 + $0x394] sm:%s200] %v667
                %v669 = vld [vmem:[%s207 + $0x730] sm:%s200]
                %670 = vst [vmem:[%s208 + $0x398] sm:%s200] %v669
                %v671 = vld [vmem:[%s207 + $0x738] sm:%s200]
                %672 = vst [vmem:[%s208 + $0x39c] sm:%s200] %v671
                %v673 = vld [vmem:[%s207 + $0x740] sm:%s200]
                %674 = vst [vmem:[%s208 + $0x3a0] sm:%s200] %v673
                %v675 = vld [vmem:[%s207 + $0x748] sm:%s200]
                %676 = vst [vmem:[%s208 + $0x3a4] sm:%s200] %v675
                %v677 = vld [vmem:[%s207 + $0x750] sm:%s200]
                %678 = vst [vmem:[%s208 + $0x3a8] sm:%s200] %v677
                %v679 = vld [vmem:[%s207 + $0x758] sm:%s200]
                %680 = vst [vmem:[%s208 + $0x3ac] sm:%s200] %v679
                %v681 = vld [vmem:[%s207 + $0x760] sm:%s200]
                %682 = vst [vmem:[%s208 + $0x3b0] sm:%s200] %v681
                %v683 = vld [vmem:[%s207 + $0x768] sm:%s200]
                %684 = vst [vmem:[%s208 + $0x3b4] sm:%s200] %v683
                %v685 = vld [vmem:[%s207 + $0x770] sm:%s200]
                %686 = vst [vmem:[%s208 + $0x3b8] sm:%s200] %v685
                %v687 = vld [vmem:[%s207 + $0x778] sm:%s200]
                %688 = vst [vmem:[%s208 + $0x3bc] sm:%s200] %v687
                %v689 = vld [vmem:[%s207 + $0x780] sm:%s200]
                %690 = vst [vmem:[%s208 + $0x3c0] sm:%s200] %v689
                %v691 = vld [vmem:[%s207 + $0x788] sm:%s200]
                %692 = vst [vmem:[%s208 + $0x3c4] sm:%s200] %v691
                %v693 = vld [vmem:[%s207 + $0x790] sm:%s200]
                %694 = vst [vmem:[%s208 + $0x3c8] sm:%s200] %v693
                %v695 = vld [vmem:[%s207 + $0x798] sm:%s200]
                %696 = vst [vmem:[%s208 + $0x3cc] sm:%s200] %v695
                %v697 = vld [vmem:[%s207 + $0x7a0] sm:%s200]
                %698 = vst [vmem:[%s208 + $0x3d0] sm:%s200] %v697
                %v699 = vld [vmem:[%s207 + $0x7a8] sm:%s200]
                %700 = vst [vmem:[%s208 + $0x3d4] sm:%s200] %v699
                %v701 = vld [vmem:[%s207 + $0x7b0] sm:%s200]
                %702 = vst [vmem:[%s208 + $0x3d8] sm:%s200] %v701
                %v703 = vld [vmem:[%s207 + $0x7b8] sm:%s200]
                %704 = vst [vmem:[%s208 + $0x3dc] sm:%s200] %v703
                %v705 = vld [vmem:[%s207 + $0x7c0] sm:%s200]
                %706 = vst [vmem:[%s208 + $0x3e0] sm:%s200] %v705
                %v707 = vld [vmem:[%s207 + $0x7c8] sm:%s200]
                %708 = vst [vmem:[%s208 + $0x3e4] sm:%s200] %v707
                %v709 = vld [vmem:[%s207 + $0x7d0] sm:%s200]
                %710 = vst [vmem:[%s208 + $0x3e8] sm:%s200] %v709
                %v711 = vld [vmem:[%s207 + $0x7d8] sm:%s200]
                %712 = vst [vmem:[%s208 + $0x3ec] sm:%s200] %v711
                %v713 = vld [vmem:[%s207 + $0x7e0] sm:%s200]
                %714 = vst [vmem:[%s208 + $0x3f0] sm:%s200] %v713
                %v715 = vld [vmem:[%s207 + $0x7e8] sm:%s200]
                %716 = vst [vmem:[%s208 + $0x3f4] sm:%s200] %v715
                %v717 = vld [vmem:[%s207 + $0x7f0] sm:%s200]
                %718 = vst [vmem:[%s208 + $0x3f8] sm:%s200] %v717
                %v719 = vld [vmem:[%s207 + $0x7f8] sm:%s200]
                %720 = vst [vmem:[%s208 + $0x3fc] sm:%s200] %v719
                %v721 = vld [vmem:[%s207 + $0x800] sm:%s200]
                %722 = vst [vmem:[%s208 + $0x400] sm:%s200] %v721
                %v723 = vld [vmem:[%s207 + $0x808] sm:%s200]
                %724 = vst [vmem:[%s208 + $0x404] sm:%s200] %v723
                %v725 = vld [vmem:[%s207 + $0x810] sm:%s200]
                %726 = vst [vmem:[%s208 + $0x408] sm:%s200] %v725
                %v727 = vld [vmem:[%s207 + $0x818] sm:%s200]
                %728 = vst [vmem:[%s208 + $0x40c] sm:%s200] %v727
                %v729 = vld [vmem:[%s207 + $0x820] sm:%s200]
                %730 = vst [vmem:[%s208 + $0x410] sm:%s200] %v729
                %v731 = vld [vmem:[%s207 + $0x828] sm:%s200]
                %732 = vst [vmem:[%s208 + $0x414] sm:%s200] %v731
                %v733 = vld [vmem:[%s207 + $0x830] sm:%s200]
                %734 = vst [vmem:[%s208 + $0x418] sm:%s200] %v733
                %v735 = vld [vmem:[%s207 + $0x838] sm:%s200]
                %736 = vst [vmem:[%s208 + $0x41c] sm:%s200] %v735
                %v737 = vld [vmem:[%s207 + $0x840] sm:%s200]
                %738 = vst [vmem:[%s208 + $0x420] sm:%s200] %v737
                %v739 = vld [vmem:[%s207 + $0x848] sm:%s200]
                %740 = vst [vmem:[%s208 + $0x424] sm:%s200] %v739
                %v741 = vld [vmem:[%s207 + $0x850] sm:%s200]
                %742 = vst [vmem:[%s208 + $0x428] sm:%s200] %v741
                %v743 = vld [vmem:[%s207 + $0x858] sm:%s200]
                %744 = vst [vmem:[%s208 + $0x42c] sm:%s200] %v743
                %v745 = vld [vmem:[%s207 + $0x860] sm:%s200]
                %746 = vst [vmem:[%s208 + $0x430] sm:%s200] %v745
                %v747 = vld [vmem:[%s207 + $0x868] sm:%s200]
                %748 = vst [vmem:[%s208 + $0x434] sm:%s200] %v747
                %v749 = vld [vmem:[%s207 + $0x870] sm:%s200]
                %750 = vst [vmem:[%s208 + $0x438] sm:%s200] %v749
                %v751 = vld [vmem:[%s207 + $0x878] sm:%s200]
                %752 = vst [vmem:[%s208 + $0x43c] sm:%s200] %v751
                %v753 = vld [vmem:[%s207 + $0x880] sm:%s200]
                %754 = vst [vmem:[%s208 + $0x440] sm:%s200] %v753
                %v755 = vld [vmem:[%s207 + $0x888] sm:%s200]
                %756 = vst [vmem:[%s208 + $0x444] sm:%s200] %v755
                %v757 = vld [vmem:[%s207 + $0x890] sm:%s200]
                %758 = vst [vmem:[%s208 + $0x448] sm:%s200] %v757
                %v759 = vld [vmem:[%s207 + $0x898] sm:%s200]
                %760 = vst [vmem:[%s208 + $0x44c] sm:%s200] %v759
                %v761 = vld [vmem:[%s207 + $0x8a0] sm:%s200]
                %762 = vst [vmem:[%s208 + $0x450] sm:%s200] %v761
                %v763 = vld [vmem:[%s207 + $0x8a8] sm:%s200]
                %764 = vst [vmem:[%s208 + $0x454] sm:%s200] %v763
                %v765 = vld [vmem:[%s207 + $0x8b0] sm:%s200]
                %766 = vst [vmem:[%s208 + $0x458] sm:%s200] %v765
                %v767 = vld [vmem:[%s207 + $0x8b8] sm:%s200]
                %768 = vst [vmem:[%s208 + $0x45c] sm:%s200] %v767
                %v769 = vld [vmem:[%s207 + $0x8c0] sm:%s200]
                %770 = vst [vmem:[%s208 + $0x460] sm:%s200] %v769
                %v771 = vld [vmem:[%s207 + $0x8c8] sm:%s200]
                %772 = vst [vmem:[%s208 + $0x464] sm:%s200] %v771
                %v773 = vld [vmem:[%s207 + $0x8d0] sm:%s200]
                %774 = vst [vmem:[%s208 + $0x468] sm:%s200] %v773
                %v775 = vld [vmem:[%s207 + $0x8d8] sm:%s200]
                %776 = vst [vmem:[%s208 + $0x46c] sm:%s200] %v775
                %v777 = vld [vmem:[%s207 + $0x8e0] sm:%s200]
                %778 = vst [vmem:[%s208 + $0x470] sm:%s200] %v777
                %v779 = vld [vmem:[%s207 + $0x8e8] sm:%s200]
                %780 = vst [vmem:[%s208 + $0x474] sm:%s200] %v779
                %v781 = vld [vmem:[%s207 + $0x8f0] sm:%s200]
                %782 = vst [vmem:[%s208 + $0x478] sm:%s200] %v781
                %v783 = vld [vmem:[%s207 + $0x8f8] sm:%s200]
                %784 = vst [vmem:[%s208 + $0x47c] sm:%s200] %v783
                %v785 = vld [vmem:[%s207 + $0x900] sm:%s200]
                %786 = vst [vmem:[%s208 + $0x480] sm:%s200] %v785
                %v787 = vld [vmem:[%s207 + $0x908] sm:%s200]
                %788 = vst [vmem:[%s208 + $0x484] sm:%s200] %v787
                %v789 = vld [vmem:[%s207 + $0x910] sm:%s200]
                %790 = vst [vmem:[%s208 + $0x488] sm:%s200] %v789
                %v791 = vld [vmem:[%s207 + $0x918] sm:%s200]
                %792 = vst [vmem:[%s208 + $0x48c] sm:%s200] %v791
                %v793 = vld [vmem:[%s207 + $0x920] sm:%s200]
                %794 = vst [vmem:[%s208 + $0x490] sm:%s200] %v793
                %v795 = vld [vmem:[%s207 + $0x928] sm:%s200]
                %796 = vst [vmem:[%s208 + $0x494] sm:%s200] %v795
                %v797 = vld [vmem:[%s207 + $0x930] sm:%s200]
                %798 = vst [vmem:[%s208 + $0x498] sm:%s200] %v797
                %v799 = vld [vmem:[%s207 + $0x938] sm:%s200]
                %800 = vst [vmem:[%s208 + $0x49c] sm:%s200] %v799
                %v801 = vld [vmem:[%s207 + $0x940] sm:%s200]
                %802 = vst [vmem:[%s208 + $0x4a0] sm:%s200] %v801
                %v803 = vld [vmem:[%s207 + $0x948] sm:%s200]
                %804 = vst [vmem:[%s208 + $0x4a4] sm:%s200] %v803
                %v805 = vld [vmem:[%s207 + $0x950] sm:%s200]
                %806 = vst [vmem:[%s208 + $0x4a8] sm:%s200] %v805
                %v807 = vld [vmem:[%s207 + $0x958] sm:%s200]
                %808 = vst [vmem:[%s208 + $0x4ac] sm:%s200] %v807
                %v809 = vld [vmem:[%s207 + $0x960] sm:%s200]
                %810 = vst [vmem:[%s208 + $0x4b0] sm:%s200] %v809
                %v811 = vld [vmem:[%s207 + $0x968] sm:%s200]
                %812 = vst [vmem:[%s208 + $0x4b4] sm:%s200] %v811
                %v813 = vld [vmem:[%s207 + $0x970] sm:%s200]
                %814 = vst [vmem:[%s208 + $0x4b8] sm:%s200] %v813
                %v815 = vld [vmem:[%s207 + $0x978] sm:%s200]
                %816 = vst [vmem:[%s208 + $0x4bc] sm:%s200] %v815
                %v817 = vld [vmem:[%s207 + $0x980] sm:%s200]
                %818 = vst [vmem:[%s208 + $0x4c0] sm:%s200] %v817
                %v819 = vld [vmem:[%s207 + $0x988] sm:%s200]
                %820 = vst [vmem:[%s208 + $0x4c4] sm:%s200] %v819
                %v821 = vld [vmem:[%s207 + $0x990] sm:%s200]
                %822 = vst [vmem:[%s208 + $0x4c8] sm:%s200] %v821
                %v823 = vld [vmem:[%s207 + $0x998] sm:%s200]
                %824 = vst [vmem:[%s208 + $0x4cc] sm:%s200] %v823
                %v825 = vld [vmem:[%s207 + $0x9a0] sm:%s200]
                %826 = vst [vmem:[%s208 + $0x4d0] sm:%s200] %v825
                %v827 = vld [vmem:[%s207 + $0x9a8] sm:%s200]
                %828 = vst [vmem:[%s208 + $0x4d4] sm:%s200] %v827
                %v829 = vld [vmem:[%s207 + $0x9b0] sm:%s200]
                %830 = vst [vmem:[%s208 + $0x4d8] sm:%s200] %v829
                %v831 = vld [vmem:[%s207 + $0x9b8] sm:%s200]
                %832 = vst [vmem:[%s208 + $0x4dc] sm:%s200] %v831
                %v833 = vld [vmem:[%s207 + $0x9c0] sm:%s200]
                %834 = vst [vmem:[%s208 + $0x4e0] sm:%s200] %v833
                %v835 = vld [vmem:[%s207 + $0x9c8] sm:%s200]
                %836 = vst [vmem:[%s208 + $0x4e4] sm:%s200] %v835
                %v837 = vld [vmem:[%s207 + $0x9d0] sm:%s200]
                %838 = vst [vmem:[%s208 + $0x4e8] sm:%s200] %v837
                %v839 = vld [vmem:[%s207 + $0x9d8] sm:%s200]
                %840 = vst [vmem:[%s208 + $0x4ec] sm:%s200] %v839
                %v841 = vld [vmem:[%s207 + $0x9e0] sm:%s200]
                %842 = vst [vmem:[%s208 + $0x4f0] sm:%s200] %v841
                %v843 = vld [vmem:[%s207 + $0x9e8] sm:%s200]
                %844 = vst [vmem:[%s208 + $0x4f4] sm:%s200] %v843
                %v845 = vld [vmem:[%s207 + $0x9f0] sm:%s200]
                %846 = vst [vmem:[%s208 + $0x4f8] sm:%s200] %v845
                %v847 = vld [vmem:[%s207 + $0x9f8] sm:%s200]
                %848 = vst [vmem:[%s208 + $0x4fc] sm:%s200] %v847
                %v849 = vld [vmem:[%s207 + $0xa00] sm:%s200]
                %850 = vst [vmem:[%s208 + $0x500] sm:%s200] %v849
                %v851 = vld [vmem:[%s207 + $0xa08] sm:%s200]
                %852 = vst [vmem:[%s208 + $0x504] sm:%s200] %v851
                %v853 = vld [vmem:[%s207 + $0xa10] sm:%s200]
                %854 = vst [vmem:[%s208 + $0x508] sm:%s200] %v853
                %v855 = vld [vmem:[%s207 + $0xa18] sm:%s200]
                %856 = vst [vmem:[%s208 + $0x50c] sm:%s200] %v855
                %v857 = vld [vmem:[%s207 + $0xa20] sm:%s200]
                %858 = vst [vmem:[%s208 + $0x510] sm:%s200] %v857
                %v859 = vld [vmem:[%s207 + $0xa28] sm:%s200]
                %860 = vst [vmem:[%s208 + $0x514] sm:%s200] %v859
                %v861 = vld [vmem:[%s207 + $0xa30] sm:%s200]
                %862 = vst [vmem:[%s208 + $0x518] sm:%s200] %v861
                %v863 = vld [vmem:[%s207 + $0xa38] sm:%s200]
                %864 = vst [vmem:[%s208 + $0x51c] sm:%s200] %v863
                %v865 = vld [vmem:[%s207 + $0xa40] sm:%s200]
                %866 = vst [vmem:[%s208 + $0x520] sm:%s200] %v865
                %v867 = vld [vmem:[%s207 + $0xa48] sm:%s200]
                %868 = vst [vmem:[%s208 + $0x524] sm:%s200] %v867
                %v869 = vld [vmem:[%s207 + $0xa50] sm:%s200]
                %870 = vst [vmem:[%s208 + $0x528] sm:%s200] %v869
                %v871 = vld [vmem:[%s207 + $0xa58] sm:%s200]
                %872 = vst [vmem:[%s208 + $0x52c] sm:%s200] %v871
                %v873 = vld [vmem:[%s207 + $0xa60] sm:%s200]
                %874 = vst [vmem:[%s208 + $0x530] sm:%s200] %v873
                %v875 = vld [vmem:[%s207 + $0xa68] sm:%s200]
                %876 = vst [vmem:[%s208 + $0x534] sm:%s200] %v875
                %v877 = vld [vmem:[%s207 + $0xa70] sm:%s200]
                %878 = vst [vmem:[%s208 + $0x538] sm:%s200] %v877
                %v879 = vld [vmem:[%s207 + $0xa78] sm:%s200]
                %880 = vst [vmem:[%s208 + $0x53c] sm:%s200] %v879
                %v881 = vld [vmem:[%s207 + $0xa80] sm:%s200]
                %882 = vst [vmem:[%s208 + $0x540] sm:%s200] %v881
                %v883 = vld [vmem:[%s207 + $0xa88] sm:%s200]
                %884 = vst [vmem:[%s208 + $0x544] sm:%s200] %v883
                %v885 = vld [vmem:[%s207 + $0xa90] sm:%s200]
                %886 = vst [vmem:[%s208 + $0x548] sm:%s200] %v885
                %v887 = vld [vmem:[%s207 + $0xa98] sm:%s200]
                %888 = vst [vmem:[%s208 + $0x54c] sm:%s200] %v887
                %v889 = vld [vmem:[%s207 + $0xaa0] sm:%s200]
                %890 = vst [vmem:[%s208 + $0x550] sm:%s200] %v889
                %v891 = vld [vmem:[%s207 + $0xaa8] sm:%s200]
                %892 = vst [vmem:[%s208 + $0x554] sm:%s200] %v891
                %v893 = vld [vmem:[%s207 + $0xab0] sm:%s200]
                %894 = vst [vmem:[%s208 + $0x558] sm:%s200] %v893
                %v895 = vld [vmem:[%s207 + $0xab8] sm:%s200]
                %896 = vst [vmem:[%s208 + $0x55c] sm:%s200] %v895
                %v897 = vld [vmem:[%s207 + $0xac0] sm:%s200]
                %898 = vst [vmem:[%s208 + $0x560] sm:%s200] %v897
                %v899 = vld [vmem:[%s207 + $0xac8] sm:%s200]
                %900 = vst [vmem:[%s208 + $0x564] sm:%s200] %v899
                %v901 = vld [vmem:[%s207 + $0xad0] sm:%s200]
                %902 = vst [vmem:[%s208 + $0x568] sm:%s200] %v901
                %v903 = vld [vmem:[%s207 + $0xad8] sm:%s200]
                %904 = vst [vmem:[%s208 + $0x56c] sm:%s200] %v903
                %v905 = vld [vmem:[%s207 + $0xae0] sm:%s200]
                %906 = vst [vmem:[%s208 + $0x570] sm:%s200] %v905
                %v907 = vld [vmem:[%s207 + $0xae8] sm:%s200]
                %908 = vst [vmem:[%s208 + $0x574] sm:%s200] %v907
                %v909 = vld [vmem:[%s207 + $0xaf0] sm:%s200]
                %910 = vst [vmem:[%s208 + $0x578] sm:%s200] %v909
                %v911 = vld [vmem:[%s207 + $0xaf8] sm:%s200]
                %912 = vst [vmem:[%s208 + $0x57c] sm:%s200] %v911
                %v913 = vld [vmem:[%s207 + $0xb00] sm:%s200]
                %914 = vst [vmem:[%s208 + $0x580] sm:%s200] %v913
                %v915 = vld [vmem:[%s207 + $0xb08] sm:%s200]
                %916 = vst [vmem:[%s208 + $0x584] sm:%s200] %v915
                %v917 = vld [vmem:[%s207 + $0xb10] sm:%s200]
                %918 = vst [vmem:[%s208 + $0x588] sm:%s200] %v917
                %v919 = vld [vmem:[%s207 + $0xb18] sm:%s200]
                %920 = vst [vmem:[%s208 + $0x58c] sm:%s200] %v919
                %v921 = vld [vmem:[%s207 + $0xb20] sm:%s200]
                %922 = vst [vmem:[%s208 + $0x590] sm:%s200] %v921
                %v923 = vld [vmem:[%s207 + $0xb28] sm:%s200]
                %924 = vst [vmem:[%s208 + $0x594] sm:%s200] %v923
                %v925 = vld [vmem:[%s207 + $0xb30] sm:%s200]
                %926 = vst [vmem:[%s208 + $0x598] sm:%s200] %v925
                %v927 = vld [vmem:[%s207 + $0xb38] sm:%s200]
                %928 = vst [vmem:[%s208 + $0x59c] sm:%s200] %v927
                %v929 = vld [vmem:[%s207 + $0xb40] sm:%s200]
                %930 = vst [vmem:[%s208 + $0x5a0] sm:%s200] %v929
                %v931 = vld [vmem:[%s207 + $0xb48] sm:%s200]
                %932 = vst [vmem:[%s208 + $0x5a4] sm:%s200] %v931
                %v933 = vld [vmem:[%s207 + $0xb50] sm:%s200]
                %934 = vst [vmem:[%s208 + $0x5a8] sm:%s200] %v933
                %v935 = vld [vmem:[%s207 + $0xb58] sm:%s200]
                %936 = vst [vmem:[%s208 + $0x5ac] sm:%s200] %v935
                %v937 = vld [vmem:[%s207 + $0xb60] sm:%s200]
                %938 = vst [vmem:[%s208 + $0x5b0] sm:%s200] %v937
                %v939 = vld [vmem:[%s207 + $0xb68] sm:%s200]
                %940 = vst [vmem:[%s208 + $0x5b4] sm:%s200] %v939
                %v941 = vld [vmem:[%s207 + $0xb70] sm:%s200]
                %942 = vst [vmem:[%s208 + $0x5b8] sm:%s200] %v941
                %v943 = vld [vmem:[%s207 + $0xb78] sm:%s200]
                %944 = vst [vmem:[%s208 + $0x5bc] sm:%s200] %v943
                %v945 = vld [vmem:[%s207 + $0xb80] sm:%s200]
                %946 = vst [vmem:[%s208 + $0x5c0] sm:%s200] %v945
                %v947 = vld [vmem:[%s207 + $0xb88] sm:%s200]
                %948 = vst [vmem:[%s208 + $0x5c4] sm:%s200] %v947
                %v949 = vld [vmem:[%s207 + $0xb90] sm:%s200]
                %950 = vst [vmem:[%s208 + $0x5c8] sm:%s200] %v949
                %v951 = vld [vmem:[%s207 + $0xb98] sm:%s200]
                %952 = vst [vmem:[%s208 + $0x5cc] sm:%s200] %v951
                %v953 = vld [vmem:[%s207 + $0xba0] sm:%s200]
                %954 = vst [vmem:[%s208 + $0x5d0] sm:%s200] %v953
                %v955 = vld [vmem:[%s207 + $0xba8] sm:%s200]
                %956 = vst [vmem:[%s208 + $0x5d4] sm:%s200] %v955
                %v957 = vld [vmem:[%s207 + $0xbb0] sm:%s200]
                %958 = vst [vmem:[%s208 + $0x5d8] sm:%s200] %v957
                %v959 = vld [vmem:[%s207 + $0xbb8] sm:%s200]
                %960 = vst [vmem:[%s208 + $0x5dc] sm:%s200] %v959
                %v961 = vld [vmem:[%s207 + $0xbc0] sm:%s200]
                %962 = vst [vmem:[%s208 + $0x5e0] sm:%s200] %v961
                %v963 = vld [vmem:[%s207 + $0xbc8] sm:%s200]
                %964 = vst [vmem:[%s208 + $0x5e4] sm:%s200] %v963
                %v965 = vld [vmem:[%s207 + $0xbd0] sm:%s200]
                %966 = vst [vmem:[%s208 + $0x5e8] sm:%s200] %v965
                %v967 = vld [vmem:[%s207 + $0xbd8] sm:%s200]
                %968 = vst [vmem:[%s208 + $0x5ec] sm:%s200] %v967
                %v969 = vld [vmem:[%s207 + $0xbe0] sm:%s200]
                %970 = vst [vmem:[%s208 + $0x5f0] sm:%s200] %v969
                %v971 = vld [vmem:[%s207 + $0xbe8] sm:%s200]
                %972 = vst [vmem:[%s208 + $0x5f4] sm:%s200] %v971
                %v973 = vld [vmem:[%s207 + $0xbf0] sm:%s200]
                %974 = vst [vmem:[%s208 + $0x5f8] sm:%s200] %v973
                %v975 = vld [vmem:[%s207 + $0xbf8] sm:%s200]
                %976 = vst [vmem:[%s208 + $0x5fc] sm:%s200] %v975
                %v977 = vld [vmem:[%s207 + $0xc00] sm:%s200]
                %978 = vst [vmem:[%s208 + $0x600] sm:%s200] %v977
                %v979 = vld [vmem:[%s207 + $0xc08] sm:%s200]
                %980 = vst [vmem:[%s208 + $0x604] sm:%s200] %v979
                %v981 = vld [vmem:[%s207 + $0xc10] sm:%s200]
                %982 = vst [vmem:[%s208 + $0x608] sm:%s200] %v981
                %v983 = vld [vmem:[%s207 + $0xc18] sm:%s200]
                %984 = vst [vmem:[%s208 + $0x60c] sm:%s200] %v983
                %v985 = vld [vmem:[%s207 + $0xc20] sm:%s200]
                %986 = vst [vmem:[%s208 + $0x610] sm:%s200] %v985
                %v987 = vld [vmem:[%s207 + $0xc28] sm:%s200]
                %988 = vst [vmem:[%s208 + $0x614] sm:%s200] %v987
                %v989 = vld [vmem:[%s207 + $0xc30] sm:%s200]
                %990 = vst [vmem:[%s208 + $0x618] sm:%s200] %v989
                %v991 = vld [vmem:[%s207 + $0xc38] sm:%s200]
                %992 = vst [vmem:[%s208 + $0x61c] sm:%s200] %v991
                %v993 = vld [vmem:[%s207 + $0xc40] sm:%s200]
                %994 = vst [vmem:[%s208 + $0x620] sm:%s200] %v993
                %v995 = vld [vmem:[%s207 + $0xc48] sm:%s200]
                %996 = vst [vmem:[%s208 + $0x624] sm:%s200] %v995
                %v997 = vld [vmem:[%s207 + $0xc50] sm:%s200]
                %998 = vst [vmem:[%s208 + $0x628] sm:%s200] %v997
                %v999 = vld [vmem:[%s207 + $0xc58] sm:%s200]
                %1000 = vst [vmem:[%s208 + $0x62c] sm:%s200] %v999
                %v1001 = vld [vmem:[%s207 + $0xc60] sm:%s200]
                %1002 = vst [vmem:[%s208 + $0x630] sm:%s200] %v1001
                %v1003 = vld [vmem:[%s207 + $0xc68] sm:%s200]
                %1004 = vst [vmem:[%s208 + $0x634] sm:%s200] %v1003
                %v1005 = vld [vmem:[%s207 + $0xc70] sm:%s200]
                %1006 = vst [vmem:[%s208 + $0x638] sm:%s200] %v1005
                %v1007 = vld [vmem:[%s207 + $0xc78] sm:%s200]
                %1008 = vst [vmem:[%s208 + $0x63c] sm:%s200] %v1007
                %v1009 = vld [vmem:[%s207 + $0xc80] sm:%s200]
                %1010 = vst [vmem:[%s208 + $0x640] sm:%s200] %v1009
                %v1011 = vld [vmem:[%s207 + $0xc88] sm:%s200]
                %1012 = vst [vmem:[%s208 + $0x644] sm:%s200] %v1011
                %v1013 = vld [vmem:[%s207 + $0xc90] sm:%s200]
                %1014 = vst [vmem:[%s208 + $0x648] sm:%s200] %v1013
                %v1015 = vld [vmem:[%s207 + $0xc98] sm:%s200]
                %1016 = vst [vmem:[%s208 + $0x64c] sm:%s200] %v1015
                %v1017 = vld [vmem:[%s207 + $0xca0] sm:%s200]
                %1018 = vst [vmem:[%s208 + $0x650] sm:%s200] %v1017
                %v1019 = vld [vmem:[%s207 + $0xca8] sm:%s200]
                %1020 = vst [vmem:[%s208 + $0x654] sm:%s200] %v1019
                %v1021 = vld [vmem:[%s207 + $0xcb0] sm:%s200]
                %1022 = vst [vmem:[%s208 + $0x658] sm:%s200] %v1021
                %v1023 = vld [vmem:[%s207 + $0xcb8] sm:%s200]
                %1024 = vst [vmem:[%s208 + $0x65c] sm:%s200] %v1023
                %v1025 = vld [vmem:[%s207 + $0xcc0] sm:%s200]
                %1026 = vst [vmem:[%s208 + $0x660] sm:%s200] %v1025
                %v1027 = vld [vmem:[%s207 + $0xcc8] sm:%s200]
                %1028 = vst [vmem:[%s208 + $0x664] sm:%s200] %v1027
                %v1029 = vld [vmem:[%s207 + $0xcd0] sm:%s200]
                %1030 = vst [vmem:[%s208 + $0x668] sm:%s200] %v1029
                %v1031 = vld [vmem:[%s207 + $0xcd8] sm:%s200]
                %1032 = vst [vmem:[%s208 + $0x66c] sm:%s200] %v1031
                %v1033 = vld [vmem:[%s207 + $0xce0] sm:%s200]
                %1034 = vst [vmem:[%s208 + $0x670] sm:%s200] %v1033
                %v1035 = vld [vmem:[%s207 + $0xce8] sm:%s200]
                %1036 = vst [vmem:[%s208 + $0x674] sm:%s200] %v1035
                %v1037 = vld [vmem:[%s207 + $0xcf0] sm:%s200]
                %1038 = vst [vmem:[%s208 + $0x678] sm:%s200] %v1037
                %v1039 = vld [vmem:[%s207 + $0xcf8] sm:%s200]
                %1040 = vst [vmem:[%s208 + $0x67c] sm:%s200] %v1039
                %v1041 = vld [vmem:[%s207 + $0xd00] sm:%s200]
                %1042 = vst [vmem:[%s208 + $0x680] sm:%s200] %v1041
                %v1043 = vld [vmem:[%s207 + $0xd08] sm:%s200]
                %1044 = vst [vmem:[%s208 + $0x684] sm:%s200] %v1043
                %v1045 = vld [vmem:[%s207 + $0xd10] sm:%s200]
                %1046 = vst [vmem:[%s208 + $0x688] sm:%s200] %v1045
                %v1047 = vld [vmem:[%s207 + $0xd18] sm:%s200]
                %1048 = vst [vmem:[%s208 + $0x68c] sm:%s200] %v1047
                %v1049 = vld [vmem:[%s207 + $0xd20] sm:%s200]
                %1050 = vst [vmem:[%s208 + $0x690] sm:%s200] %v1049
                %v1051 = vld [vmem:[%s207 + $0xd28] sm:%s200]
                %1052 = vst [vmem:[%s208 + $0x694] sm:%s200] %v1051
                %v1053 = vld [vmem:[%s207 + $0xd30] sm:%s200]
                %1054 = vst [vmem:[%s208 + $0x698] sm:%s200] %v1053
                %v1055 = vld [vmem:[%s207 + $0xd38] sm:%s200]
                %1056 = vst [vmem:[%s208 + $0x69c] sm:%s200] %v1055
                %v1057 = vld [vmem:[%s207 + $0xd40] sm:%s200]
                %1058 = vst [vmem:[%s208 + $0x6a0] sm:%s200] %v1057
                %v1059 = vld [vmem:[%s207 + $0xd48] sm:%s200]
                %1060 = vst [vmem:[%s208 + $0x6a4] sm:%s200] %v1059
                %v1061 = vld [vmem:[%s207 + $0xd50] sm:%s200]
                %1062 = vst [vmem:[%s208 + $0x6a8] sm:%s200] %v1061
                %v1063 = vld [vmem:[%s207 + $0xd58] sm:%s200]
                %1064 = vst [vmem:[%s208 + $0x6ac] sm:%s200] %v1063
                %v1065 = vld [vmem:[%s207 + $0xd60] sm:%s200]
                %1066 = vst [vmem:[%s208 + $0x6b0] sm:%s200] %v1065
                %v1067 = vld [vmem:[%s207 + $0xd68] sm:%s200]
                %1068 = vst [vmem:[%s208 + $0x6b4] sm:%s200] %v1067
                %v1069 = vld [vmem:[%s207 + $0xd70] sm:%s200]
                %1070 = vst [vmem:[%s208 + $0x6b8] sm:%s200] %v1069
                %v1071 = vld [vmem:[%s207 + $0xd78] sm:%s200]
                %1072 = vst [vmem:[%s208 + $0x6bc] sm:%s200] %v1071
              $region41: #{simple_3dcnn_encoder.5} parent=35 // loop_footer
                %s206 = sadd.s32 1, %s202
              $region42: #{simple_3dcnn_encoder.5} parent=35 // loop_footer_branch
                %201 = sbr.rel target = $region38
              $region43: #{simple_3dcnn_encoder.5} parent=35 // loop_exit
                _
            $region36: #{simple_3dcnn_encoder.5} parent=27 // pred_fallthru
              _
          $region28: #{simple_3dcnn_encoder.5} parent=23 // pred_fallthru
            _
          %3711 = vnop
        $region24: #{simple_3dcnn_encoder.5} parent=19 // pred_fallthru
          _
        // Predicated region
        $region73: #{simple_3dcnn_encoder.5} parent=19 // pred_check
          %p3712 = pneg %p78
        $region74: #{simple_3dcnn_encoder.5} parent=19 // pred_check_branch
          %3714 = sbr.rel (%p3712) target = $region76
        $region75: #{simple_3dcnn_encoder.5} parent=19 // pred_region
          %p3715 = scmp.lt.s32.totalorder %s11, 1
          %s3716 = scalar_select %p3715, %s11, 1
          %s3717 = scalar_lea.vmem %s2, %s3716
        $region76: #{simple_3dcnn_encoder.5} parent=19 // pred_fallthru
          _
        // Predicated region
        $region77: #{simple_3dcnn_encoder.5} parent=19 // pred_check
          %p3718 = pneg %p104
        $region78: #{simple_3dcnn_encoder.5} parent=19 // pred_check_branch
          %3720 = sbr.rel (%p3718) target = $region80
        $region79: #{simple_3dcnn_encoder.5} parent=19 // pred_region
          %p3721 = scmp.lt.s32.totalorder %s11, 1
          %s3722 = scalar_select %p3721, %s11, 1
          %s3723 = scalar_lea.vmem %s3, %s3722
        $region80: #{simple_3dcnn_encoder.5} parent=19 // pred_fallthru
          _
        // Predicated region
        $region81: #{simple_3dcnn_encoder.5} parent=19 // pred_check
          %p3724 = pneg %p130
        $region82: #{simple_3dcnn_encoder.5} parent=19 // pred_check_branch
          %3726 = sbr.rel (%p3724) target = $region84
        $region83: #{simple_3dcnn_encoder.5} parent=19 // pred_region
          %p3727 = scmp.lt.s32.totalorder %s11, 1
          %s3728 = scalar_select %p3727, %s11, 1
          %s3729 = scalar_lea.vmem %s4, %s3728
        $region84: #{simple_3dcnn_encoder.5} parent=19 // pred_fallthru
          _
      $region20: #{simple_3dcnn_encoder.5} parent=5 // pred_fallthru
        _
      %p3730 = scmp.le.s32.totalorder 1, %s11
      %p3731 = scmp.lt.s32.totalorder %s11, 3
      %p3732 = pnand %p3730, %p3731
      %p3733 = pneg %p3732
      // Predicated region
      $region85: #{simple_3dcnn_encoder.5} parent=5 // pred_check
        _
      $region86: #{simple_3dcnn_encoder.5} parent=5 // pred_check_branch
        %3735 = sbr.rel (%p3732) target = $region88
      $region87: #{simple_3dcnn_encoder.5} parent=5 // pred_region
        %s3736 = ssub.s32 %s11, 1
        %s3737 = sand.u32 %s45, 1
        %s3738 = sand.u32 %s45, 1
        %s3739 = smul.addr %s3738, 1728
        %s3740 = scalar_lea.vmem [#allocation2], %s3739
        // Predicated region
        $region89: #{simple_3dcnn_encoder.5} parent=87 // pred_check
          %p3741 = pneg %p58
        $region90: #{simple_3dcnn_encoder.5} parent=87 // pred_check_branch
          %3743 = sbr.rel (%p3741) target = $region92
        $region91: #{simple_3dcnn_encoder.5} parent=87 // pred_region
          _
        $region92: #{simple_3dcnn_encoder.5} parent=87 // pred_fallthru
          _
        %p3744 = pneg %p32
        %p3745 = pneg %p29
        %s3746 = sand.u32 %s45, 1
        %s3747 = sand.u32 %s45, 1
        %s3748 = smul.addr %s3747, 1728
        %s3749 = scalar_lea.vmem [#allocation2], %s3748
        %p3750 = pneg %p58
        %p3751 = pneg %p55
        %p3752 = scmp.lt.s32.totalorder %s16, 1
        %s3753 = scalar_select %p3752, %s16, 1
        %s3754 = scalar_lea.vmem %s2, %s3753
        %p3755 = pneg %p84
        %p3756 = pneg %p81
        %p3757 = scmp.lt.s32.totalorder %s16, 1
        %s3758 = scalar_select %p3757, %s16, 1
        %s3759 = scalar_lea.vmem %s3, %s3758
        %p3760 = pneg %p110
        %p3761 = pneg %p107
        %p3762 = scmp.lt.s32.totalorder %s16, 1
        %s3763 = scalar_select %p3762, %s16, 1
        %s3764 = scalar_lea.vmem %s4, %s3763
        %p3765 = pneg %p136
        %p3766 = pneg %p133
        %p3767 = pneg %p162
        %p3768 = pneg %p159
        %p3769 = scmp.lt.s32.totalorder %s16, 1
        %s3770 = scalar_select %p3769, %s16, 1
        %s3771 = smul.addr %s3770, 2
        %s3772 = scalar_lea.vmem %s5, %s3771
        %p3773 = scmp.lt.s32.totalorder %s16, 1
        %s3774 = scalar_select %p3773, %s16, 1
        %s3775 = scalar_lea.vmem %s2, %s3774
        %p3776 = scmp.lt.s32.totalorder %s16, 1
        %s3777 = scalar_select %p3776, %s16, 1
        %s3778 = scalar_lea.vmem %s3, %s3777
        %p3779 = scmp.lt.s32.totalorder %s16, 1
        %s3780 = scalar_select %p3779, %s16, 1
        %s3781 = scalar_lea.vmem %s4, %s3780
        %p3782 = scmp.lt.s32.totalorder %s16, 1
        %s3783 = scalar_select %p3782, %s16, 1
        %s3784 = smul.addr %s3783, 2
        %s3785 = scalar_lea.vmem %s5, %s3784
        %v3786 = vld [vmem:[%s0] sm:$0xff]
        %v3787 = vld [vmem:[%s0 + $0x8] sm:$0xff]
        %v3788 = vld [vmem:[%s0 + $0x10] sm:$0xff]
        %v3789 = vld [vmem:[%s0 + $0x18] sm:$0x7]
        %v3790 = vld [vmem:[%s3740] sm:$0xf]
        %v3791 = vld [vmem:[%s3740 + $0x4] sm:$0xf]
        %v3792 = vld [vmem:[%s3740 + $0x8] sm:$0xf]
        %v3793 = vld [vmem:[%s3740 + $0xc] sm:$0xf]
        %v3794 = vld [vmem:[%s3740 + $0x10] sm:$0xf]
        %v3795 = vld [vmem:[%s3740 + $0x14] sm:$0xf]
        %v3796 = vld [vmem:[%s3740 + $0x18] sm:$0xf]
        %v3797 = vld [vmem:[%s3740 + $0x1c] sm:$0xf]
        %v3798 = vld [vmem:[%s3740 + $0x20] sm:$0xf]
        %v3799 = vld [vmem:[%s3740 + $0x24] sm:$0xf]
        %v3800 = vld [vmem:[%s3740 + $0x28] sm:$0xf]
        %v3801 = vld [vmem:[%s3740 + $0x2c] sm:$0xf]
        %v3802 = vld [vmem:[%s3740 + $0x30] sm:$0xf]
        %v3803 = vld [vmem:[%s3740 + $0x34] sm:$0xf]
        %v3804 = vld [vmem:[%s3740 + $0x38] sm:$0xf]
        %v3805 = vld [vmem:[%s3740 + $0x3c] sm:$0xf]
        %v3806 = vld [vmem:[%s3740 + $0x40] sm:$0xf]
        %v3807 = vld [vmem:[%s3740 + $0x44] sm:$0xf]
        %v3808 = vld [vmem:[%s3740 + $0x48] sm:$0xf]
        %v3809 = vld [vmem:[%s3740 + $0x4c] sm:$0xf]
        %v3810 = vld [vmem:[%s3740 + $0x50] sm:$0xf]
        %v3811 = vld [vmem:[%s3740 + $0x54] sm:$0xf]
        %v3812 = vld [vmem:[%s3740 + $0x58] sm:$0xf]
        %v3813 = vld [vmem:[%s3740 + $0x5c] sm:$0xf]
        %v3814 = vld [vmem:[%s3740 + $0x60] sm:$0xf]
        %v3815 = vld [vmem:[%s3740 + $0x64] sm:$0xf]
        %v3816 = vld [vmem:[%s3740 + $0x68] sm:$0xf]
        %v3817 = vld [vmem:[%s3740 + $0x6c] sm:$0xf]
        %v3818 = vld [vmem:[%s3740 + $0x70] sm:$0xf]
        %v3819 = vld [vmem:[%s3740 + $0x74] sm:$0xf]
        %v3820 = vld [vmem:[%s3740 + $0x78] sm:$0xf]
        %v3821 = vld [vmem:[%s3740 + $0x7c] sm:$0xf]
        %v3822 = vld [vmem:[%s3740 + $0x80] sm:$0xf]
        %v3823 = vld [vmem:[%s3740 + $0x84] sm:$0xf]
        %v3824 = vld [vmem:[%s3740 + $0x88] sm:$0xf]
        %v3825 = vld [vmem:[%s3740 + $0x8c] sm:$0xf]
        %v3826 = vld [vmem:[%s3740 + $0x90] sm:$0xf]
        %v3827 = vld [vmem:[%s3740 + $0x94] sm:$0xf]
        %v3828 = vld [vmem:[%s3740 + $0x98] sm:$0xf]
        %v3829 = vld [vmem:[%s3740 + $0x9c] sm:$0xf]
        %v3830 = vld [vmem:[%s3740 + $0xa0] sm:$0xf]
        %v3831 = vld [vmem:[%s3740 + $0xa4] sm:$0xf]
        %v3832 = vld [vmem:[%s3740 + $0xa8] sm:$0xf]
        %v3833 = vld [vmem:[%s3740 + $0xac] sm:$0xf]
        %v3834 = vld [vmem:[%s3740 + $0xb0] sm:$0xf]
        %v3835 = vld [vmem:[%s3740 + $0xb4] sm:$0xf]
        %v3836 = vld [vmem:[%s3740 + $0xb8] sm:$0xf]
        %v3837 = vld [vmem:[%s3740 + $0xbc] sm:$0xf]
        %v3838 = vld [vmem:[%s3740 + $0xc0] sm:$0xf]
        %v3839 = vld [vmem:[%s3740 + $0xc4] sm:$0xf]
        %v3840 = vld [vmem:[%s3740 + $0xc8] sm:$0xf]
        %v3841 = vld [vmem:[%s3740 + $0xcc] sm:$0xf]
        %v3842 = vld [vmem:[%s3740 + $0xd0] sm:$0xf]
        %v3843 = vld [vmem:[%s3740 + $0xd4] sm:$0xf]
        %v3844 = vld [vmem:[%s3740 + $0xd8] sm:$0xf]
        %v3845 = vld [vmem:[%s3740 + $0xdc] sm:$0xf]
        %v3846 = vld [vmem:[%s3740 + $0xe0] sm:$0xf]
        %v3847 = vld [vmem:[%s3740 + $0xe4] sm:$0xf]
        %v3848 = vld [vmem:[%s3740 + $0xe8] sm:$0xf]
        %v3849 = vld [vmem:[%s3740 + $0xec] sm:$0xf]
        %v3850 = vld [vmem:[%s3740 + $0xf0] sm:$0xf]
        %v3851 = vld [vmem:[%s3740 + $0xf4] sm:$0xf]
        %v3852 = vld [vmem:[%s3740 + $0xf8] sm:$0xf]
        %v3853 = vld [vmem:[%s3740 + $0xfc] sm:$0xf]
        %v3854 = vld [vmem:[%s3740 + $0x100] sm:$0xf]
        %v3855 = vld [vmem:[%s3740 + $0x104] sm:$0xf]
        %v3856 = vld [vmem:[%s3740 + $0x108] sm:$0xf]
        %v3857 = vld [vmem:[%s3740 + $0x10c] sm:$0xf]
        %v3858 = vld [vmem:[%s3740 + $0x110] sm:$0xf]
        %v3859 = vld [vmem:[%s3740 + $0x114] sm:$0xf]
        %v3860 = vld [vmem:[%s3740 + $0x118] sm:$0xf]
        %v3861 = vld [vmem:[%s3740 + $0x11c] sm:$0xf]
        %v3862 = vld [vmem:[%s3740 + $0x120] sm:$0xf]
        %v3863 = vld [vmem:[%s3740 + $0x124] sm:$0xf]
        %v3864 = vld [vmem:[%s3740 + $0x128] sm:$0xf]
        %v3865 = vld [vmem:[%s3740 + $0x12c] sm:$0xf]
        %v3866 = vld [vmem:[%s3740 + $0x130] sm:$0xf]
        %v3867 = vld [vmem:[%s3740 + $0x134] sm:$0xf]
        %v3868 = vld [vmem:[%s3740 + $0x138] sm:$0xf]
        %v3869 = vld [vmem:[%s3740 + $0x13c] sm:$0xf]
        %v3870 = vld [vmem:[%s3740 + $0x140] sm:$0xf]
        %v3871 = vld [vmem:[%s3740 + $0x144] sm:$0xf]
        %v3872 = vld [vmem:[%s3740 + $0x148] sm:$0xf]
        %v3873 = vld [vmem:[%s3740 + $0x14c] sm:$0xf]
        %v3874 = vld [vmem:[%s3740 + $0x150] sm:$0xf]
        %v3875 = vld [vmem:[%s3740 + $0x154] sm:$0xf]
        %v3876 = vld [vmem:[%s3740 + $0x158] sm:$0xf]
        %v3877 = vld [vmem:[%s3740 + $0x15c] sm:$0xf]
        %v3878 = vld [vmem:[%s3740 + $0x160] sm:$0xf]
        %v3879 = vld [vmem:[%s3740 + $0x164] sm:$0xf]
        %v3880 = vld [vmem:[%s3740 + $0x168] sm:$0xf]
        %v3881 = vld [vmem:[%s3740 + $0x16c] sm:$0xf]
        %v3882 = vld [vmem:[%s3740 + $0x170] sm:$0xf]
        %v3883 = vld [vmem:[%s3740 + $0x174] sm:$0xf]
        %v3884 = vld [vmem:[%s3740 + $0x178] sm:$0xf]
        %v3885 = vld [vmem:[%s3740 + $0x17c] sm:$0xf]
        %v3886 = vld [vmem:[%s3740 + $0x180] sm:$0xf]
        %v3887 = vld [vmem:[%s3740 + $0x184] sm:$0xf]
        %v3888 = vld [vmem:[%s3740 + $0x188] sm:$0xf]
        %v3889 = vld [vmem:[%s3740 + $0x18c] sm:$0xf]
        %v3890 = vld [vmem:[%s3740 + $0x190] sm:$0xf]
        %v3891 = vld [vmem:[%s3740 + $0x194] sm:$0xf]
        %v3892 = vld [vmem:[%s3740 + $0x198] sm:$0xf]
        %v3893 = vld [vmem:[%s3740 + $0x19c] sm:$0xf]
        %v3894 = vld [vmem:[%s3740 + $0x1a0] sm:$0xf]
        %v3895 = vld [vmem:[%s3740 + $0x1a4] sm:$0xf]
        %v3896 = vld [vmem:[%s3740 + $0x1a8] sm:$0xf]
        %v3897 = vld [vmem:[%s3740 + $0x1ac] sm:$0xf]
        %v3898 = vld [vmem:[%s3740 + $0x1b0] sm:$0xf]
        %v3899 = vld [vmem:[%s3740 + $0x1b4] sm:$0xf]
        %v3900 = vld [vmem:[%s3740 + $0x1b8] sm:$0xf]
        %v3901 = vld [vmem:[%s3740 + $0x1bc] sm:$0xf]
        %v3902 = vld [vmem:[%s3740 + $0x1c0] sm:$0xf]
        %v3903 = vld [vmem:[%s3740 + $0x1c4] sm:$0xf]
        %v3904 = vld [vmem:[%s3740 + $0x1c8] sm:$0xf]
        %v3905 = vld [vmem:[%s3740 + $0x1cc] sm:$0xf]
        %v3906 = vld [vmem:[%s3740 + $0x1d0] sm:$0xf]
        %v3907 = vld [vmem:[%s3740 + $0x1d4] sm:$0xf]
        %v3908 = vld [vmem:[%s3740 + $0x1d8] sm:$0xf]
        %v3909 = vld [vmem:[%s3740 + $0x1dc] sm:$0xf]
        %v3910 = vld [vmem:[%s3740 + $0x1e0] sm:$0xf]
        %v3911 = vld [vmem:[%s3740 + $0x1e4] sm:$0xf]
        %v3912 = vld [vmem:[%s3740 + $0x1e8] sm:$0xf]
        %v3913 = vld [vmem:[%s3740 + $0x1ec] sm:$0xf]
        %v3914 = vld [vmem:[%s3740 + $0x1f0] sm:$0xf]
        %v3915 = vld [vmem:[%s3740 + $0x1f4] sm:$0xf]
        %v3916 = vld [vmem:[%s3740 + $0x1f8] sm:$0xf]
        %v3917 = vld [vmem:[%s3740 + $0x1fc] sm:$0xf]
        %v3918 = vld [vmem:[%s3740 + $0x200] sm:$0xf]
        %v3919 = vld [vmem:[%s3740 + $0x204] sm:$0xf]
        %v3920 = vld [vmem:[%s3740 + $0x208] sm:$0xf]
        %v3921 = vld [vmem:[%s3740 + $0x20c] sm:$0xf]
        %v3922 = vld [vmem:[%s3740 + $0x210] sm:$0xf]
        %v3923 = vld [vmem:[%s3740 + $0x214] sm:$0xf]
        %v3924 = vld [vmem:[%s3740 + $0x218] sm:$0xf]
        %v3925 = vld [vmem:[%s3740 + $0x21c] sm:$0xf]
        %v3926 = vld [vmem:[%s3740 + $0x220] sm:$0xf]
        %v3927 = vld [vmem:[%s3740 + $0x224] sm:$0xf]
        %v3928 = vld [vmem:[%s3740 + $0x228] sm:$0xf]
        %v3929 = vld [vmem:[%s3740 + $0x22c] sm:$0xf]
        %v3930 = vld [vmem:[%s3740 + $0x230] sm:$0xf]
        %v3931 = vld [vmem:[%s3740 + $0x234] sm:$0xf]
        %v3932 = vld [vmem:[%s3740 + $0x238] sm:$0xf]
        %v3933 = vld [vmem:[%s3740 + $0x23c] sm:$0xf]
        %v3934 = vld [vmem:[%s3740 + $0x240] sm:$0xf]
        %v3935 = vld [vmem:[%s3740 + $0x244] sm:$0xf]
        %v3936 = vld [vmem:[%s3740 + $0x248] sm:$0xf]
        %v3937 = vld [vmem:[%s3740 + $0x24c] sm:$0xf]
        %v3938 = vld [vmem:[%s3740 + $0x250] sm:$0xf]
        %v3939 = vld [vmem:[%s3740 + $0x254] sm:$0xf]
        %v3940 = vld [vmem:[%s3740 + $0x258] sm:$0xf]
        %v3941 = vld [vmem:[%s3740 + $0x25c] sm:$0xf]
        %v3942 = vld [vmem:[%s3740 + $0x260] sm:$0xf]
        %v3943 = vld [vmem:[%s3740 + $0x264] sm:$0xf]
        %v3944 = vld [vmem:[%s3740 + $0x268] sm:$0xf]
        %v3945 = vld [vmem:[%s3740 + $0x26c] sm:$0xf]
        %v3946 = vld [vmem:[%s3740 + $0x270] sm:$0xf]
        %v3947 = vld [vmem:[%s3740 + $0x274] sm:$0xf]
        %v3948 = vld [vmem:[%s3740 + $0x278] sm:$0xf]
        %v3949 = vld [vmem:[%s3740 + $0x27c] sm:$0xf]
        %v3950 = vld [vmem:[%s3740 + $0x280] sm:$0xf]
        %v3951 = vld [vmem:[%s3740 + $0x284] sm:$0xf]
        %v3952 = vld [vmem:[%s3740 + $0x288] sm:$0xf]
        %v3953 = vld [vmem:[%s3740 + $0x28c] sm:$0xf]
        %v3954 = vld [vmem:[%s3740 + $0x290] sm:$0xf]
        %v3955 = vld [vmem:[%s3740 + $0x294] sm:$0xf]
        %v3956 = vld [vmem:[%s3740 + $0x298] sm:$0xf]
        %v3957 = vld [vmem:[%s3740 + $0x29c] sm:$0xf]
        %v3958 = vld [vmem:[%s3740 + $0x2a0] sm:$0xf]
        %v3959 = vld [vmem:[%s3740 + $0x2a4] sm:$0xf]
        %v3960 = vld [vmem:[%s3740 + $0x2a8] sm:$0xf]
        %v3961 = vld [vmem:[%s3740 + $0x2ac] sm:$0xf]
        %v3962 = vld [vmem:[%s3740 + $0x2b0] sm:$0xf]
        %v3963 = vld [vmem:[%s3740 + $0x2b4] sm:$0xf]
        %v3964 = vld [vmem:[%s3740 + $0x2b8] sm:$0xf]
        %v3965 = vld [vmem:[%s3740 + $0x2bc] sm:$0xf]
        %v3966 = vld [vmem:[%s3740 + $0x2c0] sm:$0xf]
        %v3967 = vld [vmem:[%s3740 + $0x2c4] sm:$0xf]
        %v3968 = vld [vmem:[%s3740 + $0x2c8] sm:$0xf]
        %v3969 = vld [vmem:[%s3740 + $0x2cc] sm:$0xf]
        %v3970 = vld [vmem:[%s3740 + $0x2d0] sm:$0xf]
        %v3971 = vld [vmem:[%s3740 + $0x2d4] sm:$0xf]
        %v3972 = vld [vmem:[%s3740 + $0x2d8] sm:$0xf]
        %v3973 = vld [vmem:[%s3740 + $0x2dc] sm:$0xf]
        %v3974 = vld [vmem:[%s3740 + $0x2e0] sm:$0xf]
        %v3975 = vld [vmem:[%s3740 + $0x2e4] sm:$0xf]
        %v3976 = vld [vmem:[%s3740 + $0x2e8] sm:$0xf]
        %v3977 = vld [vmem:[%s3740 + $0x2ec] sm:$0xf]
        %v3978 = vld [vmem:[%s3740 + $0x2f0] sm:$0xf]
        %v3979 = vld [vmem:[%s3740 + $0x2f4] sm:$0xf]
        %v3980 = vld [vmem:[%s3740 + $0x2f8] sm:$0xf]
        %v3981 = vld [vmem:[%s3740 + $0x2fc] sm:$0xf]
        %v3982 = vld [vmem:[%s3740 + $0x300] sm:$0xf]
        %v3983 = vld [vmem:[%s3740 + $0x304] sm:$0xf]
        %v3984 = vld [vmem:[%s3740 + $0x308] sm:$0xf]
        %v3985 = vld [vmem:[%s3740 + $0x30c] sm:$0xf]
        %v3986 = vld [vmem:[%s3740 + $0x310] sm:$0xf]
        %v3987 = vld [vmem:[%s3740 + $0x314] sm:$0xf]
        %v3988 = vld [vmem:[%s3740 + $0x318] sm:$0xf]
        %v3989 = vld [vmem:[%s3740 + $0x31c] sm:$0xf]
        %v3990 = vld [vmem:[%s3740 + $0x320] sm:$0xf]
        %v3991 = vld [vmem:[%s3740 + $0x324] sm:$0xf]
        %v3992 = vld [vmem:[%s3740 + $0x328] sm:$0xf]
        %v3993 = vld [vmem:[%s3740 + $0x32c] sm:$0xf]
        %v3994 = vld [vmem:[%s3740 + $0x330] sm:$0xf]
        %v3995 = vld [vmem:[%s3740 + $0x334] sm:$0xf]
        %v3996 = vld [vmem:[%s3740 + $0x338] sm:$0xf]
        %v3997 = vld [vmem:[%s3740 + $0x33c] sm:$0xf]
        %v3998 = vld [vmem:[%s3740 + $0x340] sm:$0xf]
        %v3999 = vld [vmem:[%s3740 + $0x344] sm:$0xf]
        %v4000 = vld [vmem:[%s3740 + $0x348] sm:$0xf]
        %v4001 = vld [vmem:[%s3740 + $0x34c] sm:$0xf]
        %v4002 = vld [vmem:[%s3740 + $0x350] sm:$0xf]
        %v4003 = vld [vmem:[%s3740 + $0x354] sm:$0xf]
        %v4004 = vld [vmem:[%s3740 + $0x358] sm:$0xf]
        %v4005 = vld [vmem:[%s3740 + $0x35c] sm:$0xf]
        %v4006 = vld [vmem:[%s3740 + $0x360] sm:$0xf]
        %v4007 = vld [vmem:[%s3740 + $0x364] sm:$0xf]
        %v4008 = vld [vmem:[%s3740 + $0x368] sm:$0xf]
        %v4009 = vld [vmem:[%s3740 + $0x36c] sm:$0xf]
        %v4010 = vld [vmem:[%s3740 + $0x370] sm:$0xf]
        %v4011 = vld [vmem:[%s3740 + $0x374] sm:$0xf]
        %v4012 = vld [vmem:[%s3740 + $0x378] sm:$0xf]
        %v4013 = vld [vmem:[%s3740 + $0x37c] sm:$0xf]
        %v4014 = vld [vmem:[%s3740 + $0x380] sm:$0xf]
        %v4015 = vld [vmem:[%s3740 + $0x384] sm:$0xf]
        %v4016 = vld [vmem:[%s3740 + $0x388] sm:$0xf]
        %v4017 = vld [vmem:[%s3740 + $0x38c] sm:$0xf]
        %v4018 = vld [vmem:[%s3740 + $0x390] sm:$0xf]
        %v4019 = vld [vmem:[%s3740 + $0x394] sm:$0xf]
        %v4020 = vld [vmem:[%s3740 + $0x398] sm:$0xf]
        %v4021 = vld [vmem:[%s3740 + $0x39c] sm:$0xf]
        %v4022 = vld [vmem:[%s3740 + $0x3a0] sm:$0xf]
        %v4023 = vld [vmem:[%s3740 + $0x3a4] sm:$0xf]
        %v4024 = vld [vmem:[%s3740 + $0x3a8] sm:$0xf]
        %v4025 = vld [vmem:[%s3740 + $0x3ac] sm:$0xf]
        %v4026 = vld [vmem:[%s3740 + $0x3b0] sm:$0xf]
        %v4027 = vld [vmem:[%s3740 + $0x3b4] sm:$0xf]
        %v4028 = vld [vmem:[%s3740 + $0x3b8] sm:$0xf]
        %v4029 = vld [vmem:[%s3740 + $0x3bc] sm:$0xf]
        %v4030 = vld [vmem:[%s3740 + $0x3c0] sm:$0xf]
        %v4031 = vld [vmem:[%s3740 + $0x3c4] sm:$0xf]
        %v4032 = vld [vmem:[%s3740 + $0x3c8] sm:$0xf]
        %v4033 = vld [vmem:[%s3740 + $0x3cc] sm:$0xf]
        %v4034 = vld [vmem:[%s3740 + $0x3d0] sm:$0xf]
        %v4035 = vld [vmem:[%s3740 + $0x3d4] sm:$0xf]
        %v4036 = vld [vmem:[%s3740 + $0x3d8] sm:$0xf]
        %v4037 = vld [vmem:[%s3740 + $0x3dc] sm:$0xf]
        %v4038 = vld [vmem:[%s3740 + $0x3e0] sm:$0xf]
        %v4039 = vld [vmem:[%s3740 + $0x3e4] sm:$0xf]
        %v4040 = vld [vmem:[%s3740 + $0x3e8] sm:$0xf]
        %v4041 = vld [vmem:[%s3740 + $0x3ec] sm:$0xf]
        %v4042 = vld [vmem:[%s3740 + $0x3f0] sm:$0xf]
        %v4043 = vld [vmem:[%s3740 + $0x3f4] sm:$0xf]
        %v4044 = vld [vmem:[%s3740 + $0x3f8] sm:$0xf]
        %v4045 = vld [vmem:[%s3740 + $0x3fc] sm:$0xf]
        %v4046 = vld [vmem:[%s3740 + $0x400] sm:$0xf]
        %v4047 = vld [vmem:[%s3740 + $0x404] sm:$0xf]
        %v4048 = vld [vmem:[%s3740 + $0x408] sm:$0xf]
        %v4049 = vld [vmem:[%s3740 + $0x40c] sm:$0xf]
        %v4050 = vld [vmem:[%s3740 + $0x410] sm:$0xf]
        %v4051 = vld [vmem:[%s3740 + $0x414] sm:$0xf]
        %v4052 = vld [vmem:[%s3740 + $0x418] sm:$0xf]
        %v4053 = vld [vmem:[%s3740 + $0x41c] sm:$0xf]
        %v4054 = vld [vmem:[%s3740 + $0x420] sm:$0xf]
        %v4055 = vld [vmem:[%s3740 + $0x424] sm:$0xf]
        %v4056 = vld [vmem:[%s3740 + $0x428] sm:$0xf]
        %v4057 = vld [vmem:[%s3740 + $0x42c] sm:$0xf]
        %v4058 = vld [vmem:[%s3740 + $0x430] sm:$0xf]
        %v4059 = vld [vmem:[%s3740 + $0x434] sm:$0xf]
        %v4060 = vld [vmem:[%s3740 + $0x438] sm:$0xf]
        %v4061 = vld [vmem:[%s3740 + $0x43c] sm:$0xf]
        %v4062 = vld [vmem:[%s3740 + $0x440] sm:$0xf]
        %v4063 = vld [vmem:[%s3740 + $0x444] sm:$0xf]
        %v4064 = vld [vmem:[%s3740 + $0x448] sm:$0xf]
        %v4065 = vld [vmem:[%s3740 + $0x44c] sm:$0xf]
        %v4066 = vld [vmem:[%s3740 + $0x450] sm:$0xf]
        %v4067 = vld [vmem:[%s3740 + $0x454] sm:$0xf]
        %v4068 = vld [vmem:[%s3740 + $0x458] sm:$0xf]
        %v4069 = vld [vmem:[%s3740 + $0x45c] sm:$0xf]
        %v4070 = vld [vmem:[%s3740 + $0x460] sm:$0xf]
        %v4071 = vld [vmem:[%s3740 + $0x464] sm:$0xf]
        %v4072 = vld [vmem:[%s3740 + $0x468] sm:$0xf]
        %v4073 = vld [vmem:[%s3740 + $0x46c] sm:$0xf]
        %v4074 = vld [vmem:[%s3740 + $0x470] sm:$0xf]
        %v4075 = vld [vmem:[%s3740 + $0x474] sm:$0xf]
        %v4076 = vld [vmem:[%s3740 + $0x478] sm:$0xf]
        %v4077 = vld [vmem:[%s3740 + $0x47c] sm:$0xf]
        %v4078 = vld [vmem:[%s3740 + $0x480] sm:$0xf]
        %v4079 = vld [vmem:[%s3740 + $0x484] sm:$0xf]
        %v4080 = vld [vmem:[%s3740 + $0x488] sm:$0xf]
        %v4081 = vld [vmem:[%s3740 + $0x48c] sm:$0xf]
        %v4082 = vld [vmem:[%s3740 + $0x490] sm:$0xf]
        %v4083 = vld [vmem:[%s3740 + $0x494] sm:$0xf]
        %v4084 = vld [vmem:[%s3740 + $0x498] sm:$0xf]
        %v4085 = vld [vmem:[%s3740 + $0x49c] sm:$0xf]
        %v4086 = vld [vmem:[%s3740 + $0x4a0] sm:$0xf]
        %v4087 = vld [vmem:[%s3740 + $0x4a4] sm:$0xf]
        %v4088 = vld [vmem:[%s3740 + $0x4a8] sm:$0xf]
        %v4089 = vld [vmem:[%s3740 + $0x4ac] sm:$0xf]
        %v4090 = vld [vmem:[%s3740 + $0x4b0] sm:$0xf]
        %v4091 = vld [vmem:[%s3740 + $0x4b4] sm:$0xf]
        %v4092 = vld [vmem:[%s3740 + $0x4b8] sm:$0xf]
        %v4093 = vld [vmem:[%s3740 + $0x4bc] sm:$0xf]
        %v4094 = vld [vmem:[%s3740 + $0x4c0] sm:$0xf]
        %v4095 = vld [vmem:[%s3740 + $0x4c4] sm:$0xf]
        %v4096 = vld [vmem:[%s3740 + $0x4c8] sm:$0xf]
        %v4097 = vld [vmem:[%s3740 + $0x4cc] sm:$0xf]
        %v4098 = vld [vmem:[%s3740 + $0x4d0] sm:$0xf]
        %v4099 = vld [vmem:[%s3740 + $0x4d4] sm:$0xf]
        %v4100 = vld [vmem:[%s3740 + $0x4d8] sm:$0xf]
        %v4101 = vld [vmem:[%s3740 + $0x4dc] sm:$0xf]
        %v4102 = vld [vmem:[%s3740 + $0x4e0] sm:$0xf]
        %v4103 = vld [vmem:[%s3740 + $0x4e4] sm:$0xf]
        %v4104 = vld [vmem:[%s3740 + $0x4e8] sm:$0xf]
        %v4105 = vld [vmem:[%s3740 + $0x4ec] sm:$0xf]
        %v4106 = vld [vmem:[%s3740 + $0x4f0] sm:$0xf]
        %v4107 = vld [vmem:[%s3740 + $0x4f4] sm:$0xf]
        %v4108 = vld [vmem:[%s3740 + $0x4f8] sm:$0xf]
        %v4109 = vld [vmem:[%s3740 + $0x4fc] sm:$0xf]
        %v4110 = vld [vmem:[%s3740 + $0x500] sm:$0xf]
        %v4111 = vld [vmem:[%s3740 + $0x504] sm:$0xf]
        %v4112 = vld [vmem:[%s3740 + $0x508] sm:$0xf]
        %v4113 = vld [vmem:[%s3740 + $0x50c] sm:$0xf]
        %v4114 = vld [vmem:[%s3740 + $0x510] sm:$0xf]
        %v4115 = vld [vmem:[%s3740 + $0x514] sm:$0xf]
        %v4116 = vld [vmem:[%s3740 + $0x518] sm:$0xf]
        %v4117 = vld [vmem:[%s3740 + $0x51c] sm:$0xf]
        %v4118 = vld [vmem:[%s3740 + $0x520] sm:$0xf]
        %v4119 = vld [vmem:[%s3740 + $0x524] sm:$0xf]
        %v4120 = vld [vmem:[%s3740 + $0x528] sm:$0xf]
        %v4121 = vld [vmem:[%s3740 + $0x52c] sm:$0xf]
        %v4122 = vld [vmem:[%s3740 + $0x530] sm:$0xf]
        %v4123 = vld [vmem:[%s3740 + $0x534] sm:$0xf]
        %v4124 = vld [vmem:[%s3740 + $0x538] sm:$0xf]
        %v4125 = vld [vmem:[%s3740 + $0x53c] sm:$0xf]
        %v4126 = vld [vmem:[%s3740 + $0x540] sm:$0xf]
        %v4127 = vld [vmem:[%s3740 + $0x544] sm:$0xf]
        %v4128 = vld [vmem:[%s3740 + $0x548] sm:$0xf]
        %v4129 = vld [vmem:[%s3740 + $0x54c] sm:$0xf]
        %v4130 = vld [vmem:[%s3740 + $0x550] sm:$0xf]
        %v4131 = vld [vmem:[%s3740 + $0x554] sm:$0xf]
        %v4132 = vld [vmem:[%s3740 + $0x558] sm:$0xf]
        %v4133 = vld [vmem:[%s3740 + $0x55c] sm:$0xf]
        %v4134 = vld [vmem:[%s3740 + $0x560] sm:$0xf]
        %v4135 = vld [vmem:[%s3740 + $0x564] sm:$0xf]
        %v4136 = vld [vmem:[%s3740 + $0x568] sm:$0xf]
        %v4137 = vld [vmem:[%s3740 + $0x56c] sm:$0xf]
        %v4138 = vld [vmem:[%s3740 + $0x570] sm:$0xf]
        %v4139 = vld [vmem:[%s3740 + $0x574] sm:$0xf]
        %v4140 = vld [vmem:[%s3740 + $0x578] sm:$0xf]
        %v4141 = vld [vmem:[%s3740 + $0x57c] sm:$0xf]
        %v4142 = vld [vmem:[%s3740 + $0x580] sm:$0xf]
        %v4143 = vld [vmem:[%s3740 + $0x584] sm:$0xf]
        %v4144 = vld [vmem:[%s3740 + $0x588] sm:$0xf]
        %v4145 = vld [vmem:[%s3740 + $0x58c] sm:$0xf]
        %v4146 = vld [vmem:[%s3740 + $0x590] sm:$0xf]
        %v4147 = vld [vmem:[%s3740 + $0x594] sm:$0xf]
        %v4148 = vld [vmem:[%s3740 + $0x598] sm:$0xf]
        %v4149 = vld [vmem:[%s3740 + $0x59c] sm:$0xf]
        %v4150 = vld [vmem:[%s3740 + $0x5a0] sm:$0xf]
        %v4151 = vld [vmem:[%s3740 + $0x5a4] sm:$0xf]
        %v4152 = vld [vmem:[%s3740 + $0x5a8] sm:$0xf]
        %v4153 = vld [vmem:[%s3740 + $0x5ac] sm:$0xf]
        %v4154 = vld [vmem:[%s3740 + $0x5b0] sm:$0xf]
        %v4155 = vld [vmem:[%s3740 + $0x5b4] sm:$0xf]
        %v4156 = vld [vmem:[%s3740 + $0x5b8] sm:$0xf]
        %v4157 = vld [vmem:[%s3740 + $0x5bc] sm:$0xf]
        %v4158 = vld [vmem:[%s3740 + $0x5c0] sm:$0xf]
        %v4159 = vld [vmem:[%s3740 + $0x5c4] sm:$0xf]
        %v4160 = vld [vmem:[%s3740 + $0x5c8] sm:$0xf]
        %v4161 = vld [vmem:[%s3740 + $0x5cc] sm:$0xf]
        %v4162 = vld [vmem:[%s3740 + $0x5d0] sm:$0xf]
        %v4163 = vld [vmem:[%s3740 + $0x5d4] sm:$0xf]
        %v4164 = vld [vmem:[%s3740 + $0x5d8] sm:$0xf]
        %v4165 = vld [vmem:[%s3740 + $0x5dc] sm:$0xf]
        %v4166 = vld [vmem:[%s3740 + $0x5e0] sm:$0xf]
        %v4167 = vld [vmem:[%s3740 + $0x5e4] sm:$0xf]
        %v4168 = vld [vmem:[%s3740 + $0x5e8] sm:$0xf]
        %v4169 = vld [vmem:[%s3740 + $0x5ec] sm:$0xf]
        %v4170 = vld [vmem:[%s3740 + $0x5f0] sm:$0xf]
        %v4171 = vld [vmem:[%s3740 + $0x5f4] sm:$0xf]
        %v4172 = vld [vmem:[%s3740 + $0x5f8] sm:$0xf]
        %v4173 = vld [vmem:[%s3740 + $0x5fc] sm:$0xf]
        %v4174 = vld [vmem:[%s3740 + $0x600] sm:$0xf]
        %v4175 = vld [vmem:[%s3740 + $0x604] sm:$0xf]
        %v4176 = vld [vmem:[%s3740 + $0x608] sm:$0xf]
        %v4177 = vld [vmem:[%s3740 + $0x60c] sm:$0xf]
        %v4178 = vld [vmem:[%s3740 + $0x610] sm:$0xf]
        %v4179 = vld [vmem:[%s3740 + $0x614] sm:$0xf]
        %v4180 = vld [vmem:[%s3740 + $0x618] sm:$0xf]
        %v4181 = vld [vmem:[%s3740 + $0x61c] sm:$0xf]
        %v4182 = vld [vmem:[%s3740 + $0x620] sm:$0xf]
        %v4183 = vld [vmem:[%s3740 + $0x624] sm:$0xf]
        %v4184 = vld [vmem:[%s3740 + $0x628] sm:$0xf]
        %v4185 = vld [vmem:[%s3740 + $0x62c] sm:$0xf]
        %v4186 = vld [vmem:[%s3740 + $0x630] sm:$0xf]
        %v4187 = vld [vmem:[%s3740 + $0x634] sm:$0xf]
        %v4188 = vld [vmem:[%s3740 + $0x638] sm:$0xf]
        %v4189 = vld [vmem:[%s3740 + $0x63c] sm:$0xf]
        %v4190 = vld [vmem:[%s3740 + $0x640] sm:$0xf]
        %v4191 = vld [vmem:[%s3740 + $0x644] sm:$0xf]
        %v4192 = vld [vmem:[%s3740 + $0x648] sm:$0xf]
        %v4193 = vld [vmem:[%s3740 + $0x64c] sm:$0xf]
        %v4194 = vld [vmem:[%s3740 + $0x650] sm:$0xf]
        %v4195 = vld [vmem:[%s3740 + $0x654] sm:$0xf]
        %v4196 = vld [vmem:[%s3740 + $0x658] sm:$0xf]
        %v4197 = vld [vmem:[%s3740 + $0x65c] sm:$0xf]
        %v4198 = vld [vmem:[%s3740 + $0x660] sm:$0xf]
        %v4199 = vld [vmem:[%s3740 + $0x664] sm:$0xf]
        %v4200 = vld [vmem:[%s3740 + $0x668] sm:$0xf]
        %v4201 = vld [vmem:[%s3740 + $0x66c] sm:$0xf]
        %v4202 = vld [vmem:[%s3740 + $0x670] sm:$0xf]
        %v4203 = vld [vmem:[%s3740 + $0x674] sm:$0xf]
        %v4204 = vld [vmem:[%s3740 + $0x678] sm:$0xf]
        %v4205 = vld [vmem:[%s3740 + $0x67c] sm:$0xf]
        %v4206 = vld [vmem:[%s3740 + $0x680] sm:$0xf]
        %v4207 = vld [vmem:[%s3740 + $0x684] sm:$0xf]
        %v4208 = vld [vmem:[%s3740 + $0x688] sm:$0xf]
        %v4209 = vld [vmem:[%s3740 + $0x68c] sm:$0xf]
        %v4210 = vld [vmem:[%s3740 + $0x690] sm:$0xf]
        %v4211 = vld [vmem:[%s3740 + $0x694] sm:$0xf]
        %v4212 = vld [vmem:[%s3740 + $0x698] sm:$0xf]
        %v4213 = vld [vmem:[%s3740 + $0x69c] sm:$0xf]
        %v4214 = vld [vmem:[%s3740 + $0x6a0] sm:$0xf]
        %v4215 = vld [vmem:[%s3740 + $0x6a4] sm:$0xf]
        %v4216 = vld [vmem:[%s3740 + $0x6a8] sm:$0xf]
        %v4217 = vld [vmem:[%s3740 + $0x6ac] sm:$0xf]
        %v4218 = vld [vmem:[%s3740 + $0x6b0] sm:$0xf]
        %v4219 = vld [vmem:[%s3740 + $0x6b4] sm:$0xf]
        %v4220 = vld [vmem:[%s3740 + $0x6b8] sm:$0xf]
        %v4221 = vld [vmem:[%s3740 + $0x6bc] sm:$0xf]
        %v4222 = vld [vmem:[%s3775] sm:$0x1]
        %v4224 = vperm.slane %v4222, 0
        %4227 = vst [vmem:[#allocation1] ss:$9 sm:$0xff] %v3786
        %v4228 = vld [vmem:[#allocation1] sm:$0xff]
        %v4229 = vld [vmem:[#allocation1 + $0x9] sm:$0xff]
        %v4230 = vld [vmem:[#allocation1 + $0x12] sm:$0xff]
        %v4231 = vld [vmem:[#allocation1 + $0x1b] sm:$0xff]
        %v4232 = vld [vmem:[#allocation1 + $0x24] sm:$0xff]
        %v4233 = vld [vmem:[#allocation1 + $0x2d] sm:$0xff]
        %v4234 = vld [vmem:[#allocation1 + $0x36] sm:$0xff]
        %v4235 = vld [vmem:[#allocation1 + $0x3f] sm:$0xff]
        %4237 = vst [vmem:[#allocation1] ss:$9 sm:$0xff] %v3787
        %v4238 = vld [vmem:[#allocation1] sm:$0xff]
        %v4239 = vld [vmem:[#allocation1 + $0x9] sm:$0xff]
        %v4240 = vld [vmem:[#allocation1 + $0x12] sm:$0xff]
        %v4241 = vld [vmem:[#allocation1 + $0x1b] sm:$0xff]
        %v4242 = vld [vmem:[#allocation1 + $0x24] sm:$0xff]
        %v4243 = vld [vmem:[#allocation1 + $0x2d] sm:$0xff]
        %v4244 = vld [vmem:[#allocation1 + $0x36] sm:$0xff]
        %v4245 = vld [vmem:[#allocation1 + $0x3f] sm:$0xff]
        %4247 = vst [vmem:[#allocation1] ss:$9 sm:$0xff] %v3788
        %v4248 = vld [vmem:[#allocation1] sm:$0xff]
        %v4249 = vld [vmem:[#allocation1 + $0x9] sm:$0xff]
        %v4250 = vld [vmem:[#allocation1 + $0x12] sm:$0xff]
        %v4251 = vld [vmem:[#allocation1 + $0x1b] sm:$0xff]
        %v4252 = vld [vmem:[#allocation1 + $0x24] sm:$0xff]
        %v4253 = vld [vmem:[#allocation1 + $0x2d] sm:$0xff]
        %v4254 = vld [vmem:[#allocation1 + $0x36] sm:$0xff]
        %v4255 = vld [vmem:[#allocation1 + $0x3f] sm:$0xff]
        %4257 = vst [vmem:[#allocation1] ss:$9 sm:$0xff] %v3789
        %v4258 = vld [vmem:[#allocation1] sm:$0xff]
        %v4259 = vld [vmem:[#allocation1 + $0x9] sm:$0xff]
        %v4260 = vld [vmem:[#allocation1 + $0x12] sm:$0xff]
        %v4720 = vunpack.c.l.b16 %v3790
        %v4721 = vunpack.c.l.b16 %v3791
        %v4722 = vunpack.c.l.b16 %v3792
        %v4723 = vunpack.c.l.b16 %v3793
        %v4724 = vunpack.c.l.b16 %v3794
        %v4725 = vunpack.c.l.b16 %v3795
        %v4726 = vunpack.c.l.b16 %v3796
        %v4727 = vunpack.c.l.b16 %v3797
        %v4728 = vunpack.c.l.b16 %v3798
        %v4729 = vunpack.c.l.b16 %v3799
        %v4730 = vunpack.c.l.b16 %v3800
        %v4731 = vunpack.c.l.b16 %v3801
        %v4732 = vunpack.c.l.b16 %v3802
        %v4733 = vunpack.c.l.b16 %v3803
        %v4734 = vunpack.c.l.b16 %v3804
        %v4735 = vunpack.c.l.b16 %v3805
        %v4736 = vunpack.c.l.b16 %v3806
        %v4737 = vunpack.c.l.b16 %v3807
        %v4738 = vunpack.c.l.b16 %v3808
        %v4739 = vunpack.c.l.b16 %v3809
        %v4740 = vunpack.c.l.b16 %v3810
        %v4741 = vunpack.c.l.b16 %v3811
        %v4742 = vunpack.c.l.b16 %v3812
        %v4743 = vunpack.c.l.b16 %v3813
        %v4744 = vunpack.c.l.b16 %v3814
        %v4745 = vunpack.c.l.b16 %v3815
        %v4746 = vunpack.c.l.b16 %v3816
        %v4747 = vunpack.c.l.b16 %v3817
        %v4748 = vunpack.c.l.b16 %v3818
        %v4749 = vunpack.c.l.b16 %v3819
        %v4750 = vunpack.c.l.b16 %v3820
        %v4751 = vunpack.c.l.b16 %v3821
        %v4752 = vunpack.c.l.b16 %v3822
        %v4753 = vunpack.c.l.b16 %v3823
        %v4754 = vunpack.c.l.b16 %v3824
        %v4755 = vunpack.c.l.b16 %v3825
        %v4756 = vunpack.c.l.b16 %v3826
        %v4757 = vunpack.c.l.b16 %v3827
        %v4758 = vunpack.c.l.b16 %v3828
        %v4759 = vunpack.c.l.b16 %v3829
        %v4760 = vunpack.c.l.b16 %v3830
        %v4761 = vunpack.c.l.b16 %v3831
        %v4762 = vunpack.c.l.b16 %v3832
        %v4763 = vunpack.c.l.b16 %v3833
        %v4764 = vunpack.c.l.b16 %v3834
        %v4765 = vunpack.c.l.b16 %v3835
        %v4766 = vunpack.c.l.b16 %v3836
        %v4767 = vunpack.c.l.b16 %v3837
        %v4768 = vunpack.c.l.b16 %v3838
        %v4769 = vunpack.c.l.b16 %v3839
        %v4770 = vunpack.c.l.b16 %v3840
        %v4771 = vunpack.c.l.b16 %v3841
        %v4772 = vunpack.c.l.b16 %v3842
        %v4773 = vunpack.c.l.b16 %v3843
        %v4774 = vunpack.c.l.b16 %v3844
        %v4775 = vunpack.c.l.b16 %v3845
        %v4776 = vunpack.c.l.b16 %v3846
        %v4777 = vunpack.c.l.b16 %v3847
        %v4778 = vunpack.c.l.b16 %v3848
        %v4779 = vunpack.c.l.b16 %v3849
        %v4780 = vunpack.c.l.b16 %v3850
        %v4781 = vunpack.c.l.b16 %v3851
        %v4782 = vunpack.c.l.b16 %v3852
        %v4783 = vunpack.c.l.b16 %v3853
        %v4784 = vunpack.c.l.b16 %v3854
        %v4785 = vunpack.c.l.b16 %v3855
        %v4786 = vunpack.c.l.b16 %v3856
        %v4787 = vunpack.c.l.b16 %v3857
        %v4788 = vunpack.c.l.b16 %v3858
        %v4789 = vunpack.c.l.b16 %v3859
        %v4790 = vunpack.c.l.b16 %v3860
        %v4791 = vunpack.c.l.b16 %v3861
        %v4792 = vunpack.c.l.b16 %v3862
        %v4793 = vunpack.c.l.b16 %v3863
        %v4794 = vunpack.c.l.b16 %v3864
        %v4795 = vunpack.c.l.b16 %v3865
        %v4796 = vunpack.c.l.b16 %v3866
        %v4797 = vunpack.c.l.b16 %v3867
        %v4798 = vunpack.c.l.b16 %v3868
        %v4799 = vunpack.c.l.b16 %v3869
        %v4800 = vunpack.c.l.b16 %v3870
        %v4801 = vunpack.c.l.b16 %v3871
        %v4802 = vunpack.c.l.b16 %v3872
        %v4803 = vunpack.c.l.b16 %v3873
        %v4804 = vunpack.c.l.b16 %v3874
        %v4805 = vunpack.c.l.b16 %v3875
        %v4806 = vunpack.c.l.b16 %v3876
        %v4807 = vunpack.c.l.b16 %v3877
        %v4808 = vunpack.c.l.b16 %v3878
        %v4809 = vunpack.c.l.b16 %v3879
        %v4810 = vunpack.c.l.b16 %v3880
        %v4811 = vunpack.c.l.b16 %v3881
        %v4812 = vunpack.c.l.b16 %v3882
        %v4813 = vunpack.c.l.b16 %v3883
        %v4814 = vunpack.c.l.b16 %v3884
        %v4815 = vunpack.c.l.b16 %v3885
        %v4816 = vunpack.c.l.b16 %v3886
        %v4817 = vunpack.c.l.b16 %v3887
        %v4818 = vunpack.c.l.b16 %v3888
        %v4819 = vunpack.c.l.b16 %v3889
        %v4820 = vunpack.c.l.b16 %v3890
        %v4821 = vunpack.c.l.b16 %v3891
        %v4822 = vunpack.c.l.b16 %v3892
        %v4823 = vunpack.c.l.b16 %v3893
        %v4824 = vunpack.c.l.b16 %v3894
        %v4825 = vunpack.c.l.b16 %v3895
        %v4826 = vunpack.c.l.b16 %v3896
        %v4827 = vunpack.c.l.b16 %v3897
        %v4828 = vunpack.c.l.b16 %v3898
        %v4829 = vunpack.c.l.b16 %v3899
        %v4830 = vunpack.c.l.b16 %v3900
        %v4831 = vunpack.c.l.b16 %v3901
        %v4832 = vunpack.c.l.b16 %v3902
        %v4833 = vunpack.c.l.b16 %v3903
        %v4834 = vunpack.c.l.b16 %v3904
        %v4835 = vunpack.c.l.b16 %v3905
        %v4836 = vunpack.c.l.b16 %v3906
        %v4837 = vunpack.c.l.b16 %v3907
        %v4838 = vunpack.c.l.b16 %v3908
        %v4839 = vunpack.c.l.b16 %v3909
        %v4840 = vunpack.c.l.b16 %v3910
        %v4841 = vunpack.c.l.b16 %v3911
        %v4842 = vunpack.c.l.b16 %v3912
        %v4843 = vunpack.c.l.b16 %v3913
        %v4844 = vunpack.c.l.b16 %v3914
        %v4845 = vunpack.c.l.b16 %v3915
        %v4846 = vunpack.c.l.b16 %v3916
        %v4847 = vunpack.c.l.b16 %v3917
        %v4848 = vunpack.c.l.b16 %v3918
        %v4849 = vunpack.c.l.b16 %v3919
        %v4850 = vunpack.c.l.b16 %v3920
        %v4851 = vunpack.c.l.b16 %v3921
        %v4852 = vunpack.c.l.b16 %v3922
        %v4853 = vunpack.c.l.b16 %v3923
        %v4854 = vunpack.c.l.b16 %v3924
        %v4855 = vunpack.c.l.b16 %v3925
        %v4856 = vunpack.c.l.b16 %v3926
        %v4857 = vunpack.c.l.b16 %v3927
        %v4858 = vunpack.c.l.b16 %v3928
        %v4859 = vunpack.c.l.b16 %v3929
        %v4860 = vunpack.c.l.b16 %v3930
        %v4861 = vunpack.c.l.b16 %v3931
        %v4862 = vunpack.c.l.b16 %v3932
        %v4863 = vunpack.c.l.b16 %v3933
        %v4864 = vunpack.c.l.b16 %v3934
        %v4865 = vunpack.c.l.b16 %v3935
        %v4866 = vunpack.c.l.b16 %v3936
        %v4867 = vunpack.c.l.b16 %v3937
        %v4868 = vunpack.c.l.b16 %v3938
        %v4869 = vunpack.c.l.b16 %v3939
        %v4870 = vunpack.c.l.b16 %v3940
        %v4871 = vunpack.c.l.b16 %v3941
        %v4872 = vunpack.c.l.b16 %v3942
        %v4873 = vunpack.c.l.b16 %v3943
        %v4874 = vunpack.c.l.b16 %v3944
        %v4875 = vunpack.c.l.b16 %v3945
        %v4876 = vunpack.c.l.b16 %v3946
        %v4877 = vunpack.c.l.b16 %v3947
        %v4878 = vunpack.c.l.b16 %v3948
        %v4879 = vunpack.c.l.b16 %v3949
        %v4880 = vunpack.c.l.b16 %v3950
        %v4881 = vunpack.c.l.b16 %v3951
        %v4882 = vunpack.c.l.b16 %v3952
        %v4883 = vunpack.c.l.b16 %v3953
        %v4884 = vunpack.c.l.b16 %v3954
        %v4885 = vunpack.c.l.b16 %v3955
        %v4886 = vunpack.c.l.b16 %v3956
        %v4887 = vunpack.c.l.b16 %v3957
        %v4888 = vunpack.c.l.b16 %v3958
        %v4889 = vunpack.c.l.b16 %v3959
        %v4890 = vunpack.c.l.b16 %v3960
        %v4891 = vunpack.c.l.b16 %v3961
        %v4892 = vunpack.c.l.b16 %v3962
        %v4893 = vunpack.c.l.b16 %v3963
        %v4894 = vunpack.c.l.b16 %v3964
        %v4895 = vunpack.c.l.b16 %v3965
        %v4896 = vunpack.c.l.b16 %v3966
        %v4897 = vunpack.c.l.b16 %v3967
        %v4898 = vunpack.c.l.b16 %v3968
        %v4899 = vunpack.c.l.b16 %v3969
        %v4900 = vunpack.c.l.b16 %v3970
        %v4901 = vunpack.c.l.b16 %v3971
        %v4902 = vunpack.c.l.b16 %v3972
        %v4903 = vunpack.c.l.b16 %v3973
        %v4904 = vunpack.c.l.b16 %v3974
        %v4905 = vunpack.c.l.b16 %v3975
        %v4906 = vunpack.c.l.b16 %v3976
        %v4907 = vunpack.c.l.b16 %v3977
        %v4908 = vunpack.c.l.b16 %v3978
        %v4909 = vunpack.c.l.b16 %v3979
        %v4910 = vunpack.c.l.b16 %v3980
        %v4911 = vunpack.c.l.b16 %v3981
        %v4912 = vunpack.c.l.b16 %v3982
        %v4913 = vunpack.c.l.b16 %v3983
        %v4914 = vunpack.c.l.b16 %v3984
        %v4915 = vunpack.c.l.b16 %v3985
        %v4916 = vunpack.c.l.b16 %v3986
        %v4917 = vunpack.c.l.b16 %v3987
        %v4918 = vunpack.c.l.b16 %v3988
        %v4919 = vunpack.c.l.b16 %v3989
        %v4920 = vunpack.c.l.b16 %v3990
        %v4921 = vunpack.c.l.b16 %v3991
        %v4922 = vunpack.c.l.b16 %v3992
        %v4923 = vunpack.c.l.b16 %v3993
        %v4924 = vunpack.c.l.b16 %v3994
        %v4925 = vunpack.c.l.b16 %v3995
        %v4926 = vunpack.c.l.b16 %v3996
        %v4927 = vunpack.c.l.b16 %v3997
        %v4928 = vunpack.c.l.b16 %v3998
        %v4929 = vunpack.c.l.b16 %v3999
        %v4930 = vunpack.c.l.b16 %v4000
        %v4931 = vunpack.c.l.b16 %v4001
        %v4932 = vunpack.c.l.b16 %v4002
        %v4933 = vunpack.c.l.b16 %v4003
        %v4934 = vunpack.c.l.b16 %v4004
        %v4935 = vunpack.c.l.b16 %v4005
        %v4936 = vunpack.c.l.b16 %v4006
        %v4937 = vunpack.c.l.b16 %v4007
        %v4938 = vunpack.c.l.b16 %v4008
        %v4939 = vunpack.c.l.b16 %v4009
        %v4940 = vunpack.c.l.b16 %v4010
        %v4941 = vunpack.c.l.b16 %v4011
        %v4942 = vunpack.c.l.b16 %v4012
        %v4943 = vunpack.c.l.b16 %v4013
        %v4944 = vunpack.c.l.b16 %v4014
        %v4945 = vunpack.c.l.b16 %v4015
        %v4946 = vunpack.c.l.b16 %v4016
        %v4947 = vunpack.c.l.b16 %v4017
        %v4948 = vunpack.c.l.b16 %v4018
        %v4949 = vunpack.c.l.b16 %v4019
        %v4950 = vunpack.c.l.b16 %v4020
        %v4951 = vunpack.c.l.b16 %v4021
        %v4952 = vunpack.c.l.b16 %v4022
        %v4953 = vunpack.c.l.b16 %v4023
        %v4954 = vunpack.c.l.b16 %v4024
        %v4955 = vunpack.c.l.b16 %v4025
        %v4956 = vunpack.c.l.b16 %v4026
        %v4957 = vunpack.c.l.b16 %v4027
        %v4958 = vunpack.c.l.b16 %v4028
        %v4959 = vunpack.c.l.b16 %v4029
        %v4960 = vunpack.c.l.b16 %v4030
        %v4961 = vunpack.c.l.b16 %v4031
        %v4962 = vunpack.c.l.b16 %v4032
        %v4963 = vunpack.c.l.b16 %v4033
        %v4964 = vunpack.c.l.b16 %v4034
        %v4965 = vunpack.c.l.b16 %v4035
        %v4966 = vunpack.c.l.b16 %v4036
        %v4967 = vunpack.c.l.b16 %v4037
        %v4968 = vunpack.c.l.b16 %v4038
        %v4969 = vunpack.c.l.b16 %v4039
        %v4970 = vunpack.c.l.b16 %v4040
        %v4971 = vunpack.c.l.b16 %v4041
        %v4972 = vunpack.c.l.b16 %v4042
        %v4973 = vunpack.c.l.b16 %v4043
        %v4974 = vunpack.c.l.b16 %v4044
        %v4975 = vunpack.c.l.b16 %v4045
        %v4976 = vunpack.c.l.b16 %v4046
        %v4977 = vunpack.c.l.b16 %v4047
        %v4978 = vunpack.c.l.b16 %v4048
        %v4979 = vunpack.c.l.b16 %v4049
        %v4980 = vunpack.c.l.b16 %v4050
        %v4981 = vunpack.c.l.b16 %v4051
        %v4982 = vunpack.c.l.b16 %v4052
        %v4983 = vunpack.c.l.b16 %v4053
        %v4984 = vunpack.c.l.b16 %v4054
        %v4985 = vunpack.c.l.b16 %v4055
        %v4986 = vunpack.c.l.b16 %v4056
        %v4987 = vunpack.c.l.b16 %v4057
        %v4988 = vunpack.c.l.b16 %v4058
        %v4989 = vunpack.c.l.b16 %v4059
        %v4990 = vunpack.c.l.b16 %v4060
        %v4991 = vunpack.c.l.b16 %v4061
        %v4992 = vunpack.c.l.b16 %v4062
        %v4993 = vunpack.c.l.b16 %v4063
        %v4994 = vunpack.c.l.b16 %v4064
        %v4995 = vunpack.c.l.b16 %v4065
        %v4996 = vunpack.c.l.b16 %v4066
        %v4997 = vunpack.c.l.b16 %v4067
        %v4998 = vunpack.c.l.b16 %v4068
        %v4999 = vunpack.c.l.b16 %v4069
        %v5000 = vunpack.c.l.b16 %v4070
        %v5001 = vunpack.c.l.b16 %v4071
        %v5002 = vunpack.c.l.b16 %v4072
        %v5003 = vunpack.c.l.b16 %v4073
        %v5004 = vunpack.c.l.b16 %v4074
        %v5005 = vunpack.c.l.b16 %v4075
        %v5006 = vunpack.c.l.b16 %v4076
        %v5007 = vunpack.c.l.b16 %v4077
        %v5008 = vunpack.c.l.b16 %v4078
        %v5009 = vunpack.c.l.b16 %v4079
        %v5010 = vunpack.c.l.b16 %v4080
        %v5011 = vunpack.c.l.b16 %v4081
        %v5012 = vunpack.c.l.b16 %v4082
        %v5013 = vunpack.c.l.b16 %v4083
        %v5014 = vunpack.c.l.b16 %v4084
        %v5015 = vunpack.c.l.b16 %v4085
        %v5016 = vunpack.c.l.b16 %v4086
        %v5017 = vunpack.c.l.b16 %v4087
        %v5018 = vunpack.c.l.b16 %v4088
        %v5019 = vunpack.c.l.b16 %v4089
        %v5020 = vunpack.c.l.b16 %v4090
        %v5021 = vunpack.c.l.b16 %v4091
        %v5022 = vunpack.c.l.b16 %v4092
        %v5023 = vunpack.c.l.b16 %v4093
        %v5024 = vunpack.c.l.b16 %v4094
        %v5025 = vunpack.c.l.b16 %v4095
        %v5026 = vunpack.c.l.b16 %v4096
        %v5027 = vunpack.c.l.b16 %v4097
        %v5028 = vunpack.c.l.b16 %v4098
        %v5029 = vunpack.c.l.b16 %v4099
        %v5030 = vunpack.c.l.b16 %v4100
        %v5031 = vunpack.c.l.b16 %v4101
        %v5032 = vunpack.c.l.b16 %v4102
        %v5033 = vunpack.c.l.b16 %v4103
        %v5034 = vunpack.c.l.b16 %v4104
        %v5035 = vunpack.c.l.b16 %v4105
        %v5036 = vunpack.c.l.b16 %v4106
        %v5037 = vunpack.c.l.b16 %v4107
        %v5038 = vunpack.c.l.b16 %v4108
        %v5039 = vunpack.c.l.b16 %v4109
        %v5040 = vunpack.c.l.b16 %v4110
        %v5041 = vunpack.c.l.b16 %v4111
        %v5042 = vunpack.c.l.b16 %v4112
        %v5043 = vunpack.c.l.b16 %v4113
        %v5044 = vunpack.c.l.b16 %v4114
        %v5045 = vunpack.c.l.b16 %v4115
        %v5046 = vunpack.c.l.b16 %v4116
        %v5047 = vunpack.c.l.b16 %v4117
        %v5048 = vunpack.c.l.b16 %v4118
        %v5049 = vunpack.c.l.b16 %v4119
        %v5050 = vunpack.c.l.b16 %v4120
        %v5051 = vunpack.c.l.b16 %v4121
        %v5052 = vunpack.c.l.b16 %v4122
        %v5053 = vunpack.c.l.b16 %v4123
        %v5054 = vunpack.c.l.b16 %v4124
        %v5055 = vunpack.c.l.b16 %v4125
        %v5056 = vunpack.c.l.b16 %v4126
        %v5057 = vunpack.c.l.b16 %v4127
        %v5058 = vunpack.c.l.b16 %v4128
        %v5059 = vunpack.c.l.b16 %v4129
        %v5060 = vunpack.c.l.b16 %v4130
        %v5061 = vunpack.c.l.b16 %v4131
        %v5062 = vunpack.c.l.b16 %v4132
        %v5063 = vunpack.c.l.b16 %v4133
        %v5064 = vunpack.c.l.b16 %v4134
        %v5065 = vunpack.c.l.b16 %v4135
        %v5066 = vunpack.c.l.b16 %v4136
        %v5067 = vunpack.c.l.b16 %v4137
        %v5068 = vunpack.c.l.b16 %v4138
        %v5069 = vunpack.c.l.b16 %v4139
        %v5070 = vunpack.c.l.b16 %v4140
        %v5071 = vunpack.c.l.b16 %v4141
        %v5072 = vunpack.c.l.b16 %v4142
        %v5073 = vunpack.c.l.b16 %v4143
        %v5074 = vunpack.c.l.b16 %v4144
        %v5075 = vunpack.c.l.b16 %v4145
        %v5076 = vunpack.c.l.b16 %v4146
        %v5077 = vunpack.c.l.b16 %v4147
        %v5078 = vunpack.c.l.b16 %v4148
        %v5079 = vunpack.c.l.b16 %v4149
        %v5080 = vunpack.c.l.b16 %v4150
        %v5081 = vunpack.c.l.b16 %v4151
        %v5082 = vunpack.c.l.b16 %v4152
        %v5083 = vunpack.c.l.b16 %v4153
        %v5084 = vunpack.c.l.b16 %v4154
        %v5085 = vunpack.c.l.b16 %v4155
        %v5086 = vunpack.c.l.b16 %v4156
        %v5087 = vunpack.c.l.b16 %v4157
        %v5088 = vunpack.c.l.b16 %v4158
        %v5089 = vunpack.c.l.b16 %v4159
        %v5090 = vunpack.c.l.b16 %v4160
        %v5091 = vunpack.c.l.b16 %v4161
        %v5092 = vunpack.c.l.b16 %v4162
        %v5093 = vunpack.c.l.b16 %v4163
        %v5094 = vunpack.c.l.b16 %v4164
        %v5095 = vunpack.c.l.b16 %v4165
        %v5096 = vunpack.c.l.b16 %v4166
        %v5097 = vunpack.c.l.b16 %v4167
        %v5098 = vunpack.c.l.b16 %v4168
        %v5099 = vunpack.c.l.b16 %v4169
        %v5100 = vunpack.c.l.b16 %v4170
        %v5101 = vunpack.c.l.b16 %v4171
        %v5102 = vunpack.c.l.b16 %v4172
        %v5103 = vunpack.c.l.b16 %v4173
        %v5104 = vunpack.c.l.b16 %v4174
        %v5105 = vunpack.c.l.b16 %v4175
        %v5106 = vunpack.c.l.b16 %v4176
        %v5107 = vunpack.c.l.b16 %v4177
        %v5108 = vunpack.c.l.b16 %v4178
        %v5109 = vunpack.c.l.b16 %v4179
        %v5110 = vunpack.c.l.b16 %v4180
        %v5111 = vunpack.c.l.b16 %v4181
        %v5112 = vunpack.c.l.b16 %v4182
        %v5113 = vunpack.c.l.b16 %v4183
        %v5114 = vunpack.c.l.b16 %v4184
        %v5115 = vunpack.c.l.b16 %v4185
        %v5116 = vunpack.c.l.b16 %v4186
        %v5117 = vunpack.c.l.b16 %v4187
        %v5118 = vunpack.c.l.b16 %v4188
        %v5119 = vunpack.c.l.b16 %v4189
        %v5120 = vunpack.c.l.b16 %v4190
        %v5121 = vunpack.c.l.b16 %v4191
        %v5122 = vunpack.c.l.b16 %v4192
        %v5123 = vunpack.c.l.b16 %v4193
        %v5124 = vunpack.c.l.b16 %v4194
        %v5125 = vunpack.c.l.b16 %v4195
        %v5126 = vunpack.c.l.b16 %v4196
        %v5127 = vunpack.c.l.b16 %v4197
        %v5128 = vunpack.c.l.b16 %v4198
        %v5129 = vunpack.c.l.b16 %v4199
        %v5130 = vunpack.c.l.b16 %v4200
        %v5131 = vunpack.c.l.b16 %v4201
        %v5132 = vunpack.c.l.b16 %v4202
        %v5133 = vunpack.c.l.b16 %v4203
        %v5134 = vunpack.c.l.b16 %v4204
        %v5135 = vunpack.c.l.b16 %v4205
        %v5136 = vunpack.c.l.b16 %v4206
        %v5137 = vunpack.c.l.b16 %v4207
        %v5138 = vunpack.c.l.b16 %v4208
        %v5139 = vunpack.c.l.b16 %v4209
        %v5140 = vunpack.c.l.b16 %v4210
        %v5141 = vunpack.c.l.b16 %v4211
        %v5142 = vunpack.c.l.b16 %v4212
        %v5143 = vunpack.c.l.b16 %v4213
        %v5144 = vunpack.c.l.b16 %v4214
        %v5145 = vunpack.c.l.b16 %v4215
        %v5146 = vunpack.c.l.b16 %v4216
        %v5147 = vunpack.c.l.b16 %v4217
        %v5148 = vunpack.c.l.b16 %v4218
        %v5149 = vunpack.c.l.b16 %v4219
        %v5150 = vunpack.c.l.b16 %v4220
        %v5151 = vunpack.c.l.b16 %v4221
        %v5152 = vpack.c.b16 %v4721, %v4720
        %v5153 = vpack.c.b16 %v4723, %v4722
        %v5154 = vpack.c.b16 %v4725, %v4724
        %v5155 = vpack.c.b16 %v4727, %v4726
        %v5156 = vpack.c.b16 %v4729, %v4728
        %v5157 = vpack.c.b16 %v4731, %v4730
        %v5158 = vpack.c.b16 %v4733, %v4732
        %v5159 = vpack.c.b16 %v4735, %v4734
        %v5160 = vpack.c.b16 %v4737, %v4736
        %v5161 = vpack.c.b16 %v4739, %v4738
        %v5162 = vpack.c.b16 %v4741, %v4740
        %v5163 = vpack.c.b16 %v4743, %v4742
        %v5164 = vpack.c.b16 %v4745, %v4744
        %v5165 = vpack.c.b16 %v4747, %v4746
        %v5166 = vpack.c.b16 %v4749, %v4748
        %v5167 = vpack.c.b16 %v4751, %v4750
        %v5168 = vpack.c.b16 %v4753, %v4752
        %v5169 = vpack.c.b16 %v4755, %v4754
        %v5170 = vpack.c.b16 %v4757, %v4756
        %v5171 = vpack.c.b16 %v4759, %v4758
        %v5172 = vpack.c.b16 %v4761, %v4760
        %v5173 = vpack.c.b16 %v4763, %v4762
        %v5174 = vpack.c.b16 %v4765, %v4764
        %v5175 = vpack.c.b16 %v4767, %v4766
        %v5176 = vpack.c.b16 %v4769, %v4768
        %v5177 = vpack.c.b16 %v4771, %v4770
        %v5178 = vpack.c.b16 %v4773, %v4772
        %v5179 = vpack.c.b16 %v4775, %v4774
        %v5180 = vpack.c.b16 %v4777, %v4776
        %v5181 = vpack.c.b16 %v4779, %v4778
        %v5182 = vpack.c.b16 %v4781, %v4780
        %v5183 = vpack.c.b16 %v4783, %v4782
        %v5184 = vpack.c.b16 %v4785, %v4784
        %v5185 = vpack.c.b16 %v4787, %v4786
        %v5186 = vpack.c.b16 %v4789, %v4788
        %v5187 = vpack.c.b16 %v4791, %v4790
        %v5188 = vpack.c.b16 %v4793, %v4792
        %v5189 = vpack.c.b16 %v4795, %v4794
        %v5190 = vpack.c.b16 %v4797, %v4796
        %v5191 = vpack.c.b16 %v4799, %v4798
        %v5192 = vpack.c.b16 %v4801, %v4800
        %v5193 = vpack.c.b16 %v4803, %v4802
        %v5194 = vpack.c.b16 %v4805, %v4804
        %v5195 = vpack.c.b16 %v4807, %v4806
        %v5196 = vpack.c.b16 %v4809, %v4808
        %v5197 = vpack.c.b16 %v4811, %v4810
        %v5198 = vpack.c.b16 %v4813, %v4812
        %v5199 = vpack.c.b16 %v4815, %v4814
        %v5200 = vpack.c.b16 %v4817, %v4816
        %v5201 = vpack.c.b16 %v4819, %v4818
        %v5202 = vpack.c.b16 %v4821, %v4820
        %v5203 = vpack.c.b16 %v4823, %v4822
        %v5204 = vpack.c.b16 %v4825, %v4824
        %v5205 = vpack.c.b16 %v4827, %v4826
        %v5206 = vpack.c.b16 %v4829, %v4828
        %v5207 = vpack.c.b16 %v4831, %v4830
        %v5208 = vpack.c.b16 %v4833, %v4832
        %v5209 = vpack.c.b16 %v4835, %v4834
        %v5210 = vpack.c.b16 %v4837, %v4836
        %v5211 = vpack.c.b16 %v4839, %v4838
        %v5212 = vpack.c.b16 %v4841, %v4840
        %v5213 = vpack.c.b16 %v4843, %v4842
        %v5214 = vpack.c.b16 %v4845, %v4844
        %v5215 = vpack.c.b16 %v4847, %v4846
        %v5216 = vpack.c.b16 %v4849, %v4848
        %v5217 = vpack.c.b16 %v4851, %v4850
        %v5218 = vpack.c.b16 %v4853, %v4852
        %v5219 = vpack.c.b16 %v4855, %v4854
        %v5220 = vpack.c.b16 %v4857, %v4856
        %v5221 = vpack.c.b16 %v4859, %v4858
        %v5222 = vpack.c.b16 %v4861, %v4860
        %v5223 = vpack.c.b16 %v4863, %v4862
        %v5224 = vpack.c.b16 %v4865, %v4864
        %v5225 = vpack.c.b16 %v4867, %v4866
        %v5226 = vpack.c.b16 %v4869, %v4868
        %v5227 = vpack.c.b16 %v4871, %v4870
        %v5228 = vpack.c.b16 %v4873, %v4872
        %v5229 = vpack.c.b16 %v4875, %v4874
        %v5230 = vpack.c.b16 %v4877, %v4876
        %v5231 = vpack.c.b16 %v4879, %v4878
        %v5232 = vpack.c.b16 %v4881, %v4880
        %v5233 = vpack.c.b16 %v4883, %v4882
        %v5234 = vpack.c.b16 %v4885, %v4884
        %v5235 = vpack.c.b16 %v4887, %v4886
        %v5236 = vpack.c.b16 %v4889, %v4888
        %v5237 = vpack.c.b16 %v4891, %v4890
        %v5238 = vpack.c.b16 %v4893, %v4892
        %v5239 = vpack.c.b16 %v4895, %v4894
        %v5240 = vpack.c.b16 %v4897, %v4896
        %v5241 = vpack.c.b16 %v4899, %v4898
        %v5242 = vpack.c.b16 %v4901, %v4900
        %v5243 = vpack.c.b16 %v4903, %v4902
        %v5244 = vpack.c.b16 %v4905, %v4904
        %v5245 = vpack.c.b16 %v4907, %v4906
        %v5246 = vpack.c.b16 %v4909, %v4908
        %v5247 = vpack.c.b16 %v4911, %v4910
        %v5248 = vpack.c.b16 %v4913, %v4912
        %v5249 = vpack.c.b16 %v4915, %v4914
        %v5250 = vpack.c.b16 %v4917, %v4916
        %v5251 = vpack.c.b16 %v4919, %v4918
        %v5252 = vpack.c.b16 %v4921, %v4920
        %v5253 = vpack.c.b16 %v4923, %v4922
        %v5254 = vpack.c.b16 %v4925, %v4924
        %v5255 = vpack.c.b16 %v4927, %v4926
        %v5256 = vpack.c.b16 %v4929, %v4928
        %v5257 = vpack.c.b16 %v4931, %v4930
        %v5258 = vpack.c.b16 %v4933, %v4932
        %v5259 = vpack.c.b16 %v4935, %v4934
        %v5260 = vpack.c.b16 %v4937, %v4936
        %v5261 = vpack.c.b16 %v4939, %v4938
        %v5262 = vpack.c.b16 %v4941, %v4940
        %v5263 = vpack.c.b16 %v4943, %v4942
        %v5264 = vpack.c.b16 %v4945, %v4944
        %v5265 = vpack.c.b16 %v4947, %v4946
        %v5266 = vpack.c.b16 %v4949, %v4948
        %v5267 = vpack.c.b16 %v4951, %v4950
        %v5268 = vpack.c.b16 %v4953, %v4952
        %v5269 = vpack.c.b16 %v4955, %v4954
        %v5270 = vpack.c.b16 %v4957, %v4956
        %v5271 = vpack.c.b16 %v4959, %v4958
        %v5272 = vpack.c.b16 %v4961, %v4960
        %v5273 = vpack.c.b16 %v4963, %v4962
        %v5274 = vpack.c.b16 %v4965, %v4964
        %v5275 = vpack.c.b16 %v4967, %v4966
        %v5276 = vpack.c.b16 %v4969, %v4968
        %v5277 = vpack.c.b16 %v4971, %v4970
        %v5278 = vpack.c.b16 %v4973, %v4972
        %v5279 = vpack.c.b16 %v4975, %v4974
        %v5280 = vpack.c.b16 %v4977, %v4976
        %v5281 = vpack.c.b16 %v4979, %v4978
        %v5282 = vpack.c.b16 %v4981, %v4980
        %v5283 = vpack.c.b16 %v4983, %v4982
        %v5284 = vpack.c.b16 %v4985, %v4984
        %v5285 = vpack.c.b16 %v4987, %v4986
        %v5286 = vpack.c.b16 %v4989, %v4988
        %v5287 = vpack.c.b16 %v4991, %v4990
        %v5288 = vpack.c.b16 %v4993, %v4992
        %v5289 = vpack.c.b16 %v4995, %v4994
        %v5290 = vpack.c.b16 %v4997, %v4996
        %v5291 = vpack.c.b16 %v4999, %v4998
        %v5292 = vpack.c.b16 %v5001, %v5000
        %v5293 = vpack.c.b16 %v5003, %v5002
        %v5294 = vpack.c.b16 %v5005, %v5004
        %v5295 = vpack.c.b16 %v5007, %v5006
        %v5296 = vpack.c.b16 %v5009, %v5008
        %v5297 = vpack.c.b16 %v5011, %v5010
        %v5298 = vpack.c.b16 %v5013, %v5012
        %v5299 = vpack.c.b16 %v5015, %v5014
        %v5300 = vpack.c.b16 %v5017, %v5016
        %v5301 = vpack.c.b16 %v5019, %v5018
        %v5302 = vpack.c.b16 %v5021, %v5020
        %v5303 = vpack.c.b16 %v5023, %v5022
        %v5304 = vpack.c.b16 %v5025, %v5024
        %v5305 = vpack.c.b16 %v5027, %v5026
        %v5306 = vpack.c.b16 %v5029, %v5028
        %v5307 = vpack.c.b16 %v5031, %v5030
        %v5308 = vpack.c.b16 %v5033, %v5032
        %v5309 = vpack.c.b16 %v5035, %v5034
        %v5310 = vpack.c.b16 %v5037, %v5036
        %v5311 = vpack.c.b16 %v5039, %v5038
        %v5312 = vpack.c.b16 %v5041, %v5040
        %v5313 = vpack.c.b16 %v5043, %v5042
        %v5314 = vpack.c.b16 %v5045, %v5044
        %v5315 = vpack.c.b16 %v5047, %v5046
        %v5316 = vpack.c.b16 %v5049, %v5048
        %v5317 = vpack.c.b16 %v5051, %v5050
        %v5318 = vpack.c.b16 %v5053, %v5052
        %v5319 = vpack.c.b16 %v5055, %v5054
        %v5320 = vpack.c.b16 %v5057, %v5056
        %v5321 = vpack.c.b16 %v5059, %v5058
        %v5322 = vpack.c.b16 %v5061, %v5060
        %v5323 = vpack.c.b16 %v5063, %v5062
        %v5324 = vpack.c.b16 %v5065, %v5064
        %v5325 = vpack.c.b16 %v5067, %v5066
        %v5326 = vpack.c.b16 %v5069, %v5068
        %v5327 = vpack.c.b16 %v5071, %v5070
        %v5328 = vpack.c.b16 %v5073, %v5072
        %v5329 = vpack.c.b16 %v5075, %v5074
        %v5330 = vpack.c.b16 %v5077, %v5076
        %v5331 = vpack.c.b16 %v5079, %v5078
        %v5332 = vpack.c.b16 %v5081, %v5080
        %v5333 = vpack.c.b16 %v5083, %v5082
        %v5334 = vpack.c.b16 %v5085, %v5084
        %v5335 = vpack.c.b16 %v5087, %v5086
        %v5336 = vpack.c.b16 %v5089, %v5088
        %v5337 = vpack.c.b16 %v5091, %v5090
        %v5338 = vpack.c.b16 %v5093, %v5092
        %v5339 = vpack.c.b16 %v5095, %v5094
        %v5340 = vpack.c.b16 %v5097, %v5096
        %v5341 = vpack.c.b16 %v5099, %v5098
        %v5342 = vpack.c.b16 %v5101, %v5100
        %v5343 = vpack.c.b16 %v5103, %v5102
        %v5344 = vpack.c.b16 %v5105, %v5104
        %v5345 = vpack.c.b16 %v5107, %v5106
        %v5346 = vpack.c.b16 %v5109, %v5108
        %v5347 = vpack.c.b16 %v5111, %v5110
        %v5348 = vpack.c.b16 %v5113, %v5112
        %v5349 = vpack.c.b16 %v5115, %v5114
        %v5350 = vpack.c.b16 %v5117, %v5116
        %v5351 = vpack.c.b16 %v5119, %v5118
        %v5352 = vpack.c.b16 %v5121, %v5120
        %v5353 = vpack.c.b16 %v5123, %v5122
        %v5354 = vpack.c.b16 %v5125, %v5124
        %v5355 = vpack.c.b16 %v5127, %v5126
        %v5356 = vpack.c.b16 %v5129, %v5128
        %v5357 = vpack.c.b16 %v5131, %v5130
        %v5358 = vpack.c.b16 %v5133, %v5132
        %v5359 = vpack.c.b16 %v5135, %v5134
        %v5360 = vpack.c.b16 %v5137, %v5136
        %v5361 = vpack.c.b16 %v5139, %v5138
        %v5362 = vpack.c.b16 %v5141, %v5140
        %v5363 = vpack.c.b16 %v5143, %v5142
        %v5364 = vpack.c.b16 %v5145, %v5144
        %v5365 = vpack.c.b16 %v5147, %v5146
        %v5366 = vpack.c.b16 %v5149, %v5148
        %v5367 = vpack.c.b16 %v5151, %v5150
        %5584 = vmatpush.bf16.msra.mxu0 %v5159
        %5585 = vmatpush.bf16.msra.mxu0 %v5158
        %5586 = vmatpush.bf16.msra.mxu0 %v5157
        %5587 = vmatpush.bf16.msra.mxu0 %v5156
        %5588 = vmatpush.bf16.msra.mxu0 %v5155
        %5589 = vmatpush.bf16.msra.mxu0 %v5154
        %5590 = vmatpush.bf16.msra.mxu0 %v5153
        %5591 = vmatpush.bf16.msra.mxu0 %v5152
        %5592 = vmatmul.bf16.gmra.mxu0 %v4228
        %v5593 = vpop.f32.mrf.mxu0
        %v5594 = vadd.f32 %v4224, %v5593
        %v5595 = vpop.f32.mrf.mxu0
        %5596 = vdwg.mxu0
        %5597 = vmatpush.bf16.msra.mxu0 %v5167
        %5598 = vmatpush.bf16.msra.mxu0 %v5166
        %5599 = vmatpush.bf16.msra.mxu0 %v5165
        %5600 = vmatpush.bf16.msra.mxu0 %v5164
        %5601 = vmatpush.bf16.msra.mxu0 %v5163
        %5602 = vmatpush.bf16.msra.mxu0 %v5162
        %5603 = vmatpush.bf16.msra.mxu0 %v5161
        %5604 = vmatpush.bf16.msra.mxu0 %v5160
        %5605 = vmatmul.bf16.gmra.mxu0 %v4229
        %v5606 = vpop.f32.mrf.mxu0
        %v5607 = vadd.f32 %v5594, %v5606
        %v5608 = vpop.f32.mrf.mxu0
        %5609 = vdwg.mxu0
        %5610 = vmatpush.bf16.msra.mxu0 %v5175
        %5611 = vmatpush.bf16.msra.mxu0 %v5174
        %5612 = vmatpush.bf16.msra.mxu0 %v5173
        %5613 = vmatpush.bf16.msra.mxu0 %v5172
        %5614 = vmatpush.bf16.msra.mxu0 %v5171
        %5615 = vmatpush.bf16.msra.mxu0 %v5170
        %5616 = vmatpush.bf16.msra.mxu0 %v5169
        %5617 = vmatpush.bf16.msra.mxu0 %v5168
        %5618 = vmatmul.bf16.gmra.mxu0 %v4230
        %v5619 = vpop.f32.mrf.mxu0
        %v5620 = vadd.f32 %v5607, %v5619
        %v5621 = vpop.f32.mrf.mxu0
        %5622 = vdwg.mxu0
        %5623 = vmatpush.bf16.msra.mxu0 %v5183
        %5624 = vmatpush.bf16.msra.mxu0 %v5182
        %5625 = vmatpush.bf16.msra.mxu0 %v5181
        %5626 = vmatpush.bf16.msra.mxu0 %v5180
        %5627 = vmatpush.bf16.msra.mxu0 %v5179
        %5628 = vmatpush.bf16.msra.mxu0 %v5178
        %5629 = vmatpush.bf16.msra.mxu0 %v5177
        %5630 = vmatpush.bf16.msra.mxu0 %v5176
        %5631 = vmatmul.bf16.gmra.mxu0 %v4231
        %v5632 = vpop.f32.mrf.mxu0
        %v5633 = vadd.f32 %v5620, %v5632
        %v5634 = vpop.f32.mrf.mxu0
        %5635 = vdwg.mxu0
        %5636 = vmatpush.bf16.msra.mxu0 %v5191
        %5637 = vmatpush.bf16.msra.mxu0 %v5190
        %5638 = vmatpush.bf16.msra.mxu0 %v5189
        %5639 = vmatpush.bf16.msra.mxu0 %v5188
        %5640 = vmatpush.bf16.msra.mxu0 %v5187
        %5641 = vmatpush.bf16.msra.mxu0 %v5186
        %5642 = vmatpush.bf16.msra.mxu0 %v5185
        %5643 = vmatpush.bf16.msra.mxu0 %v5184
        %5644 = vmatmul.bf16.gmra.mxu0 %v4232
        %v5645 = vpop.f32.mrf.mxu0
        %v5646 = vadd.f32 %v5633, %v5645
        %v5647 = vpop.f32.mrf.mxu0
        %5648 = vdwg.mxu0
        %5649 = vmatpush.bf16.msra.mxu0 %v5199
        %5650 = vmatpush.bf16.msra.mxu0 %v5198
        %5651 = vmatpush.bf16.msra.mxu0 %v5197
        %5652 = vmatpush.bf16.msra.mxu0 %v5196
        %5653 = vmatpush.bf16.msra.mxu0 %v5195
        %5654 = vmatpush.bf16.msra.mxu0 %v5194
        %5655 = vmatpush.bf16.msra.mxu0 %v5193
        %5656 = vmatpush.bf16.msra.mxu0 %v5192
        %5657 = vmatmul.bf16.gmra.mxu0 %v4233
        %v5658 = vpop.f32.mrf.mxu0
        %v5659 = vadd.f32 %v5646, %v5658
        %v5660 = vpop.f32.mrf.mxu0
        %5661 = vdwg.mxu0
        %5662 = vmatpush.bf16.msra.mxu0 %v5207
        %5663 = vmatpush.bf16.msra.mxu0 %v5206
        %5664 = vmatpush.bf16.msra.mxu0 %v5205
        %5665 = vmatpush.bf16.msra.mxu0 %v5204
        %5666 = vmatpush.bf16.msra.mxu0 %v5203
        %5667 = vmatpush.bf16.msra.mxu0 %v5202
        %5668 = vmatpush.bf16.msra.mxu0 %v5201
        %5669 = vmatpush.bf16.msra.mxu0 %v5200
        %5670 = vmatmul.bf16.gmra.mxu0 %v4234
        %v5671 = vpop.f32.mrf.mxu0
        %v5672 = vadd.f32 %v5659, %v5671
        %v5673 = vpop.f32.mrf.mxu0
        %5674 = vdwg.mxu0
        %5675 = vmatpush.bf16.msra.mxu0 %v5215
        %5676 = vmatpush.bf16.msra.mxu0 %v5214
        %5677 = vmatpush.bf16.msra.mxu0 %v5213
        %5678 = vmatpush.bf16.msra.mxu0 %v5212
        %5679 = vmatpush.bf16.msra.mxu0 %v5211
        %5680 = vmatpush.bf16.msra.mxu0 %v5210
        %5681 = vmatpush.bf16.msra.mxu0 %v5209
        %5682 = vmatpush.bf16.msra.mxu0 %v5208
        %5683 = vmatmul.bf16.gmra.mxu0 %v4235
        %v5684 = vpop.f32.mrf.mxu0
        %v5685 = vadd.f32 %v5672, %v5684
        %v5686 = vpop.f32.mrf.mxu0
        %5687 = vdwg.mxu0
        %5688 = vmatpush.bf16.msra.mxu0 %v5223
        %5689 = vmatpush.bf16.msra.mxu0 %v5222
        %5690 = vmatpush.bf16.msra.mxu0 %v5221
        %5691 = vmatpush.bf16.msra.mxu0 %v5220
        %5692 = vmatpush.bf16.msra.mxu0 %v5219
        %5693 = vmatpush.bf16.msra.mxu0 %v5218
        %5694 = vmatpush.bf16.msra.mxu0 %v5217
        %5695 = vmatpush.bf16.msra.mxu0 %v5216
        %5696 = vmatmul.bf16.gmra.mxu0 %v4238
        %v5697 = vpop.f32.mrf.mxu0
        %v5698 = vadd.f32 %v5685, %v5697
        %v5699 = vpop.f32.mrf.mxu0
        %5700 = vdwg.mxu0
        %5701 = vmatpush.bf16.msra.mxu0 %v5231
        %5702 = vmatpush.bf16.msra.mxu0 %v5230
        %5703 = vmatpush.bf16.msra.mxu0 %v5229
        %5704 = vmatpush.bf16.msra.mxu0 %v5228
        %5705 = vmatpush.bf16.msra.mxu0 %v5227
        %5706 = vmatpush.bf16.msra.mxu0 %v5226
        %5707 = vmatpush.bf16.msra.mxu0 %v5225
        %5708 = vmatpush.bf16.msra.mxu0 %v5224
        %5709 = vmatmul.bf16.gmra.mxu0 %v4239
        %v5710 = vpop.f32.mrf.mxu0
        %v5711 = vadd.f32 %v5698, %v5710
        %v5712 = vpop.f32.mrf.mxu0
        %5713 = vdwg.mxu0
        %5714 = vmatpush.bf16.msra.mxu0 %v5239
        %5715 = vmatpush.bf16.msra.mxu0 %v5238
        %5716 = vmatpush.bf16.msra.mxu0 %v5237
        %5717 = vmatpush.bf16.msra.mxu0 %v5236
        %5718 = vmatpush.bf16.msra.mxu0 %v5235
        %5719 = vmatpush.bf16.msra.mxu0 %v5234
        %5720 = vmatpush.bf16.msra.mxu0 %v5233
        %5721 = vmatpush.bf16.msra.mxu0 %v5232
        %5722 = vmatmul.bf16.gmra.mxu0 %v4240
        %v5723 = vpop.f32.mrf.mxu0
        %v5724 = vadd.f32 %v5711, %v5723
        %v5725 = vpop.f32.mrf.mxu0
        %5726 = vdwg.mxu0
        %5727 = vmatpush.bf16.msra.mxu0 %v5247
        %5728 = vmatpush.bf16.msra.mxu0 %v5246
        %5729 = vmatpush.bf16.msra.mxu0 %v5245
        %5730 = vmatpush.bf16.msra.mxu0 %v5244
        %5731 = vmatpush.bf16.msra.mxu0 %v5243
        %5732 = vmatpush.bf16.msra.mxu0 %v5242
        %5733 = vmatpush.bf16.msra.mxu0 %v5241
        %5734 = vmatpush.bf16.msra.mxu0 %v5240
        %5735 = vmatmul.bf16.gmra.mxu0 %v4241
        %v5736 = vpop.f32.mrf.mxu0
        %v5737 = vadd.f32 %v5724, %v5736
        %v5738 = vpop.f32.mrf.mxu0
        %5739 = vdwg.mxu0
        %5740 = vmatpush.bf16.msra.mxu0 %v5255
        %5741 = vmatpush.bf16.msra.mxu0 %v5254
        %5742 = vmatpush.bf16.msra.mxu0 %v5253
        %5743 = vmatpush.bf16.msra.mxu0 %v5252
        %5744 = vmatpush.bf16.msra.mxu0 %v5251
        %5745 = vmatpush.bf16.msra.mxu0 %v5250
        %5746 = vmatpush.bf16.msra.mxu0 %v5249
        %5747 = vmatpush.bf16.msra.mxu0 %v5248
        %5748 = vmatmul.bf16.gmra.mxu0 %v4242
        %v5749 = vpop.f32.mrf.mxu0
        %v5750 = vadd.f32 %v5737, %v5749
        %v5751 = vpop.f32.mrf.mxu0
        %5752 = vdwg.mxu0
        %5753 = vmatpush.bf16.msra.mxu0 %v5263
        %5754 = vmatpush.bf16.msra.mxu0 %v5262
        %5755 = vmatpush.bf16.msra.mxu0 %v5261
        %5756 = vmatpush.bf16.msra.mxu0 %v5260
        %5757 = vmatpush.bf16.msra.mxu0 %v5259
        %5758 = vmatpush.bf16.msra.mxu0 %v5258
        %5759 = vmatpush.bf16.msra.mxu0 %v5257
        %5760 = vmatpush.bf16.msra.mxu0 %v5256
        %5761 = vmatmul.bf16.gmra.mxu0 %v4243
        %v5762 = vpop.f32.mrf.mxu0
        %v5763 = vadd.f32 %v5750, %v5762
        %v5764 = vpop.f32.mrf.mxu0
        %5765 = vdwg.mxu0
        %5766 = vmatpush.bf16.msra.mxu0 %v5271
        %5767 = vmatpush.bf16.msra.mxu0 %v5270
        %5768 = vmatpush.bf16.msra.mxu0 %v5269
        %5769 = vmatpush.bf16.msra.mxu0 %v5268
        %5770 = vmatpush.bf16.msra.mxu0 %v5267
        %5771 = vmatpush.bf16.msra.mxu0 %v5266
        %5772 = vmatpush.bf16.msra.mxu0 %v5265
        %5773 = vmatpush.bf16.msra.mxu0 %v5264
        %5774 = vmatmul.bf16.gmra.mxu0 %v4244
        %v5775 = vpop.f32.mrf.mxu0
        %v5776 = vadd.f32 %v5763, %v5775
        %v5777 = vpop.f32.mrf.mxu0
        %5778 = vdwg.mxu0
        %5779 = vmatpush.bf16.msra.mxu0 %v5279
        %5780 = vmatpush.bf16.msra.mxu0 %v5278
        %5781 = vmatpush.bf16.msra.mxu0 %v5277
        %5782 = vmatpush.bf16.msra.mxu0 %v5276
        %5783 = vmatpush.bf16.msra.mxu0 %v5275
        %5784 = vmatpush.bf16.msra.mxu0 %v5274
        %5785 = vmatpush.bf16.msra.mxu0 %v5273
        %5786 = vmatpush.bf16.msra.mxu0 %v5272
        %5787 = vmatmul.bf16.gmra.mxu0 %v4245
        %v5788 = vpop.f32.mrf.mxu0
        %v5789 = vadd.f32 %v5776, %v5788
        %v5790 = vpop.f32.mrf.mxu0
        %5791 = vdwg.mxu0
        %5792 = vmatpush.bf16.msra.mxu0 %v5287
        %5793 = vmatpush.bf16.msra.mxu0 %v5286
        %5794 = vmatpush.bf16.msra.mxu0 %v5285
        %5795 = vmatpush.bf16.msra.mxu0 %v5284
        %5796 = vmatpush.bf16.msra.mxu0 %v5283
        %5797 = vmatpush.bf16.msra.mxu0 %v5282
        %5798 = vmatpush.bf16.msra.mxu0 %v5281
        %5799 = vmatpush.bf16.msra.mxu0 %v5280
        %5800 = vmatmul.bf16.gmra.mxu0 %v4248
        %v5801 = vpop.f32.mrf.mxu0
        %v5802 = vadd.f32 %v5789, %v5801
        %v5803 = vpop.f32.mrf.mxu0
        %5804 = vdwg.mxu0
        %5805 = vmatpush.bf16.msra.mxu0 %v5295
        %5806 = vmatpush.bf16.msra.mxu0 %v5294
        %5807 = vmatpush.bf16.msra.mxu0 %v5293
        %5808 = vmatpush.bf16.msra.mxu0 %v5292
        %5809 = vmatpush.bf16.msra.mxu0 %v5291
        %5810 = vmatpush.bf16.msra.mxu0 %v5290
        %5811 = vmatpush.bf16.msra.mxu0 %v5289
        %5812 = vmatpush.bf16.msra.mxu0 %v5288
        %5813 = vmatmul.bf16.gmra.mxu0 %v4249
        %v5814 = vpop.f32.mrf.mxu0
        %v5815 = vadd.f32 %v5802, %v5814
        %v5816 = vpop.f32.mrf.mxu0
        %5817 = vdwg.mxu0
        %5818 = vmatpush.bf16.msra.mxu0 %v5303
        %5819 = vmatpush.bf16.msra.mxu0 %v5302
        %5820 = vmatpush.bf16.msra.mxu0 %v5301
        %5821 = vmatpush.bf16.msra.mxu0 %v5300
        %5822 = vmatpush.bf16.msra.mxu0 %v5299
        %5823 = vmatpush.bf16.msra.mxu0 %v5298
        %5824 = vmatpush.bf16.msra.mxu0 %v5297
        %5825 = vmatpush.bf16.msra.mxu0 %v5296
        %5826 = vmatmul.bf16.gmra.mxu0 %v4250
        %v5827 = vpop.f32.mrf.mxu0
        %v5828 = vadd.f32 %v5815, %v5827
        %v5829 = vpop.f32.mrf.mxu0
        %5830 = vdwg.mxu0
        %5831 = vmatpush.bf16.msra.mxu0 %v5311
        %5832 = vmatpush.bf16.msra.mxu0 %v5310
        %5833 = vmatpush.bf16.msra.mxu0 %v5309
        %5834 = vmatpush.bf16.msra.mxu0 %v5308
        %5835 = vmatpush.bf16.msra.mxu0 %v5307
        %5836 = vmatpush.bf16.msra.mxu0 %v5306
        %5837 = vmatpush.bf16.msra.mxu0 %v5305
        %5838 = vmatpush.bf16.msra.mxu0 %v5304
        %5839 = vmatmul.bf16.gmra.mxu0 %v4251
        %v5840 = vpop.f32.mrf.mxu0
        %v5841 = vadd.f32 %v5828, %v5840
        %v5842 = vpop.f32.mrf.mxu0
        %5843 = vdwg.mxu0
        %5844 = vmatpush.bf16.msra.mxu0 %v5319
        %5845 = vmatpush.bf16.msra.mxu0 %v5318
        %5846 = vmatpush.bf16.msra.mxu0 %v5317
        %5847 = vmatpush.bf16.msra.mxu0 %v5316
        %5848 = vmatpush.bf16.msra.mxu0 %v5315
        %5849 = vmatpush.bf16.msra.mxu0 %v5314
        %5850 = vmatpush.bf16.msra.mxu0 %v5313
        %5851 = vmatpush.bf16.msra.mxu0 %v5312
        %5852 = vmatmul.bf16.gmra.mxu0 %v4252
        %v5853 = vpop.f32.mrf.mxu0
        %v5854 = vadd.f32 %v5841, %v5853
        %v5855 = vpop.f32.mrf.mxu0
        %5856 = vdwg.mxu0
        %5857 = vmatpush.bf16.msra.mxu0 %v5327
        %5858 = vmatpush.bf16.msra.mxu0 %v5326
        %5859 = vmatpush.bf16.msra.mxu0 %v5325
        %5860 = vmatpush.bf16.msra.mxu0 %v5324
        %5861 = vmatpush.bf16.msra.mxu0 %v5323
        %5862 = vmatpush.bf16.msra.mxu0 %v5322
        %5863 = vmatpush.bf16.msra.mxu0 %v5321
        %5864 = vmatpush.bf16.msra.mxu0 %v5320
        %5865 = vmatmul.bf16.gmra.mxu0 %v4253
        %v5866 = vpop.f32.mrf.mxu0
        %v5867 = vadd.f32 %v5854, %v5866
        %v5868 = vpop.f32.mrf.mxu0
        %5869 = vdwg.mxu0
        %5870 = vmatpush.bf16.msra.mxu0 %v5335
        %5871 = vmatpush.bf16.msra.mxu0 %v5334
        %5872 = vmatpush.bf16.msra.mxu0 %v5333
        %5873 = vmatpush.bf16.msra.mxu0 %v5332
        %5874 = vmatpush.bf16.msra.mxu0 %v5331
        %5875 = vmatpush.bf16.msra.mxu0 %v5330
        %5876 = vmatpush.bf16.msra.mxu0 %v5329
        %5877 = vmatpush.bf16.msra.mxu0 %v5328
        %5878 = vmatmul.bf16.gmra.mxu0 %v4254
        %v5879 = vpop.f32.mrf.mxu0
        %v5880 = vadd.f32 %v5867, %v5879
        %v5881 = vpop.f32.mrf.mxu0
        %5882 = vdwg.mxu0
        %5883 = vmatpush.bf16.msra.mxu0 %v5343
        %5884 = vmatpush.bf16.msra.mxu0 %v5342
        %5885 = vmatpush.bf16.msra.mxu0 %v5341
        %5886 = vmatpush.bf16.msra.mxu0 %v5340
        %5887 = vmatpush.bf16.msra.mxu0 %v5339
        %5888 = vmatpush.bf16.msra.mxu0 %v5338
        %5889 = vmatpush.bf16.msra.mxu0 %v5337
        %5890 = vmatpush.bf16.msra.mxu0 %v5336
        %5891 = vmatmul.bf16.gmra.mxu0 %v4255
        %v5892 = vpop.f32.mrf.mxu0
        %v5893 = vadd.f32 %v5880, %v5892
        %v5894 = vpop.f32.mrf.mxu0
        %5895 = vdwg.mxu0
        %5896 = vmatpush.bf16.msra.mxu0 %v5351
        %5897 = vmatpush.bf16.msra.mxu0 %v5350
        %5898 = vmatpush.bf16.msra.mxu0 %v5349
        %5899 = vmatpush.bf16.msra.mxu0 %v5348
        %5900 = vmatpush.bf16.msra.mxu0 %v5347
        %5901 = vmatpush.bf16.msra.mxu0 %v5346
        %5902 = vmatpush.bf16.msra.mxu0 %v5345
        %5903 = vmatpush.bf16.msra.mxu0 %v5344
        %5904 = vmatmul.bf16.gmra.mxu0 %v4258
        %v5905 = vpop.f32.mrf.mxu0
        %v5906 = vadd.f32 %v5893, %v5905
        %v5907 = vpop.f32.mrf.mxu0
        %5908 = vdwg.mxu0
        %5909 = vmatpush.bf16.msra.mxu0 %v5359
        %5910 = vmatpush.bf16.msra.mxu0 %v5358
        %5911 = vmatpush.bf16.msra.mxu0 %v5357
        %5912 = vmatpush.bf16.msra.mxu0 %v5356
        %5913 = vmatpush.bf16.msra.mxu0 %v5355
        %5914 = vmatpush.bf16.msra.mxu0 %v5354
        %5915 = vmatpush.bf16.msra.mxu0 %v5353
        %5916 = vmatpush.bf16.msra.mxu0 %v5352
        %5917 = vmatmul.bf16.gmra.mxu0 %v4259
        %v5918 = vpop.f32.mrf.mxu0
        %v5919 = vadd.f32 %v5906, %v5918
        %v5920 = vpop.f32.mrf.mxu0
        %5921 = vdwg.mxu0
        %5922 = vmatpush.bf16.msra.mxu0 %v5367
        %5923 = vmatpush.bf16.msra.mxu0 %v5366
        %5924 = vmatpush.bf16.msra.mxu0 %v5365
        %5925 = vmatpush.bf16.msra.mxu0 %v5364
        %5926 = vmatpush.bf16.msra.mxu0 %v5363
        %5927 = vmatpush.bf16.msra.mxu0 %v5362
        %5928 = vmatpush.bf16.msra.mxu0 %v5361
        %5929 = vmatpush.bf16.msra.mxu0 %v5360
        %5930 = vmatmul.bf16.gmra.mxu0 %v4260
        %v5931 = vpop.f32.mrf.mxu0
        %v5932 = vadd.f32 %v5919, %v5931
        %v5933 = vpop.f32.mrf.mxu0
        %5934 = vdwg.mxu0
        %vm5935 = vcmask 1041408
        %v5936 = vsel %vm5935, %v5932, 0.0
        %v5937 = vrot.slane %v5936, 4
        %v5938 = vadd.f32 %v5936, %v5937
        %v5939 = vrot.slane %v5938, 2
        %v5940 = vadd.f32 %v5938, %v5939
        %v5941 = vrot.slane %v5940, 1
        %v5942 = vadd.f32 %v5940, %v5941
        %v5943 = vmul.f32 %v5942, 0.5
        %v5944 = vsub.f32 %v5932, %v5943
        %v5945 = vmul.f32 %v5944, %v5944
        %v5946 = vsel %vm5935, %v5945, 0.0
        %v5947 = vrot.slane %v5946, 4
        %v5948 = vadd.f32 %v5946, %v5947
        %v5949 = vrot.slane %v5948, 2
        %v5950 = vadd.f32 %v5948, %v5949
        %v5951 = vrot.slane %v5950, 1
        %v5952 = vadd.f32 %v5950, %v5951
        %v5953 = vmul.f32 %v5952, 0.5
        %v5954 = vld [vmem:[%s3778] sm:$0x1]
        %v5955 = vadd.f32 %v5953, 1e-05
        %v5956 = vrsqrt.pop %v5955
        %v5957 = vmul.f32 %v5956, %v5955
        %v5958 = vmul.f32 %v5957, %v5956
        %v5959 = vmul.f32 0.5, %v5958
        %v5960 = vsub.f32 1.5, %v5959
        %v5961 = vmul.f32 %v5956, %v5960
        %vm5962 = vweird.f32 %v5955
        %vm5963 = vweird.f32 %v5956
        %vm5964 = vmor %vm5962, %vm5963
        %v5965 = vsel %vm5964, %v5956, %v5961
        %v5966 = vmul.f32 %v5954, %v5965
        %v5968 = vperm.slane %v5966, 0
        %v5970 = vmul.f32 %v5944, %v5968
        %v5971 = vld [vmem:[%s3781] sm:$0x1]
        %v5973 = vperm.slane %v5971, 0
        %v5975 = vadd.f32 %v5970, %v5973
        %v5976 = vmax.f32 %v5975, 0.0
        %5977 = vst [vmem:[%s3785] sm:$0x3] %v5976
        %p5978 = scmp.lt.s32.totalorder %s16, 1
        %s5979 = scalar_select %p5978, %s16, 1
        %s5980 = smul.addr %s5979, 2
        %s5981 = scalar_lea.vmem %s5, %s5980
        // Predicated region
        $region93: #{simple_3dcnn_encoder.5} parent=87 // pred_check
          %p5982 = pneg %p159
        $region94: #{simple_3dcnn_encoder.5} parent=87 // pred_check_branch
          %5984 = sbr.rel (%p5982) target = $region96
        $region95: #{simple_3dcnn_encoder.5} parent=87 // pred_region
          _
        $region96: #{simple_3dcnn_encoder.5} parent=87 // pred_fallthru
          _
      $region88: #{simple_3dcnn_encoder.5} parent=5 // pred_fallthru
        _
      %p5985 = scmp.le.s32.totalorder 2, %s11
      // Predicated region
      $region97: #{simple_3dcnn_encoder.5} parent=5 // pred_check
        %p5986 = pneg %p5985
      $region98: #{simple_3dcnn_encoder.5} parent=5 // pred_check_branch
        %5988 = sbr.rel (%p5986) target = $region100
      $region99: #{simple_3dcnn_encoder.5} parent=5 // pred_region
        %s5989 = ssub.s32 %s11, 2
        // Predicated region
        $region101: #{simple_3dcnn_encoder.5} parent=99 // pred_check
          %p5990 = pneg %p165
        $region102: #{simple_3dcnn_encoder.5} parent=99 // pred_check_branch
          %5992 = sbr.rel (%p5990) target = $region104
        $region103: #{simple_3dcnn_encoder.5} parent=99 // pred_region
          %p5993 = scmp.lt.s32.totalorder %s17, 1
          %s5994 = scalar_select %p5993, %s17, 1
          %s5995 = smul.addr %s5994, 2
          %s5996 = scalar_lea.vmem %s5, %s5995
        $region104: #{simple_3dcnn_encoder.5} parent=99 // pred_fallthru
          _
      $region100: #{simple_3dcnn_encoder.5} parent=5 // pred_fallthru
        _
    $region6: #{simple_3dcnn_encoder.5} parent=1 // loop_footer
      %s15 = sadd.s32 1, %s11
    $region7: #{simple_3dcnn_encoder.5} parent=1 // loop_footer_branch
      %10 = sbr.rel target = $region3
    $region8: #{simple_3dcnn_encoder.5} parent=1 // loop_exit
      _

</llo_original>
